<compile_context>
chip_gen: v6e
topology: v6e:2x2x1
jax: 0.10.0
libtpu: 0.0.40
codegen_flags: <defaults>
</compile_context>

<pallas_src>
from functools import partial, reduce
from operator import add

import jax
import jax.numpy as jnp
from jax import lax
from jax.experimental import pallas as pl
from jax.experimental.pallas import tpu as pltpu

FEAT_DIM = 512   # vgg16 branch: all extracted feature maps have 512 channels
N_FEATS = 7      # len(feat_ids) for vgg16

# stack_ids derivation, exactly as in __init__ (vgg16 branch):
NBOTTLENECKS = [2, 2, 3, 3, 3, 1]
LIDS = reduce(add, [[i + 1] * x for i, x in enumerate(NBOTTLENECKS)])
_bins = [0] * (max(LIDS) + 1)
for _v in LIDS:
    _bins[_v] += 1
_acc, STACK_IDS = 0, []
for _v in _bins[::-1]:
    _acc += _v
    STACK_IDS.append(_acc)
STACK_IDS = STACK_IDS[:3]          # -> [1, 4, 7]


# ----------------------------------------------------------------------------
# Plain-JAX glue helpers
# ----------------------------------------------------------------------------
def resize_bilinear_ac(x, out_h, out_w):
    """F.interpolate(x, (out_h, out_w), mode='bilinear', align_corners=True), x: [B,C,H,W]."""
    B, C, H, W = x.shape
    ys = jnp.zeros((out_h,), jnp.float32) if H == 1 else jnp.linspace(0.0, H - 1.0, out_h)
    xs = jnp.zeros((out_w,), jnp.float32) if W == 1 else jnp.linspace(0.0, W - 1.0, out_w)
    y0 = jnp.clip(jnp.floor(ys).astype(jnp.int32), 0, H - 1)
    y1 = jnp.clip(y0 + 1, 0, H - 1)
    x0 = jnp.clip(jnp.floor(xs).astype(jnp.int32), 0, W - 1)
    x1 = jnp.clip(x0 + 1, 0, W - 1)
    wy = (ys - y0.astype(jnp.float32))[None, None, :, None]
    wx = (xs - x0.astype(jnp.float32))[None, None, None, :]
    g00 = x[:, :, y0][:, :, :, x0]
    g01 = x[:, :, y0][:, :, :, x1]
    g10 = x[:, :, y1][:, :, :, x0]
    g11 = x[:, :, y1][:, :, :, x1]
    top = g00 * (1.0 - wx) + g01 * wx
    bot = g10 * (1.0 - wx) + g11 * wx
    return top * (1.0 - wy) + bot * wy


def avg_pool_to(x, out_h, out_w):
    B, C, H, W = x.shape
    return x.reshape(B, C, out_h, H // out_h, out_w, W // out_w).mean(axis=(3, 5))


def backbone_stub(img, proj_ws):
    # TODO(synk): pretrained vgg16 feature extractor (extract_feat_vgg) cannot be loaded
    # in-script; deterministic pooled-projection stand-in with the same pyramid structure:
    # 7 levels, 512 channels, 3 at stride ~4 and 4 at stride ~8.  Emits lane-dense bf16 NHWC.
    B, Cin, H, W = img.shape
    sizes = [(H // 4, W // 4)] * 3 + [(H // 8, W // 8)] * 4
    feats = []
    for w, (fh, fw) in zip(proj_ws, sizes):
        pooled = avg_pool_to(img, fh, fw)                       # [B, 3, fh, fw]
        f = jnp.einsum("oc,bchw->bhwo", w, pooled)              # [B, fh, fw, 512]  (NHWC)
        feats.append(jax.nn.relu(f).astype(jnp.bfloat16))
    return feats


def group_levels(feats):
    """Group level indices by (h, w) so same-shape levels share one pallas_call chain."""
    groups, order = {}, []
    for i, f in enumerate(feats):
        key = (f.shape[1], f.shape[2])       # NHWC
        if key not in groups:
            groups[key] = []
            order.append(key)
        groups[key].append(i)
    return [(groups[k], k) for k in order]


def _pick_tile(n, cap, mult):
    """Largest divisor of n that is <= cap and a multiple of `mult`; else the full extent."""
    if n <= cap:
        return n
    t = (cap // mult) * mult
    while t >= mult:
        if n % t == 0:
            return t
        t -= mult
    # TODO(synk): no aligned divisor -> full extent (pad HW upstream for odd resolutions).
    return n


# ----------------------------------------------------------------------------
# Pallas kernel 1: masked-feature prototypes (fg / bg), fused over a level group
# ----------------------------------------------------------------------------
def _proto_kernel(s_ref, m_ref, pf_ref, pb_ref, acc_ref, msum_ref, *, hw_total):
    t = pl.program_id(2)

    @pl.when(t == 0)
    def _init():
        acc_ref[...] = jnp.zeros_like(acc_ref)
        msum_ref[...] = jnp.zeros_like(msum_ref)

    feat = s_ref[0, 0]                                   # [THW, C] bf16
    m = m_ref[0]                                         # [1, THW] f32 (lane-dense)
    thw = feat.shape[0]
    # MXU reduction: rows of `w` are [ones, mask, 0, ...]; w @ feat -> [8, C] with
    # row0 = sum(feat), row1 = sum(feat * mask).  bg sums are derived from these.
    w = jnp.concatenate([jnp.ones_like(m), m, jnp.zeros((6, thw), jnp.float32)],
                        axis=0).astype(jnp.bfloat16)     # [8, THW]
    acc_ref[...] += lax.dot_general(w, feat, (((1,), (0,)), ((), ())),
                                    preferred_element_type=jnp.float32)
    msum_ref[...] += jnp.sum(m, axis=1, keepdims=True)

    @pl.when(t == pl.num_programs(2) - 1)
    def _finalize():
        eps = 1e-6
        msum = msum_ref[...]                              # [1, 1]
        fsum = acc_ref[0:1, :]                            # sum(feat)
        wsum = acc_ref[1:2, :]                            # sum(feat * mask)
        pf_ref[0, 0] = wsum / (msum + eps)
        pb_ref[0, 0] = (fsum - wsum) / ((hw_total - msum) + eps)


def mask_feature_group(sf, m):
    """sf: [L,B,HW,C] bf16, m: [B,1,HW] f32 -> prototypes (pf, pb) each [L,B,C] f32."""
    L, Bsz, HW, C = sf.shape
    thw = _pick_tile(HW, 4096, 128)
    grid = (L, Bsz, HW // thw)
    pf, pb = pl.pallas_call(
        partial(_proto_kernel, hw_total=float(HW)),
        grid=grid,
        in_specs=[pl.BlockSpec((1, 1, thw, C), lambda l, b, t: (l, b, t, 0)),
                  pl.BlockSpec((1, 1, thw), lambda l, b, t: (b, 0, t))],
        out_specs=(pl.BlockSpec((1, 1, 1, C), lambda l, b, t: (l, b, 0, 0)),
                   pl.BlockSpec((1, 1, 1, C), lambda l, b, t: (l, b, 0, 0))),
        out_shape=(jax.ShapeDtypeStruct((L, Bsz, 1, C), jnp.float32),
                   jax.ShapeDtypeStruct((L, Bsz, 1, C), jnp.float32)),
        scratch_shapes=[pltpu.VMEM((8, C), jnp.float32),
                        pltpu.VMEM((1, 1), jnp.float32)],
        compiler_params=pltpu.CompilerParams(
            dimension_semantics=("parallel", "parallel", "arbitrary")),
    )(sf, m)
    return pf[:, :, 0], pb[:, :, 0]


# ----------------------------------------------------------------------------
# Glue: Transformation factors collapsed into a rank-2 projection  proj = [Cn ; A Cn]
# ----------------------------------------------------------------------------
def compute_projection(proto_b, proto_f, ref_w):
    """proto_*: [L,B,Cd]; ref_w: [L,2,Cd] -> proj [L,B,4,Cd] (bf16).

    Reference math: C=[p_b;p_f] row-normalized -> Cn; R row-normalized -> Rn;
    P = (pinverse(C) @ R)^T = Rn^T G^{-1} Cn with G = Cn Cn^T.  With GR = G^{-1} Rn and
    A = GR GR^T, the transformed-feature cosine correlation depends only on Cn x and A.
    """
    eps = 1e-6
    L, Bsz, Cd = proto_b.shape
    Cmat = jnp.stack([proto_b, proto_f], axis=2)                              # [L,B,2,Cd]
    Cn = Cmat / (jnp.sqrt(jnp.sum(Cmat * Cmat, axis=-1, keepdims=True)) + eps)
    Rn = ref_w / (jnp.sqrt(jnp.sum(ref_w * ref_w, axis=-1, keepdims=True)) + eps)
    Rn = jnp.broadcast_to(Rn[:, None], (L, Bsz, 2, Cd))
    G = jnp.einsum("lbic,lbjc->lbij", Cn, Cn)                                 # [L,B,2,2]
    a, b = G[..., 0, 0], G[..., 0, 1]
    c, d = G[..., 1, 0], G[..., 1, 1]
    # TODO(synk): torch.pinverse is SVD-based; here the analytic 2x2 inverse is used with a
    # clamped determinant (det of a unit-row Gram lies in [0,1]) to stay finite when the
    # fg / bg prototypes are near-parallel.
    det = jnp.maximum(a * d - b * c, 1e-6)
    Ginv = jnp.stack([jnp.stack([d, -b], -1),
                      jnp.stack([-c, a], -1)], -2) / det[..., None, None]
    GR = jnp.einsum("lbij,lbjc->lbic", Ginv, Rn)                              # [L,B,2,Cd]
    A = jnp.einsum("lbic,lbjc->lbij", GR, GR)                                 # [L,B,2,2]
    # Uniform rescaling of A leaves the cosine correlation invariant (up to the tiny eps in
    # the norm terms); it keeps the A.Cn rows O(1) so the bf16 cast stays accurate even when
    # the det clamp made G^{-1} entries huge.
    A = A / jnp.maximum(jnp.max(jnp.abs(A), axis=(-2, -1), keepdims=True), 1e-12)
    ACn = jnp.einsum("lbij,lbjc->lbic", A, Cn)                                # [L,B,2,Cd]
    return jnp.concatenate([Cn, ACn], axis=2).astype(jnp.bfloat16)            # [L,B,4,Cd]


# ----------------------------------------------------------------------------
# Pallas kernel S: support-side factors, computed ONCE per (level, batch)
#   F_s = (m * Cn s) * inv_s  with  inv_s = 1 / (||P s_m|| + eps)
# ----------------------------------------------------------------------------
def _support_factor_kernel(s_ref, m_ref, p_ref, fs_ref):
    eps = 1e-5
    s = s_ref[0, 0]                                      # [TSW, C] bf16 (raw support feat)
    m = m_ref[0]                                         # [1, TSW] f32
    proj = p_ref[0, 0]                                   # [4, C]  bf16: [Cn0,Cn1,(ACn)0,(ACn)1]

    # rank-2 projection of the support feature (K=512 MXU), mask folded into the tiny result
    ts = lax.dot_general(proj, s, (((1,), (1,)), ((), ())),
                         preferred_element_type=jnp.float32)        # [4, TSW]
    ts = ts * m                                                      # = proj @ (m*s)^T
    ns = ts[0:1, :] * ts[2:3, :] + ts[1:2, :] * ts[3:4, :]           # ||P s_m||^2
    inv_s = pl.reciprocal(jnp.sqrt(jnp.maximum(ns, 0.0)) + eps, approx=True)
    fs_ref[0, 0] = (ts[0:2, :] * inv_s).astype(fs_ref.dtype)         # [2, TSW]


def support_factor_group(sf, m, proj):
    """sf: [L,B,HW,C] bf16, m: [B,1,HW] f32, proj: [L,B,4,C] bf16 -> F_s [L,B,2,HW] bf16."""
    L, Bsz, HW, C = sf.shape
    tsw = _pick_tile(HW, 2048, 128)
    grid = (L, Bsz, HW // tsw)
    return pl.pallas_call(
        _support_factor_kernel,
        grid=grid,
        in_specs=[pl.BlockSpec((1, 1, tsw, C), lambda l, b, t: (l, b, t, 0)),
                  pl.BlockSpec((1, 1, tsw), lambda l, b, t: (b, 0, t)),
                  pl.BlockSpec((1, 1, 4, C), lambda l, b, t: (l, b, 0, 0))],
        out_specs=pl.BlockSpec((1, 1, 2, tsw), lambda l, b, t: (l, b, 0, t)),
        out_shape=jax.ShapeDtypeStruct((L, Bsz, 2, HW), jnp.bfloat16),
        compiler_params=pltpu.CompilerParams(
            dimension_semantics=("parallel", "parallel", "parallel")),
    )(sf, m, proj)


# ----------------------------------------------------------------------------
# Pallas kernel 2: query projection + channel-cosine correlation (all on the MXU)
# ----------------------------------------------------------------------------
def _corr_kernel(q_ref, p_ref, fs_ref, corr_ref):
    eps = 1e-5
    q = q_ref[0, 0]                                      # [TQ, C]  bf16 (raw query feat)
    proj = p_ref[0, 0]                                   # [4, C]   bf16
    fs = fs_ref[0, 0]                                    # [2, HWs] bf16 (mask+norm folded)

    tqf = lax.dot_general(q, proj, (((1,), (1,)), ((), ())),
                          preferred_element_type=jnp.float32)        # [TQ, 4]
    nq = tqf[:, 0:1] * tqf[:, 2:3] + tqf[:, 1:2] * tqf[:, 3:4]       # ||P q||^2
    inv_q = pl.reciprocal(jnp.sqrt(jnp.maximum(nq, 0.0)) + eps, approx=True)
    fq = (tqf[:, 2:4] * inv_q).astype(jnp.bfloat16)                  # [TQ, 2] = (A Cn q)*inv_q

    # K=2 MXU matmul produces the whole [TQ, HWs] tile; only relu + cast stay on the VPU.
    raw = lax.dot_general(fq, fs, (((1,), (0,)), ((), ())),
                          preferred_element_type=jnp.float32)        # [TQ, HWs]
    corr_ref[0, 0] = jnp.maximum(raw, 0.0).astype(corr_ref.dtype)


def corr_group(qf, proj, fs):
    """qf: [L,B,HWq,C] bf16, proj: [L,B,4,C] bf16, fs: [L,B,2,HWs] bf16 -> corr bf16."""
    L, Bsz, HWq, C = qf.shape
    HWs = fs.shape[3]
    tq = _pick_tile(HWq, 512, 8)
    grid = (L, Bsz, HWq // tq)
    return pl.pallas_call(
        _corr_kernel,
        grid=grid,
        in_specs=[pl.BlockSpec((1, 1, tq, C), lambda l, b, t: (l, b, t, 0)),
                  pl.BlockSpec((1, 1, 4, C), lambda l, b, t: (l, b, 0, 0)),
                  pl.BlockSpec((1, 1, 2, HWs), lambda l, b, t: (l, b, 0, 0))],
        out_specs=pl.BlockSpec((1, 1, tq, HWs), lambda l, b, t: (l, b, t, 0)),
        out_shape=jax.ShapeDtypeStruct((L, Bsz, HWq, HWs), jnp.bfloat16),
        compiler_params=pltpu.CompilerParams(
            dimension_semantics=("parallel", "parallel", "parallel")),
    )(qf, proj, fs)


# ----------------------------------------------------------------------------
# Head stub + full forward
# ----------------------------------------------------------------------------
def head_stub(corr_pyramid):
    # TODO(synk): HPNLearner (center-pivot 4D conv pyramid) is an external module not defined
    # in the reference file; deterministic mean-pool + multi-scale average readout instead.
    target = corr_pyramid[-1]                            # corr_l2 (finest query resolution)
    Bsz, _, ha, wa = target.shape[:4]
    acc = jnp.zeros((Bsz, ha, wa), jnp.float32)
    for c in corr_pyramid:
        fg = jnp.mean(c.astype(jnp.float32), axis=(1, 4, 5))         # [B, h, w]
        acc = acc + resize_bilinear_ac(fg[:, None], ha, wa)[:, 0]
    fg = acc / float(len(corr_pyramid))
    return jnp.stack([-fg, fg], axis=1)                  # [B, 2, ha, wa]


def patnet_forward(params, query_img, support_img, support_mask):
    Bsz = query_img.shape[0]
    H, W = support_img.shape[2], support_img.shape[3]

    query_feats = backbone_stub(query_img, params["backbone_proj"])      # NHWC bf16
    support_feats = backbone_stub(support_img, params["backbone_proj"])
    mask4d = support_mask[:, None].astype(jnp.float32)                   # [B, 1, H, W]

    corrs = [None] * N_FEATS
    for lv_idx, (h, w) in group_levels(support_feats):
        HW = h * w
        sf = jnp.stack([support_feats[i].reshape(Bsz, HW, FEAT_DIM) for i in lv_idx])  # [L,B,HW,C]
        qf = jnp.stack([query_feats[i].reshape(Bsz, HW, FEAT_DIM) for i in lv_idx])
        m = resize_bilinear_ac(mask4d, h, w).reshape(Bsz, 1, HW)          # lane-dense mask

        # 1) masked-feature prototypes (one pallas_call per level group)
        pf, pb = mask_feature_group(sf, m)                                # [L, B, C] f32

        # 2) transformation factors -> rank-2 projection (tiny glue math)
        ref_w = jnp.stack([params["ref1_w"] if i <= 3 else
                           (params["ref2_w"] if i <= 9 else params["ref3_w"])
                           for i in lv_idx])                              # [L, 2, C]
        proj = compute_projection(pb, pf, ref_w)                          # [L, B, 4, C] bf16

        # 3) support-side factors hoisted out of the query-tile loop (mask + norm folded)
        fs = support_factor_group(sf, m, proj)                            # [L, B, 2, HW] bf16

        # 4) query projection + channel-cosine correlation on the MXU
        corr_g = corr_group(qf, proj, fs)                                 # [L, B, HW, HW] bf16
        for j, lvl in enumerate(lv_idx):
            corrs[lvl] = corr_g[j].reshape(Bsz, h, w, h, w)

    corr_l4 = jnp.stack(corrs[-STACK_IDS[0]:], axis=1)
    corr_l3 = jnp.stack(corrs[-STACK_IDS[1]:-STACK_IDS[0]], axis=1)
    corr_l2 = jnp.stack(corrs[-STACK_IDS[2]:-STACK_IDS[1]], axis=1)

    logit = head_stub([corr_l4, corr_l3, corr_l2])
    # final F.interpolate(logit_mask, support_img.size()[2:], 'bilinear', align_corners=True)
    return resize_bilinear_ac(logit, H, W)


# ----------------------------------------------------------------------------
# Parameter init
# ----------------------------------------------------------------------------
def init_params(key):
    keys = jax.random.split(key, 3 + N_FEATS)

    def kaiming_linear(k, out_f, in_f):
        # kaiming_normal_(a=0, mode='fan_in', nonlinearity='linear') -> std = 1/sqrt(fan_in)
        return (float(in_f) ** -0.5) * jax.random.normal(k, (out_f, in_f), jnp.float32)

    return {
        "ref1_w": kaiming_linear(keys[0], 2, FEAT_DIM),
        "ref2_w": kaiming_linear(keys[1], 2, FEAT_DIM),
        "ref3_w": kaiming_linear(keys[2], 2, FEAT_DIM),
        "ref1_b": jnp.zeros((2,), jnp.float32),   # biases are zero-init and unused in forward
        "ref2_b": jnp.zeros((2,), jnp.float32),
        "ref3_b": jnp.zeros((2,), jnp.float32),
        "backbone_proj": [0.1 * jax.random.normal(keys[3 + i], (FEAT_DIM, 3), jnp.float32)
                          for i in range(N_FEATS)],
    }


if __name__ == "__main__":
    key = jax.random.PRNGKey(0)
    kq, ks, km, kp = jax.random.split(key, 4)
    Bsz, H, W = 2, 32, 32
    query_img = jax.random.normal(kq, (Bsz, 3, H, W), jnp.float32)
    support_img = jax.random.normal(ks, (Bsz, 3, H, W), jnp.float32)
    support_mask = (jax.random.uniform(km, (Bsz, H, W)) > 0.5).astype(jnp.float32)
    params = init_params(kp)

    forward = jax.jit(patnet_forward)
    logit_mask = jax.block_until_ready(forward(params, query_img, support_img, support_mask))
    assert logit_mask.shape == (Bsz, 2, H, W), logit_mask.shape
    assert bool(jnp.all(jnp.isfinite(logit_mask)))
    print("KERNEL_OK")
</pallas_src>

<mosaic_0001>
module attributes {stable_mosaic.version = 11 : i64} {
  func.func @_proto_kernel(%arg0: i32, %arg1: i32, %arg2: i32, %arg3: memref<1x1x16x512xbf16, #tpu.memory_space<vmem>>, %arg4: memref<1x1x16xf32, #tpu.memory_space<vmem>>, %arg5: memref<1x1x1x512xf32, #tpu.memory_space<vmem>>, %arg6: memref<1x1x1x512xf32, #tpu.memory_space<vmem>>, %arg7: memref<8x512xf32, #tpu.memory_space<vmem>>, %arg8: memref<1x1xf32, #tpu.memory_space<vmem>>) attributes {dimension_semantics = [#tpu.dimension_semantics<parallel>, #tpu.dimension_semantics<parallel>, #tpu.dimension_semantics<arbitrary>], iteration_bounds = array<i64: 4, 2, 1>, scalar_prefetch = 0 : i64, scratch_operands = 2 : i64, tpu.core_type = #tpu.core_type<tc>, window_params = [{transform_indices = @transform_0, window_bounds = array<i64: 1, 1, 16, 512>}, {transform_indices = @transform_1, window_bounds = array<i64: 1, 1, 16>}, {transform_indices = @transform_2, window_bounds = array<i64: 1, 1, 1, 512>}, {transform_indices = @transform_3, window_bounds = array<i64: 1, 1, 1, 512>}]} {
    %c0_i32 = arith.constant 0 : i32
    %0 = arith.cmpi eq, %arg2, %c0_i32 : i32
    %1 = arith.extui %0 : i1 to i32
    %c0_i32_0 = arith.constant 0 : i32
    %2 = arith.cmpi ne, %1, %c0_i32_0 : i32
    scf.if %2 {
      %cst_20 = arith.constant 0.000000e+00 : f32
      %23 = vector.broadcast %cst_20 : f32 to vector<8x512xf32>
      %c0_21 = arith.constant 0 : index
      %c0_22 = arith.constant 0 : index
      %24 = vector.load %arg7[%c0_21, %c0_22] : memref<8x512xf32, #tpu.memory_space<vmem>>, vector<8x512xf32>
      tpu.vector_store %arg7[%c0_21, %c0_22], %23 {strides = array<i32>} : memref<8x512xf32, #tpu.memory_space<vmem>>, vector<8x512xf32>,
      %cst_23 = arith.constant 0.000000e+00 : f32
      %25 = vector.broadcast %cst_23 : f32 to vector<1x1xf32>
      %c0_24 = arith.constant 0 : index
      %c0_25 = arith.constant 0 : index
      %26 = vector.load %arg8[%c0_24, %c0_25] : memref<1x1xf32, #tpu.memory_space<vmem>>, vector<1x1xf32>
      tpu.vector_store %arg8[%c0_24, %c0_25], %25 {strides = array<i32>} : memref<1x1xf32, #tpu.memory_space<vmem>>, vector<1x1xf32>,
    } else {
    }
    %c0 = arith.constant 0 : index
    %c0_1 = arith.constant 0 : index
    %c0_2 = arith.constant 0 : index
    %c0_3 = arith.constant 0 : index
    %3 = vector.load %arg3[%c0, %c0_1, %c0_2, %c0_3] : memref<1x1x16x512xbf16, #tpu.memory_space<vmem>>, vector<1x1x16x512xbf16>
    %4 = vector.shape_cast %3 : vector<1x1x16x512xbf16> to vector<16x512xbf16>
    %c0_4 = arith.constant 0 : index
    %c0_5 = arith.constant 0 : index
    %c0_6 = arith.constant 0 : index
    %5 = vector.load %arg4[%c0_4, %c0_5, %c0_6] : memref<1x1x16xf32, #tpu.memory_space<vmem>>, vector<1x1x16xf32>
    %6 = vector.shape_cast %5 : vector<1x1x16xf32> to vector<1x16xf32>
    %cst = arith.constant 1.000000e+00 : f32
    %7 = vector.broadcast %cst : f32 to vector<1x16xf32>
    %cst_7 = arith.constant 0.000000e+00 : f32
    %8 = vector.broadcast %cst_7 : f32 to vector<6x16xf32>
    %9 = tpu.concatenate %7, %6, %8 in 0 : vector<1x16xf32>, vector<1x16xf32>, vector<6x16xf32> -> vector<8x16xf32>
    %10 = arith.truncf %9 : vector<8x16xf32> to vector<8x16xbf16>
    %c0_8 = arith.constant 0 : index
    %c0_9 = arith.constant 0 : index
    %11 = vector.load %arg7[%c0_8, %c0_9] : memref<8x512xf32, #tpu.memory_space<vmem>>, vector<8x512xf32>
    %cst_10 = arith.constant dense<0.000000e+00> : vector<8x512xf32>
    %12 = tpu.matmul %10, %4, %cst_10 {dimension_numbers = #tpu.dot_dimension_numbers<[1], [0], [0], [1], [0, 0, 1, 1], [], []>} : vector<8x16xbf16>, vector<16x512xbf16>, vector<8x512xf32> -> vector<8x512xf32>
    %13 = arith.addf %11, %12 : vector<8x512xf32>
    %c0_11 = arith.constant 0 : index
    %c0_12 = arith.constant 0 : index
    %14 = vector.load %arg7[%c0_11, %c0_12] : memref<8x512xf32, #tpu.memory_space<vmem>>, vector<8x512xf32>
    tpu.vector_store %arg7[%c0_11, %c0_12], %13 {strides = array<i32>} : memref<8x512xf32, #tpu.memory_space<vmem>>, vector<8x512xf32>,
    %c0_13 = arith.constant 0 : index
    %c0_14 = arith.constant 0 : index
    %15 = vector.load %arg8[%c0_13, %c0_14] : memref<1x1xf32, #tpu.memory_space<vmem>>, vector<1x1xf32>
    %cst_15 = arith.constant dense<0.000000e+00> : vector<1xf32>
    %16 = vector.multi_reduction <add>, %6, %cst_15 [1] : vector<1x16xf32> to vector<1xf32>
    %17 = vector.shape_cast %16 : vector<1xf32> to vector<1x1xf32>
    %18 = arith.addf %15, %17 : vector<1x1xf32>
    %c0_16 = arith.constant 0 : index
    %c0_17 = arith.constant 0 : index
    %19 = vector.load %arg8[%c0_16, %c0_17] : memref<1x1xf32, #tpu.memory_space<vmem>>, vector<1x1xf32>
    tpu.vector_store %arg8[%c0_16, %c0_17], %18 {strides = array<i32>} : memref<1x1xf32, #tpu.memory_space<vmem>>, vector<1x1xf32>,
    %c0_i32_18 = arith.constant 0 : i32
    %20 = arith.cmpi eq, %arg2, %c0_i32_18 : i32
    %21 = arith.extui %20 : i1 to i32
    %c0_i32_19 = arith.constant 0 : i32
    %22 = arith.cmpi ne, %21, %c0_i32_19 : i32
    scf.if %22 {
      %c0_20 = arith.constant 0 : index
      %c0_21 = arith.constant 0 : index
      %23 = vector.load %arg8[%c0_20, %c0_21] : memref<1x1xf32, #tpu.memory_space<vmem>>, vector<1x1xf32>
      %c0_22 = arith.constant 0 : index
      %c0_23 = arith.constant 0 : index
      %24 = vector.load %arg7[%c0_22, %c0_23] : memref<8x512xf32, #tpu.memory_space<vmem>>, vector<1x512xf32>
      %c1 = arith.constant 1 : index
      %c0_24 = arith.constant 0 : index
      %25 = vector.load %arg7[%c1, %c0_24] : memref<8x512xf32, #tpu.memory_space<vmem>>, vector<1x512xf32>
      %cst_25 = arith.constant 9.99999997E-7 : f32
      %26 = vector.broadcast %cst_25 : f32 to vector<1x1xf32>
      %27 = arith.addf %23, %26 : vector<1x1xf32>
      %28 = vector.broadcast %27 : vector<1x1xf32> to vector<1x512xf32>
      %29 = arith.divf %25, %28 : vector<1x512xf32>
      %c0_26 = arith.constant 0 : index
      %c0_27 = arith.constant 0 : index
      %c0_28 = arith.constant 0 : index
      %c0_29 = arith.constant 0 : index
      %30 = vector.load %arg5[%c0_26, %c0_27, %c0_28, %c0_29] : memref<1x1x1x512xf32, #tpu.memory_space<vmem>>, vector<1x1x1x512xf32>
      %31 = vector.shape_cast %30 : vector<1x1x1x512xf32> to vector<1x512xf32>
      %32 = vector.shape_cast %29 : vector<1x512xf32> to vector<1x1x1x512xf32>
      tpu.vector_store %arg5[%c0_26, %c0_27, %c0_28, %c0_29], %32 {strides = array<i32>} : memref<1x1x1x512xf32, #tpu.memory_space<vmem>>, vector<1x1x1x512xf32>,
      %33 = arith.subf %24, %25 : vector<1x512xf32>
      %cst_30 = arith.constant 1.600000e+01 : f32
      %34 = vector.broadcast %cst_30 : f32 to vector<1x1xf32>
      %35 = arith.subf %34, %23 : vector<1x1xf32>
      %cst_31 = arith.constant 9.99999997E-7 : f32
      %36 = vector.broadcast %cst_31 : f32 to vector<1x1xf32>
      %37 = arith.addf %35, %36 : vector<1x1xf32>
      %38 = vector.broadcast %37 : vector<1x1xf32> to vector<1x512xf32>
      %39 = arith.divf %33, %38 : vector<1x512xf32>
      %c0_32 = arith.constant 0 : index
      %c0_33 = arith.constant 0 : index
      %c0_34 = arith.constant 0 : index
      %c0_35 = arith.constant 0 : index
      %40 = vector.load %arg6[%c0_32, %c0_33, %c0_34, %c0_35] : memref<1x1x1x512xf32, #tpu.memory_space<vmem>>, vector<1x1x1x512xf32>
      %41 = vector.shape_cast %40 : vector<1x1x1x512xf32> to vector<1x512xf32>
      %42 = vector.shape_cast %39 : vector<1x512xf32> to vector<1x1x1x512xf32>
      tpu.vector_store %arg6[%c0_32, %c0_33, %c0_34, %c0_35], %42 {strides = array<i32>} : memref<1x1x1x512xf32, #tpu.memory_space<vmem>>, vector<1x1x1x512xf32>,
    } else {
    }
    return
  }
  func.func @transform_0(%arg0: i32, %arg1: i32, %arg2: i32) -> (i32, i32, i32, i32) {
    %c0_i32 = arith.constant 0 : i32
    %c0_i32_0 = arith.constant 0 : i32
    return %arg0, %arg1, %arg2, %c0_i32 : i32, i32, i32, i32
  }
  func.func @transform_1(%arg0: i32, %arg1: i32, %arg2: i32) -> (i32, i32, i32) {
    %c0_i32 = arith.constant 0 : i32
    %c0_i32_0 = arith.constant 0 : i32
    return %arg1, %c0_i32, %arg2 : i32, i32, i32
  }
  func.func @transform_2(%arg0: i32, %arg1: i32, %arg2: i32) -> (i32, i32, i32, i32) {
    %c0_i32 = arith.constant 0 : i32
    %c0_i32_0 = arith.constant 0 : i32
    %c0_i32_1 = arith.constant 0 : i32
    return %arg0, %arg1, %c0_i32, %c0_i32_0 : i32, i32, i32, i32
  }
  func.func @transform_3(%arg0: i32, %arg1: i32, %arg2: i32) -> (i32, i32, i32, i32) {
    %c0_i32 = arith.constant 0 : i32
    %c0_i32_0 = arith.constant 0 : i32
    %c0_i32_1 = arith.constant 0 : i32
    return %arg0, %arg1, %c0_i32, %c0_i32_0 : i32, i32, i32, i32
  }
}

module attributes {stable_mosaic.version = 11 : i64} {
  func.func @_support_factor_kernel(%arg0: i32, %arg1: i32, %arg2: i32, %arg3: memref<1x1x16x512xbf16, #tpu.memory_space<vmem>>, %arg4: memref<1x1x16xf32, #tpu.memory_space<vmem>>, %arg5: memref<1x1x4x512xbf16, #tpu.memory_space<vmem>>, %arg6: memref<1x1x2x16xbf16, #tpu.memory_space<vmem>>) attributes {dimension_semantics = [#tpu.dimension_semantics<parallel>, #tpu.dimension_semantics<parallel>, #tpu.dimension_semantics<parallel>], iteration_bounds = array<i64: 4, 2, 1>, scalar_prefetch = 0 : i64, scratch_operands = 0 : i64, tpu.core_type = #tpu.core_type<tc>, window_params = [{transform_indices = @transform_0, window_bounds = array<i64: 1, 1, 16, 512>}, {transform_indices = @transform_1, window_bounds = array<i64: 1, 1, 16>}, {transform_indices = @transform_2, window_bounds = array<i64: 1, 1, 4, 512>}, {transform_indices = @transform_3, window_bounds = array<i64: 1, 1, 2, 16>}]} {
    %c0 = arith.constant 0 : index
    %c0_0 = arith.constant 0 : index
    %c0_1 = arith.constant 0 : index
    %c0_2 = arith.constant 0 : index
    %0 = vector.load %arg3[%c0, %c0_0, %c0_1, %c0_2] : memref<1x1x16x512xbf16, #tpu.memory_space<vmem>>, vector<1x1x16x512xbf16>
    %1 = vector.shape_cast %0 : vector<1x1x16x512xbf16> to vector<16x512xbf16>
    %c0_3 = arith.constant 0 : index
    %c0_4 = arith.constant 0 : index
    %c0_5 = arith.constant 0 : index
    %2 = vector.load %arg4[%c0_3, %c0_4, %c0_5] : memref<1x1x16xf32, #tpu.memory_space<vmem>>, vector<1x1x16xf32>
    %3 = vector.shape_cast %2 : vector<1x1x16xf32> to vector<1x16xf32>
    %c0_6 = arith.constant 0 : index
    %c0_7 = arith.constant 0 : index
    %c0_8 = arith.constant 0 : index
    %c0_9 = arith.constant 0 : index
    %4 = vector.load %arg5[%c0_6, %c0_7, %c0_8, %c0_9] : memref<1x1x4x512xbf16, #tpu.memory_space<vmem>>, vector<1x1x4x512xbf16>
    %5 = vector.shape_cast %4 : vector<1x1x4x512xbf16> to vector<4x512xbf16>
    %cst = arith.constant dense<0.000000e+00> : vector<4x16xf32>
    %6 = tpu.matmul %5, %1, %cst {dimension_numbers = #tpu.dot_dimension_numbers<[1], [1], [0], [0], [0, 0, 1, 0], [], []>} : vector<4x512xbf16>, vector<16x512xbf16>, vector<4x16xf32> -> vector<4x16xf32>
    %7 = vector.broadcast %3 : vector<1x16xf32> to vector<4x16xf32>
    %8 = arith.mulf %6, %7 : vector<4x16xf32>
    %9 = vector.extract_strided_slice %8 {offsets = [0, 0], sizes = [1, 16], strides = [1, 1]} : vector<4x16xf32> to vector<1x16xf32>
    %10 = vector.extract_strided_slice %8 {offsets = [2, 0], sizes = [1, 16], strides = [1, 1]} : vector<4x16xf32> to vector<1x16xf32>
    %11 = arith.mulf %9, %10 : vector<1x16xf32>
    %12 = vector.extract_strided_slice %8 {offsets = [1, 0], sizes = [1, 16], strides = [1, 1]} : vector<4x16xf32> to vector<1x16xf32>
    %13 = vector.extract_strided_slice %8 {offsets = [3, 0], sizes = [1, 16], strides = [1, 1]} : vector<4x16xf32> to vector<1x16xf32>
    %14 = arith.mulf %12, %13 : vector<1x16xf32>
    %15 = arith.addf %11, %14 : vector<1x16xf32>
    %cst_10 = arith.constant 0.000000e+00 : f32
    %16 = vector.broadcast %cst_10 : f32 to vector<1x16xf32>
    %17 = arith.maximumf %15, %16 : vector<1x16xf32>
    %18 = math.sqrt %17 : vector<1x16xf32>
    %cst_11 = arith.constant 9.99999974E-6 : f32
    %19 = vector.broadcast %cst_11 : f32 to vector<1x16xf32>
    %20 = arith.addf %18, %19 : vector<1x16xf32>
    %21 = tpu.reciprocal %20 {approx = true} : vector<1x16xf32> -> vector<1x16xf32>
    %22 = vector.extract_strided_slice %8 {offsets = [0, 0], sizes = [2, 16], strides = [1, 1]} : vector<4x16xf32> to vector<2x16xf32>
    %23 = vector.broadcast %21 : vector<1x16xf32> to vector<2x16xf32>
    %24 = arith.mulf %22, %23 : vector<2x16xf32>
    %25 = arith.truncf %24 : vector<2x16xf32> to vector<2x16xbf16>
    %c0_12 = arith.constant 0 : index
    %c0_13 = arith.constant 0 : index
    %c0_14 = arith.constant 0 : index
    %c0_15 = arith.constant 0 : index
    %26 = vector.load %arg6[%c0_12, %c0_13, %c0_14, %c0_15] : memref<1x1x2x16xbf16, #tpu.memory_space<vmem>>, vector<1x1x2x16xbf16>
    %27 = vector.shape_cast %26 : vector<1x1x2x16xbf16> to vector<2x16xbf16>
    %28 = vector.shape_cast %25 : vector<2x16xbf16> to vector<1x1x2x16xbf16>
    tpu.vector_store %arg6[%c0_12, %c0_13, %c0_14, %c0_15], %28 {strides = array<i32>} : memref<1x1x2x16xbf16, #tpu.memory_space<vmem>>, vector<1x1x2x16xbf16>,
    return
  }
  func.func @transform_0(%arg0: i32, %arg1: i32, %arg2: i32) -> (i32, i32, i32, i32) {
    %c0_i32 = arith.constant 0 : i32
    %c0_i32_0 = arith.constant 0 : i32
    return %arg0, %arg1, %arg2, %c0_i32 : i32, i32, i32, i32
  }
  func.func @transform_1(%arg0: i32, %arg1: i32, %arg2: i32) -> (i32, i32, i32) {
    %c0_i32 = arith.constant 0 : i32
    %c0_i32_0 = arith.constant 0 : i32
    return %arg1, %c0_i32, %arg2 : i32, i32, i32
  }
  func.func @transform_2(%arg0: i32, %arg1: i32, %arg2: i32) -> (i32, i32, i32, i32) {
    %c0_i32 = arith.constant 0 : i32
    %c0_i32_0 = arith.constant 0 : i32
    %c0_i32_1 = arith.constant 0 : i32
    return %arg0, %arg1, %c0_i32, %c0_i32_0 : i32, i32, i32, i32
  }
  func.func @transform_3(%arg0: i32, %arg1: i32, %arg2: i32) -> (i32, i32, i32, i32) {
    %c0_i32 = arith.constant 0 : i32
    %c0_i32_0 = arith.constant 0 : i32
    return %arg0, %arg1, %c0_i32, %arg2 : i32, i32, i32, i32
  }
}

module attributes {stable_mosaic.version = 11 : i64} {
  func.func @_corr_kernel(%arg0: i32, %arg1: i32, %arg2: i32, %arg3: memref<1x1x16x512xbf16, #tpu.memory_space<vmem>>, %arg4: memref<1x1x4x512xbf16, #tpu.memory_space<vmem>>, %arg5: memref<1x1x2x16xbf16, #tpu.memory_space<vmem>>, %arg6: memref<1x1x16x16xbf16, #tpu.memory_space<vmem>>) attributes {dimension_semantics = [#tpu.dimension_semantics<parallel>, #tpu.dimension_semantics<parallel>, #tpu.dimension_semantics<parallel>], iteration_bounds = array<i64: 4, 2, 1>, scalar_prefetch = 0 : i64, scratch_operands = 0 : i64, tpu.core_type = #tpu.core_type<tc>, window_params = [{transform_indices = @transform_0, window_bounds = array<i64: 1, 1, 16, 512>}, {transform_indices = @transform_1, window_bounds = array<i64: 1, 1, 4, 512>}, {transform_indices = @transform_2, window_bounds = array<i64: 1, 1, 2, 16>}, {transform_indices = @transform_3, window_bounds = array<i64: 1, 1, 16, 16>}]} {
    %c0 = arith.constant 0 : index
    %c0_0 = arith.constant 0 : index
    %c0_1 = arith.constant 0 : index
    %c0_2 = arith.constant 0 : index
    %0 = vector.load %arg3[%c0, %c0_0, %c0_1, %c0_2] : memref<1x1x16x512xbf16, #tpu.memory_space<vmem>>, vector<1x1x16x512xbf16>
    %1 = vector.shape_cast %0 : vector<1x1x16x512xbf16> to vector<16x512xbf16>
    %c0_3 = arith.constant 0 : index
    %c0_4 = arith.constant 0 : index
    %c0_5 = arith.constant 0 : index
    %c0_6 = arith.constant 0 : index
    %2 = vector.load %arg4[%c0_3, %c0_4, %c0_5, %c0_6] : memref<1x1x4x512xbf16, #tpu.memory_space<vmem>>, vector<1x1x4x512xbf16>
    %3 = vector.shape_cast %2 : vector<1x1x4x512xbf16> to vector<4x512xbf16>
    %c0_7 = arith.constant 0 : index
    %c0_8 = arith.constant 0 : index
    %c0_9 = arith.constant 0 : index
    %c0_10 = arith.constant 0 : index
    %4 = vector.load %arg5[%c0_7, %c0_8, %c0_9, %c0_10] : memref<1x1x2x16xbf16, #tpu.memory_space<vmem>>, vector<1x1x2x16xbf16>
    %5 = vector.shape_cast %4 : vector<1x1x2x16xbf16> to vector<2x16xbf16>
    %cst = arith.constant dense<0.000000e+00> : vector<16x4xf32>
    %6 = tpu.matmul %1, %3, %cst {dimension_numbers = #tpu.dot_dimension_numbers<[1], [1], [0], [0], [0, 0, 1, 0], [], []>} : vector<16x512xbf16>, vector<4x512xbf16>, vector<16x4xf32> -> vector<16x4xf32>
    %7 = vector.extract_strided_slice %6 {offsets = [0, 0], sizes = [16, 1], strides = [1, 1]} : vector<16x4xf32> to vector<16x1xf32>
    %8 = vector.extract_strided_slice %6 {offsets = [0, 2], sizes = [16, 1], strides = [1, 1]} : vector<16x4xf32> to vector<16x1xf32>
    %9 = arith.mulf %7, %8 : vector<16x1xf32>
    %10 = vector.extract_strided_slice %6 {offsets = [0, 1], sizes = [16, 1], strides = [1, 1]} : vector<16x4xf32> to vector<16x1xf32>
    %11 = vector.extract_strided_slice %6 {offsets = [0, 3], sizes = [16, 1], strides = [1, 1]} : vector<16x4xf32> to vector<16x1xf32>
    %12 = arith.mulf %10, %11 : vector<16x1xf32>
    %13 = arith.addf %9, %12 : vector<16x1xf32>
    %cst_11 = arith.constant 0.000000e+00 : f32
    %14 = vector.broadcast %cst_11 : f32 to vector<16x1xf32>
    %15 = arith.maximumf %13, %14 : vector<16x1xf32>
    %16 = math.sqrt %15 : vector<16x1xf32>
    %cst_12 = arith.constant 9.99999974E-6 : f32
    %17 = vector.broadcast %cst_12 : f32 to vector<16x1xf32>
    %18 = arith.addf %16, %17 : vector<16x1xf32>
    %19 = tpu.reciprocal %18 {approx = true} : vector<16x1xf32> -> vector<16x1xf32>
    %20 = vector.extract_strided_slice %6 {offsets = [0, 2], sizes = [16, 2], strides = [1, 1]} : vector<16x4xf32> to vector<16x2xf32>
    %21 = vector.broadcast %19 : vector<16x1xf32> to vector<16x2xf32>
    %22 = arith.mulf %20, %21 : vector<16x2xf32>
    %23 = arith.truncf %22 : vector<16x2xf32> to vector<16x2xbf16>
    %cst_13 = arith.constant dense<0.000000e+00> : vector<16x16xf32>
    %24 = tpu.matmul %23, %5, %cst_13 {dimension_numbers = #tpu.dot_dimension_numbers<[1], [0], [0], [1], [0, 0, 1, 1], [], []>} : vector<16x2xbf16>, vector<2x16xbf16>, vector<16x16xf32> -> vector<16x16xf32>
    %cst_14 = arith.constant 0.000000e+00 : f32
    %25 = vector.broadcast %cst_14 : f32 to vector<16x16xf32>
    %26 = arith.maximumf %24, %25 : vector<16x16xf32>
    %27 = arith.truncf %26 : vector<16x16xf32> to vector<16x16xbf16>
    %c0_15 = arith.constant 0 : index
    %c0_16 = arith.constant 0 : index
    %c0_17 = arith.constant 0 : index
    %c0_18 = arith.constant 0 : index
    %28 = vector.load %arg6[%c0_15, %c0_16, %c0_17, %c0_18] : memref<1x1x16x16xbf16, #tpu.memory_space<vmem>>, vector<1x1x16x16xbf16>
    %29 = vector.shape_cast %28 : vector<1x1x16x16xbf16> to vector<16x16xbf16>
    %30 = vector.shape_cast %27 : vector<16x16xbf16> to vector<1x1x16x16xbf16>
    tpu.vector_store %arg6[%c0_15, %c0_16, %c0_17, %c0_18], %30 {strides = array<i32>} : memref<1x1x16x16xbf16, #tpu.memory_space<vmem>>, vector<1x1x16x16xbf16>,
    return
  }
  func.func @transform_0(%arg0: i32, %arg1: i32, %arg2: i32) -> (i32, i32, i32, i32) {
    %c0_i32 = arith.constant 0 : i32
    %c0_i32_0 = arith.constant 0 : i32
    return %arg0, %arg1, %arg2, %c0_i32 : i32, i32, i32, i32
  }
  func.func @transform_1(%arg0: i32, %arg1: i32, %arg2: i32) -> (i32, i32, i32, i32) {
    %c0_i32 = arith.constant 0 : i32
    %c0_i32_0 = arith.constant 0 : i32
    %c0_i32_1 = arith.constant 0 : i32
    return %arg0, %arg1, %c0_i32, %c0_i32_0 : i32, i32, i32, i32
  }
  func.func @transform_2(%arg0: i32, %arg1: i32, %arg2: i32) -> (i32, i32, i32, i32) {
    %c0_i32 = arith.constant 0 : i32
    %c0_i32_0 = arith.constant 0 : i32
    %c0_i32_1 = arith.constant 0 : i32
    return %arg0, %arg1, %c0_i32, %c0_i32_0 : i32, i32, i32, i32
  }
  func.func @transform_3(%arg0: i32, %arg1: i32, %arg2: i32) -> (i32, i32, i32, i32) {
    %c0_i32 = arith.constant 0 : i32
    %c0_i32_0 = arith.constant 0 : i32
    return %arg0, %arg1, %arg2, %c0_i32 : i32, i32, i32, i32
  }
}

module attributes {stable_mosaic.version = 11 : i64} {
  func.func @_proto_kernel(%arg0: i32, %arg1: i32, %arg2: i32, %arg3: memref<1x1x64x512xbf16, #tpu.memory_space<vmem>>, %arg4: memref<1x1x64xf32, #tpu.memory_space<vmem>>, %arg5: memref<1x1x1x512xf32, #tpu.memory_space<vmem>>, %arg6: memref<1x1x1x512xf32, #tpu.memory_space<vmem>>, %arg7: memref<8x512xf32, #tpu.memory_space<vmem>>, %arg8: memref<1x1xf32, #tpu.memory_space<vmem>>) attributes {dimension_semantics = [#tpu.dimension_semantics<parallel>, #tpu.dimension_semantics<parallel>, #tpu.dimension_semantics<arbitrary>], iteration_bounds = array<i64: 3, 2, 1>, scalar_prefetch = 0 : i64, scratch_operands = 2 : i64, tpu.core_type = #tpu.core_type<tc>, window_params = [{transform_indices = @transform_0, window_bounds = array<i64: 1, 1, 64, 512>}, {transform_indices = @transform_1, window_bounds = array<i64: 1, 1, 64>}, {transform_indices = @transform_2, window_bounds = array<i64: 1, 1, 1, 512>}, {transform_indices = @transform_3, window_bounds = array<i64: 1, 1, 1, 512>}]} {
    %c0_i32 = arith.constant 0 : i32
    %0 = arith.cmpi eq, %arg2, %c0_i32 : i32
    %1 = arith.extui %0 : i1 to i32
    %c0_i32_0 = arith.constant 0 : i32
    %2 = arith.cmpi ne, %1, %c0_i32_0 : i32
    scf.if %2 {
      %cst_20 = arith.constant 0.000000e+00 : f32
      %23 = vector.broadcast %cst_20 : f32 to vector<8x512xf32>
      %c0_21 = arith.constant 0 : index
      %c0_22 = arith.constant 0 : index
      %24 = vector.load %arg7[%c0_21, %c0_22] : memref<8x512xf32, #tpu.memory_space<vmem>>, vector<8x512xf32>
      tpu.vector_store %arg7[%c0_21, %c0_22], %23 {strides = array<i32>} : memref<8x512xf32, #tpu.memory_space<vmem>>, vector<8x512xf32>,
      %cst_23 = arith.constant 0.000000e+00 : f32
      %25 = vector.broadcast %cst_23 : f32 to vector<1x1xf32>
      %c0_24 = arith.constant 0 : index
      %c0_25 = arith.constant 0 : index
      %26 = vector.load %arg8[%c0_24, %c0_25] : memref<1x1xf32, #tpu.memory_space<vmem>>, vector<1x1xf32>
      tpu.vector_store %arg8[%c0_24, %c0_25], %25 {strides = array<i32>} : memref<1x1xf32, #tpu.memory_space<vmem>>, vector<1x1xf32>,
    } else {
    }
    %c0 = arith.constant 0 : index
    %c0_1 = arith.constant 0 : index
    %c0_2 = arith.constant 0 : index
    %c0_3 = arith.constant 0 : index
    %3 = vector.load %arg3[%c0, %c0_1, %c0_2, %c0_3] : memref<1x1x64x512xbf16, #tpu.memory_space<vmem>>, vector<1x1x64x512xbf16>
    %4 = vector.shape_cast %3 : vector<1x1x64x512xbf16> to vector<64x512xbf16>
    %c0_4 = arith.constant 0 : index
    %c0_5 = arith.constant 0 : index
    %c0_6 = arith.constant 0 : index
    %5 = vector.load %arg4[%c0_4, %c0_5, %c0_6] : memref<1x1x64xf32, #tpu.memory_space<vmem>>, vector<1x1x64xf32>
    %6 = vector.shape_cast %5 : vector<1x1x64xf32> to vector<1x64xf32>
    %cst = arith.constant 1.000000e+00 : f32
    %7 = vector.broadcast %cst : f32 to vector<1x64xf32>
    %cst_7 = arith.constant 0.000000e+00 : f32
    %8 = vector.broadcast %cst_7 : f32 to vector<6x64xf32>
    %9 = tpu.concatenate %7, %6, %8 in 0 : vector<1x64xf32>, vector<1x64xf32>, vector<6x64xf32> -> vector<8x64xf32>
    %10 = arith.truncf %9 : vector<8x64xf32> to vector<8x64xbf16>
    %c0_8 = arith.constant 0 : index
    %c0_9 = arith.constant 0 : index
    %11 = vector.load %arg7[%c0_8, %c0_9] : memref<8x512xf32, #tpu.memory_space<vmem>>, vector<8x512xf32>
    %cst_10 = arith.constant dense<0.000000e+00> : vector<8x512xf32>
    %12 = tpu.matmul %10, %4, %cst_10 {dimension_numbers = #tpu.dot_dimension_numbers<[1], [0], [0], [1], [0, 0, 1, 1], [], []>} : vector<8x64xbf16>, vector<64x512xbf16>, vector<8x512xf32> -> vector<8x512xf32>
    %13 = arith.addf %11, %12 : vector<8x512xf32>
    %c0_11 = arith.constant 0 : index
    %c0_12 = arith.constant 0 : index
    %14 = vector.load %arg7[%c0_11, %c0_12] : memref<8x512xf32, #tpu.memory_space<vmem>>, vector<8x512xf32>
    tpu.vector_store %arg7[%c0_11, %c0_12], %13 {strides = array<i32>} : memref<8x512xf32, #tpu.memory_space<vmem>>, vector<8x512xf32>,
    %c0_13 = arith.constant 0 : index
    %c0_14 = arith.constant 0 : index
    %15 = vector.load %arg8[%c0_13, %c0_14] : memref<1x1xf32, #tpu.memory_space<vmem>>, vector<1x1xf32>
    %cst_15 = arith.constant dense<0.000000e+00> : vector<1xf32>
    %16 = vector.multi_reduction <add>, %6, %cst_15 [1] : vector<1x64xf32> to vector<1xf32>
    %17 = vector.shape_cast %16 : vector<1xf32> to vector<1x1xf32>
    %18 = arith.addf %15, %17 : vector<1x1xf32>
    %c0_16 = arith.constant 0 : index
    %c0_17 = arith.constant 0 : index
    %19 = vector.load %arg8[%c0_16, %c0_17] : memref<1x1xf32, #tpu.memory_space<vmem>>, vector<1x1xf32>
    tpu.vector_store %arg8[%c0_16, %c0_17], %18 {strides = array<i32>} : memref<1x1xf32, #tpu.memory_space<vmem>>, vector<1x1xf32>,
    %c0_i32_18 = arith.constant 0 : i32
    %20 = arith.cmpi eq, %arg2, %c0_i32_18 : i32
    %21 = arith.extui %20 : i1 to i32
    %c0_i32_19 = arith.constant 0 : i32
    %22 = arith.cmpi ne, %21, %c0_i32_19 : i32
    scf.if %22 {
      %c0_20 = arith.constant 0 : index
      %c0_21 = arith.constant 0 : index
      %23 = vector.load %arg8[%c0_20, %c0_21] : memref<1x1xf32, #tpu.memory_space<vmem>>, vector<1x1xf32>
      %c0_22 = arith.constant 0 : index
      %c0_23 = arith.constant 0 : index
      %24 = vector.load %arg7[%c0_22, %c0_23] : memref<8x512xf32, #tpu.memory_space<vmem>>, vector<1x512xf32>
      %c1 = arith.constant 1 : index
      %c0_24 = arith.constant 0 : index
      %25 = vector.load %arg7[%c1, %c0_24] : memref<8x512xf32, #tpu.memory_space<vmem>>, vector<1x512xf32>
      %cst_25 = arith.constant 9.99999997E-7 : f32
      %26 = vector.broadcast %cst_25 : f32 to vector<1x1xf32>
      %27 = arith.addf %23, %26 : vector<1x1xf32>
      %28 = vector.broadcast %27 : vector<1x1xf32> to vector<1x512xf32>
      %29 = arith.divf %25, %28 : vector<1x512xf32>
      %c0_26 = arith.constant 0 : index
      %c0_27 = arith.constant 0 : index
      %c0_28 = arith.constant 0 : index
      %c0_29 = arith.constant 0 : index
      %30 = vector.load %arg5[%c0_26, %c0_27, %c0_28, %c0_29] : memref<1x1x1x512xf32, #tpu.memory_space<vmem>>, vector<1x1x1x512xf32>
      %31 = vector.shape_cast %30 : vector<1x1x1x512xf32> to vector<1x512xf32>
      %32 = vector.shape_cast %29 : vector<1x512xf32> to vector<1x1x1x512xf32>
      tpu.vector_store %arg5[%c0_26, %c0_27, %c0_28, %c0_29], %32 {strides = array<i32>} : memref<1x1x1x512xf32, #tpu.memory_space<vmem>>, vector<1x1x1x512xf32>,
      %33 = arith.subf %24, %25 : vector<1x512xf32>
      %cst_30 = arith.constant 6.400000e+01 : f32
      %34 = vector.broadcast %cst_30 : f32 to vector<1x1xf32>
      %35 = arith.subf %34, %23 : vector<1x1xf32>
      %cst_31 = arith.constant 9.99999997E-7 : f32
      %36 = vector.broadcast %cst_31 : f32 to vector<1x1xf32>
      %37 = arith.addf %35, %36 : vector<1x1xf32>
      %38 = vector.broadcast %37 : vector<1x1xf32> to vector<1x512xf32>
      %39 = arith.divf %33, %38 : vector<1x512xf32>
      %c0_32 = arith.constant 0 : index
      %c0_33 = arith.constant 0 : index
      %c0_34 = arith.constant 0 : index
      %c0_35 = arith.constant 0 : index
      %40 = vector.load %arg6[%c0_32, %c0_33, %c0_34, %c0_35] : memref<1x1x1x512xf32, #tpu.memory_space<vmem>>, vector<1x1x1x512xf32>
      %41 = vector.shape_cast %40 : vector<1x1x1x512xf32> to vector<1x512xf32>
      %42 = vector.shape_cast %39 : vector<1x512xf32> to vector<1x1x1x512xf32>
      tpu.vector_store %arg6[%c0_32, %c0_33, %c0_34, %c0_35], %42 {strides = array<i32>} : memref<1x1x1x512xf32, #tpu.memory_space<vmem>>, vector<1x1x1x512xf32>,
    } else {
    }
    return
  }
  func.func @transform_0(%arg0: i32, %arg1: i32, %arg2: i32) -> (i32, i32, i32, i32) {
    %c0_i32 = arith.constant 0 : i32
    %c0_i32_0 = arith.constant 0 : i32
    return %arg0, %arg1, %arg2, %c0_i32 : i32, i32, i32, i32
  }
  func.func @transform_1(%arg0: i32, %arg1: i32, %arg2: i32) -> (i32, i32, i32) {
    %c0_i32 = arith.constant 0 : i32
    %c0_i32_0 = arith.constant 0 : i32
    return %arg1, %c0_i32, %arg2 : i32, i32, i32
  }
  func.func @transform_2(%arg0: i32, %arg1: i32, %arg2: i32) -> (i32, i32, i32, i32) {
    %c0_i32 = arith.constant 0 : i32
    %c0_i32_0 = arith.constant 0 : i32
    %c0_i32_1 = arith.constant 0 : i32
    return %arg0, %arg1, %c0_i32, %c0_i32_0 : i32, i32, i32, i32
  }
  func.func @transform_3(%arg0: i32, %arg1: i32, %arg2: i32) -> (i32, i32, i32, i32) {
    %c0_i32 = arith.constant 0 : i32
    %c0_i32_0 = arith.constant 0 : i32
    %c0_i32_1 = arith.constant 0 : i32
    return %arg0, %arg1, %c0_i32, %c0_i32_0 : i32, i32, i32, i32
  }
}

module attributes {stable_mosaic.version = 11 : i64} {
  func.func @_support_factor_kernel(%arg0: i32, %arg1: i32, %arg2: i32, %arg3: memref<1x1x64x512xbf16, #tpu.memory_space<vmem>>, %arg4: memref<1x1x64xf32, #tpu.memory_space<vmem>>, %arg5: memref<1x1x4x512xbf16, #tpu.memory_space<vmem>>, %arg6: memref<1x1x2x64xbf16, #tpu.memory_space<vmem>>) attributes {dimension_semantics = [#tpu.dimension_semantics<parallel>, #tpu.dimension_semantics<parallel>, #tpu.dimension_semantics<parallel>], iteration_bounds = array<i64: 3, 2, 1>, scalar_prefetch = 0 : i64, scratch_operands = 0 : i64, tpu.core_type = #tpu.core_type<tc>, window_params = [{transform_indices = @transform_0, window_bounds = array<i64: 1, 1, 64, 512>}, {transform_indices = @transform_1, window_bounds = array<i64: 1, 1, 64>}, {transform_indices = @transform_2, window_bounds = array<i64: 1, 1, 4, 512>}, {transform_indices = @transform_3, window_bounds = array<i64: 1, 1, 2, 64>}]} {
    %c0 = arith.constant 0 : index
    %c0_0 = arith.constant 0 : index
    %c0_1 = arith.constant 0 : index
    %c0_2 = arith.constant 0 : index
    %0 = vector.load %arg3[%c0, %c0_0, %c0_1, %c0_2] : memref<1x1x64x512xbf16, #tpu.memory_space<vmem>>, vector<1x1x64x512xbf16>
    %1 = vector.shape_cast %0 : vector<1x1x64x512xbf16> to vector<64x512xbf16>
    %c0_3 = arith.constant 0 : index
    %c0_4 = arith.constant 0 : index
    %c0_5 = arith.constant 0 : index
    %2 = vector.load %arg4[%c0_3, %c0_4, %c0_5] : memref<1x1x64xf32, #tpu.memory_space<vmem>>, vector<1x1x64xf32>
    %3 = vector.shape_cast %2 : vector<1x1x64xf32> to vector<1x64xf32>
    %c0_6 = arith.constant 0 : index
    %c0_7 = arith.constant 0 : index
    %c0_8 = arith.constant 0 : index
    %c0_9 = arith.constant 0 : index
    %4 = vector.load %arg5[%c0_6, %c0_7, %c0_8, %c0_9] : memref<1x1x4x512xbf16, #tpu.memory_space<vmem>>, vector<1x1x4x512xbf16>
    %5 = vector.shape_cast %4 : vector<1x1x4x512xbf16> to vector<4x512xbf16>
    %cst = arith.constant dense<0.000000e+00> : vector<4x64xf32>
    %6 = tpu.matmul %5, %1, %cst {dimension_numbers = #tpu.dot_dimension_numbers<[1], [1], [0], [0], [0, 0, 1, 0], [], []>} : vector<4x512xbf16>, vector<64x512xbf16>, vector<4x64xf32> -> vector<4x64xf32>
    %7 = vector.broadcast %3 : vector<1x64xf32> to vector<4x64xf32>
    %8 = arith.mulf %6, %7 : vector<4x64xf32>
    %9 = vector.extract_strided_slice %8 {offsets = [0, 0], sizes = [1, 64], strides = [1, 1]} : vector<4x64xf32> to vector<1x64xf32>
    %10 = vector.extract_strided_slice %8 {offsets = [2, 0], sizes = [1, 64], strides = [1, 1]} : vector<4x64xf32> to vector<1x64xf32>
    %11 = arith.mulf %9, %10 : vector<1x64xf32>
    %12 = vector.extract_strided_slice %8 {offsets = [1, 0], sizes = [1, 64], strides = [1, 1]} : vector<4x64xf32> to vector<1x64xf32>
    %13 = vector.extract_strided_slice %8 {offsets = [3, 0], sizes = [1, 64], strides = [1, 1]} : vector<4x64xf32> to vector<1x64xf32>
    %14 = arith.mulf %12, %13 : vector<1x64xf32>
    %15 = arith.addf %11, %14 : vector<1x64xf32>
    %cst_10 = arith.constant 0.000000e+00 : f32
    %16 = vector.broadcast %cst_10 : f32 to vector<1x64xf32>
    %17 = arith.maximumf %15, %16 : vector<1x64xf32>
    %18 = math.sqrt %17 : vector<1x64xf32>
    %cst_11 = arith.constant 9.99999974E-6 : f32
    %19 = vector.broadcast %cst_11 : f32 to vector<1x64xf32>
    %20 = arith.addf %18, %19 : vector<1x64xf32>
    %21 = tpu.reciprocal %20 {approx = true} : vector<1x64xf32> -> vector<1x64xf32>
    %22 = vector.extract_strided_slice %8 {offsets = [0, 0], sizes = [2, 64], strides = [1, 1]} : vector<4x64xf32> to vector<2x64xf32>
    %23 = vector.broadcast %21 : vector<1x64xf32> to vector<2x64xf32>
    %24 = arith.mulf %22, %23 : vector<2x64xf32>
    %25 = arith.truncf %24 : vector<2x64xf32> to vector<2x64xbf16>
    %c0_12 = arith.constant 0 : index
    %c0_13 = arith.constant 0 : index
    %c0_14 = arith.constant 0 : index
    %c0_15 = arith.constant 0 : index
    %26 = vector.load %arg6[%c0_12, %c0_13, %c0_14, %c0_15] : memref<1x1x2x64xbf16, #tpu.memory_space<vmem>>, vector<1x1x2x64xbf16>
    %27 = vector.shape_cast %26 : vector<1x1x2x64xbf16> to vector<2x64xbf16>
    %28 = vector.shape_cast %25 : vector<2x64xbf16> to vector<1x1x2x64xbf16>
    tpu.vector_store %arg6[%c0_12, %c0_13, %c0_14, %c0_15], %28 {strides = array<i32>} : memref<1x1x2x64xbf16, #tpu.memory_space<vmem>>, vector<1x1x2x64xbf16>,
    return
  }
  func.func @transform_0(%arg0: i32, %arg1: i32, %arg2: i32) -> (i32, i32, i32, i32) {
    %c0_i32 = arith.constant 0 : i32
    %c0_i32_0 = arith.constant 0 : i32
    return %arg0, %arg1, %arg2, %c0_i32 : i32, i32, i32, i32
  }
  func.func @transform_1(%arg0: i32, %arg1: i32, %arg2: i32) -> (i32, i32, i32) {
    %c0_i32 = arith.constant 0 : i32
    %c0_i32_0 = arith.constant 0 : i32
    return %arg1, %c0_i32, %arg2 : i32, i32, i32
  }
  func.func @transform_2(%arg0: i32, %arg1: i32, %arg2: i32) -> (i32, i32, i32, i32) {
    %c0_i32 = arith.constant 0 : i32
    %c0_i32_0 = arith.constant 0 : i32
    %c0_i32_1 = arith.constant 0 : i32
    return %arg0, %arg1, %c0_i32, %c0_i32_0 : i32, i32, i32, i32
  }
  func.func @transform_3(%arg0: i32, %arg1: i32, %arg2: i32) -> (i32, i32, i32, i32) {
    %c0_i32 = arith.constant 0 : i32
    %c0_i32_0 = arith.constant 0 : i32
    return %arg0, %arg1, %c0_i32, %arg2 : i32, i32, i32, i32
  }
}

module attributes {stable_mosaic.version = 11 : i64} {
  func.func @_corr_kernel(%arg0: i32, %arg1: i32, %arg2: i32, %arg3: memref<1x1x64x512xbf16, #tpu.memory_space<vmem>>, %arg4: memref<1x1x4x512xbf16, #tpu.memory_space<vmem>>, %arg5: memref<1x1x2x64xbf16, #tpu.memory_space<vmem>>, %arg6: memref<1x1x64x64xbf16, #tpu.memory_space<vmem>>) attributes {dimension_semantics = [#tpu.dimension_semantics<parallel>, #tpu.dimension_semantics<parallel>, #tpu.dimension_semantics<parallel>], iteration_bounds = array<i64: 3, 2, 1>, scalar_prefetch = 0 : i64, scratch_operands = 0 : i64, tpu.core_type = #tpu.core_type<tc>, window_params = [{transform_indices = @transform_0, window_bounds = array<i64: 1, 1, 64, 512>}, {transform_indices = @transform_1, window_bounds = array<i64: 1, 1, 4, 512>}, {transform_indices = @transform_2, window_bounds = array<i64: 1, 1, 2, 64>}, {transform_indices = @transform_3, window_bounds = array<i64: 1, 1, 64, 64>}]} {
    %c0 = arith.constant 0 : index
    %c0_0 = arith.constant 0 : index
    %c0_1 = arith.constant 0 : index
    %c0_2 = arith.constant 0 : index
    %0 = vector.load %arg3[%c0, %c0_0, %c0_1, %c0_2] : memref<1x1x64x512xbf16, #tpu.memory_space<vmem>>, vector<1x1x64x512xbf16>
    %1 = vector.shape_cast %0 : vector<1x1x64x512xbf16> to vector<64x512xbf16>
    %c0_3 = arith.constant 0 : index
    %c0_4 = arith.constant 0 : index
    %c0_5 = arith.constant 0 : index
    %c0_6 = arith.constant 0 : index
    %2 = vector.load %arg4[%c0_3, %c0_4, %c0_5, %c0_6] : memref<1x1x4x512xbf16, #tpu.memory_space<vmem>>, vector<1x1x4x512xbf16>
    %3 = vector.shape_cast %2 : vector<1x1x4x512xbf16> to vector<4x512xbf16>
    %c0_7 = arith.constant 0 : index
    %c0_8 = arith.constant 0 : index
    %c0_9 = arith.constant 0 : index
    %c0_10 = arith.constant 0 : index
    %4 = vector.load %arg5[%c0_7, %c0_8, %c0_9, %c0_10] : memref<1x1x2x64xbf16, #tpu.memory_space<vmem>>, vector<1x1x2x64xbf16>
    %5 = vector.shape_cast %4 : vector<1x1x2x64xbf16> to vector<2x64xbf16>
    %cst = arith.constant dense<0.000000e+00> : vector<64x4xf32>
    %6 = tpu.matmul %1, %3, %cst {dimension_numbers = #tpu.dot_dimension_numbers<[1], [1], [0], [0], [0, 0, 1, 0], [], []>} : vector<64x512xbf16>, vector<4x512xbf16>, vector<64x4xf32> -> vector<64x4xf32>
    %7 = vector.extract_strided_slice %6 {offsets = [0, 0], sizes = [64, 1], strides = [1, 1]} : vector<64x4xf32> to vector<64x1xf32>
    %8 = vector.extract_strided_slice %6 {offsets = [0, 2], sizes = [64, 1], strides = [1, 1]} : vector<64x4xf32> to vector<64x1xf32>
    %9 = arith.mulf %7, %8 : vector<64x1xf32>
    %10 = vector.extract_strided_slice %6 {offsets = [0, 1], sizes = [64, 1], strides = [1, 1]} : vector<64x4xf32> to vector<64x1xf32>
    %11 = vector.extract_strided_slice %6 {offsets = [0, 3], sizes = [64, 1], strides = [1, 1]} : vector<64x4xf32> to vector<64x1xf32>
    %12 = arith.mulf %10, %11 : vector<64x1xf32>
    %13 = arith.addf %9, %12 : vector<64x1xf32>
    %cst_11 = arith.constant 0.000000e+00 : f32
    %14 = vector.broadcast %cst_11 : f32 to vector<64x1xf32>
    %15 = arith.maximumf %13, %14 : vector<64x1xf32>
    %16 = math.sqrt %15 : vector<64x1xf32>
    %cst_12 = arith.constant 9.99999974E-6 : f32
    %17 = vector.broadcast %cst_12 : f32 to vector<64x1xf32>
    %18 = arith.addf %16, %17 : vector<64x1xf32>
    %19 = tpu.reciprocal %18 {approx = true} : vector<64x1xf32> -> vector<64x1xf32>
    %20 = vector.extract_strided_slice %6 {offsets = [0, 2], sizes = [64, 2], strides = [1, 1]} : vector<64x4xf32> to vector<64x2xf32>
    %21 = vector.broadcast %19 : vector<64x1xf32> to vector<64x2xf32>
    %22 = arith.mulf %20, %21 : vector<64x2xf32>
    %23 = arith.truncf %22 : vector<64x2xf32> to vector<64x2xbf16>
    %cst_13 = arith.constant dense<0.000000e+00> : vector<64x64xf32>
    %24 = tpu.matmul %23, %5, %cst_13 {dimension_numbers = #tpu.dot_dimension_numbers<[1], [0], [0], [1], [0, 0, 1, 1], [], []>} : vector<64x2xbf16>, vector<2x64xbf16>, vector<64x64xf32> -> vector<64x64xf32>
    %cst_14 = arith.constant 0.000000e+00 : f32
    %25 = vector.broadcast %cst_14 : f32 to vector<64x64xf32>
    %26 = arith.maximumf %24, %25 : vector<64x64xf32>
    %27 = arith.truncf %26 : vector<64x64xf32> to vector<64x64xbf16>
    %c0_15 = arith.constant 0 : index
    %c0_16 = arith.constant 0 : index
    %c0_17 = arith.constant 0 : index
    %c0_18 = arith.constant 0 : index
    %28 = vector.load %arg6[%c0_15, %c0_16, %c0_17, %c0_18] : memref<1x1x64x64xbf16, #tpu.memory_space<vmem>>, vector<1x1x64x64xbf16>
    %29 = vector.shape_cast %28 : vector<1x1x64x64xbf16> to vector<64x64xbf16>
    %30 = vector.shape_cast %27 : vector<64x64xbf16> to vector<1x1x64x64xbf16>
    tpu.vector_store %arg6[%c0_15, %c0_16, %c0_17, %c0_18], %30 {strides = array<i32>} : memref<1x1x64x64xbf16, #tpu.memory_space<vmem>>, vector<1x1x64x64xbf16>,
    return
  }
  func.func @transform_0(%arg0: i32, %arg1: i32, %arg2: i32) -> (i32, i32, i32, i32) {
    %c0_i32 = arith.constant 0 : i32
    %c0_i32_0 = arith.constant 0 : i32
    return %arg0, %arg1, %arg2, %c0_i32 : i32, i32, i32, i32
  }
  func.func @transform_1(%arg0: i32, %arg1: i32, %arg2: i32) -> (i32, i32, i32, i32) {
    %c0_i32 = arith.constant 0 : i32
    %c0_i32_0 = arith.constant 0 : i32
    %c0_i32_1 = arith.constant 0 : i32
    return %arg0, %arg1, %c0_i32, %c0_i32_0 : i32, i32, i32, i32
  }
  func.func @transform_2(%arg0: i32, %arg1: i32, %arg2: i32) -> (i32, i32, i32, i32) {
    %c0_i32 = arith.constant 0 : i32
    %c0_i32_0 = arith.constant 0 : i32
    %c0_i32_1 = arith.constant 0 : i32
    return %arg0, %arg1, %c0_i32, %c0_i32_0 : i32, i32, i32, i32
  }
  func.func @transform_3(%arg0: i32, %arg1: i32, %arg2: i32) -> (i32, i32, i32, i32) {
    %c0_i32 = arith.constant 0 : i32
    %c0_i32_0 = arith.constant 0 : i32
    return %arg0, %arg1, %arg2, %c0_i32 : i32, i32, i32, i32
  }
}

</mosaic_0001>

<llo_original>
// kernel: patnet_forward.9
$region0: #{patnet_forward.9}
  #allocation0 [shape = 'u32[]', space=smem, size = 0x4, offset = 0x4, fixed_abs, tag = 'smem constant byte address 0x4 - core index']
  #allocation1 [shape = 'u32[144,128]{1,0:T(1,128)}', space=vmem, size = 0x12000, scoped, tag = 'internal scratch']
  #allocation2 [shape = 'f32[8,512]{1,0:T(8,128)}', space=vmem, size = 0x4000, scoped, tag = 'scratch operand']
  #allocation3 [shape = 'f32[1,1]{1,0:T(1,128)}', space=vmem, size = 0x200, scoped, tag = 'scratch operand']
  %s0 = inlined_call_operand.vmem [shape: bf16[4,2,16,512], index: 0, kind: input, shape index: {}]
  %s1 = inlined_call_operand.vmem [shape: f32[2,1,16], index: 1, kind: input, shape index: {}]
  %s2 = inlined_call_operand.vmem [shape: f32[4,2,1,512], index: 2, kind: output, shape index: {0}]
  %s3 = inlined_call_operand.vmem [shape: f32[4,2,1,512], index: 3, kind: output, shape index: {1}]
  %4 = xla_tuple %s2, %s3
  %s5 = sld [smem:[#allocation0]]
  $region57: #{patnet_forward.9} parent=0
    _
  %s7 = ssub.s32 1, %s5
  %s8 = scalar_select 0, %s7, %s5
  loop: start=0, step=1, limit=10
  $region2: #{patnet_forward.9} parent=0 // loop_pre_header
    _
  $region3: #{patnet_forward.9} parent=0 // loop_header
    %s10 = sphi 0, %s14
    %p11 = scmp.ge.s32.totalorder %s10, 10
    %s17 = sphi 0, %s36
    %s18 = sphi 0, %s32
    %s19 = sphi 0, %s28
    %s20 = sphi 0, %s17
    %s21 = sphi 0, %s18
    %s22 = sphi 0, %s19
    %s23 = sphi 0, %s20
    %s24 = sphi 0, %s21
    %s25 = sphi 0, %s22
    %s43 = sphi 0, %s45
    %s46 = sphi 0, %s43
    %s47 = sphi 0, %s46
    %s63 = sphi 0, %s47
    %s71 = sphi 0, %s73
    %s74 = sphi 0, %s71
    %s75 = sphi 0, %s74
    %s91 = sphi 0, %s75
    %s99 = sphi 0, %s101
    %s102 = sphi 0, %s99
    %s103 = sphi 0, %s102
    %s119 = sphi 0, %s103
    %s127 = sphi 0, %s129
    %s130 = sphi 0, %s127
    %s131 = sphi 0, %s130
    %s147 = sphi 0, %s131
  $region4: #{patnet_forward.9} parent=0 // loop_header_branch
    %13 = sbr.rel (%p11) target = $region8
  $region5: #{patnet_forward.9} parent=0 // loop_body
    %s15 = ssub.s32 %s10, 1
    %s16 = ssub.s32 %s10, 2
    %s26 = sadd.s32 1, %s19
    %p27 = scmp.ge.s32.totalorder %s26, 1
    %s28 = scalar_select %p27, 0, %s26
    %s29 = sadd.s32 1, %s18
    %s30 = scalar_select %p27, %s29, %s18
    %p31 = scmp.ge.s32.totalorder %s30, 2
    %s32 = scalar_select %p31, 0, %s30
    %s33 = sadd.s32 1, %s17
    %s34 = scalar_select %p31, %s33, %s17
    %p35 = scmp.ge.s32.totalorder %s34, 4
    %s36 = scalar_select %p35, 0, %s34
    %s37 = ssub.s32 %s17, %s36
    %s38 = ssub.s32 %s18, %s32
    %s39 = sor.u32 %s37, %s38
    %s40 = ssub.s32 %s19, %s28
    %s41 = sor.u32 %s39, %s40
    %p42 = scmp.eq.s32.totalorder %s41, 0
    %s44 = sadd.s32 %s43, 1
    %s45 = scalar_select %p42, %s43, %s44
    %p48 = pneg %p42
    %p49 = scmp.eq.s32.totalorder %s10, 7
    %p50 = por %p48, %p49
    %p51 = scmp.ne.s32.totalorder %s43, %s46
    %p52 = scmp.eq.s32.totalorder %s10, 0
    %p53 = por %p51, %p52
    %p54 = scmp.ne.s32.totalorder %s43, %s46
    %p55 = scmp.eq.s32.totalorder %s15, 7
    %p56 = por %p54, %p55
    %p57 = scmp.ne.s32.totalorder %s46, %s47
    %p58 = scmp.eq.s32.totalorder %s15, 0
    %p59 = por %p57, %p58
    %p60 = scmp.ne.s32.totalorder %s46, %s47
    %p61 = scmp.eq.s32.totalorder %s16, 7
    %p62 = por %p60, %p61
    %p64 = scmp.ne.s32.totalorder %s47, %s63
    %p65 = scmp.eq.s32.totalorder %s16, 0
    %p66 = por %p64, %p65
    %s67 = ssub.s32 %s18, %s32
    %s68 = ssub.s32 %s19, %s28
    %s69 = sor.u32 %s67, %s68
    %p70 = scmp.eq.s32.totalorder %s69, 0
    %s72 = sadd.s32 %s71, 1
    %s73 = scalar_select %p70, %s71, %s72
    %p76 = pneg %p70
    %p77 = scmp.eq.s32.totalorder %s10, 7
    %p78 = por %p76, %p77
    %p79 = scmp.ne.s32.totalorder %s71, %s74
    %p80 = scmp.eq.s32.totalorder %s10, 0
    %p81 = por %p79, %p80
    %p82 = scmp.ne.s32.totalorder %s71, %s74
    %p83 = scmp.eq.s32.totalorder %s15, 7
    %p84 = por %p82, %p83
    %p85 = scmp.ne.s32.totalorder %s74, %s75
    %p86 = scmp.eq.s32.totalorder %s15, 0
    %p87 = por %p85, %p86
    %p88 = scmp.ne.s32.totalorder %s74, %s75
    %p89 = scmp.eq.s32.totalorder %s16, 7
    %p90 = por %p88, %p89
    %p92 = scmp.ne.s32.totalorder %s75, %s91
    %p93 = scmp.eq.s32.totalorder %s16, 0
    %p94 = por %p92, %p93
    %s95 = ssub.s32 %s17, %s36
    %s96 = ssub.s32 %s18, %s32
    %s97 = sor.u32 %s95, %s96
    %p98 = scmp.eq.s32.totalorder %s97, 0
    %s100 = sadd.s32 %s99, 1
    %s101 = scalar_select %p98, %s99, %s100
    %p104 = pneg %p98
    %p105 = scmp.eq.s32.totalorder %s10, 7
    %p106 = por %p104, %p105
    %p107 = scmp.ne.s32.totalorder %s99, %s102
    %p108 = scmp.eq.s32.totalorder %s10, 0
    %p109 = por %p107, %p108
    %p110 = scmp.ne.s32.totalorder %s99, %s102
    %p111 = scmp.eq.s32.totalorder %s15, 7
    %p112 = por %p110, %p111
    %p113 = scmp.ne.s32.totalorder %s102, %s103
    %p114 = scmp.eq.s32.totalorder %s15, 0
    %p115 = por %p113, %p114
    %p116 = scmp.ne.s32.totalorder %s102, %s103
    %p117 = scmp.eq.s32.totalorder %s16, 7
    %p118 = por %p116, %p117
    %p120 = scmp.ne.s32.totalorder %s103, %s119
    %p121 = scmp.eq.s32.totalorder %s16, 0
    %p122 = por %p120, %p121
    %s123 = ssub.s32 %s17, %s36
    %s124 = ssub.s32 %s18, %s32
    %s125 = sor.u32 %s123, %s124
    %p126 = scmp.eq.s32.totalorder %s125, 0
    %s128 = sadd.s32 %s127, 1
    %s129 = scalar_select %p126, %s127, %s128
    %p132 = pneg %p126
    %p133 = scmp.eq.s32.totalorder %s10, 7
    %p134 = por %p132, %p133
    %p135 = scmp.ne.s32.totalorder %s127, %s130
    %p136 = scmp.eq.s32.totalorder %s10, 0
    %p137 = por %p135, %p136
    %p138 = scmp.ne.s32.totalorder %s127, %s130
    %p139 = scmp.eq.s32.totalorder %s15, 7
    %p140 = por %p138, %p139
    %p141 = scmp.ne.s32.totalorder %s130, %s131
    %p142 = scmp.eq.s32.totalorder %s15, 0
    %p143 = por %p141, %p142
    %p144 = scmp.ne.s32.totalorder %s130, %s131
    %p145 = scmp.eq.s32.totalorder %s16, 7
    %p146 = por %p144, %p145
    %p148 = scmp.ne.s32.totalorder %s131, %s147
    %p149 = scmp.eq.s32.totalorder %s16, 0
    %p150 = por %p148, %p149
    %p151 = scmp.le.s32.totalorder 1, %s10
    %p152 = scmp.lt.s32.totalorder %s10, 9
    %p153 = pnand %p151, %p152
    %p154 = pneg %p153
    // Predicated region
    $region9: #{patnet_forward.9} parent=5 // pred_check
      _
    $region10: #{patnet_forward.9} parent=5 // pred_check_branch
      %156 = sbr.rel (%p153) target = $region12
    $region11: #{patnet_forward.9} parent=5 // pred_region
      %s157 = ssub.s32 %s10, 1
    $region12: #{patnet_forward.9} parent=5 // pred_fallthru
      _
    %p158 = scmp.lt.s32.totalorder %s10, 8
    // Predicated region
    $region13: #{patnet_forward.9} parent=5 // pred_check
      %p159 = pneg %p158
    $region14: #{patnet_forward.9} parent=5 // pred_check_branch
      %161 = sbr.rel (%p159) target = $region16
    $region15: #{patnet_forward.9} parent=5 // pred_region
      // Predicated region
      $region17: #{patnet_forward.9} parent=15 // pred_check
        %p162 = pneg %p53
      $region18: #{patnet_forward.9} parent=15 // pred_check_branch
        %164 = sbr.rel (%p162) target = $region20
      $region19: #{patnet_forward.9} parent=15 // pred_region
        %s165 = smul.u32 2, %s19
        %p166 = scmp.lt.s32.totalorder %s17, 3
        %s167 = scalar_select %p166, %s17, 3
        %p168 = scmp.lt.s32.totalorder %s18, 1
        %s169 = scalar_select %p168, %s18, 1
        %p170 = scmp.lt.s32.totalorder %s165, 1
        %s171 = scalar_select %p170, %s165, 1
        %s172 = smul.addr %s171, 4
        %s173 = smul.addr %s169, 8
        %s174 = sadd.s32 %s172, %s173
        %s175 = smul.addr %s167, 16
        %s176 = sadd.s32 %s174, %s175
        %s177 = smul.addr %s176, 4
        %s178 = scalar_lea.vmem %s0, %s177
        %s179 = smul.u32 2, %s19
      $region20: #{patnet_forward.9} parent=15 // pred_fallthru
        _
      // Predicated region
      $region21: #{patnet_forward.9} parent=15 // pred_check
        %p180 = pneg %p81
      $region22: #{patnet_forward.9} parent=15 // pred_check_branch
        %182 = sbr.rel (%p180) target = $region24
      $region23: #{patnet_forward.9} parent=15 // pred_region
        %p183 = scmp.lt.s32.totalorder %s18, 1
        %s184 = scalar_select %p183, %s18, 1
        %p185 = scmp.lt.s32.totalorder %s19, 0
        %s186 = scalar_select %p185, %s19, 0
        %s187 = sadd.s32 %s186, %s184
        %s188 = scalar_lea.vmem %s1, %s187
      $region24: #{patnet_forward.9} parent=15 // pred_fallthru
        _
    $region16: #{patnet_forward.9} parent=5 // pred_fallthru
      _
    %p189 = scmp.le.s32.totalorder 1, %s10
    %p190 = scmp.lt.s32.totalorder %s10, 9
    %p191 = pnand %p189, %p190
    %p192 = pneg %p191
    // Predicated region
    $region25: #{patnet_forward.9} parent=5 // pred_check
      _
    $region26: #{patnet_forward.9} parent=5 // pred_check_branch
      %194 = sbr.rel (%p191) target = $region28
    $region27: #{patnet_forward.9} parent=5 // pred_region
      %s195 = ssub.s32 %s10, 1
      %s196 = smul.u32 2, %s22
      %p197 = scmp.lt.s32.totalorder %s20, 3
      %s198 = scalar_select %p197, %s20, 3
      %p199 = scmp.lt.s32.totalorder %s21, 1
      %s200 = scalar_select %p199, %s21, 1
      %p201 = scmp.lt.s32.totalorder %s196, 1
      %s202 = scalar_select %p201, %s196, 1
      %s203 = smul.addr %s202, 4
      %s204 = smul.addr %s200, 8
      %s205 = sadd.s32 %s203, %s204
      %s206 = smul.addr %s198, 16
      %s207 = sadd.s32 %s205, %s206
      %s208 = smul.addr %s207, 4
      %s209 = scalar_lea.vmem %s0, %s208
      %p210 = pneg %p59
      %p211 = pneg %p56
      %p212 = scmp.lt.s32.totalorder %s21, 1
      %s213 = scalar_select %p212, %s21, 1
      %p214 = scmp.lt.s32.totalorder %s22, 0
      %s215 = scalar_select %p214, %s22, 0
      %s216 = sadd.s32 %s215, %s213
      %s217 = scalar_lea.vmem %s1, %s216
      %p218 = pneg %p87
      %p219 = pneg %p84
      %p220 = pneg %p115
      %p221 = pneg %p112
      %p222 = scmp.lt.s32.totalorder %s20, 3
      %s223 = scalar_select %p222, %s20, 3
      %p224 = scmp.lt.s32.totalorder %s21, 1
      %s225 = scalar_select %p224, %s21, 1
      %s226 = smul.addr %s225, 4
      %s227 = smul.addr %s223, 8
      %s228 = sadd.s32 %s226, %s227
      %s229 = scalar_lea.vmem %s2, %s228
      %p230 = pneg %p143
      %p231 = pneg %p140
      %p232 = scmp.lt.s32.totalorder %s20, 3
      %s233 = scalar_select %p232, %s20, 3
      %p234 = scmp.lt.s32.totalorder %s21, 1
      %s235 = scalar_select %p234, %s21, 1
      %s236 = smul.addr %s235, 4
      %s237 = smul.addr %s233, 8
      %s238 = sadd.s32 %s236, %s237
      %s239 = scalar_lea.vmem %s3, %s238
      %s240 = smul.u32 2, %s22
      %p241 = scmp.lt.s32.totalorder %s20, 3
      %s242 = scalar_select %p241, %s20, 3
      %p243 = scmp.lt.s32.totalorder %s21, 1
      %s244 = scalar_select %p243, %s21, 1
      %p245 = scmp.lt.s32.totalorder %s240, 1
      %s246 = scalar_select %p245, %s240, 1
      %s247 = smul.addr %s246, 4
      %s248 = smul.addr %s244, 8
      %s249 = sadd.s32 %s247, %s248
      %s250 = smul.addr %s242, 16
      %s251 = sadd.s32 %s249, %s250
      %s252 = smul.addr %s251, 4
      %s253 = scalar_lea.vmem %s0, %s252
      %s254 = smul.u32 2, %s22
      %p255 = scmp.lt.s32.totalorder %s21, 1
      %s256 = scalar_select %p255, %s21, 1
      %p257 = scmp.lt.s32.totalorder %s22, 0
      %s258 = scalar_select %p257, %s22, 0
      %s259 = sadd.s32 %s258, %s256
      %s260 = scalar_lea.vmem %s1, %s259
      %p261 = scmp.lt.s32.totalorder %s20, 3
      %s262 = scalar_select %p261, %s20, 3
      %p263 = scmp.lt.s32.totalorder %s21, 1
      %s264 = scalar_select %p263, %s21, 1
      %s265 = smul.addr %s264, 4
      %s266 = smul.addr %s262, 8
      %s267 = sadd.s32 %s265, %s266
      %s268 = scalar_lea.vmem %s2, %s267
      %p269 = scmp.lt.s32.totalorder %s20, 3
      %s270 = scalar_select %p269, %s20, 3
      %p271 = scmp.lt.s32.totalorder %s21, 1
      %s272 = scalar_select %p271, %s21, 1
      %s273 = smul.addr %s272, 4
      %s274 = smul.addr %s270, 8
      %s275 = sadd.s32 %s273, %s274
      %s276 = scalar_lea.vmem %s3, %s275
      %p278 = scmp.eq.s32.totalorder %s22, 0
      // Predicated region
      $region29: #{patnet_forward.9} parent=27 // pred_check
        %p279 = pneg %p278
      $region30: #{patnet_forward.9} parent=27 // pred_check_branch
        %281 = sbr.rel (%p279) target = $region32
      $region31: #{patnet_forward.9} parent=27 // pred_region
        %282 = vst [vmem:[#allocation2] sm:$0xff] 0.0
        %283 = vst [vmem:[#allocation2 + $0x8] sm:$0xff] 0.0
        %284 = vst [vmem:[#allocation2 + $0x10] sm:$0xff] 0.0
        %285 = vst [vmem:[#allocation2 + $0x18] sm:$0xff] 0.0
        %vm286 = vcmask 0
        %287 = vst.msk [vmem:[#allocation3] sm:$0x1] %vm286, 0.0
      $region32: #{patnet_forward.9} parent=27 // pred_fallthru
        _
      %v288 = vld [vmem:[%s253] sm:$0xff]
      %v289 = vld [vmem:[%s253 + $0x8] sm:$0xff]
      %v290 = vld [vmem:[%s253 + $0x10] sm:$0xff]
      %v291 = vld [vmem:[%s253 + $0x18] sm:$0xff]
      %v292 = vld [vmem:[%s260] sm:$0x1]
      %v294 = vlaneseq
      %v295 = vshrl.u32 %v294, 7
      %v296 = vsub.s32 0, %v295
      %v297 = vrot.slane %v292, %v296
      %vm299 = vcmask 1040384
      %v300 = vsel %vm299, 1.0, %v297
      %vm301 = vcmask 1041408
      %v302 = vsel %vm301, %v300, 0.0
      %v303 = vpack.c.bf16 %v302, %v302
      %v304 = vld [vmem:[#allocation2] sm:$0xff]
      %v305 = vld [vmem:[#allocation2 + $0x8] sm:$0xff]
      %v306 = vld [vmem:[#allocation2 + $0x10] sm:$0xff]
      %v307 = vld [vmem:[#allocation2 + $0x18] sm:$0xff]
      %v312 = vunpack.c.l.b16 %v288
      %v313 = vunpack.c.h.b16 %v288
      %v314 = vunpack.c.l.b16 %v289
      %v315 = vunpack.c.h.b16 %v289
      %v316 = vunpack.c.l.b16 %v290
      %v317 = vunpack.c.h.b16 %v290
      %v318 = vunpack.c.l.b16 %v291
      %v319 = vunpack.c.h.b16 %v291
      %v320 = vpack.c.b16 %v316, %v312
      %v321 = vpack.c.b16 %v317, %v313
      %v322 = vpack.c.b16 %v318, %v314
      %v323 = vpack.c.b16 %v319, %v315
      %vm328 = vcmask 130048
      %v330 = vsel %vm328, %v303, 0
      %332 = vmatprep.subr.bf16.mxu0 0
      %333 = vmatpush1.bf16.msra.mxu0 0
      %334 = vmatprep.subr.bf16.mxu0 0
      %335 = vmatpush1.bf16.msra.mxu0 0
      %336 = vmatprep.subr.bf16.mxu0 0
      %337 = vmatpush1.bf16.msra.mxu0 0
      %338 = vmatprep.subr.bf16.mxu0 0
      %339 = vmatpush1.bf16.msra.mxu0 0
      %340 = vmatprep.subr.bf16.mxu0 0
      %341 = vmatpush1.bf16.msra.mxu0 0
      %342 = vmatprep.subr.bf16.mxu0 0
      %343 = vmatpush1.bf16.msra.mxu0 0
      %344 = vmatprep.subr.bf16.mxu0 0
      %345 = vmatpush1.bf16.msra.mxu0 0
      %346 = vmatprep.subr.bf16.mxu0 %v321
      %347 = vmatpush1.bf16.msra.mxu0 %v320
      %348 = vmatprep.subr.bf16.mxu0 0
      %349 = vmatpush2.bf16.msra.mxu0 0
      %350 = vmatprep.subr.bf16.mxu0 0
      %351 = vmatpush2.bf16.msra.mxu0 0
      %352 = vmatprep.subr.bf16.mxu0 0
      %353 = vmatpush2.bf16.msra.mxu0 0
      %354 = vmatprep.subr.bf16.mxu0 0
      %355 = vmatpush2.bf16.msra.mxu0 0
      %356 = vmatprep.subr.bf16.mxu0 0
      %357 = vmatpush2.bf16.msra.mxu0 0
      %358 = vmatprep.subr.bf16.mxu0 0
      %359 = vmatpush2.bf16.msra.mxu0 0
      %360 = vmatprep.subr.bf16.mxu0 0
      %361 = vmatpush2.bf16.msra.mxu0 0
      %362 = vmatprep.subr.bf16.mxu0 0
      %363 = vmatpush2.bf16.msra.mxu0 0
      %364 = vmatprep.mubr.bf16.mxu0 0
      %365 = vmatmul.mubr.bf16.gmra.mxu0 %v330
      %v366 = vpop.f32.mrf.mxu0
      %v367 = vadd.f32 0.0, %v366
      %v368 = vpop.f32.mrf.mxu0
      %v369 = vadd.f32 0.0, %v368
      %v370 = vpop.f32.mrf.mxu0
      %v371 = vpop.f32.mrf.mxu0
      %372 = vdwg.mxu0
      %373 = vmatprep.subr.bf16.mxu0 0
      %374 = vmatpush1.bf16.msra.mxu0 0
      %375 = vmatprep.subr.bf16.mxu0 0
      %376 = vmatpush1.bf16.msra.mxu0 0
      %377 = vmatprep.subr.bf16.mxu0 0
      %378 = vmatpush1.bf16.msra.mxu0 0
      %379 = vmatprep.subr.bf16.mxu0 0
      %380 = vmatpush1.bf16.msra.mxu0 0
      %381 = vmatprep.subr.bf16.mxu0 0
      %382 = vmatpush1.bf16.msra.mxu0 0
      %383 = vmatprep.subr.bf16.mxu0 0
      %384 = vmatpush1.bf16.msra.mxu0 0
      %385 = vmatprep.subr.bf16.mxu0 0
      %386 = vmatpush1.bf16.msra.mxu0 0
      %387 = vmatprep.subr.bf16.mxu0 %v323
      %388 = vmatpush1.bf16.msra.mxu0 %v322
      %389 = vmatprep.subr.bf16.mxu0 0
      %390 = vmatpush2.bf16.msra.mxu0 0
      %391 = vmatprep.subr.bf16.mxu0 0
      %392 = vmatpush2.bf16.msra.mxu0 0
      %393 = vmatprep.subr.bf16.mxu0 0
      %394 = vmatpush2.bf16.msra.mxu0 0
      %395 = vmatprep.subr.bf16.mxu0 0
      %396 = vmatpush2.bf16.msra.mxu0 0
      %397 = vmatprep.subr.bf16.mxu0 0
      %398 = vmatpush2.bf16.msra.mxu0 0
      %399 = vmatprep.subr.bf16.mxu0 0
      %400 = vmatpush2.bf16.msra.mxu0 0
      %401 = vmatprep.subr.bf16.mxu0 0
      %402 = vmatpush2.bf16.msra.mxu0 0
      %403 = vmatprep.subr.bf16.mxu0 0
      %404 = vmatpush2.bf16.msra.mxu0 0
      %405 = vmatprep.mubr.bf16.mxu0 0
      %406 = vmatmul.mubr.bf16.gmra.mxu0 %v330
      %v407 = vpop.f32.mrf.mxu0
      %v408 = vadd.f32 0.0, %v407
      %v409 = vpop.f32.mrf.mxu0
      %v410 = vadd.f32 0.0, %v409
      %v411 = vpop.f32.mrf.mxu0
      %v412 = vpop.f32.mrf.mxu0
      %413 = vdwg.mxu0
      %v414 = vadd.f32 %v304, %v367
      %v415 = vadd.f32 %v305, %v369
      %v416 = vadd.f32 %v306, %v408
      %v417 = vadd.f32 %v307, %v410
      %418 = vst [vmem:[#allocation2] sm:$0xff] %v414
      %419 = vst [vmem:[#allocation2 + $0x8] sm:$0xff] %v415
      %420 = vst [vmem:[#allocation2 + $0x10] sm:$0xff] %v416
      %421 = vst [vmem:[#allocation2 + $0x18] sm:$0xff] %v417
      %v422 = vld [vmem:[#allocation3] sm:$0x1]
      %vm423 = vcmask 122880
      %v424 = vsel %vm423, %v292, 0.0
      %425 = vadd.xlane.f32.xlu0 %v424
      %v426 = vpop.xlane.xlu0 %425
      %v427 = vadd.f32 %v422, %v426
      %vm428 = vcmask 0
      %429 = vst.msk [vmem:[#allocation3] sm:$0x1] %vm428, %v427
      // Predicated region
      $region33: #{patnet_forward.9} parent=27 // pred_check
        %p430 = pneg %p278
      $region34: #{patnet_forward.9} parent=27 // pred_check_branch
        %432 = sbr.rel (%p430) target = $region36
      $region35: #{patnet_forward.9} parent=27 // pred_region
        %v433 = vld [vmem:[#allocation3] sm:$0x1]
        %v434 = vld [vmem:[#allocation2] ss:$8 sm:$0xf]
        %s435 = scalar_lea.vmem [#allocation2], 1
        %v436 = vld [vmem:[%s435] ss:$8 sm:$0xf]
        %v437 = vadd.f32 %v433, 1e-06
        %439 = vset.pattern.permute.xlu0 0
        %440 = vperm.xlu0 %439, %v437
        %v441 = vpop.permute.xlu0 %440
        %v443 = vlaneseq
        %v444 = vshrl.u32 %v443, 7
        %v445 = vsub.s32 0, %v444
        %v446 = vrot.slane %v441, %v445
        %v447 = vrcp.pop %v446
        %v448 = vmul.f32 %v436, %v447
        %v449 = vlaneseq
        %vm450 = vcmp.ge.s32.totalorder %v449, 0
        %vm451 = vcmp.lt.s32.totalorder %v449, 512
        %vm452 = vmand %vm450, %vm451
        %453 = vst.msk [vmem:[%s268] sm:$0xf] %vm452, %v448
        %v454 = vsub.f32 %v434, %v436
        %v455 = vsub.f32 16.0, %v433
        %v456 = vadd.f32 %v455, 1e-06
        %458 = vset.pattern.permute.xlu0 0
        %459 = vperm.xlu0 %458, %v456
        %v460 = vpop.permute.xlu0 %459
        %v462 = vlaneseq
        %v463 = vshrl.u32 %v462, 7
        %v464 = vsub.s32 0, %v463
        %v465 = vrot.slane %v460, %v464
        %v466 = vrcp.pop %v465
        %v467 = vmul.f32 %v454, %v466
        %468 = vst.msk [vmem:[%s276] sm:$0xf] %vm452, %v467
      $region36: #{patnet_forward.9} parent=27 // pred_fallthru
        _
      %p469 = scmp.lt.s32.totalorder %s20, 3
      %s470 = scalar_select %p469, %s20, 3
      %p471 = scmp.lt.s32.totalorder %s21, 1
      %s472 = scalar_select %p471, %s21, 1
      %s473 = smul.addr %s472, 4
      %s474 = smul.addr %s470, 8
      %s475 = sadd.s32 %s473, %s474
      %s476 = scalar_lea.vmem %s2, %s475
      %p477 = scmp.lt.s32.totalorder %s20, 3
      %s478 = scalar_select %p477, %s20, 3
      %p479 = scmp.lt.s32.totalorder %s21, 1
      %s480 = scalar_select %p479, %s21, 1
      %s481 = smul.addr %s480, 4
      %s482 = smul.addr %s478, 8
      %s483 = sadd.s32 %s481, %s482
      %s484 = scalar_lea.vmem %s3, %s483
      // Predicated region
      $region37: #{patnet_forward.9} parent=27 // pred_check
        %p485 = pneg %p112
      $region38: #{patnet_forward.9} parent=27 // pred_check_branch
        %487 = sbr.rel (%p485) target = $region40
      $region39: #{patnet_forward.9} parent=27 // pred_region
        _
      $region40: #{patnet_forward.9} parent=27 // pred_fallthru
        _
      // Predicated region
      $region41: #{patnet_forward.9} parent=27 // pred_check
        %p488 = pneg %p140
      $region42: #{patnet_forward.9} parent=27 // pred_check_branch
        %490 = sbr.rel (%p488) target = $region44
      $region43: #{patnet_forward.9} parent=27 // pred_region
        _
      $region44: #{patnet_forward.9} parent=27 // pred_fallthru
        _
    $region28: #{patnet_forward.9} parent=5 // pred_fallthru
      _
    %p491 = scmp.le.s32.totalorder 2, %s10
    // Predicated region
    $region45: #{patnet_forward.9} parent=5 // pred_check
      %p492 = pneg %p491
    $region46: #{patnet_forward.9} parent=5 // pred_check_branch
      %494 = sbr.rel (%p492) target = $region48
    $region47: #{patnet_forward.9} parent=5 // pred_region
      %s495 = ssub.s32 %s10, 2
      // Predicated region
      $region49: #{patnet_forward.9} parent=47 // pred_check
        %p496 = pneg %p118
      $region50: #{patnet_forward.9} parent=47 // pred_check_branch
        %498 = sbr.rel (%p496) target = $region52
      $region51: #{patnet_forward.9} parent=47 // pred_region
        %p499 = scmp.lt.s32.totalorder %s23, 3
        %s500 = scalar_select %p499, %s23, 3
        %p501 = scmp.lt.s32.totalorder %s24, 1
        %s502 = scalar_select %p501, %s24, 1
        %s503 = smul.addr %s502, 4
        %s504 = smul.addr %s500, 8
        %s505 = sadd.s32 %s503, %s504
        %s506 = scalar_lea.vmem %s2, %s505
      $region52: #{patnet_forward.9} parent=47 // pred_fallthru
        _
      // Predicated region
      $region53: #{patnet_forward.9} parent=47 // pred_check
        %p507 = pneg %p146
      $region54: #{patnet_forward.9} parent=47 // pred_check_branch
        %509 = sbr.rel (%p507) target = $region56
      $region55: #{patnet_forward.9} parent=47 // pred_region
        %p510 = scmp.lt.s32.totalorder %s23, 3
        %s511 = scalar_select %p510, %s23, 3
        %p512 = scmp.lt.s32.totalorder %s24, 1
        %s513 = scalar_select %p512, %s24, 1
        %s514 = smul.addr %s513, 4
        %s515 = smul.addr %s511, 8
        %s516 = sadd.s32 %s514, %s515
        %s517 = scalar_lea.vmem %s3, %s516
      $region56: #{patnet_forward.9} parent=47 // pred_fallthru
        _
    $region48: #{patnet_forward.9} parent=5 // pred_fallthru
      _
  $region6: #{patnet_forward.9} parent=0 // loop_footer
    %s14 = sadd.s32 1, %s10
  $region7: #{patnet_forward.9} parent=0 // loop_footer_branch
    %9 = sbr.rel target = $region3
  $region8: #{patnet_forward.9} parent=0 // loop_exit
    _

// kernel: squeeze.35
$region0: #{squeeze.35}
  %s0 = inlined_call_operand.vmem [shape: bf16[1,2,16,16], index: 0, kind: input, shape index: {}]
  %s1 = inlined_call_operand.vmem [shape: bf16[2,1,4,4,4,4], index: 1, kind: output, shape index: {}]
  $region1: #{squeeze.35} parent=0
    #allocation0 [shape = 'u8[131072]{0}', space=vmem, size = 0x20000, scoped, tag = 'scoped mem for output reshape']
    #allocation1 [shape = 'u8[16384]{0}', space=vmem, size = 0x4000, scoped, tag = 'scoped mem for input reshape']
    %s3 = smul.u32 4, 2
    %s4 = sshll.u32 1, %s3
    %s5 = ssub.s32 %s4, 1
    %s6 = smul.addr 4, 3
    %s7 = scalar_lea.vmem %s0, %s6
    %s8 = sshrl.u32 %s5, 1
    %s9 = sor.u32 %s5, %s8
    %s10 = sand.u32 %s9, 85
    %s11 = sshrl.u32 %s10, 1
    %s12 = sor.u32 %s10, %s11
    %s13 = sand.u32 51, %s12
    %s14 = sshrl.u32 %s13, 2
    %s15 = sor.u32 %s13, %s14
    %s16 = sand.u32 15, %s15
    %v17 = vld [vmem:[%s7] sm:%s16]
    %v18 = vunpack.c.l.bf16 %v17
    %v19 = vunpack.c.h.bf16 %v17
    %s20 = scalar_lea.vmem [#allocation1], 24
    %21 = vst [vmem:[%s20] sm:%s5] %v18
    %s22 = smul.addr 4, 2
    %s23 = scalar_lea.vmem %s0, %s22
    %s24 = sshrl.u32 %s5, 1
    %s25 = sor.u32 %s5, %s24
    %s26 = sand.u32 %s25, 85
    %s27 = sshrl.u32 %s26, 1
    %s28 = sor.u32 %s26, %s27
    %s29 = sand.u32 51, %s28
    %s30 = sshrl.u32 %s29, 2
    %s31 = sor.u32 %s29, %s30
    %s32 = sand.u32 15, %s31
    %v33 = vld [vmem:[%s23] sm:%s32]
    %v34 = vunpack.c.l.bf16 %v33
    %v35 = vunpack.c.h.bf16 %v33
    %s36 = scalar_lea.vmem [#allocation1], 16
    %37 = vst [vmem:[%s36] sm:%s5] %v34
    %s38 = scalar_lea.vmem %s0, 4
    %s39 = sshrl.u32 %s5, 1
    %s40 = sor.u32 %s5, %s39
    %s41 = sand.u32 %s40, 85
    %s42 = sshrl.u32 %s41, 1
    %s43 = sor.u32 %s41, %s42
    %s44 = sand.u32 51, %s43
    %s45 = sshrl.u32 %s44, 2
    %s46 = sor.u32 %s44, %s45
    %s47 = sand.u32 15, %s46
    %v48 = vld [vmem:[%s38] sm:%s47]
    %v49 = vunpack.c.l.bf16 %v48
    %v50 = vunpack.c.h.bf16 %v48
    %s51 = scalar_lea.vmem [#allocation1], 8
    %52 = vst [vmem:[%s51] sm:%s5] %v49
    %s53 = sshrl.u32 %s5, 1
    %s54 = sor.u32 %s5, %s53
    %s55 = sand.u32 %s54, 85
    %s56 = sshrl.u32 %s55, 1
    %s57 = sor.u32 %s55, %s56
    %s58 = sand.u32 51, %s57
    %s59 = sshrl.u32 %s58, 2
    %s60 = sor.u32 %s58, %s59
    %s61 = sand.u32 15, %s60
    %v62 = vld [vmem:[%s0] sm:%s61]
    %v63 = vunpack.c.l.bf16 %v62
    %v64 = vunpack.c.h.bf16 %v62
    %65 = vst [vmem:[#allocation1] sm:%s5] %v63
    %v66 = vld [vmem:[#allocation1] sm:$0xff]
    %vm67 = vcmask 31744
    %68 = vst.msk [vmem:[#allocation0] ss:$8 sm:$0xf] %vm67, %v66
    %69 = vst.msk [vmem:[#allocation0] ss:$8 sm:$0xf0] %vm67, %v66
    %s70 = scalar_lea.vmem [#allocation1], 8
    %v71 = vld [vmem:[%s70] sm:$0xff]
    %vm72 = vcmask 31744
    %s73 = scalar_lea.vmem [#allocation0], 64
    %74 = vst.msk [vmem:[%s73] ss:$8 sm:$0xf] %vm72, %v71
    %s75 = scalar_lea.vmem [#allocation0], 64
    %76 = vst.msk [vmem:[%s75] ss:$8 sm:$0xf0] %vm72, %v71
    %s77 = scalar_lea.vmem [#allocation1], 16
    %v78 = vld [vmem:[%s77] sm:$0xff]
    %vm79 = vcmask 31744
    %s80 = scalar_lea.vmem [#allocation0], 128
    %81 = vst.msk [vmem:[%s80] ss:$8 sm:$0xf] %vm79, %v78
    %s82 = scalar_lea.vmem [#allocation0], 128
    %83 = vst.msk [vmem:[%s82] ss:$8 sm:$0xf0] %vm79, %v78
    %s84 = scalar_lea.vmem [#allocation1], 24
    %v85 = vld [vmem:[%s84] sm:$0xff]
    %vm86 = vcmask 31744
    %s87 = scalar_lea.vmem [#allocation0], 192
    %88 = vst.msk [vmem:[%s87] ss:$8 sm:$0xf] %vm86, %v85
    %s89 = scalar_lea.vmem [#allocation0], 192
    %90 = vst.msk [vmem:[%s89] ss:$8 sm:$0xf0] %vm86, %v85
    %v91 = vld [vmem:[#allocation1] sm:$0xff]
    %92 = vrot.lane.b32.xlu0 %v91, 124
    %v93 = vpop.permute.xlu0 %92
    %vm94 = vcmask 31744
    %s95 = scalar_lea.vmem [#allocation0], 1
    %96 = vst.msk [vmem:[%s95] ss:$8 sm:$0xf] %vm94, %v93
    %s97 = scalar_lea.vmem [#allocation0], 1
    %98 = vst.msk [vmem:[%s97] ss:$8 sm:$0xf0] %vm94, %v93
    %s99 = scalar_lea.vmem [#allocation1], 8
    %v100 = vld [vmem:[%s99] sm:$0xff]
    %101 = vrot.lane.b32.xlu0 %v100, 124
    %v102 = vpop.permute.xlu0 %101
    %vm103 = vcmask 31744
    %s104 = scalar_lea.vmem [#allocation0], 65
    %105 = vst.msk [vmem:[%s104] ss:$8 sm:$0xf] %vm103, %v102
    %s106 = scalar_lea.vmem [#allocation0], 65
    %107 = vst.msk [vmem:[%s106] ss:$8 sm:$0xf0] %vm103, %v102
    %s108 = scalar_lea.vmem [#allocation1], 16
    %v109 = vld [vmem:[%s108] sm:$0xff]
    %110 = vrot.lane.b32.xlu0 %v109, 124
    %v111 = vpop.permute.xlu0 %110
    %vm112 = vcmask 31744
    %s113 = scalar_lea.vmem [#allocation0], 129
    %114 = vst.msk [vmem:[%s113] ss:$8 sm:$0xf] %vm112, %v111
    %s115 = scalar_lea.vmem [#allocation0], 129
    %116 = vst.msk [vmem:[%s115] ss:$8 sm:$0xf0] %vm112, %v111
    %s117 = scalar_lea.vmem [#allocation1], 24
    %v118 = vld [vmem:[%s117] sm:$0xff]
    %119 = vrot.lane.b32.xlu0 %v118, 124
    %v120 = vpop.permute.xlu0 %119
    %vm121 = vcmask 31744
    %s122 = scalar_lea.vmem [#allocation0], 193
    %123 = vst.msk [vmem:[%s122] ss:$8 sm:$0xf] %vm121, %v120
    %s124 = scalar_lea.vmem [#allocation0], 193
    %125 = vst.msk [vmem:[%s124] ss:$8 sm:$0xf0] %vm121, %v120
    %v126 = vld [vmem:[#allocation1] sm:$0xff]
    %127 = vrot.lane.b32.xlu0 %v126, 120
    %v128 = vpop.permute.xlu0 %127
    %vm129 = vcmask 31744
    %s130 = scalar_lea.vmem [#allocation0], 2
    %131 = vst.msk [vmem:[%s130] ss:$8 sm:$0xf] %vm129, %v128
    %s132 = scalar_lea.vmem [#allocation0], 2
    %133 = vst.msk [vmem:[%s132] ss:$8 sm:$0xf0] %vm129, %v128
    %s134 = scalar_lea.vmem [#allocation1], 8
    %v135 = vld [vmem:[%s134] sm:$0xff]
    %136 = vrot.lane.b32.xlu0 %v135, 120
    %v137 = vpop.permute.xlu0 %136
    %vm138 = vcmask 31744
    %s139 = scalar_lea.vmem [#allocation0], 66
    %140 = vst.msk [vmem:[%s139] ss:$8 sm:$0xf] %vm138, %v137
    %s141 = scalar_lea.vmem [#allocation0], 66
    %142 = vst.msk [vmem:[%s141] ss:$8 sm:$0xf0] %vm138, %v137
    %s143 = scalar_lea.vmem [#allocation1], 16
    %v144 = vld [vmem:[%s143] sm:$0xff]
    %145 = vrot.lane.b32.xlu0 %v144, 120
    %v146 = vpop.permute.xlu0 %145
    %vm147 = vcmask 31744
    %s148 = scalar_lea.vmem [#allocation0], 130
    %149 = vst.msk [vmem:[%s148] ss:$8 sm:$0xf] %vm147, %v146
    %s150 = scalar_lea.vmem [#allocation0], 130
    %151 = vst.msk [vmem:[%s150] ss:$8 sm:$0xf0] %vm147, %v146
    %s152 = scalar_lea.vmem [#allocation1], 24
    %v153 = vld [vmem:[%s152] sm:$0xff]
    %154 = vrot.lane.b32.xlu0 %v153, 120
    %v155 = vpop.permute.xlu0 %154
    %vm156 = vcmask 31744
    %s157 = scalar_lea.vmem [#allocation0], 194
    %158 = vst.msk [vmem:[%s157] ss:$8 sm:$0xf] %vm156, %v155
    %s159 = scalar_lea.vmem [#allocation0], 194
    %160 = vst.msk [vmem:[%s159] ss:$8 sm:$0xf0] %vm156, %v155
    %v161 = vld [vmem:[#allocation1] sm:$0xff]
    %162 = vrot.lane.b32.xlu0 %v161, 116
    %v163 = vpop.permute.xlu0 %162
    %vm164 = vcmask 31744
    %s165 = scalar_lea.vmem [#allocation0], 3
    %166 = vst.msk [vmem:[%s165] ss:$8 sm:$0xf] %vm164, %v163
    %s167 = scalar_lea.vmem [#allocation0], 3
    %168 = vst.msk [vmem:[%s167] ss:$8 sm:$0xf0] %vm164, %v163
    %s169 = scalar_lea.vmem [#allocation1], 8
    %v170 = vld [vmem:[%s169] sm:$0xff]
    %171 = vrot.lane.b32.xlu0 %v170, 116
    %v172 = vpop.permute.xlu0 %171
    %vm173 = vcmask 31744
    %s174 = scalar_lea.vmem [#allocation0], 67
    %175 = vst.msk [vmem:[%s174] ss:$8 sm:$0xf] %vm173, %v172
    %s176 = scalar_lea.vmem [#allocation0], 67
    %177 = vst.msk [vmem:[%s176] ss:$8 sm:$0xf0] %vm173, %v172
    %s178 = scalar_lea.vmem [#allocation1], 16
    %v179 = vld [vmem:[%s178] sm:$0xff]
    %180 = vrot.lane.b32.xlu0 %v179, 116
    %v181 = vpop.permute.xlu0 %180
    %vm182 = vcmask 31744
    %s183 = scalar_lea.vmem [#allocation0], 131
    %184 = vst.msk [vmem:[%s183] ss:$8 sm:$0xf] %vm182, %v181
    %s185 = scalar_lea.vmem [#allocation0], 131
    %186 = vst.msk [vmem:[%s185] ss:$8 sm:$0xf0] %vm182, %v181
    %s187 = scalar_lea.vmem [#allocation1], 24
    %v188 = vld [vmem:[%s187] sm:$0xff]
    %189 = vrot.lane.b32.xlu0 %v188, 116
    %v190 = vpop.permute.xlu0 %189
    %vm191 = vcmask 31744
    %s192 = scalar_lea.vmem [#allocation0], 195
    %193 = vst.msk [vmem:[%s192] ss:$8 sm:$0xf] %vm191, %v190
    %s194 = scalar_lea.vmem [#allocation0], 195
    %195 = vst.msk [vmem:[%s194] ss:$8 sm:$0xf0] %vm191, %v190
    %s197 = smul.u32 2, 2
    %s198 = sshll.u32 1, %s197
    %s199 = ssub.s32 %s198, 1
    %s200 = sshrl.u32 %s197, 1
    %v201 = vld [vmem:[#allocation0] sm:%s199]
    %v202 = vpack.c.bf16 0.0, %v201
    %s203 = sshll.u32 1, %s200
    %s204 = ssub.s32 %s203, 1
    %205 = vst [vmem:[%s1] sm:%s204] %v202
    %s206 = scalar_lea.vmem [#allocation0], 8
    %v207 = vld [vmem:[%s206] sm:%s199]
    %v208 = vpack.c.bf16 0.0, %v207
    %s209 = sshll.u32 1, %s200
    %s210 = ssub.s32 %s209, 1
    %s211 = scalar_lea.vmem %s1, 2
    %212 = vst [vmem:[%s211] sm:%s210] %v208
    %s213 = scalar_lea.vmem [#allocation0], 16
    %v214 = vld [vmem:[%s213] sm:%s199]
    %v215 = vpack.c.bf16 0.0, %v214
    %s216 = sshll.u32 1, %s200
    %s217 = ssub.s32 %s216, 1
    %s218 = smul.addr 2, 2
    %s219 = scalar_lea.vmem %s1, %s218
    %220 = vst [vmem:[%s219] sm:%s217] %v215
    %s221 = scalar_lea.vmem [#allocation0], 24
    %v222 = vld [vmem:[%s221] sm:%s199]
    %v223 = vpack.c.bf16 0.0, %v222
    %s224 = sshll.u32 1, %s200
    %s225 = ssub.s32 %s224, 1
    %s226 = smul.addr 2, 3
    %s227 = scalar_lea.vmem %s1, %s226
    %228 = vst [vmem:[%s227] sm:%s225] %v223
    %s229 = scalar_lea.vmem [#allocation0], 32
    %v230 = vld [vmem:[%s229] sm:%s199]
    %v231 = vpack.c.bf16 0.0, %v230
    %s232 = sshll.u32 1, %s200
    %s233 = ssub.s32 %s232, 1
    %s234 = smul.addr 2, 4
    %s235 = scalar_lea.vmem %s1, %s234
    %236 = vst [vmem:[%s235] sm:%s233] %v231
    %s237 = scalar_lea.vmem [#allocation0], 40
    %v238 = vld [vmem:[%s237] sm:%s199]
    %v239 = vpack.c.bf16 0.0, %v238
    %s240 = sshll.u32 1, %s200
    %s241 = ssub.s32 %s240, 1
    %s242 = smul.addr 2, 5
    %s243 = scalar_lea.vmem %s1, %s242
    %244 = vst [vmem:[%s243] sm:%s241] %v239
    %s245 = scalar_lea.vmem [#allocation0], 48
    %v246 = vld [vmem:[%s245] sm:%s199]
    %v247 = vpack.c.bf16 0.0, %v246
    %s248 = sshll.u32 1, %s200
    %s249 = ssub.s32 %s248, 1
    %s250 = smul.addr 2, 6
    %s251 = scalar_lea.vmem %s1, %s250
    %252 = vst [vmem:[%s251] sm:%s249] %v247
    %s253 = scalar_lea.vmem [#allocation0], 56
    %v254 = vld [vmem:[%s253] sm:%s199]
    %v255 = vpack.c.bf16 0.0, %v254
    %s256 = sshll.u32 1, %s200
    %s257 = ssub.s32 %s256, 1
    %s258 = smul.addr 2, 7
    %s259 = scalar_lea.vmem %s1, %s258
    %260 = vst [vmem:[%s259] sm:%s257] %v255
    %s261 = scalar_lea.vmem [#allocation0], 64
    %v262 = vld [vmem:[%s261] sm:%s199]
    %v263 = vpack.c.bf16 0.0, %v262
    %s264 = sshll.u32 1, %s200
    %s265 = ssub.s32 %s264, 1
    %s266 = smul.addr 2, 8
    %s267 = scalar_lea.vmem %s1, %s266
    %268 = vst [vmem:[%s267] sm:%s265] %v263
    %s269 = scalar_lea.vmem [#allocation0], 72
    %v270 = vld [vmem:[%s269] sm:%s199]
    %v271 = vpack.c.bf16 0.0, %v270
    %s272 = sshll.u32 1, %s200
    %s273 = ssub.s32 %s272, 1
    %s274 = smul.addr 2, 9
    %s275 = scalar_lea.vmem %s1, %s274
    %276 = vst [vmem:[%s275] sm:%s273] %v271
    %s277 = scalar_lea.vmem [#allocation0], 80
    %v278 = vld [vmem:[%s277] sm:%s199]
    %v279 = vpack.c.bf16 0.0, %v278
    %s280 = sshll.u32 1, %s200
    %s281 = ssub.s32 %s280, 1
    %s282 = smul.addr 2, 10
    %s283 = scalar_lea.vmem %s1, %s282
    %284 = vst [vmem:[%s283] sm:%s281] %v279
    %s285 = scalar_lea.vmem [#allocation0], 88
    %v286 = vld [vmem:[%s285] sm:%s199]
    %v287 = vpack.c.bf16 0.0, %v286
    %s288 = sshll.u32 1, %s200
    %s289 = ssub.s32 %s288, 1
    %s290 = smul.addr 2, 11
    %s291 = scalar_lea.vmem %s1, %s290
    %292 = vst [vmem:[%s291] sm:%s289] %v287
    %s293 = scalar_lea.vmem [#allocation0], 96
    %v294 = vld [vmem:[%s293] sm:%s199]
    %v295 = vpack.c.bf16 0.0, %v294
    %s296 = sshll.u32 1, %s200
    %s297 = ssub.s32 %s296, 1
    %s298 = smul.addr 2, 12
    %s299 = scalar_lea.vmem %s1, %s298
    %300 = vst [vmem:[%s299] sm:%s297] %v295
    %s301 = scalar_lea.vmem [#allocation0], 104
    %v302 = vld [vmem:[%s301] sm:%s199]
    %v303 = vpack.c.bf16 0.0, %v302
    %s304 = sshll.u32 1, %s200
    %s305 = ssub.s32 %s304, 1
    %s306 = smul.addr 2, 13
    %s307 = scalar_lea.vmem %s1, %s306
    %308 = vst [vmem:[%s307] sm:%s305] %v303
    %s309 = scalar_lea.vmem [#allocation0], 112
    %v310 = vld [vmem:[%s309] sm:%s199]
    %v311 = vpack.c.bf16 0.0, %v310
    %s312 = sshll.u32 1, %s200
    %s313 = ssub.s32 %s312, 1
    %s314 = smul.addr 2, 14
    %s315 = scalar_lea.vmem %s1, %s314
    %316 = vst [vmem:[%s315] sm:%s313] %v311
    %s317 = scalar_lea.vmem [#allocation0], 120
    %v318 = vld [vmem:[%s317] sm:%s199]
    %v319 = vpack.c.bf16 0.0, %v318
    %s320 = sshll.u32 1, %s200
    %s321 = ssub.s32 %s320, 1
    %s322 = smul.addr 2, 15
    %s323 = scalar_lea.vmem %s1, %s322
    %324 = vst [vmem:[%s323] sm:%s321] %v319
    %s325 = scalar_lea.vmem [#allocation0], 128
    %v326 = vld [vmem:[%s325] sm:%s199]
    %v327 = vpack.c.bf16 0.0, %v326
    %s328 = sshll.u32 1, %s200
    %s329 = ssub.s32 %s328, 1
    %s330 = smul.addr 2, 16
    %s331 = scalar_lea.vmem %s1, %s330
    %332 = vst [vmem:[%s331] sm:%s329] %v327
    %s333 = scalar_lea.vmem [#allocation0], 136
    %v334 = vld [vmem:[%s333] sm:%s199]
    %v335 = vpack.c.bf16 0.0, %v334
    %s336 = sshll.u32 1, %s200
    %s337 = ssub.s32 %s336, 1
    %s338 = smul.addr 2, 17
    %s339 = scalar_lea.vmem %s1, %s338
    %340 = vst [vmem:[%s339] sm:%s337] %v335
    %s341 = scalar_lea.vmem [#allocation0], 144
    %v342 = vld [vmem:[%s341] sm:%s199]
    %v343 = vpack.c.bf16 0.0, %v342
    %s344 = sshll.u32 1, %s200
    %s345 = ssub.s32 %s344, 1
    %s346 = smul.addr 2, 18
    %s347 = scalar_lea.vmem %s1, %s346
    %348 = vst [vmem:[%s347] sm:%s345] %v343
    %s349 = scalar_lea.vmem [#allocation0], 152
    %v350 = vld [vmem:[%s349] sm:%s199]
    %v351 = vpack.c.bf16 0.0, %v350
    %s352 = sshll.u32 1, %s200
    %s353 = ssub.s32 %s352, 1
    %s354 = smul.addr 2, 19
    %s355 = scalar_lea.vmem %s1, %s354
    %356 = vst [vmem:[%s355] sm:%s353] %v351
    %s357 = scalar_lea.vmem [#allocation0], 160
    %v358 = vld [vmem:[%s357] sm:%s199]
    %v359 = vpack.c.bf16 0.0, %v358
    %s360 = sshll.u32 1, %s200
    %s361 = ssub.s32 %s360, 1
    %s362 = smul.addr 2, 20
    %s363 = scalar_lea.vmem %s1, %s362
    %364 = vst [vmem:[%s363] sm:%s361] %v359
    %s365 = scalar_lea.vmem [#allocation0], 168
    %v366 = vld [vmem:[%s365] sm:%s199]
    %v367 = vpack.c.bf16 0.0, %v366
    %s368 = sshll.u32 1, %s200
    %s369 = ssub.s32 %s368, 1
    %s370 = smul.addr 2, 21
    %s371 = scalar_lea.vmem %s1, %s370
    %372 = vst [vmem:[%s371] sm:%s369] %v367
    %s373 = scalar_lea.vmem [#allocation0], 176
    %v374 = vld [vmem:[%s373] sm:%s199]
    %v375 = vpack.c.bf16 0.0, %v374
    %s376 = sshll.u32 1, %s200
    %s377 = ssub.s32 %s376, 1
    %s378 = smul.addr 2, 22
    %s379 = scalar_lea.vmem %s1, %s378
    %380 = vst [vmem:[%s379] sm:%s377] %v375
    %s381 = scalar_lea.vmem [#allocation0], 184
    %v382 = vld [vmem:[%s381] sm:%s199]
    %v383 = vpack.c.bf16 0.0, %v382
    %s384 = sshll.u32 1, %s200
    %s385 = ssub.s32 %s384, 1
    %s386 = smul.addr 2, 23
    %s387 = scalar_lea.vmem %s1, %s386
    %388 = vst [vmem:[%s387] sm:%s385] %v383
    %s389 = scalar_lea.vmem [#allocation0], 192
    %v390 = vld [vmem:[%s389] sm:%s199]
    %v391 = vpack.c.bf16 0.0, %v390
    %s392 = sshll.u32 1, %s200
    %s393 = ssub.s32 %s392, 1
    %s394 = smul.addr 2, 24
    %s395 = scalar_lea.vmem %s1, %s394
    %396 = vst [vmem:[%s395] sm:%s393] %v391
    %s397 = scalar_lea.vmem [#allocation0], 200
    %v398 = vld [vmem:[%s397] sm:%s199]
    %v399 = vpack.c.bf16 0.0, %v398
    %s400 = sshll.u32 1, %s200
    %s401 = ssub.s32 %s400, 1
    %s402 = smul.addr 2, 25
    %s403 = scalar_lea.vmem %s1, %s402
    %404 = vst [vmem:[%s403] sm:%s401] %v399
    %s405 = scalar_lea.vmem [#allocation0], 208
    %v406 = vld [vmem:[%s405] sm:%s199]
    %v407 = vpack.c.bf16 0.0, %v406
    %s408 = sshll.u32 1, %s200
    %s409 = ssub.s32 %s408, 1
    %s410 = smul.addr 2, 26
    %s411 = scalar_lea.vmem %s1, %s410
    %412 = vst [vmem:[%s411] sm:%s409] %v407
    %s413 = scalar_lea.vmem [#allocation0], 216
    %v414 = vld [vmem:[%s413] sm:%s199]
    %v415 = vpack.c.bf16 0.0, %v414
    %s416 = sshll.u32 1, %s200
    %s417 = ssub.s32 %s416, 1
    %s418 = smul.addr 2, 27
    %s419 = scalar_lea.vmem %s1, %s418
    %420 = vst [vmem:[%s419] sm:%s417] %v415
    %s421 = scalar_lea.vmem [#allocation0], 224
    %v422 = vld [vmem:[%s421] sm:%s199]
    %v423 = vpack.c.bf16 0.0, %v422
    %s424 = sshll.u32 1, %s200
    %s425 = ssub.s32 %s424, 1
    %s426 = smul.addr 2, 28
    %s427 = scalar_lea.vmem %s1, %s426
    %428 = vst [vmem:[%s427] sm:%s425] %v423
    %s429 = scalar_lea.vmem [#allocation0], 232
    %v430 = vld [vmem:[%s429] sm:%s199]
    %v431 = vpack.c.bf16 0.0, %v430
    %s432 = sshll.u32 1, %s200
    %s433 = ssub.s32 %s432, 1
    %s434 = smul.addr 2, 29
    %s435 = scalar_lea.vmem %s1, %s434
    %436 = vst [vmem:[%s435] sm:%s433] %v431
    %s437 = scalar_lea.vmem [#allocation0], 240
    %v438 = vld [vmem:[%s437] sm:%s199]
    %v439 = vpack.c.bf16 0.0, %v438
    %s440 = sshll.u32 1, %s200
    %s441 = ssub.s32 %s440, 1
    %s442 = smul.addr 2, 30
    %s443 = scalar_lea.vmem %s1, %s442
    %444 = vst [vmem:[%s443] sm:%s441] %v439
    %s445 = scalar_lea.vmem [#allocation0], 248
    %v446 = vld [vmem:[%s445] sm:%s199]
    %v447 = vpack.c.bf16 0.0, %v446
    %s448 = sshll.u32 1, %s200
    %s449 = ssub.s32 %s448, 1
    %s450 = smul.addr 2, 31
    %s451 = scalar_lea.vmem %s1, %s450
    %452 = vst [vmem:[%s451] sm:%s449] %v447

// kernel: patnet_forward.11
$region0: #{patnet_forward.11}
  #allocation0 [shape = 'u32[]', space=smem, size = 0x4, offset = 0x4, fixed_abs, tag = 'smem constant byte address 0x4 - core index']
  #allocation1 [shape = 'u32[144,128]{1,0:T(1,128)}', space=vmem, size = 0x12000, scoped, tag = 'internal scratch']
  %s0 = inlined_call_operand.vmem [shape: bf16[4,2,16,512], index: 0, kind: input, shape index: {}]
  %s1 = inlined_call_operand.vmem [shape: bf16[4,2,4,512], index: 1, kind: input, shape index: {}]
  %s2 = inlined_call_operand.vmem [shape: bf16[4,2,2,16], index: 2, kind: input, shape index: {}]
  %s3 = inlined_call_operand.vmem [shape: bf16[4,2,16,16], index: 3, kind: output, shape index: {}]
  %s4 = sld [smem:[#allocation0]]
  $region45: #{patnet_forward.11} parent=0
    _
  %s6 = ssub.s32 1, %s4
  %s7 = scalar_select 0, %s6, %s4
  loop: start=0, step=1, limit=10
  $region2: #{patnet_forward.11} parent=0 // loop_pre_header
    _
  $region3: #{patnet_forward.11} parent=0 // loop_header
    %s9 = sphi 0, %s13
    %p10 = scmp.ge.s32.totalorder %s9, 10
    %s16 = sphi 0, %s35
    %s17 = sphi 0, %s31
    %s18 = sphi 0, %s27
    %s19 = sphi 0, %s16
    %s20 = sphi 0, %s17
    %s21 = sphi 0, %s18
    %s22 = sphi 0, %s19
    %s23 = sphi 0, %s20
    %s24 = sphi 0, %s21
    %s42 = sphi 0, %s44
    %s45 = sphi 0, %s42
    %s46 = sphi 0, %s45
    %s62 = sphi 0, %s46
    %s70 = sphi 0, %s72
    %s73 = sphi 0, %s70
    %s74 = sphi 0, %s73
    %s90 = sphi 0, %s74
    %s98 = sphi 0, %s100
    %s101 = sphi 0, %s98
    %s102 = sphi 0, %s101
    %s118 = sphi 0, %s102
    %s128 = sphi 0, %s130
    %s131 = sphi 0, %s128
    %s132 = sphi 0, %s131
    %s148 = sphi 0, %s132
  $region4: #{patnet_forward.11} parent=0 // loop_header_branch
    %12 = sbr.rel (%p10) target = $region8
  $region5: #{patnet_forward.11} parent=0 // loop_body
    %s14 = ssub.s32 %s9, 1
    %s15 = ssub.s32 %s9, 2
    %s25 = sadd.s32 1, %s18
    %p26 = scmp.ge.s32.totalorder %s25, 1
    %s27 = scalar_select %p26, 0, %s25
    %s28 = sadd.s32 1, %s17
    %s29 = scalar_select %p26, %s28, %s17
    %p30 = scmp.ge.s32.totalorder %s29, 2
    %s31 = scalar_select %p30, 0, %s29
    %s32 = sadd.s32 1, %s16
    %s33 = scalar_select %p30, %s32, %s16
    %p34 = scmp.ge.s32.totalorder %s33, 4
    %s35 = scalar_select %p34, 0, %s33
    %s36 = ssub.s32 %s16, %s35
    %s37 = ssub.s32 %s17, %s31
    %s38 = sor.u32 %s36, %s37
    %s39 = ssub.s32 %s18, %s27
    %s40 = sor.u32 %s38, %s39
    %p41 = scmp.eq.s32.totalorder %s40, 0
    %s43 = sadd.s32 %s42, 1
    %s44 = scalar_select %p41, %s42, %s43
    %p47 = pneg %p41
    %p48 = scmp.eq.s32.totalorder %s9, 7
    %p49 = por %p47, %p48
    %p50 = scmp.ne.s32.totalorder %s42, %s45
    %p51 = scmp.eq.s32.totalorder %s9, 0
    %p52 = por %p50, %p51
    %p53 = scmp.ne.s32.totalorder %s42, %s45
    %p54 = scmp.eq.s32.totalorder %s14, 7
    %p55 = por %p53, %p54
    %p56 = scmp.ne.s32.totalorder %s45, %s46
    %p57 = scmp.eq.s32.totalorder %s14, 0
    %p58 = por %p56, %p57
    %p59 = scmp.ne.s32.totalorder %s45, %s46
    %p60 = scmp.eq.s32.totalorder %s15, 7
    %p61 = por %p59, %p60
    %p63 = scmp.ne.s32.totalorder %s46, %s62
    %p64 = scmp.eq.s32.totalorder %s15, 0
    %p65 = por %p63, %p64
    %s66 = ssub.s32 %s16, %s35
    %s67 = ssub.s32 %s17, %s31
    %s68 = sor.u32 %s66, %s67
    %p69 = scmp.eq.s32.totalorder %s68, 0
    %s71 = sadd.s32 %s70, 1
    %s72 = scalar_select %p69, %s70, %s71
    %p75 = pneg %p69
    %p76 = scmp.eq.s32.totalorder %s9, 7
    %p77 = por %p75, %p76
    %p78 = scmp.ne.s32.totalorder %s70, %s73
    %p79 = scmp.eq.s32.totalorder %s9, 0
    %p80 = por %p78, %p79
    %p81 = scmp.ne.s32.totalorder %s70, %s73
    %p82 = scmp.eq.s32.totalorder %s14, 7
    %p83 = por %p81, %p82
    %p84 = scmp.ne.s32.totalorder %s73, %s74
    %p85 = scmp.eq.s32.totalorder %s14, 0
    %p86 = por %p84, %p85
    %p87 = scmp.ne.s32.totalorder %s73, %s74
    %p88 = scmp.eq.s32.totalorder %s15, 7
    %p89 = por %p87, %p88
    %p91 = scmp.ne.s32.totalorder %s74, %s90
    %p92 = scmp.eq.s32.totalorder %s15, 0
    %p93 = por %p91, %p92
    %s94 = ssub.s32 %s16, %s35
    %s95 = ssub.s32 %s17, %s31
    %s96 = sor.u32 %s94, %s95
    %p97 = scmp.eq.s32.totalorder %s96, 0
    %s99 = sadd.s32 %s98, 1
    %s100 = scalar_select %p97, %s98, %s99
    %p103 = pneg %p97
    %p104 = scmp.eq.s32.totalorder %s9, 7
    %p105 = por %p103, %p104
    %p106 = scmp.ne.s32.totalorder %s98, %s101
    %p107 = scmp.eq.s32.totalorder %s9, 0
    %p108 = por %p106, %p107
    %p109 = scmp.ne.s32.totalorder %s98, %s101
    %p110 = scmp.eq.s32.totalorder %s14, 7
    %p111 = por %p109, %p110
    %p112 = scmp.ne.s32.totalorder %s101, %s102
    %p113 = scmp.eq.s32.totalorder %s14, 0
    %p114 = por %p112, %p113
    %p115 = scmp.ne.s32.totalorder %s101, %s102
    %p116 = scmp.eq.s32.totalorder %s15, 7
    %p117 = por %p115, %p116
    %p119 = scmp.ne.s32.totalorder %s102, %s118
    %p120 = scmp.eq.s32.totalorder %s15, 0
    %p121 = por %p119, %p120
    %s122 = ssub.s32 %s16, %s35
    %s123 = ssub.s32 %s17, %s31
    %s124 = sor.u32 %s122, %s123
    %s125 = ssub.s32 %s18, %s27
    %s126 = sor.u32 %s124, %s125
    %p127 = scmp.eq.s32.totalorder %s126, 0
    %s129 = sadd.s32 %s128, 1
    %s130 = scalar_select %p127, %s128, %s129
    %p133 = pneg %p127
    %p134 = scmp.eq.s32.totalorder %s9, 7
    %p135 = por %p133, %p134
    %p136 = scmp.ne.s32.totalorder %s128, %s131
    %p137 = scmp.eq.s32.totalorder %s9, 0
    %p138 = por %p136, %p137
    %p139 = scmp.ne.s32.totalorder %s128, %s131
    %p140 = scmp.eq.s32.totalorder %s14, 7
    %p141 = por %p139, %p140
    %p142 = scmp.ne.s32.totalorder %s131, %s132
    %p143 = scmp.eq.s32.totalorder %s14, 0
    %p144 = por %p142, %p143
    %p145 = scmp.ne.s32.totalorder %s131, %s132
    %p146 = scmp.eq.s32.totalorder %s15, 7
    %p147 = por %p145, %p146
    %p149 = scmp.ne.s32.totalorder %s132, %s148
    %p150 = scmp.eq.s32.totalorder %s15, 0
    %p151 = por %p149, %p150
    %p152 = scmp.le.s32.totalorder 1, %s9
    %p153 = scmp.lt.s32.totalorder %s9, 9
    %p154 = pnand %p152, %p153
    %p155 = pneg %p154
    // Predicated region
    $region9: #{patnet_forward.11} parent=5 // pred_check
      _
    $region10: #{patnet_forward.11} parent=5 // pred_check_branch
      %157 = sbr.rel (%p154) target = $region12
    $region11: #{patnet_forward.11} parent=5 // pred_region
      %s158 = ssub.s32 %s9, 1
    $region12: #{patnet_forward.11} parent=5 // pred_fallthru
      _
    %p159 = scmp.lt.s32.totalorder %s9, 8
    // Predicated region
    $region13: #{patnet_forward.11} parent=5 // pred_check
      %p160 = pneg %p159
    $region14: #{patnet_forward.11} parent=5 // pred_check_branch
      %162 = sbr.rel (%p160) target = $region16
    $region15: #{patnet_forward.11} parent=5 // pred_region
      // Predicated region
      $region17: #{patnet_forward.11} parent=15 // pred_check
        %p163 = pneg %p52
      $region18: #{patnet_forward.11} parent=15 // pred_check_branch
        %165 = sbr.rel (%p163) target = $region20
      $region19: #{patnet_forward.11} parent=15 // pred_region
        %s166 = smul.u32 2, %s18
        %p167 = scmp.lt.s32.totalorder %s16, 3
        %s168 = scalar_select %p167, %s16, 3
        %p169 = scmp.lt.s32.totalorder %s17, 1
        %s170 = scalar_select %p169, %s17, 1
        %p171 = scmp.lt.s32.totalorder %s166, 1
        %s172 = scalar_select %p171, %s166, 1
        %s173 = smul.addr %s172, 4
        %s174 = smul.addr %s170, 8
        %s175 = sadd.s32 %s173, %s174
        %s176 = smul.addr %s168, 16
        %s177 = sadd.s32 %s175, %s176
        %s178 = smul.addr %s177, 4
        %s179 = scalar_lea.vmem %s0, %s178
        %s180 = smul.u32 2, %s18
      $region20: #{patnet_forward.11} parent=15 // pred_fallthru
        _
      // Predicated region
      $region21: #{patnet_forward.11} parent=15 // pred_check
        %p181 = pneg %p80
      $region22: #{patnet_forward.11} parent=15 // pred_check_branch
        %183 = sbr.rel (%p181) target = $region24
      $region23: #{patnet_forward.11} parent=15 // pred_region
        %p184 = scmp.lt.s32.totalorder %s16, 3
        %s185 = scalar_select %p184, %s16, 3
        %p186 = scmp.lt.s32.totalorder %s17, 1
        %s187 = scalar_select %p186, %s17, 1
        %s188 = smul.addr %s187, 4
        %s189 = smul.addr %s185, 8
        %s190 = sadd.s32 %s188, %s189
        %s191 = smul.addr %s190, 2
        %s192 = scalar_lea.vmem %s1, %s191
      $region24: #{patnet_forward.11} parent=15 // pred_fallthru
        _
      // Predicated region
      $region25: #{patnet_forward.11} parent=15 // pred_check
        %p193 = pneg %p108
      $region26: #{patnet_forward.11} parent=15 // pred_check_branch
        %195 = sbr.rel (%p193) target = $region28
      $region27: #{patnet_forward.11} parent=15 // pred_region
        %p196 = scmp.lt.s32.totalorder %s16, 3
        %s197 = scalar_select %p196, %s16, 3
        %p198 = scmp.lt.s32.totalorder %s17, 1
        %s199 = scalar_select %p198, %s17, 1
        %s200 = smul.addr %s197, 2
        %s201 = sadd.s32 %s199, %s200
        %s202 = scalar_lea.vmem %s2, %s201
      $region28: #{patnet_forward.11} parent=15 // pred_fallthru
        _
    $region16: #{patnet_forward.11} parent=5 // pred_fallthru
      _
    %p203 = scmp.le.s32.totalorder 1, %s9
    %p204 = scmp.lt.s32.totalorder %s9, 9
    %p205 = pnand %p203, %p204
    %p206 = pneg %p205
    // Predicated region
    $region29: #{patnet_forward.11} parent=5 // pred_check
      _
    $region30: #{patnet_forward.11} parent=5 // pred_check_branch
      %208 = sbr.rel (%p205) target = $region32
    $region31: #{patnet_forward.11} parent=5 // pred_region
      %s209 = ssub.s32 %s9, 1
      %s210 = smul.u32 2, %s21
      %p211 = scmp.lt.s32.totalorder %s19, 3
      %s212 = scalar_select %p211, %s19, 3
      %p213 = scmp.lt.s32.totalorder %s20, 1
      %s214 = scalar_select %p213, %s20, 1
      %p215 = scmp.lt.s32.totalorder %s210, 1
      %s216 = scalar_select %p215, %s210, 1
      %s217 = smul.addr %s216, 4
      %s218 = smul.addr %s214, 8
      %s219 = sadd.s32 %s217, %s218
      %s220 = smul.addr %s212, 16
      %s221 = sadd.s32 %s219, %s220
      %s222 = smul.addr %s221, 4
      %s223 = scalar_lea.vmem %s0, %s222
      %p224 = pneg %p58
      %p225 = pneg %p55
      %p226 = scmp.lt.s32.totalorder %s19, 3
      %s227 = scalar_select %p226, %s19, 3
      %p228 = scmp.lt.s32.totalorder %s20, 1
      %s229 = scalar_select %p228, %s20, 1
      %s230 = smul.addr %s229, 4
      %s231 = smul.addr %s227, 8
      %s232 = sadd.s32 %s230, %s231
      %s233 = smul.addr %s232, 2
      %s234 = scalar_lea.vmem %s1, %s233
      %p235 = pneg %p86
      %p236 = pneg %p83
      %p237 = scmp.lt.s32.totalorder %s19, 3
      %s238 = scalar_select %p237, %s19, 3
      %p239 = scmp.lt.s32.totalorder %s20, 1
      %s240 = scalar_select %p239, %s20, 1
      %s241 = smul.addr %s238, 2
      %s242 = sadd.s32 %s240, %s241
      %s243 = scalar_lea.vmem %s2, %s242
      %p244 = pneg %p114
      %p245 = pneg %p111
      %p246 = pneg %p144
      %p247 = pneg %p141
      %s248 = smul.u32 2, %s21
      %p249 = scmp.lt.s32.totalorder %s19, 3
      %s250 = scalar_select %p249, %s19, 3
      %p251 = scmp.lt.s32.totalorder %s20, 1
      %s252 = scalar_select %p251, %s20, 1
      %p253 = scmp.lt.s32.totalorder %s248, 1
      %s254 = scalar_select %p253, %s248, 1
      %s255 = smul.addr %s252, 2
      %s256 = sadd.s32 %s254, %s255
      %s257 = smul.addr %s250, 4
      %s258 = sadd.s32 %s256, %s257
      %s259 = smul.addr %s258, 4
      %s260 = scalar_lea.vmem %s3, %s259
      %s261 = smul.u32 2, %s21
      %p262 = scmp.lt.s32.totalorder %s19, 3
      %s263 = scalar_select %p262, %s19, 3
      %p264 = scmp.lt.s32.totalorder %s20, 1
      %s265 = scalar_select %p264, %s20, 1
      %p266 = scmp.lt.s32.totalorder %s261, 1
      %s267 = scalar_select %p266, %s261, 1
      %s268 = smul.addr %s267, 4
      %s269 = smul.addr %s265, 8
      %s270 = sadd.s32 %s268, %s269
      %s271 = smul.addr %s263, 16
      %s272 = sadd.s32 %s270, %s271
      %s273 = smul.addr %s272, 4
      %s274 = scalar_lea.vmem %s0, %s273
      %s275 = smul.u32 2, %s21
      %p276 = scmp.lt.s32.totalorder %s19, 3
      %s277 = scalar_select %p276, %s19, 3
      %p278 = scmp.lt.s32.totalorder %s20, 1
      %s279 = scalar_select %p278, %s20, 1
      %s280 = smul.addr %s279, 4
      %s281 = smul.addr %s277, 8
      %s282 = sadd.s32 %s280, %s281
      %s283 = smul.addr %s282, 2
      %s284 = scalar_lea.vmem %s1, %s283
      %p285 = scmp.lt.s32.totalorder %s19, 3
      %s286 = scalar_select %p285, %s19, 3
      %p287 = scmp.lt.s32.totalorder %s20, 1
      %s288 = scalar_select %p287, %s20, 1
      %s289 = smul.addr %s286, 2
      %s290 = sadd.s32 %s288, %s289
      %s291 = scalar_lea.vmem %s2, %s290
      %s292 = smul.u32 2, %s21
      %p293 = scmp.lt.s32.totalorder %s19, 3
      %s294 = scalar_select %p293, %s19, 3
      %p295 = scmp.lt.s32.totalorder %s20, 1
      %s296 = scalar_select %p295, %s20, 1
      %p297 = scmp.lt.s32.totalorder %s292, 1
      %s298 = scalar_select %p297, %s292, 1
      %s299 = smul.addr %s296, 2
      %s300 = sadd.s32 %s298, %s299
      %s301 = smul.addr %s294, 4
      %s302 = sadd.s32 %s300, %s301
      %s303 = smul.addr %s302, 4
      %s304 = scalar_lea.vmem %s3, %s303
      %s305 = smul.u32 2, %s21
      %v307 = vld [vmem:[%s274] sm:$0xff]
      %v308 = vld [vmem:[%s274 + $0x8] sm:$0xff]
      %v309 = vld [vmem:[%s274 + $0x10] sm:$0xff]
      %v310 = vld [vmem:[%s274 + $0x18] sm:$0xff]
      %v311 = vld [vmem:[%s284] sm:$0xff]
      %v312 = vld [vmem:[%s291] sm:$0x1]
      %v317 = vunpack.c.l.b16 %v307
      %v318 = vunpack.c.h.b16 %v307
      %v319 = vunpack.c.l.b16 %v308
      %v320 = vunpack.c.h.b16 %v308
      %v321 = vunpack.c.l.b16 %v309
      %v322 = vunpack.c.h.b16 %v309
      %v323 = vunpack.c.l.b16 %v310
      %v324 = vunpack.c.h.b16 %v310
      %v325 = vpack.c.b16 %v321, %v317
      %v326 = vpack.c.b16 %v322, %v318
      %v327 = vpack.c.b16 %v323, %v319
      %v328 = vpack.c.b16 %v324, %v320
      %v334 = vcombine.high %v311, %v311
      %v336 = vunpack.c.l.s4 1983009808
      %v337 = vunpack.c.0.s8 %v336
      %v338 = vlaneseq
      %v339 = vshrl.u32 %v338, 7
      %v340 = vsub.s32 %v337, %v339
      %v341 = vrot.slane %v311, %v340
      %v343 = vunpack.c.l.s4 1983009808
      %v344 = vunpack.c.0.s8 %v343
      %v345 = vlaneseq
      %v346 = vshrl.u32 %v345, 7
      %v347 = vsub.s32 %v344, %v346
      %v348 = vrot.slane %v334, %v347
      %v349 = vcombine.high %v341, %v341
      %v350 = vcombine.high %v348, %v348
      %355 = vmatprep.subr.bf16.mxu0 0
      %356 = vmatpush1.bf16.xpose.msra.mxu0 0
      %357 = vmatprep.subr.bf16.mxu0 0
      %358 = vmatpush1.bf16.xpose.msra.mxu0 0
      %359 = vmatprep.subr.bf16.mxu0 0
      %360 = vmatpush1.bf16.xpose.msra.mxu0 0
      %361 = vmatprep.subr.bf16.mxu0 0
      %362 = vmatpush1.bf16.xpose.msra.mxu0 0
      %363 = vmatprep.subr.bf16.mxu0 0
      %364 = vmatpush1.bf16.xpose.msra.mxu0 0
      %365 = vmatprep.subr.bf16.mxu0 0
      %366 = vmatpush1.bf16.xpose.msra.mxu0 0
      %367 = vmatprep.subr.bf16.mxu0 0
      %368 = vmatpush1.bf16.xpose.msra.mxu0 0
      %369 = vmatprep.subr.bf16.mxu0 %v349
      %370 = vmatpush1.bf16.xpose.msra.mxu0 %v341
      %371 = vmatprep.subr.bf16.mxu0 0
      %372 = vmatpush2.bf16.xpose.msra.mxu0 0
      %373 = vmatprep.subr.bf16.mxu0 0
      %374 = vmatpush2.bf16.xpose.msra.mxu0 0
      %375 = vmatprep.subr.bf16.mxu0 0
      %376 = vmatpush2.bf16.xpose.msra.mxu0 0
      %377 = vmatprep.subr.bf16.mxu0 0
      %378 = vmatpush2.bf16.xpose.msra.mxu0 0
      %379 = vmatprep.subr.bf16.mxu0 0
      %380 = vmatpush2.bf16.xpose.msra.mxu0 0
      %381 = vmatprep.subr.bf16.mxu0 0
      %382 = vmatpush2.bf16.xpose.msra.mxu0 0
      %383 = vmatprep.subr.bf16.mxu0 0
      %384 = vmatpush2.bf16.xpose.msra.mxu0 0
      %385 = vmatprep.subr.bf16.mxu0 0
      %386 = vmatpush2.bf16.xpose.msra.mxu0 0
      %387 = vmatprep.mubr.bf16.mxu0 %v326
      %388 = vmatmul.mubr.bf16.gmra.mxu0 %v325
      %v389 = vpop.f32.mrf.mxu0
      %v390 = vadd.f32 0.0, %v389
      %v391 = vpop.f32.mrf.mxu0
      %v392 = vpop.f32.mrf.mxu0
      %v393 = vadd.f32 0.0, %v392
      %v394 = vpop.f32.mrf.mxu0
      %395 = vdwg.mxu0
      %396 = vmatprep.subr.bf16.mxu0 0
      %397 = vmatpush1.bf16.xpose.msra.mxu0 0
      %398 = vmatprep.subr.bf16.mxu0 0
      %399 = vmatpush1.bf16.xpose.msra.mxu0 0
      %400 = vmatprep.subr.bf16.mxu0 0
      %401 = vmatpush1.bf16.xpose.msra.mxu0 0
      %402 = vmatprep.subr.bf16.mxu0 0
      %403 = vmatpush1.bf16.xpose.msra.mxu0 0
      %404 = vmatprep.subr.bf16.mxu0 0
      %405 = vmatpush1.bf16.xpose.msra.mxu0 0
      %406 = vmatprep.subr.bf16.mxu0 0
      %407 = vmatpush1.bf16.xpose.msra.mxu0 0
      %408 = vmatprep.subr.bf16.mxu0 0
      %409 = vmatpush1.bf16.xpose.msra.mxu0 0
      %410 = vmatprep.subr.bf16.mxu0 %v350
      %411 = vmatpush1.bf16.xpose.msra.mxu0 %v348
      %412 = vmatprep.subr.bf16.mxu0 0
      %413 = vmatpush2.bf16.xpose.msra.mxu0 0
      %414 = vmatprep.subr.bf16.mxu0 0
      %415 = vmatpush2.bf16.xpose.msra.mxu0 0
      %416 = vmatprep.subr.bf16.mxu0 0
      %417 = vmatpush2.bf16.xpose.msra.mxu0 0
      %418 = vmatprep.subr.bf16.mxu0 0
      %419 = vmatpush2.bf16.xpose.msra.mxu0 0
      %420 = vmatprep.subr.bf16.mxu0 0
      %421 = vmatpush2.bf16.xpose.msra.mxu0 0
      %422 = vmatprep.subr.bf16.mxu0 0
      %423 = vmatpush2.bf16.xpose.msra.mxu0 0
      %424 = vmatprep.subr.bf16.mxu0 0
      %425 = vmatpush2.bf16.xpose.msra.mxu0 0
      %426 = vmatprep.subr.bf16.mxu0 0
      %427 = vmatpush2.bf16.xpose.msra.mxu0 0
      %428 = vmatprep.mubr.bf16.mxu0 %v328
      %429 = vmatmul.mubr.bf16.gmra.mxu0 %v327
      %v430 = vpop.f32.mrf.mxu0
      %v431 = vadd.f32 %v390, %v430
      %v432 = vpop.f32.mrf.mxu0
      %v433 = vpop.f32.mrf.mxu0
      %v434 = vadd.f32 %v393, %v433
      %v435 = vpop.f32.mrf.mxu0
      %436 = vdwg.mxu0
      %439 = vrot.lane.b32.xlu0 %v431, 126
      %v440 = vpop.permute.xlu0 %439
      %441 = vrot.lane.b32.xlu0 %v434, 126
      %v442 = vpop.permute.xlu0 %441
      %v445 = vmul.f32 %v431, %v440
      %v446 = vmul.f32 %v434, %v442
      %449 = vrot.lane.b32.xlu0 %v445, 127
      %v450 = vpop.permute.xlu0 %449
      %451 = vrot.lane.b32.xlu0 %v446, 127
      %v452 = vpop.permute.xlu0 %451
      %v455 = vadd.f32 %v445, %v450
      %v456 = vadd.f32 %v446, %v452
      %v457 = vmax.f32 %v455, 0.0
      %v458 = vmax.f32 %v456, 0.0
      %v459 = vrsqrt.pop %v457
      %v460 = vmul.f32 %v457, %v459
      %vm461 = vcmp.eq.f32.partialorder %v457, inf
      %v462 = vsel %vm461, %v457, %v460
      %vm463 = vcmp.eq.f32.partialorder %v457, 0.0
      %v464 = vand.u32 %v457, 2147483648
      %v465 = vsel %vm463, %v464, %v462
      %v466 = vrsqrt.pop %v458
      %v467 = vmul.f32 %v458, %v466
      %vm468 = vcmp.eq.f32.partialorder %v458, inf
      %v469 = vsel %vm468, %v458, %v467
      %vm470 = vcmp.eq.f32.partialorder %v458, 0.0
      %v471 = vand.u32 %v458, 2147483648
      %v472 = vsel %vm470, %v471, %v469
      %v473 = vadd.f32 %v465, 1e-05
      %v474 = vadd.f32 %v472, 1e-05
      %v475 = vrcp.pop %v473
      %v476 = vrcp.pop %v474
      %478 = vset.pattern.permute.xlu0 0
      %479 = vperm.xlu0 %478, %v475
      %v480 = vpop.permute.xlu0 %479
      %483 = vset.pattern.permute.xlu0 0
      %484 = vperm.xlu0 %483, %v476
      %v485 = vpop.permute.xlu0 %484
      %v487 = vmul.f32 %v431, %v480
      %v488 = vmul.f32 %v434, %v485
      %v489 = vpack.c.bf16 %v488, %v487
      %491 = vrot.lane.b32.xlu0 %v489, 126
      %v492 = vpop.permute.xlu0 %491
      %vm493 = vcmask 15360
      %v495 = vsel %vm493, %v492, 0
      %vm497 = vcmask 1040384
      %v499 = vsel %vm497, %v312, 0
      %501 = vmatprep.subr.bf16.mxu0 0
      %502 = vmatpush1.bf16.msra.mxu0 0
      %503 = vmatprep.subr.bf16.mxu0 0
      %504 = vmatpush1.bf16.msra.mxu0 0
      %505 = vmatprep.subr.bf16.mxu0 0
      %506 = vmatpush1.bf16.msra.mxu0 0
      %507 = vmatprep.subr.bf16.mxu0 0
      %508 = vmatpush1.bf16.msra.mxu0 0
      %509 = vmatprep.subr.bf16.mxu0 0
      %510 = vmatpush1.bf16.msra.mxu0 0
      %511 = vmatprep.subr.bf16.mxu0 0
      %512 = vmatpush1.bf16.msra.mxu0 0
      %513 = vmatprep.subr.bf16.mxu0 0
      %514 = vmatpush1.bf16.msra.mxu0 0
      %515 = vmatprep.subr.bf16.mxu0 0
      %516 = vmatpush1.bf16.msra.mxu0 %v499
      %517 = vmatprep.subr.bf16.mxu0 0
      %518 = vmatpush2.bf16.msra.mxu0 0
      %519 = vmatprep.subr.bf16.mxu0 0
      %520 = vmatpush2.bf16.msra.mxu0 0
      %521 = vmatprep.subr.bf16.mxu0 0
      %522 = vmatpush2.bf16.msra.mxu0 0
      %523 = vmatprep.subr.bf16.mxu0 0
      %524 = vmatpush2.bf16.msra.mxu0 0
      %525 = vmatprep.subr.bf16.mxu0 0
      %526 = vmatpush2.bf16.msra.mxu0 0
      %527 = vmatprep.subr.bf16.mxu0 0
      %528 = vmatpush2.bf16.msra.mxu0 0
      %529 = vmatprep.subr.bf16.mxu0 0
      %530 = vmatpush2.bf16.msra.mxu0 0
      %531 = vmatprep.subr.bf16.mxu0 0
      %532 = vmatpush2.bf16.msra.mxu0 0
      %533 = vmatprep.mubr.bf16.mxu0 0
      %534 = vmatmul.mubr.bf16.gmra.mxu0 %v495
      %v535 = vpop.f32.mrf.mxu0
      %v536 = vadd.f32 0.0, %v535
      %v537 = vpop.f32.mrf.mxu0
      %v538 = vpop.f32.mrf.mxu0
      %v539 = vadd.f32 0.0, %v538
      %v540 = vpop.f32.mrf.mxu0
      %541 = vdwg.mxu0
      %v542 = vmax.f32 %v536, 0.0
      %v543 = vmax.f32 %v539, 0.0
      %v544 = vpack.c.bf16 %v543, %v542
      %v546 = vunpack.c.l.b16 %v544
      %v547 = vunpack.c.h.b16 %v544
      %v548 = vpack.c.b16 %v546, %v546
      %v549 = vpack.c.b16 %v547, %v547
      %vm552 = vcmask 125952
      %553 = vst.msk [vmem:[%s304] sm:$0xf] %vm552, %v548
      %554 = vst.msk [vmem:[%s304 + $0x4] sm:$0xf] %vm552, %v549
      %s555 = smul.u32 2, %s21
      %p556 = scmp.lt.s32.totalorder %s19, 3
      %s557 = scalar_select %p556, %s19, 3
      %p558 = scmp.lt.s32.totalorder %s20, 1
      %s559 = scalar_select %p558, %s20, 1
      %p560 = scmp.lt.s32.totalorder %s555, 1
      %s561 = scalar_select %p560, %s555, 1
      %s562 = smul.addr %s559, 2
      %s563 = sadd.s32 %s561, %s562
      %s564 = smul.addr %s557, 4
      %s565 = sadd.s32 %s563, %s564
      %s566 = smul.addr %s565, 4
      %s567 = scalar_lea.vmem %s3, %s566
      // Predicated region
      $region33: #{patnet_forward.11} parent=31 // pred_check
        %p568 = pneg %p141
      $region34: #{patnet_forward.11} parent=31 // pred_check_branch
        %570 = sbr.rel (%p568) target = $region36
      $region35: #{patnet_forward.11} parent=31 // pred_region
        %s571 = smul.u32 2, %s21
      $region36: #{patnet_forward.11} parent=31 // pred_fallthru
        _
    $region32: #{patnet_forward.11} parent=5 // pred_fallthru
      _
    %p572 = scmp.le.s32.totalorder 2, %s9
    // Predicated region
    $region37: #{patnet_forward.11} parent=5 // pred_check
      %p573 = pneg %p572
    $region38: #{patnet_forward.11} parent=5 // pred_check_branch
      %575 = sbr.rel (%p573) target = $region40
    $region39: #{patnet_forward.11} parent=5 // pred_region
      %s576 = ssub.s32 %s9, 2
      // Predicated region
      $region41: #{patnet_forward.11} parent=39 // pred_check
        %p577 = pneg %p147
      $region42: #{patnet_forward.11} parent=39 // pred_check_branch
        %579 = sbr.rel (%p577) target = $region44
      $region43: #{patnet_forward.11} parent=39 // pred_region
        %s580 = smul.u32 2, %s24
        %p581 = scmp.lt.s32.totalorder %s22, 3
        %s582 = scalar_select %p581, %s22, 3
        %p583 = scmp.lt.s32.totalorder %s23, 1
        %s584 = scalar_select %p583, %s23, 1
        %p585 = scmp.lt.s32.totalorder %s580, 1
        %s586 = scalar_select %p585, %s580, 1
        %s587 = smul.addr %s584, 2
        %s588 = sadd.s32 %s586, %s587
        %s589 = smul.addr %s582, 4
        %s590 = sadd.s32 %s588, %s589
        %s591 = smul.addr %s590, 4
        %s592 = scalar_lea.vmem %s3, %s591
      $region44: #{patnet_forward.11} parent=39 // pred_fallthru
        _
    $region40: #{patnet_forward.11} parent=5 // pred_fallthru
      _
  $region6: #{patnet_forward.11} parent=0 // loop_footer
    %s13 = sadd.s32 1, %s9
  $region7: #{patnet_forward.11} parent=0 // loop_footer_branch
    %8 = sbr.rel target = $region3
  $region8: #{patnet_forward.11} parent=0 // loop_exit
    _

// kernel: patnet_forward.10
$region0: #{patnet_forward.10}
  #allocation0 [shape = 'u32[]', space=smem, size = 0x4, offset = 0x4, fixed_abs, tag = 'smem constant byte address 0x4 - core index']
  #allocation1 [shape = 'u32[144,128]{1,0:T(1,128)}', space=vmem, size = 0x12000, scoped, tag = 'internal scratch']
  %s0 = inlined_call_operand.vmem [shape: bf16[4,2,16,512], index: 0, kind: input, shape index: {}]
  %s1 = inlined_call_operand.vmem [shape: f32[2,1,16], index: 1, kind: input, shape index: {}]
  %s2 = inlined_call_operand.vmem [shape: bf16[4,2,4,512], index: 2, kind: input, shape index: {}]
  %s3 = inlined_call_operand.vmem [shape: bf16[4,2,2,16], index: 3, kind: output, shape index: {}]
  %s4 = sld [smem:[#allocation0]]
  $region45: #{patnet_forward.10} parent=0
    _
  %s6 = ssub.s32 1, %s4
  %s7 = scalar_select 0, %s6, %s4
  loop: start=0, step=1, limit=10
  $region2: #{patnet_forward.10} parent=0 // loop_pre_header
    _
  $region3: #{patnet_forward.10} parent=0 // loop_header
    %s9 = sphi 0, %s13
    %p10 = scmp.ge.s32.totalorder %s9, 10
    %s16 = sphi 0, %s35
    %s17 = sphi 0, %s31
    %s18 = sphi 0, %s27
    %s19 = sphi 0, %s16
    %s20 = sphi 0, %s17
    %s21 = sphi 0, %s18
    %s22 = sphi 0, %s19
    %s23 = sphi 0, %s20
    %s24 = sphi 0, %s21
    %s42 = sphi 0, %s44
    %s45 = sphi 0, %s42
    %s46 = sphi 0, %s45
    %s62 = sphi 0, %s46
    %s70 = sphi 0, %s72
    %s73 = sphi 0, %s70
    %s74 = sphi 0, %s73
    %s90 = sphi 0, %s74
    %s98 = sphi 0, %s100
    %s101 = sphi 0, %s98
    %s102 = sphi 0, %s101
    %s118 = sphi 0, %s102
    %s128 = sphi 0, %s130
    %s131 = sphi 0, %s128
    %s132 = sphi 0, %s131
    %s148 = sphi 0, %s132
  $region4: #{patnet_forward.10} parent=0 // loop_header_branch
    %12 = sbr.rel (%p10) target = $region8
  $region5: #{patnet_forward.10} parent=0 // loop_body
    %s14 = ssub.s32 %s9, 1
    %s15 = ssub.s32 %s9, 2
    %s25 = sadd.s32 1, %s18
    %p26 = scmp.ge.s32.totalorder %s25, 1
    %s27 = scalar_select %p26, 0, %s25
    %s28 = sadd.s32 1, %s17
    %s29 = scalar_select %p26, %s28, %s17
    %p30 = scmp.ge.s32.totalorder %s29, 2
    %s31 = scalar_select %p30, 0, %s29
    %s32 = sadd.s32 1, %s16
    %s33 = scalar_select %p30, %s32, %s16
    %p34 = scmp.ge.s32.totalorder %s33, 4
    %s35 = scalar_select %p34, 0, %s33
    %s36 = ssub.s32 %s16, %s35
    %s37 = ssub.s32 %s17, %s31
    %s38 = sor.u32 %s36, %s37
    %s39 = ssub.s32 %s18, %s27
    %s40 = sor.u32 %s38, %s39
    %p41 = scmp.eq.s32.totalorder %s40, 0
    %s43 = sadd.s32 %s42, 1
    %s44 = scalar_select %p41, %s42, %s43
    %p47 = pneg %p41
    %p48 = scmp.eq.s32.totalorder %s9, 7
    %p49 = por %p47, %p48
    %p50 = scmp.ne.s32.totalorder %s42, %s45
    %p51 = scmp.eq.s32.totalorder %s9, 0
    %p52 = por %p50, %p51
    %p53 = scmp.ne.s32.totalorder %s42, %s45
    %p54 = scmp.eq.s32.totalorder %s14, 7
    %p55 = por %p53, %p54
    %p56 = scmp.ne.s32.totalorder %s45, %s46
    %p57 = scmp.eq.s32.totalorder %s14, 0
    %p58 = por %p56, %p57
    %p59 = scmp.ne.s32.totalorder %s45, %s46
    %p60 = scmp.eq.s32.totalorder %s15, 7
    %p61 = por %p59, %p60
    %p63 = scmp.ne.s32.totalorder %s46, %s62
    %p64 = scmp.eq.s32.totalorder %s15, 0
    %p65 = por %p63, %p64
    %s66 = ssub.s32 %s17, %s31
    %s67 = ssub.s32 %s18, %s27
    %s68 = sor.u32 %s66, %s67
    %p69 = scmp.eq.s32.totalorder %s68, 0
    %s71 = sadd.s32 %s70, 1
    %s72 = scalar_select %p69, %s70, %s71
    %p75 = pneg %p69
    %p76 = scmp.eq.s32.totalorder %s9, 7
    %p77 = por %p75, %p76
    %p78 = scmp.ne.s32.totalorder %s70, %s73
    %p79 = scmp.eq.s32.totalorder %s9, 0
    %p80 = por %p78, %p79
    %p81 = scmp.ne.s32.totalorder %s70, %s73
    %p82 = scmp.eq.s32.totalorder %s14, 7
    %p83 = por %p81, %p82
    %p84 = scmp.ne.s32.totalorder %s73, %s74
    %p85 = scmp.eq.s32.totalorder %s14, 0
    %p86 = por %p84, %p85
    %p87 = scmp.ne.s32.totalorder %s73, %s74
    %p88 = scmp.eq.s32.totalorder %s15, 7
    %p89 = por %p87, %p88
    %p91 = scmp.ne.s32.totalorder %s74, %s90
    %p92 = scmp.eq.s32.totalorder %s15, 0
    %p93 = por %p91, %p92
    %s94 = ssub.s32 %s16, %s35
    %s95 = ssub.s32 %s17, %s31
    %s96 = sor.u32 %s94, %s95
    %p97 = scmp.eq.s32.totalorder %s96, 0
    %s99 = sadd.s32 %s98, 1
    %s100 = scalar_select %p97, %s98, %s99
    %p103 = pneg %p97
    %p104 = scmp.eq.s32.totalorder %s9, 7
    %p105 = por %p103, %p104
    %p106 = scmp.ne.s32.totalorder %s98, %s101
    %p107 = scmp.eq.s32.totalorder %s9, 0
    %p108 = por %p106, %p107
    %p109 = scmp.ne.s32.totalorder %s98, %s101
    %p110 = scmp.eq.s32.totalorder %s14, 7
    %p111 = por %p109, %p110
    %p112 = scmp.ne.s32.totalorder %s101, %s102
    %p113 = scmp.eq.s32.totalorder %s14, 0
    %p114 = por %p112, %p113
    %p115 = scmp.ne.s32.totalorder %s101, %s102
    %p116 = scmp.eq.s32.totalorder %s15, 7
    %p117 = por %p115, %p116
    %p119 = scmp.ne.s32.totalorder %s102, %s118
    %p120 = scmp.eq.s32.totalorder %s15, 0
    %p121 = por %p119, %p120
    %s122 = ssub.s32 %s16, %s35
    %s123 = ssub.s32 %s17, %s31
    %s124 = sor.u32 %s122, %s123
    %s125 = ssub.s32 %s18, %s27
    %s126 = sor.u32 %s124, %s125
    %p127 = scmp.eq.s32.totalorder %s126, 0
    %s129 = sadd.s32 %s128, 1
    %s130 = scalar_select %p127, %s128, %s129
    %p133 = pneg %p127
    %p134 = scmp.eq.s32.totalorder %s9, 7
    %p135 = por %p133, %p134
    %p136 = scmp.ne.s32.totalorder %s128, %s131
    %p137 = scmp.eq.s32.totalorder %s9, 0
    %p138 = por %p136, %p137
    %p139 = scmp.ne.s32.totalorder %s128, %s131
    %p140 = scmp.eq.s32.totalorder %s14, 7
    %p141 = por %p139, %p140
    %p142 = scmp.ne.s32.totalorder %s131, %s132
    %p143 = scmp.eq.s32.totalorder %s14, 0
    %p144 = por %p142, %p143
    %p145 = scmp.ne.s32.totalorder %s131, %s132
    %p146 = scmp.eq.s32.totalorder %s15, 7
    %p147 = por %p145, %p146
    %p149 = scmp.ne.s32.totalorder %s132, %s148
    %p150 = scmp.eq.s32.totalorder %s15, 0
    %p151 = por %p149, %p150
    %p152 = scmp.le.s32.totalorder 1, %s9
    %p153 = scmp.lt.s32.totalorder %s9, 9
    %p154 = pnand %p152, %p153
    %p155 = pneg %p154
    // Predicated region
    $region9: #{patnet_forward.10} parent=5 // pred_check
      _
    $region10: #{patnet_forward.10} parent=5 // pred_check_branch
      %157 = sbr.rel (%p154) target = $region12
    $region11: #{patnet_forward.10} parent=5 // pred_region
      %s158 = ssub.s32 %s9, 1
    $region12: #{patnet_forward.10} parent=5 // pred_fallthru
      _
    %p159 = scmp.lt.s32.totalorder %s9, 8
    // Predicated region
    $region13: #{patnet_forward.10} parent=5 // pred_check
      %p160 = pneg %p159
    $region14: #{patnet_forward.10} parent=5 // pred_check_branch
      %162 = sbr.rel (%p160) target = $region16
    $region15: #{patnet_forward.10} parent=5 // pred_region
      // Predicated region
      $region17: #{patnet_forward.10} parent=15 // pred_check
        %p163 = pneg %p52
      $region18: #{patnet_forward.10} parent=15 // pred_check_branch
        %165 = sbr.rel (%p163) target = $region20
      $region19: #{patnet_forward.10} parent=15 // pred_region
        %s166 = smul.u32 2, %s18
        %p167 = scmp.lt.s32.totalorder %s16, 3
        %s168 = scalar_select %p167, %s16, 3
        %p169 = scmp.lt.s32.totalorder %s17, 1
        %s170 = scalar_select %p169, %s17, 1
        %p171 = scmp.lt.s32.totalorder %s166, 1
        %s172 = scalar_select %p171, %s166, 1
        %s173 = smul.addr %s172, 4
        %s174 = smul.addr %s170, 8
        %s175 = sadd.s32 %s173, %s174
        %s176 = smul.addr %s168, 16
        %s177 = sadd.s32 %s175, %s176
        %s178 = smul.addr %s177, 4
        %s179 = scalar_lea.vmem %s0, %s178
        %s180 = smul.u32 2, %s18
      $region20: #{patnet_forward.10} parent=15 // pred_fallthru
        _
      // Predicated region
      $region21: #{patnet_forward.10} parent=15 // pred_check
        %p181 = pneg %p80
      $region22: #{patnet_forward.10} parent=15 // pred_check_branch
        %183 = sbr.rel (%p181) target = $region24
      $region23: #{patnet_forward.10} parent=15 // pred_region
        %p184 = scmp.lt.s32.totalorder %s17, 1
        %s185 = scalar_select %p184, %s17, 1
        %p186 = scmp.lt.s32.totalorder %s18, 0
        %s187 = scalar_select %p186, %s18, 0
        %s188 = sadd.s32 %s187, %s185
        %s189 = scalar_lea.vmem %s1, %s188
      $region24: #{patnet_forward.10} parent=15 // pred_fallthru
        _
      // Predicated region
      $region25: #{patnet_forward.10} parent=15 // pred_check
        %p190 = pneg %p108
      $region26: #{patnet_forward.10} parent=15 // pred_check_branch
        %192 = sbr.rel (%p190) target = $region28
      $region27: #{patnet_forward.10} parent=15 // pred_region
        %p193 = scmp.lt.s32.totalorder %s16, 3
        %s194 = scalar_select %p193, %s16, 3
        %p195 = scmp.lt.s32.totalorder %s17, 1
        %s196 = scalar_select %p195, %s17, 1
        %s197 = smul.addr %s196, 4
        %s198 = smul.addr %s194, 8
        %s199 = sadd.s32 %s197, %s198
        %s200 = smul.addr %s199, 2
        %s201 = scalar_lea.vmem %s2, %s200
      $region28: #{patnet_forward.10} parent=15 // pred_fallthru
        _
    $region16: #{patnet_forward.10} parent=5 // pred_fallthru
      _
    %p202 = scmp.le.s32.totalorder 1, %s9
    %p203 = scmp.lt.s32.totalorder %s9, 9
    %p204 = pnand %p202, %p203
    %p205 = pneg %p204
    // Predicated region
    $region29: #{patnet_forward.10} parent=5 // pred_check
      _
    $region30: #{patnet_forward.10} parent=5 // pred_check_branch
      %207 = sbr.rel (%p204) target = $region32
    $region31: #{patnet_forward.10} parent=5 // pred_region
      %s208 = ssub.s32 %s9, 1
      %s209 = smul.u32 2, %s21
      %p210 = scmp.lt.s32.totalorder %s19, 3
      %s211 = scalar_select %p210, %s19, 3
      %p212 = scmp.lt.s32.totalorder %s20, 1
      %s213 = scalar_select %p212, %s20, 1
      %p214 = scmp.lt.s32.totalorder %s209, 1
      %s215 = scalar_select %p214, %s209, 1
      %s216 = smul.addr %s215, 4
      %s217 = smul.addr %s213, 8
      %s218 = sadd.s32 %s216, %s217
      %s219 = smul.addr %s211, 16
      %s220 = sadd.s32 %s218, %s219
      %s221 = smul.addr %s220, 4
      %s222 = scalar_lea.vmem %s0, %s221
      %p223 = pneg %p58
      %p224 = pneg %p55
      %p225 = scmp.lt.s32.totalorder %s20, 1
      %s226 = scalar_select %p225, %s20, 1
      %p227 = scmp.lt.s32.totalorder %s21, 0
      %s228 = scalar_select %p227, %s21, 0
      %s229 = sadd.s32 %s228, %s226
      %s230 = scalar_lea.vmem %s1, %s229
      %p231 = pneg %p86
      %p232 = pneg %p83
      %p233 = scmp.lt.s32.totalorder %s19, 3
      %s234 = scalar_select %p233, %s19, 3
      %p235 = scmp.lt.s32.totalorder %s20, 1
      %s236 = scalar_select %p235, %s20, 1
      %s237 = smul.addr %s236, 4
      %s238 = smul.addr %s234, 8
      %s239 = sadd.s32 %s237, %s238
      %s240 = smul.addr %s239, 2
      %s241 = scalar_lea.vmem %s2, %s240
      %p242 = pneg %p114
      %p243 = pneg %p111
      %p244 = pneg %p144
      %p245 = pneg %p141
      %p246 = scmp.lt.s32.totalorder %s19, 3
      %s247 = scalar_select %p246, %s19, 3
      %p248 = scmp.lt.s32.totalorder %s20, 1
      %s249 = scalar_select %p248, %s20, 1
      %p250 = scmp.lt.s32.totalorder %s21, 0
      %s251 = scalar_select %p250, %s21, 0
      %s252 = sadd.s32 %s251, %s249
      %s253 = smul.addr %s247, 2
      %s254 = sadd.s32 %s252, %s253
      %s255 = scalar_lea.vmem %s3, %s254
      %s256 = smul.u32 2, %s21
      %p257 = scmp.lt.s32.totalorder %s19, 3
      %s258 = scalar_select %p257, %s19, 3
      %p259 = scmp.lt.s32.totalorder %s20, 1
      %s260 = scalar_select %p259, %s20, 1
      %p261 = scmp.lt.s32.totalorder %s256, 1
      %s262 = scalar_select %p261, %s256, 1
      %s263 = smul.addr %s262, 4
      %s264 = smul.addr %s260, 8
      %s265 = sadd.s32 %s263, %s264
      %s266 = smul.addr %s258, 16
      %s267 = sadd.s32 %s265, %s266
      %s268 = smul.addr %s267, 4
      %s269 = scalar_lea.vmem %s0, %s268
      %s270 = smul.u32 2, %s21
      %p271 = scmp.lt.s32.totalorder %s20, 1
      %s272 = scalar_select %p271, %s20, 1
      %p273 = scmp.lt.s32.totalorder %s21, 0
      %s274 = scalar_select %p273, %s21, 0
      %s275 = sadd.s32 %s274, %s272
      %s276 = scalar_lea.vmem %s1, %s275
      %p277 = scmp.lt.s32.totalorder %s19, 3
      %s278 = scalar_select %p277, %s19, 3
      %p279 = scmp.lt.s32.totalorder %s20, 1
      %s280 = scalar_select %p279, %s20, 1
      %s281 = smul.addr %s280, 4
      %s282 = smul.addr %s278, 8
      %s283 = sadd.s32 %s281, %s282
      %s284 = smul.addr %s283, 2
      %s285 = scalar_lea.vmem %s2, %s284
      %p286 = scmp.lt.s32.totalorder %s19, 3
      %s287 = scalar_select %p286, %s19, 3
      %p288 = scmp.lt.s32.totalorder %s20, 1
      %s289 = scalar_select %p288, %s20, 1
      %p290 = scmp.lt.s32.totalorder %s21, 0
      %s291 = scalar_select %p290, %s21, 0
      %s292 = sadd.s32 %s291, %s289
      %s293 = smul.addr %s287, 2
      %s294 = sadd.s32 %s292, %s293
      %s295 = scalar_lea.vmem %s3, %s294
      %v297 = vld [vmem:[%s269] sm:$0xff]
      %v298 = vld [vmem:[%s269 + $0x8] sm:$0xff]
      %v299 = vld [vmem:[%s269 + $0x10] sm:$0xff]
      %v300 = vld [vmem:[%s269 + $0x18] sm:$0xff]
      %v301 = vld [vmem:[%s276] sm:$0x1]
      %v302 = vld [vmem:[%s285] sm:$0xff]
      %v304 = vcombine.high %v302, %v302
      %v306 = vunpack.c.l.s4 1983009808
      %v307 = vunpack.c.0.s8 %v306
      %v308 = vlaneseq
      %v309 = vshrl.u32 %v308, 7
      %v310 = vsub.s32 %v307, %v309
      %v311 = vrot.slane %v302, %v310
      %v313 = vunpack.c.l.s4 1983009808
      %v314 = vunpack.c.0.s8 %v313
      %v315 = vlaneseq
      %v316 = vshrl.u32 %v315, 7
      %v317 = vsub.s32 %v314, %v316
      %v318 = vrot.slane %v304, %v317
      %v319 = vcombine.high %v311, %v311
      %v320 = vcombine.high %v318, %v318
      %v329 = vunpack.c.l.b16 %v297
      %v330 = vunpack.c.h.b16 %v297
      %v331 = vunpack.c.l.b16 %v298
      %v332 = vunpack.c.h.b16 %v298
      %v333 = vunpack.c.l.b16 %v299
      %v334 = vunpack.c.h.b16 %v299
      %v335 = vunpack.c.l.b16 %v300
      %v336 = vunpack.c.h.b16 %v300
      %v337 = vpack.c.b16 %v333, %v329
      %v338 = vpack.c.b16 %v334, %v330
      %v339 = vpack.c.b16 %v335, %v331
      %v340 = vpack.c.b16 %v336, %v332
      %345 = vmatprep.subr.bf16.mxu0 0
      %346 = vmatpush1.bf16.xpose.msra.mxu0 0
      %347 = vmatprep.subr.bf16.mxu0 0
      %348 = vmatpush1.bf16.xpose.msra.mxu0 0
      %349 = vmatprep.subr.bf16.mxu0 0
      %350 = vmatpush1.bf16.xpose.msra.mxu0 0
      %351 = vmatprep.subr.bf16.mxu0 0
      %352 = vmatpush1.bf16.xpose.msra.mxu0 0
      %353 = vmatprep.subr.bf16.mxu0 0
      %354 = vmatpush1.bf16.xpose.msra.mxu0 0
      %355 = vmatprep.subr.bf16.mxu0 0
      %356 = vmatpush1.bf16.xpose.msra.mxu0 0
      %357 = vmatprep.subr.bf16.mxu0 0
      %358 = vmatpush1.bf16.xpose.msra.mxu0 0
      %359 = vmatprep.subr.bf16.mxu0 %v338
      %360 = vmatpush1.bf16.xpose.msra.mxu0 %v337
      %361 = vmatprep.subr.bf16.mxu0 0
      %362 = vmatpush2.bf16.xpose.msra.mxu0 0
      %363 = vmatprep.subr.bf16.mxu0 0
      %364 = vmatpush2.bf16.xpose.msra.mxu0 0
      %365 = vmatprep.subr.bf16.mxu0 0
      %366 = vmatpush2.bf16.xpose.msra.mxu0 0
      %367 = vmatprep.subr.bf16.mxu0 0
      %368 = vmatpush2.bf16.xpose.msra.mxu0 0
      %369 = vmatprep.subr.bf16.mxu0 0
      %370 = vmatpush2.bf16.xpose.msra.mxu0 0
      %371 = vmatprep.subr.bf16.mxu0 0
      %372 = vmatpush2.bf16.xpose.msra.mxu0 0
      %373 = vmatprep.subr.bf16.mxu0 0
      %374 = vmatpush2.bf16.xpose.msra.mxu0 0
      %375 = vmatprep.subr.bf16.mxu0 0
      %376 = vmatpush2.bf16.xpose.msra.mxu0 0
      %377 = vmatprep.mubr.bf16.mxu0 %v319
      %378 = vmatmul.mubr.bf16.gmra.mxu0 %v311
      %v379 = vpop.f32.mrf.mxu0
      %v380 = vadd.f32 0.0, %v379
      %v381 = vpop.f32.mrf.mxu0
      %v382 = vpop.f32.mrf.mxu0
      %v383 = vpop.f32.mrf.mxu0
      %384 = vdwg.mxu0
      %385 = vmatprep.subr.bf16.mxu0 0
      %386 = vmatpush1.bf16.xpose.msra.mxu0 0
      %387 = vmatprep.subr.bf16.mxu0 0
      %388 = vmatpush1.bf16.xpose.msra.mxu0 0
      %389 = vmatprep.subr.bf16.mxu0 0
      %390 = vmatpush1.bf16.xpose.msra.mxu0 0
      %391 = vmatprep.subr.bf16.mxu0 0
      %392 = vmatpush1.bf16.xpose.msra.mxu0 0
      %393 = vmatprep.subr.bf16.mxu0 0
      %394 = vmatpush1.bf16.xpose.msra.mxu0 0
      %395 = vmatprep.subr.bf16.mxu0 0
      %396 = vmatpush1.bf16.xpose.msra.mxu0 0
      %397 = vmatprep.subr.bf16.mxu0 0
      %398 = vmatpush1.bf16.xpose.msra.mxu0 0
      %399 = vmatprep.subr.bf16.mxu0 %v340
      %400 = vmatpush1.bf16.xpose.msra.mxu0 %v339
      %401 = vmatprep.subr.bf16.mxu0 0
      %402 = vmatpush2.bf16.xpose.msra.mxu0 0
      %403 = vmatprep.subr.bf16.mxu0 0
      %404 = vmatpush2.bf16.xpose.msra.mxu0 0
      %405 = vmatprep.subr.bf16.mxu0 0
      %406 = vmatpush2.bf16.xpose.msra.mxu0 0
      %407 = vmatprep.subr.bf16.mxu0 0
      %408 = vmatpush2.bf16.xpose.msra.mxu0 0
      %409 = vmatprep.subr.bf16.mxu0 0
      %410 = vmatpush2.bf16.xpose.msra.mxu0 0
      %411 = vmatprep.subr.bf16.mxu0 0
      %412 = vmatpush2.bf16.xpose.msra.mxu0 0
      %413 = vmatprep.subr.bf16.mxu0 0
      %414 = vmatpush2.bf16.xpose.msra.mxu0 0
      %415 = vmatprep.subr.bf16.mxu0 0
      %416 = vmatpush2.bf16.xpose.msra.mxu0 0
      %417 = vmatprep.mubr.bf16.mxu0 %v320
      %418 = vmatmul.mubr.bf16.gmra.mxu0 %v318
      %v419 = vpop.f32.mrf.mxu0
      %v420 = vadd.f32 %v380, %v419
      %v421 = vpop.f32.mrf.mxu0
      %v422 = vpop.f32.mrf.mxu0
      %v423 = vpop.f32.mrf.mxu0
      %424 = vdwg.mxu0
      %v426 = vlaneseq
      %v427 = vshrl.u32 %v426, 7
      %v428 = vsub.s32 0, %v427
      %v429 = vrot.slane %v301, %v428
      %v431 = vmul.f32 %v420, %v429
      %v433 = vrot.slane %v431, 2
      %v435 = vmul.f32 %v431, %v433
      %v437 = vrot.slane %v435, 1
      %v439 = vadd.f32 %v435, %v437
      %v440 = vmax.f32 %v439, 0.0
      %v441 = vrsqrt.pop %v440
      %v442 = vmul.f32 %v440, %v441
      %vm443 = vcmp.eq.f32.partialorder %v440, inf
      %v444 = vsel %vm443, %v440, %v442
      %vm445 = vcmp.eq.f32.partialorder %v440, 0.0
      %v446 = vand.u32 %v440, 2147483648
      %v447 = vsel %vm445, %v446, %v444
      %v448 = vadd.f32 %v447, 1e-05
      %v449 = vrcp.pop %v448
      %v450 = vlaneseq
      %v451 = vshrl.u32 %v450, 7
      %v452 = vsub.s32 0, %v451
      %v453 = vrot.slane %v449, %v452
      %v454 = vmul.f32 %v431, %v453
      %v455 = vpack.c.bf16 %v454, %v454
      %vm456 = vcmask 122880
      %457 = vst.msk [vmem:[%s295] sm:$0x1] %vm456, %v455
      %p458 = scmp.lt.s32.totalorder %s19, 3
      %s459 = scalar_select %p458, %s19, 3
      %p460 = scmp.lt.s32.totalorder %s20, 1
      %s461 = scalar_select %p460, %s20, 1
      %p462 = scmp.lt.s32.totalorder %s21, 0
      %s463 = scalar_select %p462, %s21, 0
      %s464 = sadd.s32 %s463, %s461
      %s465 = smul.addr %s459, 2
      %s466 = sadd.s32 %s464, %s465
      %s467 = scalar_lea.vmem %s3, %s466
      // Predicated region
      $region33: #{patnet_forward.10} parent=31 // pred_check
        %p468 = pneg %p141
      $region34: #{patnet_forward.10} parent=31 // pred_check_branch
        %470 = sbr.rel (%p468) target = $region36
      $region35: #{patnet_forward.10} parent=31 // pred_region
        _
      $region36: #{patnet_forward.10} parent=31 // pred_fallthru
        _
    $region32: #{patnet_forward.10} parent=5 // pred_fallthru
      _
    %p471 = scmp.le.s32.totalorder 2, %s9
    // Predicated region
    $region37: #{patnet_forward.10} parent=5 // pred_check
      %p472 = pneg %p471
    $region38: #{patnet_forward.10} parent=5 // pred_check_branch
      %474 = sbr.rel (%p472) target = $region40
    $region39: #{patnet_forward.10} parent=5 // pred_region
      %s475 = ssub.s32 %s9, 2
      // Predicated region
      $region41: #{patnet_forward.10} parent=39 // pred_check
        %p476 = pneg %p147
      $region42: #{patnet_forward.10} parent=39 // pred_check_branch
        %478 = sbr.rel (%p476) target = $region44
      $region43: #{patnet_forward.10} parent=39 // pred_region
        %p479 = scmp.lt.s32.totalorder %s22, 3
        %s480 = scalar_select %p479, %s22, 3
        %p481 = scmp.lt.s32.totalorder %s23, 1
        %s482 = scalar_select %p481, %s23, 1
        %p483 = scmp.lt.s32.totalorder %s24, 0
        %s484 = scalar_select %p483, %s24, 0
        %s485 = sadd.s32 %s484, %s482
        %s486 = smul.addr %s480, 2
        %s487 = sadd.s32 %s485, %s486
        %s488 = scalar_lea.vmem %s3, %s487
      $region44: #{patnet_forward.10} parent=39 // pred_fallthru
        _
    $region40: #{patnet_forward.10} parent=5 // pred_fallthru
      _
  $region6: #{patnet_forward.10} parent=0 // loop_footer
    %s13 = sadd.s32 1, %s9
  $region7: #{patnet_forward.10} parent=0 // loop_footer_branch
    %8 = sbr.rel target = $region3
  $region8: #{patnet_forward.10} parent=0 // loop_exit
    _

// kernel: patnet_forward.6
$region0: #{patnet_forward.6}
  #allocation0 [shape = 'u32[]', space=smem, size = 0x4, offset = 0x4, fixed_abs, tag = 'smem constant byte address 0x4 - core index']
  #allocation1 [shape = 'u32[144,128]{1,0:T(1,128)}', space=vmem, size = 0x12000, scoped, tag = 'internal scratch']
  #allocation2 [shape = 'f32[8,512]{1,0:T(8,128)}', space=vmem, size = 0x4000, scoped, tag = 'scratch operand']
  #allocation3 [shape = 'f32[1,1]{1,0:T(1,128)}', space=vmem, size = 0x200, scoped, tag = 'scratch operand']
  %s0 = inlined_call_operand.vmem [shape: bf16[3,2,64,512], index: 0, kind: input, shape index: {}]
  %s1 = inlined_call_operand.vmem [shape: f32[2,1,64], index: 1, kind: input, shape index: {}]
  %s2 = inlined_call_operand.vmem [shape: f32[3,2,1,512], index: 2, kind: output, shape index: {0}]
  %s3 = inlined_call_operand.vmem [shape: f32[3,2,1,512], index: 3, kind: output, shape index: {1}]
  %4 = xla_tuple %s2, %s3
  %s5 = sld [smem:[#allocation0]]
  $region57: #{patnet_forward.6} parent=0
    _
  %s7 = ssub.s32 1, %s5
  %s8 = scalar_select 0, %s7, %s5
  loop: start=0, step=1, limit=8
  $region2: #{patnet_forward.6} parent=0 // loop_pre_header
    _
  $region3: #{patnet_forward.6} parent=0 // loop_header
    %s10 = sphi 0, %s14
    %p11 = scmp.ge.s32.totalorder %s10, 8
    %s17 = sphi 0, %s36
    %s18 = sphi 0, %s32
    %s19 = sphi 0, %s28
    %s20 = sphi 0, %s17
    %s21 = sphi 0, %s18
    %s22 = sphi 0, %s19
    %s23 = sphi 0, %s20
    %s24 = sphi 0, %s21
    %s25 = sphi 0, %s22
    %s43 = sphi 0, %s45
    %s46 = sphi 0, %s43
    %s47 = sphi 0, %s46
    %s63 = sphi 0, %s47
    %s71 = sphi 0, %s73
    %s74 = sphi 0, %s71
    %s75 = sphi 0, %s74
    %s91 = sphi 0, %s75
    %s99 = sphi 0, %s101
    %s102 = sphi 0, %s99
    %s103 = sphi 0, %s102
    %s119 = sphi 0, %s103
    %s127 = sphi 0, %s129
    %s130 = sphi 0, %s127
    %s131 = sphi 0, %s130
    %s147 = sphi 0, %s131
  $region4: #{patnet_forward.6} parent=0 // loop_header_branch
    %13 = sbr.rel (%p11) target = $region8
  $region5: #{patnet_forward.6} parent=0 // loop_body
    %s15 = ssub.s32 %s10, 1
    %s16 = ssub.s32 %s10, 2
    %s26 = sadd.s32 1, %s19
    %p27 = scmp.ge.s32.totalorder %s26, 1
    %s28 = scalar_select %p27, 0, %s26
    %s29 = sadd.s32 1, %s18
    %s30 = scalar_select %p27, %s29, %s18
    %p31 = scmp.ge.s32.totalorder %s30, 2
    %s32 = scalar_select %p31, 0, %s30
    %s33 = sadd.s32 1, %s17
    %s34 = scalar_select %p31, %s33, %s17
    %p35 = scmp.ge.s32.totalorder %s34, 3
    %s36 = scalar_select %p35, 0, %s34
    %s37 = ssub.s32 %s17, %s36
    %s38 = ssub.s32 %s18, %s32
    %s39 = sor.u32 %s37, %s38
    %s40 = ssub.s32 %s19, %s28
    %s41 = sor.u32 %s39, %s40
    %p42 = scmp.eq.s32.totalorder %s41, 0
    %s44 = sadd.s32 %s43, 1
    %s45 = scalar_select %p42, %s43, %s44
    %p48 = pneg %p42
    %p49 = scmp.eq.s32.totalorder %s10, 5
    %p50 = por %p48, %p49
    %p51 = scmp.ne.s32.totalorder %s43, %s46
    %p52 = scmp.eq.s32.totalorder %s10, 0
    %p53 = por %p51, %p52
    %p54 = scmp.ne.s32.totalorder %s43, %s46
    %p55 = scmp.eq.s32.totalorder %s15, 5
    %p56 = por %p54, %p55
    %p57 = scmp.ne.s32.totalorder %s46, %s47
    %p58 = scmp.eq.s32.totalorder %s15, 0
    %p59 = por %p57, %p58
    %p60 = scmp.ne.s32.totalorder %s46, %s47
    %p61 = scmp.eq.s32.totalorder %s16, 5
    %p62 = por %p60, %p61
    %p64 = scmp.ne.s32.totalorder %s47, %s63
    %p65 = scmp.eq.s32.totalorder %s16, 0
    %p66 = por %p64, %p65
    %s67 = ssub.s32 %s18, %s32
    %s68 = ssub.s32 %s19, %s28
    %s69 = sor.u32 %s67, %s68
    %p70 = scmp.eq.s32.totalorder %s69, 0
    %s72 = sadd.s32 %s71, 1
    %s73 = scalar_select %p70, %s71, %s72
    %p76 = pneg %p70
    %p77 = scmp.eq.s32.totalorder %s10, 5
    %p78 = por %p76, %p77
    %p79 = scmp.ne.s32.totalorder %s71, %s74
    %p80 = scmp.eq.s32.totalorder %s10, 0
    %p81 = por %p79, %p80
    %p82 = scmp.ne.s32.totalorder %s71, %s74
    %p83 = scmp.eq.s32.totalorder %s15, 5
    %p84 = por %p82, %p83
    %p85 = scmp.ne.s32.totalorder %s74, %s75
    %p86 = scmp.eq.s32.totalorder %s15, 0
    %p87 = por %p85, %p86
    %p88 = scmp.ne.s32.totalorder %s74, %s75
    %p89 = scmp.eq.s32.totalorder %s16, 5
    %p90 = por %p88, %p89
    %p92 = scmp.ne.s32.totalorder %s75, %s91
    %p93 = scmp.eq.s32.totalorder %s16, 0
    %p94 = por %p92, %p93
    %s95 = ssub.s32 %s17, %s36
    %s96 = ssub.s32 %s18, %s32
    %s97 = sor.u32 %s95, %s96
    %p98 = scmp.eq.s32.totalorder %s97, 0
    %s100 = sadd.s32 %s99, 1
    %s101 = scalar_select %p98, %s99, %s100
    %p104 = pneg %p98
    %p105 = scmp.eq.s32.totalorder %s10, 5
    %p106 = por %p104, %p105
    %p107 = scmp.ne.s32.totalorder %s99, %s102
    %p108 = scmp.eq.s32.totalorder %s10, 0
    %p109 = por %p107, %p108
    %p110 = scmp.ne.s32.totalorder %s99, %s102
    %p111 = scmp.eq.s32.totalorder %s15, 5
    %p112 = por %p110, %p111
    %p113 = scmp.ne.s32.totalorder %s102, %s103
    %p114 = scmp.eq.s32.totalorder %s15, 0
    %p115 = por %p113, %p114
    %p116 = scmp.ne.s32.totalorder %s102, %s103
    %p117 = scmp.eq.s32.totalorder %s16, 5
    %p118 = por %p116, %p117
    %p120 = scmp.ne.s32.totalorder %s103, %s119
    %p121 = scmp.eq.s32.totalorder %s16, 0
    %p122 = por %p120, %p121
    %s123 = ssub.s32 %s17, %s36
    %s124 = ssub.s32 %s18, %s32
    %s125 = sor.u32 %s123, %s124
    %p126 = scmp.eq.s32.totalorder %s125, 0
    %s128 = sadd.s32 %s127, 1
    %s129 = scalar_select %p126, %s127, %s128
    %p132 = pneg %p126
    %p133 = scmp.eq.s32.totalorder %s10, 5
    %p134 = por %p132, %p133
    %p135 = scmp.ne.s32.totalorder %s127, %s130
    %p136 = scmp.eq.s32.totalorder %s10, 0
    %p137 = por %p135, %p136
    %p138 = scmp.ne.s32.totalorder %s127, %s130
    %p139 = scmp.eq.s32.totalorder %s15, 5
    %p140 = por %p138, %p139
    %p141 = scmp.ne.s32.totalorder %s130, %s131
    %p142 = scmp.eq.s32.totalorder %s15, 0
    %p143 = por %p141, %p142
    %p144 = scmp.ne.s32.totalorder %s130, %s131
    %p145 = scmp.eq.s32.totalorder %s16, 5
    %p146 = por %p144, %p145
    %p148 = scmp.ne.s32.totalorder %s131, %s147
    %p149 = scmp.eq.s32.totalorder %s16, 0
    %p150 = por %p148, %p149
    %p151 = scmp.le.s32.totalorder 1, %s10
    %p152 = scmp.lt.s32.totalorder %s10, 7
    %p153 = pnand %p151, %p152
    %p154 = pneg %p153
    // Predicated region
    $region9: #{patnet_forward.6} parent=5 // pred_check
      _
    $region10: #{patnet_forward.6} parent=5 // pred_check_branch
      %156 = sbr.rel (%p153) target = $region12
    $region11: #{patnet_forward.6} parent=5 // pred_region
      %s157 = ssub.s32 %s10, 1
    $region12: #{patnet_forward.6} parent=5 // pred_fallthru
      _
    %p158 = scmp.lt.s32.totalorder %s10, 6
    // Predicated region
    $region13: #{patnet_forward.6} parent=5 // pred_check
      %p159 = pneg %p158
    $region14: #{patnet_forward.6} parent=5 // pred_check_branch
      %161 = sbr.rel (%p159) target = $region16
    $region15: #{patnet_forward.6} parent=5 // pred_region
      // Predicated region
      $region17: #{patnet_forward.6} parent=15 // pred_check
        %p162 = pneg %p53
      $region18: #{patnet_forward.6} parent=15 // pred_check_branch
        %164 = sbr.rel (%p162) target = $region20
      $region19: #{patnet_forward.6} parent=15 // pred_region
        %s165 = smul.u32 8, %s19
        %p166 = scmp.lt.s32.totalorder %s17, 2
        %s167 = scalar_select %p166, %s17, 2
        %p168 = scmp.lt.s32.totalorder %s18, 1
        %s169 = scalar_select %p168, %s18, 1
        %p170 = scmp.lt.s32.totalorder %s165, 7
        %s171 = scalar_select %p170, %s165, 7
        %s172 = smul.addr %s171, 4
        %s173 = smul.addr %s169, 32
        %s174 = sadd.s32 %s172, %s173
        %s175 = smul.addr %s167, 64
        %s176 = sadd.s32 %s174, %s175
        %s177 = smul.addr %s176, 4
        %s178 = scalar_lea.vmem %s0, %s177
        %s179 = smul.u32 8, %s19
      $region20: #{patnet_forward.6} parent=15 // pred_fallthru
        _
      // Predicated region
      $region21: #{patnet_forward.6} parent=15 // pred_check
        %p180 = pneg %p81
      $region22: #{patnet_forward.6} parent=15 // pred_check_branch
        %182 = sbr.rel (%p180) target = $region24
      $region23: #{patnet_forward.6} parent=15 // pred_region
        %p183 = scmp.lt.s32.totalorder %s18, 1
        %s184 = scalar_select %p183, %s18, 1
        %p185 = scmp.lt.s32.totalorder %s19, 0
        %s186 = scalar_select %p185, %s19, 0
        %s187 = sadd.s32 %s186, %s184
        %s188 = scalar_lea.vmem %s1, %s187
      $region24: #{patnet_forward.6} parent=15 // pred_fallthru
        _
    $region16: #{patnet_forward.6} parent=5 // pred_fallthru
      _
    %p189 = scmp.le.s32.totalorder 1, %s10
    %p190 = scmp.lt.s32.totalorder %s10, 7
    %p191 = pnand %p189, %p190
    %p192 = pneg %p191
    // Predicated region
    $region25: #{patnet_forward.6} parent=5 // pred_check
      _
    $region26: #{patnet_forward.6} parent=5 // pred_check_branch
      %194 = sbr.rel (%p191) target = $region28
    $region27: #{patnet_forward.6} parent=5 // pred_region
      %s195 = ssub.s32 %s10, 1
      %s196 = smul.u32 8, %s22
      %p197 = scmp.lt.s32.totalorder %s20, 2
      %s198 = scalar_select %p197, %s20, 2
      %p199 = scmp.lt.s32.totalorder %s21, 1
      %s200 = scalar_select %p199, %s21, 1
      %p201 = scmp.lt.s32.totalorder %s196, 7
      %s202 = scalar_select %p201, %s196, 7
      %s203 = smul.addr %s202, 4
      %s204 = smul.addr %s200, 32
      %s205 = sadd.s32 %s203, %s204
      %s206 = smul.addr %s198, 64
      %s207 = sadd.s32 %s205, %s206
      %s208 = smul.addr %s207, 4
      %s209 = scalar_lea.vmem %s0, %s208
      %p210 = pneg %p59
      %p211 = pneg %p56
      %p212 = scmp.lt.s32.totalorder %s21, 1
      %s213 = scalar_select %p212, %s21, 1
      %p214 = scmp.lt.s32.totalorder %s22, 0
      %s215 = scalar_select %p214, %s22, 0
      %s216 = sadd.s32 %s215, %s213
      %s217 = scalar_lea.vmem %s1, %s216
      %p218 = pneg %p87
      %p219 = pneg %p84
      %p220 = pneg %p115
      %p221 = pneg %p112
      %p222 = scmp.lt.s32.totalorder %s20, 2
      %s223 = scalar_select %p222, %s20, 2
      %p224 = scmp.lt.s32.totalorder %s21, 1
      %s225 = scalar_select %p224, %s21, 1
      %s226 = smul.addr %s225, 4
      %s227 = smul.addr %s223, 8
      %s228 = sadd.s32 %s226, %s227
      %s229 = scalar_lea.vmem %s2, %s228
      %p230 = pneg %p143
      %p231 = pneg %p140
      %p232 = scmp.lt.s32.totalorder %s20, 2
      %s233 = scalar_select %p232, %s20, 2
      %p234 = scmp.lt.s32.totalorder %s21, 1
      %s235 = scalar_select %p234, %s21, 1
      %s236 = smul.addr %s235, 4
      %s237 = smul.addr %s233, 8
      %s238 = sadd.s32 %s236, %s237
      %s239 = scalar_lea.vmem %s3, %s238
      %s240 = smul.u32 8, %s22
      %p241 = scmp.lt.s32.totalorder %s20, 2
      %s242 = scalar_select %p241, %s20, 2
      %p243 = scmp.lt.s32.totalorder %s21, 1
      %s244 = scalar_select %p243, %s21, 1
      %p245 = scmp.lt.s32.totalorder %s240, 7
      %s246 = scalar_select %p245, %s240, 7
      %s247 = smul.addr %s246, 4
      %s248 = smul.addr %s244, 32
      %s249 = sadd.s32 %s247, %s248
      %s250 = smul.addr %s242, 64
      %s251 = sadd.s32 %s249, %s250
      %s252 = smul.addr %s251, 4
      %s253 = scalar_lea.vmem %s0, %s252
      %s254 = smul.u32 8, %s22
      %p255 = scmp.lt.s32.totalorder %s21, 1
      %s256 = scalar_select %p255, %s21, 1
      %p257 = scmp.lt.s32.totalorder %s22, 0
      %s258 = scalar_select %p257, %s22, 0
      %s259 = sadd.s32 %s258, %s256
      %s260 = scalar_lea.vmem %s1, %s259
      %p261 = scmp.lt.s32.totalorder %s20, 2
      %s262 = scalar_select %p261, %s20, 2
      %p263 = scmp.lt.s32.totalorder %s21, 1
      %s264 = scalar_select %p263, %s21, 1
      %s265 = smul.addr %s264, 4
      %s266 = smul.addr %s262, 8
      %s267 = sadd.s32 %s265, %s266
      %s268 = scalar_lea.vmem %s2, %s267
      %p269 = scmp.lt.s32.totalorder %s20, 2
      %s270 = scalar_select %p269, %s20, 2
      %p271 = scmp.lt.s32.totalorder %s21, 1
      %s272 = scalar_select %p271, %s21, 1
      %s273 = smul.addr %s272, 4
      %s274 = smul.addr %s270, 8
      %s275 = sadd.s32 %s273, %s274
      %s276 = scalar_lea.vmem %s3, %s275
      %p278 = scmp.eq.s32.totalorder %s22, 0
      // Predicated region
      $region29: #{patnet_forward.6} parent=27 // pred_check
        %p279 = pneg %p278
      $region30: #{patnet_forward.6} parent=27 // pred_check_branch
        %281 = sbr.rel (%p279) target = $region32
      $region31: #{patnet_forward.6} parent=27 // pred_region
        %282 = vst [vmem:[#allocation2] sm:$0xff] 0.0
        %283 = vst [vmem:[#allocation2 + $0x8] sm:$0xff] 0.0
        %284 = vst [vmem:[#allocation2 + $0x10] sm:$0xff] 0.0
        %285 = vst [vmem:[#allocation2 + $0x18] sm:$0xff] 0.0
        %vm286 = vcmask 0
        %287 = vst.msk [vmem:[#allocation3] sm:$0x1] %vm286, 0.0
      $region32: #{patnet_forward.6} parent=27 // pred_fallthru
        _
      %v288 = vld [vmem:[%s253] sm:$0xff]
      %v289 = vld [vmem:[%s253 + $0x8] sm:$0xff]
      %v290 = vld [vmem:[%s253 + $0x10] sm:$0xff]
      %v291 = vld [vmem:[%s253 + $0x18] sm:$0xff]
      %v292 = vld [vmem:[%s253 + $0x20] sm:$0xff]
      %v293 = vld [vmem:[%s253 + $0x28] sm:$0xff]
      %v294 = vld [vmem:[%s253 + $0x30] sm:$0xff]
      %v295 = vld [vmem:[%s253 + $0x38] sm:$0xff]
      %v296 = vld [vmem:[%s253 + $0x40] sm:$0xff]
      %v297 = vld [vmem:[%s253 + $0x48] sm:$0xff]
      %v298 = vld [vmem:[%s253 + $0x50] sm:$0xff]
      %v299 = vld [vmem:[%s253 + $0x58] sm:$0xff]
      %v300 = vld [vmem:[%s253 + $0x60] sm:$0xff]
      %v301 = vld [vmem:[%s253 + $0x68] sm:$0xff]
      %v302 = vld [vmem:[%s253 + $0x70] sm:$0xff]
      %v303 = vld [vmem:[%s253 + $0x78] sm:$0xff]
      %v304 = vld [vmem:[%s260] sm:$0x1]
      %v306 = vlaneseq
      %v307 = vshrl.u32 %v306, 7
      %v308 = vsub.s32 0, %v307
      %v309 = vrot.slane %v304, %v308
      %vm311 = vcmask 1040384
      %v312 = vsel %vm311, 1.0, %v309
      %vm313 = vcmask 1041408
      %v314 = vsel %vm313, %v312, 0.0
      %v315 = vpack.c.bf16 %v314, %v314
      %v316 = vld [vmem:[#allocation2] sm:$0xff]
      %v317 = vld [vmem:[#allocation2 + $0x8] sm:$0xff]
      %v318 = vld [vmem:[#allocation2 + $0x10] sm:$0xff]
      %v319 = vld [vmem:[#allocation2 + $0x18] sm:$0xff]
      %v336 = vunpack.c.l.b16 %v288
      %v337 = vunpack.c.h.b16 %v288
      %v338 = vunpack.c.l.b16 %v289
      %v339 = vunpack.c.h.b16 %v289
      %v340 = vunpack.c.l.b16 %v290
      %v341 = vunpack.c.h.b16 %v290
      %v342 = vunpack.c.l.b16 %v291
      %v343 = vunpack.c.h.b16 %v291
      %v344 = vunpack.c.l.b16 %v292
      %v345 = vunpack.c.h.b16 %v292
      %v346 = vunpack.c.l.b16 %v293
      %v347 = vunpack.c.h.b16 %v293
      %v348 = vunpack.c.l.b16 %v294
      %v349 = vunpack.c.h.b16 %v294
      %v350 = vunpack.c.l.b16 %v295
      %v351 = vunpack.c.h.b16 %v295
      %v352 = vunpack.c.l.b16 %v296
      %v353 = vunpack.c.h.b16 %v296
      %v354 = vunpack.c.l.b16 %v297
      %v355 = vunpack.c.h.b16 %v297
      %v356 = vunpack.c.l.b16 %v298
      %v357 = vunpack.c.h.b16 %v298
      %v358 = vunpack.c.l.b16 %v299
      %v359 = vunpack.c.h.b16 %v299
      %v360 = vunpack.c.l.b16 %v300
      %v361 = vunpack.c.h.b16 %v300
      %v362 = vunpack.c.l.b16 %v301
      %v363 = vunpack.c.h.b16 %v301
      %v364 = vunpack.c.l.b16 %v302
      %v365 = vunpack.c.h.b16 %v302
      %v366 = vunpack.c.l.b16 %v303
      %v367 = vunpack.c.h.b16 %v303
      %v368 = vpack.c.b16 %v340, %v336
      %v369 = vpack.c.b16 %v341, %v337
      %v370 = vpack.c.b16 %v342, %v338
      %v371 = vpack.c.b16 %v343, %v339
      %v372 = vpack.c.b16 %v348, %v344
      %v373 = vpack.c.b16 %v349, %v345
      %v374 = vpack.c.b16 %v350, %v346
      %v375 = vpack.c.b16 %v351, %v347
      %v376 = vpack.c.b16 %v356, %v352
      %v377 = vpack.c.b16 %v357, %v353
      %v378 = vpack.c.b16 %v358, %v354
      %v379 = vpack.c.b16 %v359, %v355
      %v380 = vpack.c.b16 %v364, %v360
      %v381 = vpack.c.b16 %v365, %v361
      %v382 = vpack.c.b16 %v366, %v362
      %v383 = vpack.c.b16 %v367, %v363
      %vm400 = vcmask 523264
      %v402 = vsel %vm400, %v315, 0
      %404 = vmatprep.subr.bf16.mxu0 0
      %405 = vmatpush1.bf16.msra.mxu0 0
      %406 = vmatprep.subr.bf16.mxu0 0
      %407 = vmatpush1.bf16.msra.mxu0 0
      %408 = vmatprep.subr.bf16.mxu0 0
      %409 = vmatpush1.bf16.msra.mxu0 0
      %410 = vmatprep.subr.bf16.mxu0 0
      %411 = vmatpush1.bf16.msra.mxu0 0
      %412 = vmatprep.subr.bf16.mxu0 %v381
      %413 = vmatpush1.bf16.msra.mxu0 %v380
      %414 = vmatprep.subr.bf16.mxu0 %v377
      %415 = vmatpush1.bf16.msra.mxu0 %v376
      %416 = vmatprep.subr.bf16.mxu0 %v373
      %417 = vmatpush1.bf16.msra.mxu0 %v372
      %418 = vmatprep.subr.bf16.mxu0 %v369
      %419 = vmatpush1.bf16.msra.mxu0 %v368
      %420 = vmatprep.subr.bf16.mxu0 0
      %421 = vmatpush2.bf16.msra.mxu0 0
      %422 = vmatprep.subr.bf16.mxu0 0
      %423 = vmatpush2.bf16.msra.mxu0 0
      %424 = vmatprep.subr.bf16.mxu0 0
      %425 = vmatpush2.bf16.msra.mxu0 0
      %426 = vmatprep.subr.bf16.mxu0 0
      %427 = vmatpush2.bf16.msra.mxu0 0
      %428 = vmatprep.subr.bf16.mxu0 0
      %429 = vmatpush2.bf16.msra.mxu0 0
      %430 = vmatprep.subr.bf16.mxu0 0
      %431 = vmatpush2.bf16.msra.mxu0 0
      %432 = vmatprep.subr.bf16.mxu0 0
      %433 = vmatpush2.bf16.msra.mxu0 0
      %434 = vmatprep.subr.bf16.mxu0 0
      %435 = vmatpush2.bf16.msra.mxu0 0
      %436 = vmatprep.mubr.bf16.mxu0 0
      %437 = vmatmul.mubr.bf16.gmra.mxu0 %v402
      %v438 = vpop.f32.mrf.mxu0
      %v439 = vadd.f32 0.0, %v438
      %v440 = vpop.f32.mrf.mxu0
      %v441 = vadd.f32 0.0, %v440
      %v442 = vpop.f32.mrf.mxu0
      %v443 = vpop.f32.mrf.mxu0
      %444 = vdwg.mxu0
      %445 = vmatprep.subr.bf16.mxu0 0
      %446 = vmatpush1.bf16.msra.mxu0 0
      %447 = vmatprep.subr.bf16.mxu0 0
      %448 = vmatpush1.bf16.msra.mxu0 0
      %449 = vmatprep.subr.bf16.mxu0 0
      %450 = vmatpush1.bf16.msra.mxu0 0
      %451 = vmatprep.subr.bf16.mxu0 0
      %452 = vmatpush1.bf16.msra.mxu0 0
      %453 = vmatprep.subr.bf16.mxu0 %v383
      %454 = vmatpush1.bf16.msra.mxu0 %v382
      %455 = vmatprep.subr.bf16.mxu0 %v379
      %456 = vmatpush1.bf16.msra.mxu0 %v378
      %457 = vmatprep.subr.bf16.mxu0 %v375
      %458 = vmatpush1.bf16.msra.mxu0 %v374
      %459 = vmatprep.subr.bf16.mxu0 %v371
      %460 = vmatpush1.bf16.msra.mxu0 %v370
      %461 = vmatprep.subr.bf16.mxu0 0
      %462 = vmatpush2.bf16.msra.mxu0 0
      %463 = vmatprep.subr.bf16.mxu0 0
      %464 = vmatpush2.bf16.msra.mxu0 0
      %465 = vmatprep.subr.bf16.mxu0 0
      %466 = vmatpush2.bf16.msra.mxu0 0
      %467 = vmatprep.subr.bf16.mxu0 0
      %468 = vmatpush2.bf16.msra.mxu0 0
      %469 = vmatprep.subr.bf16.mxu0 0
      %470 = vmatpush2.bf16.msra.mxu0 0
      %471 = vmatprep.subr.bf16.mxu0 0
      %472 = vmatpush2.bf16.msra.mxu0 0
      %473 = vmatprep.subr.bf16.mxu0 0
      %474 = vmatpush2.bf16.msra.mxu0 0
      %475 = vmatprep.subr.bf16.mxu0 0
      %476 = vmatpush2.bf16.msra.mxu0 0
      %477 = vmatprep.mubr.bf16.mxu0 0
      %478 = vmatmul.mubr.bf16.gmra.mxu0 %v402
      %v479 = vpop.f32.mrf.mxu0
      %v480 = vadd.f32 0.0, %v479
      %v481 = vpop.f32.mrf.mxu0
      %v482 = vadd.f32 0.0, %v481
      %v483 = vpop.f32.mrf.mxu0
      %v484 = vpop.f32.mrf.mxu0
      %485 = vdwg.mxu0
      %v486 = vadd.f32 %v316, %v439
      %v487 = vadd.f32 %v317, %v441
      %v488 = vadd.f32 %v318, %v480
      %v489 = vadd.f32 %v319, %v482
      %490 = vst [vmem:[#allocation2] sm:$0xff] %v486
      %491 = vst [vmem:[#allocation2 + $0x8] sm:$0xff] %v487
      %492 = vst [vmem:[#allocation2 + $0x10] sm:$0xff] %v488
      %493 = vst [vmem:[#allocation2 + $0x18] sm:$0xff] %v489
      %v494 = vld [vmem:[#allocation3] sm:$0x1]
      %vm495 = vcmask 516096
      %v496 = vsel %vm495, %v304, 0.0
      %497 = vadd.xlane.f32.xlu0 %v496
      %v498 = vpop.xlane.xlu0 %497
      %v499 = vadd.f32 %v494, %v498
      %vm500 = vcmask 0
      %501 = vst.msk [vmem:[#allocation3] sm:$0x1] %vm500, %v499
      // Predicated region
      $region33: #{patnet_forward.6} parent=27 // pred_check
        %p502 = pneg %p278
      $region34: #{patnet_forward.6} parent=27 // pred_check_branch
        %504 = sbr.rel (%p502) target = $region36
      $region35: #{patnet_forward.6} parent=27 // pred_region
        %v505 = vld [vmem:[#allocation3] sm:$0x1]
        %v506 = vld [vmem:[#allocation2] ss:$8 sm:$0xf]
        %s507 = scalar_lea.vmem [#allocation2], 1
        %v508 = vld [vmem:[%s507] ss:$8 sm:$0xf]
        %v509 = vadd.f32 %v505, 1e-06
        %511 = vset.pattern.permute.xlu0 0
        %512 = vperm.xlu0 %511, %v509
        %v513 = vpop.permute.xlu0 %512
        %v515 = vlaneseq
        %v516 = vshrl.u32 %v515, 7
        %v517 = vsub.s32 0, %v516
        %v518 = vrot.slane %v513, %v517
        %v519 = vrcp.pop %v518
        %v520 = vmul.f32 %v508, %v519
        %v521 = vlaneseq
        %vm522 = vcmp.ge.s32.totalorder %v521, 0
        %vm523 = vcmp.lt.s32.totalorder %v521, 512
        %vm524 = vmand %vm522, %vm523
        %525 = vst.msk [vmem:[%s268] sm:$0xf] %vm524, %v520
        %v526 = vsub.f32 %v506, %v508
        %v527 = vsub.f32 64.0, %v505
        %v528 = vadd.f32 %v527, 1e-06
        %530 = vset.pattern.permute.xlu0 0
        %531 = vperm.xlu0 %530, %v528
        %v532 = vpop.permute.xlu0 %531
        %v534 = vlaneseq
        %v535 = vshrl.u32 %v534, 7
        %v536 = vsub.s32 0, %v535
        %v537 = vrot.slane %v532, %v536
        %v538 = vrcp.pop %v537
        %v539 = vmul.f32 %v526, %v538
        %540 = vst.msk [vmem:[%s276] sm:$0xf] %vm524, %v539
      $region36: #{patnet_forward.6} parent=27 // pred_fallthru
        _
      %p541 = scmp.lt.s32.totalorder %s20, 2
      %s542 = scalar_select %p541, %s20, 2
      %p543 = scmp.lt.s32.totalorder %s21, 1
      %s544 = scalar_select %p543, %s21, 1
      %s545 = smul.addr %s544, 4
      %s546 = smul.addr %s542, 8
      %s547 = sadd.s32 %s545, %s546
      %s548 = scalar_lea.vmem %s2, %s547
      %p549 = scmp.lt.s32.totalorder %s20, 2
      %s550 = scalar_select %p549, %s20, 2
      %p551 = scmp.lt.s32.totalorder %s21, 1
      %s552 = scalar_select %p551, %s21, 1
      %s553 = smul.addr %s552, 4
      %s554 = smul.addr %s550, 8
      %s555 = sadd.s32 %s553, %s554
      %s556 = scalar_lea.vmem %s3, %s555
      // Predicated region
      $region37: #{patnet_forward.6} parent=27 // pred_check
        %p557 = pneg %p112
      $region38: #{patnet_forward.6} parent=27 // pred_check_branch
        %559 = sbr.rel (%p557) target = $region40
      $region39: #{patnet_forward.6} parent=27 // pred_region
        _
      $region40: #{patnet_forward.6} parent=27 // pred_fallthru
        _
      // Predicated region
      $region41: #{patnet_forward.6} parent=27 // pred_check
        %p560 = pneg %p140
      $region42: #{patnet_forward.6} parent=27 // pred_check_branch
        %562 = sbr.rel (%p560) target = $region44
      $region43: #{patnet_forward.6} parent=27 // pred_region
        _
      $region44: #{patnet_forward.6} parent=27 // pred_fallthru
        _
    $region28: #{patnet_forward.6} parent=5 // pred_fallthru
      _
    %p563 = scmp.le.s32.totalorder 2, %s10
    // Predicated region
    $region45: #{patnet_forward.6} parent=5 // pred_check
      %p564 = pneg %p563
    $region46: #{patnet_forward.6} parent=5 // pred_check_branch
      %566 = sbr.rel (%p564) target = $region48
    $region47: #{patnet_forward.6} parent=5 // pred_region
      %s567 = ssub.s32 %s10, 2
      // Predicated region
      $region49: #{patnet_forward.6} parent=47 // pred_check
        %p568 = pneg %p118
      $region50: #{patnet_forward.6} parent=47 // pred_check_branch
        %570 = sbr.rel (%p568) target = $region52
      $region51: #{patnet_forward.6} parent=47 // pred_region
        %p571 = scmp.lt.s32.totalorder %s23, 2
        %s572 = scalar_select %p571, %s23, 2
        %p573 = scmp.lt.s32.totalorder %s24, 1
        %s574 = scalar_select %p573, %s24, 1
        %s575 = smul.addr %s574, 4
        %s576 = smul.addr %s572, 8
        %s577 = sadd.s32 %s575, %s576
        %s578 = scalar_lea.vmem %s2, %s577
      $region52: #{patnet_forward.6} parent=47 // pred_fallthru
        _
      // Predicated region
      $region53: #{patnet_forward.6} parent=47 // pred_check
        %p579 = pneg %p146
      $region54: #{patnet_forward.6} parent=47 // pred_check_branch
        %581 = sbr.rel (%p579) target = $region56
      $region55: #{patnet_forward.6} parent=47 // pred_region
        %p582 = scmp.lt.s32.totalorder %s23, 2
        %s583 = scalar_select %p582, %s23, 2
        %p584 = scmp.lt.s32.totalorder %s24, 1
        %s585 = scalar_select %p584, %s24, 1
        %s586 = smul.addr %s585, 4
        %s587 = smul.addr %s583, 8
        %s588 = sadd.s32 %s586, %s587
        %s589 = scalar_lea.vmem %s3, %s588
      $region56: #{patnet_forward.6} parent=47 // pred_fallthru
        _
    $region48: #{patnet_forward.6} parent=5 // pred_fallthru
      _
  $region6: #{patnet_forward.6} parent=0 // loop_footer
    %s14 = sadd.s32 1, %s10
  $region7: #{patnet_forward.6} parent=0 // loop_footer_branch
    %9 = sbr.rel target = $region3
  $region8: #{patnet_forward.6} parent=0 // loop_exit
    _

// kernel: mul.146
$region0: #{mul.146}
  #allocation0 [shape = 's32[1]{0}', space=sflag, size = 0x4, scoped, tag = 'scoped memory for mul.146']
  %s0 = inlined_call_operand.vmem [shape: f32[2,512], index: 0, kind: input, shape index: {}, may-alias: {0,1}]
  %s1 = inlined_call_operand.vmem [shape: f32[2,512], index: 1, kind: input, shape index: {}, may-alias: {0,1}]
  %s2 = inlined_call_operand.vmem [shape: f32[2,512], index: 2, kind: output, shape index: {}]
  %v3 = vld [vmem:[%s0] sm:$0x3]
  %v4 = vld [vmem:[%s1] sm:$0x3]
  %5 = xla_tuple %v3, %v4
  %6 = xla_tuple %5
  %v7 = vmul.f32 %v3, %v4
  %8 = xla_tuple %v7
  %9 = vst [vmem:[%s2] sm:$0x3] %v7
  %s10 = scalar_lea.vmem %s0, 2
  %v11 = vld [vmem:[%s10] sm:$0x3]
  %s12 = scalar_lea.vmem %s1, 2
  %v13 = vld [vmem:[%s12] sm:$0x3]
  %14 = xla_tuple %v11, %v13
  %15 = xla_tuple %14
  %v16 = vmul.f32 %v11, %v13
  %17 = xla_tuple %v16
  %s18 = scalar_lea.vmem %s2, 2
  %19 = vst [vmem:[%s18] sm:$0x3] %v16
  %s20 = scalar_lea.vmem %s0, 4
  %v21 = vld [vmem:[%s20] sm:$0x3]
  %s22 = scalar_lea.vmem %s1, 4
  %v23 = vld [vmem:[%s22] sm:$0x3]
  %24 = xla_tuple %v21, %v23
  %25 = xla_tuple %24
  %v26 = vmul.f32 %v21, %v23
  %27 = xla_tuple %v26
  %s28 = scalar_lea.vmem %s2, 4
  %29 = vst [vmem:[%s28] sm:$0x3] %v26
  %s30 = scalar_lea.vmem %s0, 6
  %v31 = vld [vmem:[%s30] sm:$0x3]
  %s32 = scalar_lea.vmem %s1, 6
  %v33 = vld [vmem:[%s32] sm:$0x3]
  %34 = xla_tuple %v31, %v33
  %35 = xla_tuple %34
  %v36 = vmul.f32 %v31, %v33
  %37 = xla_tuple %v36
  %s38 = scalar_lea.vmem %s2, 6
  %39 = vst [vmem:[%s38] sm:$0x3] %v36

// kernel: squeeze.38
$region0: #{squeeze.38}
  %s0 = inlined_call_operand.vmem [shape: bf16[1,2,64,64], index: 0, kind: input, shape index: {}]
  %s1 = inlined_call_operand.vmem [shape: bf16[2,1,8,8,8,8], index: 1, kind: output, shape index: {}]
  $region1: #{squeeze.38} parent=0
    #allocation0 [shape = 'u8[524288]{0}', space=vmem, size = 0x80000, scoped, tag = 'scoped mem for output reshape']
    #allocation1 [shape = 'u8[65536]{0}', space=vmem, size = 0x10000, scoped, tag = 'scoped mem for input reshape']
    %s3 = smul.u32 4, 2
    %s4 = sshll.u32 1, %s3
    %s5 = ssub.s32 %s4, 1
    %s6 = smul.addr 4, 15
    %s7 = scalar_lea.vmem %s0, %s6
    %s8 = sshrl.u32 %s5, 1
    %s9 = sor.u32 %s5, %s8
    %s10 = sand.u32 %s9, 85
    %s11 = sshrl.u32 %s10, 1
    %s12 = sor.u32 %s10, %s11
    %s13 = sand.u32 51, %s12
    %s14 = sshrl.u32 %s13, 2
    %s15 = sor.u32 %s13, %s14
    %s16 = sand.u32 15, %s15
    %v17 = vld [vmem:[%s7] sm:%s16]
    %v18 = vunpack.c.l.bf16 %v17
    %v19 = vunpack.c.h.bf16 %v17
    %s20 = scalar_lea.vmem [#allocation1], 120
    %21 = vst [vmem:[%s20] sm:%s5] %v18
    %s22 = smul.addr 4, 14
    %s23 = scalar_lea.vmem %s0, %s22
    %s24 = sshrl.u32 %s5, 1
    %s25 = sor.u32 %s5, %s24
    %s26 = sand.u32 %s25, 85
    %s27 = sshrl.u32 %s26, 1
    %s28 = sor.u32 %s26, %s27
    %s29 = sand.u32 51, %s28
    %s30 = sshrl.u32 %s29, 2
    %s31 = sor.u32 %s29, %s30
    %s32 = sand.u32 15, %s31
    %v33 = vld [vmem:[%s23] sm:%s32]
    %v34 = vunpack.c.l.bf16 %v33
    %v35 = vunpack.c.h.bf16 %v33
    %s36 = scalar_lea.vmem [#allocation1], 112
    %37 = vst [vmem:[%s36] sm:%s5] %v34
    %s38 = smul.addr 4, 13
    %s39 = scalar_lea.vmem %s0, %s38
    %s40 = sshrl.u32 %s5, 1
    %s41 = sor.u32 %s5, %s40
    %s42 = sand.u32 %s41, 85
    %s43 = sshrl.u32 %s42, 1
    %s44 = sor.u32 %s42, %s43
    %s45 = sand.u32 51, %s44
    %s46 = sshrl.u32 %s45, 2
    %s47 = sor.u32 %s45, %s46
    %s48 = sand.u32 15, %s47
    %v49 = vld [vmem:[%s39] sm:%s48]
    %v50 = vunpack.c.l.bf16 %v49
    %v51 = vunpack.c.h.bf16 %v49
    %s52 = scalar_lea.vmem [#allocation1], 104
    %53 = vst [vmem:[%s52] sm:%s5] %v50
    %s54 = smul.addr 4, 12
    %s55 = scalar_lea.vmem %s0, %s54
    %s56 = sshrl.u32 %s5, 1
    %s57 = sor.u32 %s5, %s56
    %s58 = sand.u32 %s57, 85
    %s59 = sshrl.u32 %s58, 1
    %s60 = sor.u32 %s58, %s59
    %s61 = sand.u32 51, %s60
    %s62 = sshrl.u32 %s61, 2
    %s63 = sor.u32 %s61, %s62
    %s64 = sand.u32 15, %s63
    %v65 = vld [vmem:[%s55] sm:%s64]
    %v66 = vunpack.c.l.bf16 %v65
    %v67 = vunpack.c.h.bf16 %v65
    %s68 = scalar_lea.vmem [#allocation1], 96
    %69 = vst [vmem:[%s68] sm:%s5] %v66
    %s70 = smul.addr 4, 11
    %s71 = scalar_lea.vmem %s0, %s70
    %s72 = sshrl.u32 %s5, 1
    %s73 = sor.u32 %s5, %s72
    %s74 = sand.u32 %s73, 85
    %s75 = sshrl.u32 %s74, 1
    %s76 = sor.u32 %s74, %s75
    %s77 = sand.u32 51, %s76
    %s78 = sshrl.u32 %s77, 2
    %s79 = sor.u32 %s77, %s78
    %s80 = sand.u32 15, %s79
    %v81 = vld [vmem:[%s71] sm:%s80]
    %v82 = vunpack.c.l.bf16 %v81
    %v83 = vunpack.c.h.bf16 %v81
    %s84 = scalar_lea.vmem [#allocation1], 88
    %85 = vst [vmem:[%s84] sm:%s5] %v82
    %s86 = smul.addr 4, 10
    %s87 = scalar_lea.vmem %s0, %s86
    %s88 = sshrl.u32 %s5, 1
    %s89 = sor.u32 %s5, %s88
    %s90 = sand.u32 %s89, 85
    %s91 = sshrl.u32 %s90, 1
    %s92 = sor.u32 %s90, %s91
    %s93 = sand.u32 51, %s92
    %s94 = sshrl.u32 %s93, 2
    %s95 = sor.u32 %s93, %s94
    %s96 = sand.u32 15, %s95
    %v97 = vld [vmem:[%s87] sm:%s96]
    %v98 = vunpack.c.l.bf16 %v97
    %v99 = vunpack.c.h.bf16 %v97
    %s100 = scalar_lea.vmem [#allocation1], 80
    %101 = vst [vmem:[%s100] sm:%s5] %v98
    %s102 = smul.addr 4, 9
    %s103 = scalar_lea.vmem %s0, %s102
    %s104 = sshrl.u32 %s5, 1
    %s105 = sor.u32 %s5, %s104
    %s106 = sand.u32 %s105, 85
    %s107 = sshrl.u32 %s106, 1
    %s108 = sor.u32 %s106, %s107
    %s109 = sand.u32 51, %s108
    %s110 = sshrl.u32 %s109, 2
    %s111 = sor.u32 %s109, %s110
    %s112 = sand.u32 15, %s111
    %v113 = vld [vmem:[%s103] sm:%s112]
    %v114 = vunpack.c.l.bf16 %v113
    %v115 = vunpack.c.h.bf16 %v113
    %s116 = scalar_lea.vmem [#allocation1], 72
    %117 = vst [vmem:[%s116] sm:%s5] %v114
    %s118 = smul.addr 4, 8
    %s119 = scalar_lea.vmem %s0, %s118
    %s120 = sshrl.u32 %s5, 1
    %s121 = sor.u32 %s5, %s120
    %s122 = sand.u32 %s121, 85
    %s123 = sshrl.u32 %s122, 1
    %s124 = sor.u32 %s122, %s123
    %s125 = sand.u32 51, %s124
    %s126 = sshrl.u32 %s125, 2
    %s127 = sor.u32 %s125, %s126
    %s128 = sand.u32 15, %s127
    %v129 = vld [vmem:[%s119] sm:%s128]
    %v130 = vunpack.c.l.bf16 %v129
    %v131 = vunpack.c.h.bf16 %v129
    %s132 = scalar_lea.vmem [#allocation1], 64
    %133 = vst [vmem:[%s132] sm:%s5] %v130
    %s134 = smul.addr 4, 7
    %s135 = scalar_lea.vmem %s0, %s134
    %s136 = sshrl.u32 %s5, 1
    %s137 = sor.u32 %s5, %s136
    %s138 = sand.u32 %s137, 85
    %s139 = sshrl.u32 %s138, 1
    %s140 = sor.u32 %s138, %s139
    %s141 = sand.u32 51, %s140
    %s142 = sshrl.u32 %s141, 2
    %s143 = sor.u32 %s141, %s142
    %s144 = sand.u32 15, %s143
    %v145 = vld [vmem:[%s135] sm:%s144]
    %v146 = vunpack.c.l.bf16 %v145
    %v147 = vunpack.c.h.bf16 %v145
    %s148 = scalar_lea.vmem [#allocation1], 56
    %149 = vst [vmem:[%s148] sm:%s5] %v146
    %s150 = smul.addr 4, 6
    %s151 = scalar_lea.vmem %s0, %s150
    %s152 = sshrl.u32 %s5, 1
    %s153 = sor.u32 %s5, %s152
    %s154 = sand.u32 %s153, 85
    %s155 = sshrl.u32 %s154, 1
    %s156 = sor.u32 %s154, %s155
    %s157 = sand.u32 51, %s156
    %s158 = sshrl.u32 %s157, 2
    %s159 = sor.u32 %s157, %s158
    %s160 = sand.u32 15, %s159
    %v161 = vld [vmem:[%s151] sm:%s160]
    %v162 = vunpack.c.l.bf16 %v161
    %v163 = vunpack.c.h.bf16 %v161
    %s164 = scalar_lea.vmem [#allocation1], 48
    %165 = vst [vmem:[%s164] sm:%s5] %v162
    %s166 = smul.addr 4, 5
    %s167 = scalar_lea.vmem %s0, %s166
    %s168 = sshrl.u32 %s5, 1
    %s169 = sor.u32 %s5, %s168
    %s170 = sand.u32 %s169, 85
    %s171 = sshrl.u32 %s170, 1
    %s172 = sor.u32 %s170, %s171
    %s173 = sand.u32 51, %s172
    %s174 = sshrl.u32 %s173, 2
    %s175 = sor.u32 %s173, %s174
    %s176 = sand.u32 15, %s175
    %v177 = vld [vmem:[%s167] sm:%s176]
    %v178 = vunpack.c.l.bf16 %v177
    %v179 = vunpack.c.h.bf16 %v177
    %s180 = scalar_lea.vmem [#allocation1], 40
    %181 = vst [vmem:[%s180] sm:%s5] %v178
    %s182 = smul.addr 4, 4
    %s183 = scalar_lea.vmem %s0, %s182
    %s184 = sshrl.u32 %s5, 1
    %s185 = sor.u32 %s5, %s184
    %s186 = sand.u32 %s185, 85
    %s187 = sshrl.u32 %s186, 1
    %s188 = sor.u32 %s186, %s187
    %s189 = sand.u32 51, %s188
    %s190 = sshrl.u32 %s189, 2
    %s191 = sor.u32 %s189, %s190
    %s192 = sand.u32 15, %s191
    %v193 = vld [vmem:[%s183] sm:%s192]
    %v194 = vunpack.c.l.bf16 %v193
    %v195 = vunpack.c.h.bf16 %v193
    %s196 = scalar_lea.vmem [#allocation1], 32
    %197 = vst [vmem:[%s196] sm:%s5] %v194
    %s198 = smul.addr 4, 3
    %s199 = scalar_lea.vmem %s0, %s198
    %s200 = sshrl.u32 %s5, 1
    %s201 = sor.u32 %s5, %s200
    %s202 = sand.u32 %s201, 85
    %s203 = sshrl.u32 %s202, 1
    %s204 = sor.u32 %s202, %s203
    %s205 = sand.u32 51, %s204
    %s206 = sshrl.u32 %s205, 2
    %s207 = sor.u32 %s205, %s206
    %s208 = sand.u32 15, %s207
    %v209 = vld [vmem:[%s199] sm:%s208]
    %v210 = vunpack.c.l.bf16 %v209
    %v211 = vunpack.c.h.bf16 %v209
    %s212 = scalar_lea.vmem [#allocation1], 24
    %213 = vst [vmem:[%s212] sm:%s5] %v210
    %s214 = smul.addr 4, 2
    %s215 = scalar_lea.vmem %s0, %s214
    %s216 = sshrl.u32 %s5, 1
    %s217 = sor.u32 %s5, %s216
    %s218 = sand.u32 %s217, 85
    %s219 = sshrl.u32 %s218, 1
    %s220 = sor.u32 %s218, %s219
    %s221 = sand.u32 51, %s220
    %s222 = sshrl.u32 %s221, 2
    %s223 = sor.u32 %s221, %s222
    %s224 = sand.u32 15, %s223
    %v225 = vld [vmem:[%s215] sm:%s224]
    %v226 = vunpack.c.l.bf16 %v225
    %v227 = vunpack.c.h.bf16 %v225
    %s228 = scalar_lea.vmem [#allocation1], 16
    %229 = vst [vmem:[%s228] sm:%s5] %v226
    %s230 = scalar_lea.vmem %s0, 4
    %s231 = sshrl.u32 %s5, 1
    %s232 = sor.u32 %s5, %s231
    %s233 = sand.u32 %s232, 85
    %s234 = sshrl.u32 %s233, 1
    %s235 = sor.u32 %s233, %s234
    %s236 = sand.u32 51, %s235
    %s237 = sshrl.u32 %s236, 2
    %s238 = sor.u32 %s236, %s237
    %s239 = sand.u32 15, %s238
    %v240 = vld [vmem:[%s230] sm:%s239]
    %v241 = vunpack.c.l.bf16 %v240
    %v242 = vunpack.c.h.bf16 %v240
    %s243 = scalar_lea.vmem [#allocation1], 8
    %244 = vst [vmem:[%s243] sm:%s5] %v241
    %s245 = sshrl.u32 %s5, 1
    %s246 = sor.u32 %s5, %s245
    %s247 = sand.u32 %s246, 85
    %s248 = sshrl.u32 %s247, 1
    %s249 = sor.u32 %s247, %s248
    %s250 = sand.u32 51, %s249
    %s251 = sshrl.u32 %s250, 2
    %s252 = sor.u32 %s250, %s251
    %s253 = sand.u32 15, %s252
    %v254 = vld [vmem:[%s0] sm:%s253]
    %v255 = vunpack.c.l.bf16 %v254
    %v256 = vunpack.c.h.bf16 %v254
    %257 = vst [vmem:[#allocation1] sm:%s5] %v255
    %v258 = vld [vmem:[#allocation1] sm:$0xff]
    %vm259 = vcmask 64512
    %260 = vst.msk [vmem:[#allocation0] ss:$8 sm:$0xf] %vm259, %v258
    %261 = vst.msk [vmem:[#allocation0] ss:$8 sm:$0xf0] %vm259, %v258
    %s262 = scalar_lea.vmem [#allocation1], 8
    %v263 = vld [vmem:[%s262] sm:$0xff]
    %vm264 = vcmask 64512
    %s265 = scalar_lea.vmem [#allocation0], 64
    %266 = vst.msk [vmem:[%s265] ss:$8 sm:$0xf] %vm264, %v263
    %s267 = scalar_lea.vmem [#allocation0], 64
    %268 = vst.msk [vmem:[%s267] ss:$8 sm:$0xf0] %vm264, %v263
    %s269 = scalar_lea.vmem [#allocation1], 16
    %v270 = vld [vmem:[%s269] sm:$0xff]
    %vm271 = vcmask 64512
    %s272 = scalar_lea.vmem [#allocation0], 128
    %273 = vst.msk [vmem:[%s272] ss:$8 sm:$0xf] %vm271, %v270
    %s274 = scalar_lea.vmem [#allocation0], 128
    %275 = vst.msk [vmem:[%s274] ss:$8 sm:$0xf0] %vm271, %v270
    %s276 = scalar_lea.vmem [#allocation1], 24
    %v277 = vld [vmem:[%s276] sm:$0xff]
    %vm278 = vcmask 64512
    %s279 = scalar_lea.vmem [#allocation0], 192
    %280 = vst.msk [vmem:[%s279] ss:$8 sm:$0xf] %vm278, %v277
    %s281 = scalar_lea.vmem [#allocation0], 192
    %282 = vst.msk [vmem:[%s281] ss:$8 sm:$0xf0] %vm278, %v277
    %s283 = scalar_lea.vmem [#allocation1], 32
    %v284 = vld [vmem:[%s283] sm:$0xff]
    %vm285 = vcmask 64512
    %s286 = scalar_lea.vmem [#allocation0], 256
    %287 = vst.msk [vmem:[%s286] ss:$8 sm:$0xf] %vm285, %v284
    %s288 = scalar_lea.vmem [#allocation0], 256
    %289 = vst.msk [vmem:[%s288] ss:$8 sm:$0xf0] %vm285, %v284
    %s290 = scalar_lea.vmem [#allocation1], 40
    %v291 = vld [vmem:[%s290] sm:$0xff]
    %vm292 = vcmask 64512
    %s293 = scalar_lea.vmem [#allocation0], 320
    %294 = vst.msk [vmem:[%s293] ss:$8 sm:$0xf] %vm292, %v291
    %s295 = scalar_lea.vmem [#allocation0], 320
    %296 = vst.msk [vmem:[%s295] ss:$8 sm:$0xf0] %vm292, %v291
    %s297 = scalar_lea.vmem [#allocation1], 48
    %v298 = vld [vmem:[%s297] sm:$0xff]
    %vm299 = vcmask 64512
    %s300 = scalar_lea.vmem [#allocation0], 384
    %301 = vst.msk [vmem:[%s300] ss:$8 sm:$0xf] %vm299, %v298
    %s302 = scalar_lea.vmem [#allocation0], 384
    %303 = vst.msk [vmem:[%s302] ss:$8 sm:$0xf0] %vm299, %v298
    %s304 = scalar_lea.vmem [#allocation1], 56
    %v305 = vld [vmem:[%s304] sm:$0xff]
    %vm306 = vcmask 64512
    %s307 = scalar_lea.vmem [#allocation0], 448
    %308 = vst.msk [vmem:[%s307] ss:$8 sm:$0xf] %vm306, %v305
    %s309 = scalar_lea.vmem [#allocation0], 448
    %310 = vst.msk [vmem:[%s309] ss:$8 sm:$0xf0] %vm306, %v305
    %s311 = scalar_lea.vmem [#allocation1], 64
    %v312 = vld [vmem:[%s311] sm:$0xff]
    %vm313 = vcmask 64512
    %s314 = scalar_lea.vmem [#allocation0], 512
    %315 = vst.msk [vmem:[%s314] ss:$8 sm:$0xf] %vm313, %v312
    %s316 = scalar_lea.vmem [#allocation0], 512
    %317 = vst.msk [vmem:[%s316] ss:$8 sm:$0xf0] %vm313, %v312
    %s318 = scalar_lea.vmem [#allocation1], 72
    %v319 = vld [vmem:[%s318] sm:$0xff]
    %vm320 = vcmask 64512
    %s321 = scalar_lea.vmem [#allocation0], 576
    %322 = vst.msk [vmem:[%s321] ss:$8 sm:$0xf] %vm320, %v319
    %s323 = scalar_lea.vmem [#allocation0], 576
    %324 = vst.msk [vmem:[%s323] ss:$8 sm:$0xf0] %vm320, %v319
    %s325 = scalar_lea.vmem [#allocation1], 80
    %v326 = vld [vmem:[%s325] sm:$0xff]
    %vm327 = vcmask 64512
    %s328 = scalar_lea.vmem [#allocation0], 640
    %329 = vst.msk [vmem:[%s328] ss:$8 sm:$0xf] %vm327, %v326
    %s330 = scalar_lea.vmem [#allocation0], 640
    %331 = vst.msk [vmem:[%s330] ss:$8 sm:$0xf0] %vm327, %v326
    %s332 = scalar_lea.vmem [#allocation1], 88
    %v333 = vld [vmem:[%s332] sm:$0xff]
    %vm334 = vcmask 64512
    %s335 = scalar_lea.vmem [#allocation0], 704
    %336 = vst.msk [vmem:[%s335] ss:$8 sm:$0xf] %vm334, %v333
    %s337 = scalar_lea.vmem [#allocation0], 704
    %338 = vst.msk [vmem:[%s337] ss:$8 sm:$0xf0] %vm334, %v333
    %s339 = scalar_lea.vmem [#allocation1], 96
    %v340 = vld [vmem:[%s339] sm:$0xff]
    %vm341 = vcmask 64512
    %s342 = scalar_lea.vmem [#allocation0], 768
    %343 = vst.msk [vmem:[%s342] ss:$8 sm:$0xf] %vm341, %v340
    %s344 = scalar_lea.vmem [#allocation0], 768
    %345 = vst.msk [vmem:[%s344] ss:$8 sm:$0xf0] %vm341, %v340
    %s346 = scalar_lea.vmem [#allocation1], 104
    %v347 = vld [vmem:[%s346] sm:$0xff]
    %vm348 = vcmask 64512
    %s349 = scalar_lea.vmem [#allocation0], 832
    %350 = vst.msk [vmem:[%s349] ss:$8 sm:$0xf] %vm348, %v347
    %s351 = scalar_lea.vmem [#allocation0], 832
    %352 = vst.msk [vmem:[%s351] ss:$8 sm:$0xf0] %vm348, %v347
    %s353 = scalar_lea.vmem [#allocation1], 112
    %v354 = vld [vmem:[%s353] sm:$0xff]
    %vm355 = vcmask 64512
    %s356 = scalar_lea.vmem [#allocation0], 896
    %357 = vst.msk [vmem:[%s356] ss:$8 sm:$0xf] %vm355, %v354
    %s358 = scalar_lea.vmem [#allocation0], 896
    %359 = vst.msk [vmem:[%s358] ss:$8 sm:$0xf0] %vm355, %v354
    %s360 = scalar_lea.vmem [#allocation1], 120
    %v361 = vld [vmem:[%s360] sm:$0xff]
    %vm362 = vcmask 64512
    %s363 = scalar_lea.vmem [#allocation0], 960
    %364 = vst.msk [vmem:[%s363] ss:$8 sm:$0xf] %vm362, %v361
    %s365 = scalar_lea.vmem [#allocation0], 960
    %366 = vst.msk [vmem:[%s365] ss:$8 sm:$0xf0] %vm362, %v361
    %v367 = vld [vmem:[#allocation1] sm:$0xff]
    %368 = vrot.lane.b32.xlu0 %v367, 120
    %v369 = vpop.permute.xlu0 %368
    %vm370 = vcmask 64512
    %s371 = scalar_lea.vmem [#allocation0], 1
    %372 = vst.msk [vmem:[%s371] ss:$8 sm:$0xf] %vm370, %v369
    %s373 = scalar_lea.vmem [#allocation0], 1
    %374 = vst.msk [vmem:[%s373] ss:$8 sm:$0xf0] %vm370, %v369
    %s375 = scalar_lea.vmem [#allocation1], 8
    %v376 = vld [vmem:[%s375] sm:$0xff]
    %377 = vrot.lane.b32.xlu0 %v376, 120
    %v378 = vpop.permute.xlu0 %377
    %vm379 = vcmask 64512
    %s380 = scalar_lea.vmem [#allocation0], 65
    %381 = vst.msk [vmem:[%s380] ss:$8 sm:$0xf] %vm379, %v378
    %s382 = scalar_lea.vmem [#allocation0], 65
    %383 = vst.msk [vmem:[%s382] ss:$8 sm:$0xf0] %vm379, %v378
    %s384 = scalar_lea.vmem [#allocation1], 16
    %v385 = vld [vmem:[%s384] sm:$0xff]
    %386 = vrot.lane.b32.xlu0 %v385, 120
    %v387 = vpop.permute.xlu0 %386
    %vm388 = vcmask 64512
    %s389 = scalar_lea.vmem [#allocation0], 129
    %390 = vst.msk [vmem:[%s389] ss:$8 sm:$0xf] %vm388, %v387
    %s391 = scalar_lea.vmem [#allocation0], 129
    %392 = vst.msk [vmem:[%s391] ss:$8 sm:$0xf0] %vm388, %v387
    %s393 = scalar_lea.vmem [#allocation1], 24
    %v394 = vld [vmem:[%s393] sm:$0xff]
    %395 = vrot.lane.b32.xlu0 %v394, 120
    %v396 = vpop.permute.xlu0 %395
    %vm397 = vcmask 64512
    %s398 = scalar_lea.vmem [#allocation0], 193
    %399 = vst.msk [vmem:[%s398] ss:$8 sm:$0xf] %vm397, %v396
    %s400 = scalar_lea.vmem [#allocation0], 193
    %401 = vst.msk [vmem:[%s400] ss:$8 sm:$0xf0] %vm397, %v396
    %s402 = scalar_lea.vmem [#allocation1], 32
    %v403 = vld [vmem:[%s402] sm:$0xff]
    %404 = vrot.lane.b32.xlu0 %v403, 120
    %v405 = vpop.permute.xlu0 %404
    %vm406 = vcmask 64512
    %s407 = scalar_lea.vmem [#allocation0], 257
    %408 = vst.msk [vmem:[%s407] ss:$8 sm:$0xf] %vm406, %v405
    %s409 = scalar_lea.vmem [#allocation0], 257
    %410 = vst.msk [vmem:[%s409] ss:$8 sm:$0xf0] %vm406, %v405
    %s411 = scalar_lea.vmem [#allocation1], 40
    %v412 = vld [vmem:[%s411] sm:$0xff]
    %413 = vrot.lane.b32.xlu0 %v412, 120
    %v414 = vpop.permute.xlu0 %413
    %vm415 = vcmask 64512
    %s416 = scalar_lea.vmem [#allocation0], 321
    %417 = vst.msk [vmem:[%s416] ss:$8 sm:$0xf] %vm415, %v414
    %s418 = scalar_lea.vmem [#allocation0], 321
    %419 = vst.msk [vmem:[%s418] ss:$8 sm:$0xf0] %vm415, %v414
    %s420 = scalar_lea.vmem [#allocation1], 48
    %v421 = vld [vmem:[%s420] sm:$0xff]
    %422 = vrot.lane.b32.xlu0 %v421, 120
    %v423 = vpop.permute.xlu0 %422
    %vm424 = vcmask 64512
    %s425 = scalar_lea.vmem [#allocation0], 385
    %426 = vst.msk [vmem:[%s425] ss:$8 sm:$0xf] %vm424, %v423
    %s427 = scalar_lea.vmem [#allocation0], 385
    %428 = vst.msk [vmem:[%s427] ss:$8 sm:$0xf0] %vm424, %v423
    %s429 = scalar_lea.vmem [#allocation1], 56
    %v430 = vld [vmem:[%s429] sm:$0xff]
    %431 = vrot.lane.b32.xlu0 %v430, 120
    %v432 = vpop.permute.xlu0 %431
    %vm433 = vcmask 64512
    %s434 = scalar_lea.vmem [#allocation0], 449
    %435 = vst.msk [vmem:[%s434] ss:$8 sm:$0xf] %vm433, %v432
    %s436 = scalar_lea.vmem [#allocation0], 449
    %437 = vst.msk [vmem:[%s436] ss:$8 sm:$0xf0] %vm433, %v432
    %s438 = scalar_lea.vmem [#allocation1], 64
    %v439 = vld [vmem:[%s438] sm:$0xff]
    %440 = vrot.lane.b32.xlu0 %v439, 120
    %v441 = vpop.permute.xlu0 %440
    %vm442 = vcmask 64512
    %s443 = scalar_lea.vmem [#allocation0], 513
    %444 = vst.msk [vmem:[%s443] ss:$8 sm:$0xf] %vm442, %v441
    %s445 = scalar_lea.vmem [#allocation0], 513
    %446 = vst.msk [vmem:[%s445] ss:$8 sm:$0xf0] %vm442, %v441
    %s447 = scalar_lea.vmem [#allocation1], 72
    %v448 = vld [vmem:[%s447] sm:$0xff]
    %449 = vrot.lane.b32.xlu0 %v448, 120
    %v450 = vpop.permute.xlu0 %449
    %vm451 = vcmask 64512
    %s452 = scalar_lea.vmem [#allocation0], 577
    %453 = vst.msk [vmem:[%s452] ss:$8 sm:$0xf] %vm451, %v450
    %s454 = scalar_lea.vmem [#allocation0], 577
    %455 = vst.msk [vmem:[%s454] ss:$8 sm:$0xf0] %vm451, %v450
    %s456 = scalar_lea.vmem [#allocation1], 80
    %v457 = vld [vmem:[%s456] sm:$0xff]
    %458 = vrot.lane.b32.xlu0 %v457, 120
    %v459 = vpop.permute.xlu0 %458
    %vm460 = vcmask 64512
    %s461 = scalar_lea.vmem [#allocation0], 641
    %462 = vst.msk [vmem:[%s461] ss:$8 sm:$0xf] %vm460, %v459
    %s463 = scalar_lea.vmem [#allocation0], 641
    %464 = vst.msk [vmem:[%s463] ss:$8 sm:$0xf0] %vm460, %v459
    %s465 = scalar_lea.vmem [#allocation1], 88
    %v466 = vld [vmem:[%s465] sm:$0xff]
    %467 = vrot.lane.b32.xlu0 %v466, 120
    %v468 = vpop.permute.xlu0 %467
    %vm469 = vcmask 64512
    %s470 = scalar_lea.vmem [#allocation0], 705
    %471 = vst.msk [vmem:[%s470] ss:$8 sm:$0xf] %vm469, %v468
    %s472 = scalar_lea.vmem [#allocation0], 705
    %473 = vst.msk [vmem:[%s472] ss:$8 sm:$0xf0] %vm469, %v468
    %s474 = scalar_lea.vmem [#allocation1], 96
    %v475 = vld [vmem:[%s474] sm:$0xff]
    %476 = vrot.lane.b32.xlu0 %v475, 120
    %v477 = vpop.permute.xlu0 %476
    %vm478 = vcmask 64512
    %s479 = scalar_lea.vmem [#allocation0], 769
    %480 = vst.msk [vmem:[%s479] ss:$8 sm:$0xf] %vm478, %v477
    %s481 = scalar_lea.vmem [#allocation0], 769
    %482 = vst.msk [vmem:[%s481] ss:$8 sm:$0xf0] %vm478, %v477
    %s483 = scalar_lea.vmem [#allocation1], 104
    %v484 = vld [vmem:[%s483] sm:$0xff]
    %485 = vrot.lane.b32.xlu0 %v484, 120
    %v486 = vpop.permute.xlu0 %485
    %vm487 = vcmask 64512
    %s488 = scalar_lea.vmem [#allocation0], 833
    %489 = vst.msk [vmem:[%s488] ss:$8 sm:$0xf] %vm487, %v486
    %s490 = scalar_lea.vmem [#allocation0], 833
    %491 = vst.msk [vmem:[%s490] ss:$8 sm:$0xf0] %vm487, %v486
    %s492 = scalar_lea.vmem [#allocation1], 112
    %v493 = vld [vmem:[%s492] sm:$0xff]
    %494 = vrot.lane.b32.xlu0 %v493, 120
    %v495 = vpop.permute.xlu0 %494
    %vm496 = vcmask 64512
    %s497 = scalar_lea.vmem [#allocation0], 897
    %498 = vst.msk [vmem:[%s497] ss:$8 sm:$0xf] %vm496, %v495
    %s499 = scalar_lea.vmem [#allocation0], 897
    %500 = vst.msk [vmem:[%s499] ss:$8 sm:$0xf0] %vm496, %v495
    %s501 = scalar_lea.vmem [#allocation1], 120
    %v502 = vld [vmem:[%s501] sm:$0xff]
    %503 = vrot.lane.b32.xlu0 %v502, 120
    %v504 = vpop.permute.xlu0 %503
    %vm505 = vcmask 64512
    %s506 = scalar_lea.vmem [#allocation0], 961
    %507 = vst.msk [vmem:[%s506] ss:$8 sm:$0xf] %vm505, %v504
    %s508 = scalar_lea.vmem [#allocation0], 961
    %509 = vst.msk [vmem:[%s508] ss:$8 sm:$0xf0] %vm505, %v504
    %v510 = vld [vmem:[#allocation1] sm:$0xff]
    %511 = vrot.lane.b32.xlu0 %v510, 112
    %v512 = vpop.permute.xlu0 %511
    %vm513 = vcmask 64512
    %s514 = scalar_lea.vmem [#allocation0], 2
    %515 = vst.msk [vmem:[%s514] ss:$8 sm:$0xf] %vm513, %v512
    %s516 = scalar_lea.vmem [#allocation0], 2
    %517 = vst.msk [vmem:[%s516] ss:$8 sm:$0xf0] %vm513, %v512
    %s518 = scalar_lea.vmem [#allocation1], 8
    %v519 = vld [vmem:[%s518] sm:$0xff]
    %520 = vrot.lane.b32.xlu0 %v519, 112
    %v521 = vpop.permute.xlu0 %520
    %vm522 = vcmask 64512
    %s523 = scalar_lea.vmem [#allocation0], 66
    %524 = vst.msk [vmem:[%s523] ss:$8 sm:$0xf] %vm522, %v521
    %s525 = scalar_lea.vmem [#allocation0], 66
    %526 = vst.msk [vmem:[%s525] ss:$8 sm:$0xf0] %vm522, %v521
    %s527 = scalar_lea.vmem [#allocation1], 16
    %v528 = vld [vmem:[%s527] sm:$0xff]
    %529 = vrot.lane.b32.xlu0 %v528, 112
    %v530 = vpop.permute.xlu0 %529
    %vm531 = vcmask 64512
    %s532 = scalar_lea.vmem [#allocation0], 130
    %533 = vst.msk [vmem:[%s532] ss:$8 sm:$0xf] %vm531, %v530
    %s534 = scalar_lea.vmem [#allocation0], 130
    %535 = vst.msk [vmem:[%s534] ss:$8 sm:$0xf0] %vm531, %v530
    %s536 = scalar_lea.vmem [#allocation1], 24
    %v537 = vld [vmem:[%s536] sm:$0xff]
    %538 = vrot.lane.b32.xlu0 %v537, 112
    %v539 = vpop.permute.xlu0 %538
    %vm540 = vcmask 64512
    %s541 = scalar_lea.vmem [#allocation0], 194
    %542 = vst.msk [vmem:[%s541] ss:$8 sm:$0xf] %vm540, %v539
    %s543 = scalar_lea.vmem [#allocation0], 194
    %544 = vst.msk [vmem:[%s543] ss:$8 sm:$0xf0] %vm540, %v539
    %s545 = scalar_lea.vmem [#allocation1], 32
    %v546 = vld [vmem:[%s545] sm:$0xff]
    %547 = vrot.lane.b32.xlu0 %v546, 112
    %v548 = vpop.permute.xlu0 %547
    %vm549 = vcmask 64512
    %s550 = scalar_lea.vmem [#allocation0], 258
    %551 = vst.msk [vmem:[%s550] ss:$8 sm:$0xf] %vm549, %v548
    %s552 = scalar_lea.vmem [#allocation0], 258
    %553 = vst.msk [vmem:[%s552] ss:$8 sm:$0xf0] %vm549, %v548
    %s554 = scalar_lea.vmem [#allocation1], 40
    %v555 = vld [vmem:[%s554] sm:$0xff]
    %556 = vrot.lane.b32.xlu0 %v555, 112
    %v557 = vpop.permute.xlu0 %556
    %vm558 = vcmask 64512
    %s559 = scalar_lea.vmem [#allocation0], 322
    %560 = vst.msk [vmem:[%s559] ss:$8 sm:$0xf] %vm558, %v557
    %s561 = scalar_lea.vmem [#allocation0], 322
    %562 = vst.msk [vmem:[%s561] ss:$8 sm:$0xf0] %vm558, %v557
    %s563 = scalar_lea.vmem [#allocation1], 48
    %v564 = vld [vmem:[%s563] sm:$0xff]
    %565 = vrot.lane.b32.xlu0 %v564, 112
    %v566 = vpop.permute.xlu0 %565
    %vm567 = vcmask 64512
    %s568 = scalar_lea.vmem [#allocation0], 386
    %569 = vst.msk [vmem:[%s568] ss:$8 sm:$0xf] %vm567, %v566
    %s570 = scalar_lea.vmem [#allocation0], 386
    %571 = vst.msk [vmem:[%s570] ss:$8 sm:$0xf0] %vm567, %v566
    %s572 = scalar_lea.vmem [#allocation1], 56
    %v573 = vld [vmem:[%s572] sm:$0xff]
    %574 = vrot.lane.b32.xlu0 %v573, 112
    %v575 = vpop.permute.xlu0 %574
    %vm576 = vcmask 64512
    %s577 = scalar_lea.vmem [#allocation0], 450
    %578 = vst.msk [vmem:[%s577] ss:$8 sm:$0xf] %vm576, %v575
    %s579 = scalar_lea.vmem [#allocation0], 450
    %580 = vst.msk [vmem:[%s579] ss:$8 sm:$0xf0] %vm576, %v575
    %s581 = scalar_lea.vmem [#allocation1], 64
    %v582 = vld [vmem:[%s581] sm:$0xff]
    %583 = vrot.lane.b32.xlu0 %v582, 112
    %v584 = vpop.permute.xlu0 %583
    %vm585 = vcmask 64512
    %s586 = scalar_lea.vmem [#allocation0], 514
    %587 = vst.msk [vmem:[%s586] ss:$8 sm:$0xf] %vm585, %v584
    %s588 = scalar_lea.vmem [#allocation0], 514
    %589 = vst.msk [vmem:[%s588] ss:$8 sm:$0xf0] %vm585, %v584
    %s590 = scalar_lea.vmem [#allocation1], 72
    %v591 = vld [vmem:[%s590] sm:$0xff]
    %592 = vrot.lane.b32.xlu0 %v591, 112
    %v593 = vpop.permute.xlu0 %592
    %vm594 = vcmask 64512
    %s595 = scalar_lea.vmem [#allocation0], 578
    %596 = vst.msk [vmem:[%s595] ss:$8 sm:$0xf] %vm594, %v593
    %s597 = scalar_lea.vmem [#allocation0], 578
    %598 = vst.msk [vmem:[%s597] ss:$8 sm:$0xf0] %vm594, %v593
    %s599 = scalar_lea.vmem [#allocation1], 80
    %v600 = vld [vmem:[%s599] sm:$0xff]
    %601 = vrot.lane.b32.xlu0 %v600, 112
    %v602 = vpop.permute.xlu0 %601
    %vm603 = vcmask 64512
    %s604 = scalar_lea.vmem [#allocation0], 642
    %605 = vst.msk [vmem:[%s604] ss:$8 sm:$0xf] %vm603, %v602
    %s606 = scalar_lea.vmem [#allocation0], 642
    %607 = vst.msk [vmem:[%s606] ss:$8 sm:$0xf0] %vm603, %v602
    %s608 = scalar_lea.vmem [#allocation1], 88
    %v609 = vld [vmem:[%s608] sm:$0xff]
    %610 = vrot.lane.b32.xlu0 %v609, 112
    %v611 = vpop.permute.xlu0 %610
    %vm612 = vcmask 64512
    %s613 = scalar_lea.vmem [#allocation0], 706
    %614 = vst.msk [vmem:[%s613] ss:$8 sm:$0xf] %vm612, %v611
    %s615 = scalar_lea.vmem [#allocation0], 706
    %616 = vst.msk [vmem:[%s615] ss:$8 sm:$0xf0] %vm612, %v611
    %s617 = scalar_lea.vmem [#allocation1], 96
    %v618 = vld [vmem:[%s617] sm:$0xff]
    %619 = vrot.lane.b32.xlu0 %v618, 112
    %v620 = vpop.permute.xlu0 %619
    %vm621 = vcmask 64512
    %s622 = scalar_lea.vmem [#allocation0], 770
    %623 = vst.msk [vmem:[%s622] ss:$8 sm:$0xf] %vm621, %v620
    %s624 = scalar_lea.vmem [#allocation0], 770
    %625 = vst.msk [vmem:[%s624] ss:$8 sm:$0xf0] %vm621, %v620
    %s626 = scalar_lea.vmem [#allocation1], 104
    %v627 = vld [vmem:[%s626] sm:$0xff]
    %628 = vrot.lane.b32.xlu0 %v627, 112
    %v629 = vpop.permute.xlu0 %628
    %vm630 = vcmask 64512
    %s631 = scalar_lea.vmem [#allocation0], 834
    %632 = vst.msk [vmem:[%s631] ss:$8 sm:$0xf] %vm630, %v629
    %s633 = scalar_lea.vmem [#allocation0], 834
    %634 = vst.msk [vmem:[%s633] ss:$8 sm:$0xf0] %vm630, %v629
    %s635 = scalar_lea.vmem [#allocation1], 112
    %v636 = vld [vmem:[%s635] sm:$0xff]
    %637 = vrot.lane.b32.xlu0 %v636, 112
    %v638 = vpop.permute.xlu0 %637
    %vm639 = vcmask 64512
    %s640 = scalar_lea.vmem [#allocation0], 898
    %641 = vst.msk [vmem:[%s640] ss:$8 sm:$0xf] %vm639, %v638
    %s642 = scalar_lea.vmem [#allocation0], 898
    %643 = vst.msk [vmem:[%s642] ss:$8 sm:$0xf0] %vm639, %v638
    %s644 = scalar_lea.vmem [#allocation1], 120
    %v645 = vld [vmem:[%s644] sm:$0xff]
    %646 = vrot.lane.b32.xlu0 %v645, 112
    %v647 = vpop.permute.xlu0 %646
    %vm648 = vcmask 64512
    %s649 = scalar_lea.vmem [#allocation0], 962
    %650 = vst.msk [vmem:[%s649] ss:$8 sm:$0xf] %vm648, %v647
    %s651 = scalar_lea.vmem [#allocation0], 962
    %652 = vst.msk [vmem:[%s651] ss:$8 sm:$0xf0] %vm648, %v647
    %v653 = vld [vmem:[#allocation1] sm:$0xff]
    %654 = vrot.lane.b32.xlu0 %v653, 104
    %v655 = vpop.permute.xlu0 %654
    %vm656 = vcmask 64512
    %s657 = scalar_lea.vmem [#allocation0], 3
    %658 = vst.msk [vmem:[%s657] ss:$8 sm:$0xf] %vm656, %v655
    %s659 = scalar_lea.vmem [#allocation0], 3
    %660 = vst.msk [vmem:[%s659] ss:$8 sm:$0xf0] %vm656, %v655
    %s661 = scalar_lea.vmem [#allocation1], 8
    %v662 = vld [vmem:[%s661] sm:$0xff]
    %663 = vrot.lane.b32.xlu0 %v662, 104
    %v664 = vpop.permute.xlu0 %663
    %vm665 = vcmask 64512
    %s666 = scalar_lea.vmem [#allocation0], 67
    %667 = vst.msk [vmem:[%s666] ss:$8 sm:$0xf] %vm665, %v664
    %s668 = scalar_lea.vmem [#allocation0], 67
    %669 = vst.msk [vmem:[%s668] ss:$8 sm:$0xf0] %vm665, %v664
    %s670 = scalar_lea.vmem [#allocation1], 16
    %v671 = vld [vmem:[%s670] sm:$0xff]
    %672 = vrot.lane.b32.xlu0 %v671, 104
    %v673 = vpop.permute.xlu0 %672
    %vm674 = vcmask 64512
    %s675 = scalar_lea.vmem [#allocation0], 131
    %676 = vst.msk [vmem:[%s675] ss:$8 sm:$0xf] %vm674, %v673
    %s677 = scalar_lea.vmem [#allocation0], 131
    %678 = vst.msk [vmem:[%s677] ss:$8 sm:$0xf0] %vm674, %v673
    %s679 = scalar_lea.vmem [#allocation1], 24
    %v680 = vld [vmem:[%s679] sm:$0xff]
    %681 = vrot.lane.b32.xlu0 %v680, 104
    %v682 = vpop.permute.xlu0 %681
    %vm683 = vcmask 64512
    %s684 = scalar_lea.vmem [#allocation0], 195
    %685 = vst.msk [vmem:[%s684] ss:$8 sm:$0xf] %vm683, %v682
    %s686 = scalar_lea.vmem [#allocation0], 195
    %687 = vst.msk [vmem:[%s686] ss:$8 sm:$0xf0] %vm683, %v682
    %s688 = scalar_lea.vmem [#allocation1], 32
    %v689 = vld [vmem:[%s688] sm:$0xff]
    %690 = vrot.lane.b32.xlu0 %v689, 104
    %v691 = vpop.permute.xlu0 %690
    %vm692 = vcmask 64512
    %s693 = scalar_lea.vmem [#allocation0], 259
    %694 = vst.msk [vmem:[%s693] ss:$8 sm:$0xf] %vm692, %v691
    %s695 = scalar_lea.vmem [#allocation0], 259
    %696 = vst.msk [vmem:[%s695] ss:$8 sm:$0xf0] %vm692, %v691
    %s697 = scalar_lea.vmem [#allocation1], 40
    %v698 = vld [vmem:[%s697] sm:$0xff]
    %699 = vrot.lane.b32.xlu0 %v698, 104
    %v700 = vpop.permute.xlu0 %699
    %vm701 = vcmask 64512
    %s702 = scalar_lea.vmem [#allocation0], 323
    %703 = vst.msk [vmem:[%s702] ss:$8 sm:$0xf] %vm701, %v700
    %s704 = scalar_lea.vmem [#allocation0], 323
    %705 = vst.msk [vmem:[%s704] ss:$8 sm:$0xf0] %vm701, %v700
    %s706 = scalar_lea.vmem [#allocation1], 48
    %v707 = vld [vmem:[%s706] sm:$0xff]
    %708 = vrot.lane.b32.xlu0 %v707, 104
    %v709 = vpop.permute.xlu0 %708
    %vm710 = vcmask 64512
    %s711 = scalar_lea.vmem [#allocation0], 387
    %712 = vst.msk [vmem:[%s711] ss:$8 sm:$0xf] %vm710, %v709
    %s713 = scalar_lea.vmem [#allocation0], 387
    %714 = vst.msk [vmem:[%s713] ss:$8 sm:$0xf0] %vm710, %v709
    %s715 = scalar_lea.vmem [#allocation1], 56
    %v716 = vld [vmem:[%s715] sm:$0xff]
    %717 = vrot.lane.b32.xlu0 %v716, 104
    %v718 = vpop.permute.xlu0 %717
    %vm719 = vcmask 64512
    %s720 = scalar_lea.vmem [#allocation0], 451
    %721 = vst.msk [vmem:[%s720] ss:$8 sm:$0xf] %vm719, %v718
    %s722 = scalar_lea.vmem [#allocation0], 451
    %723 = vst.msk [vmem:[%s722] ss:$8 sm:$0xf0] %vm719, %v718
    %s724 = scalar_lea.vmem [#allocation1], 64
    %v725 = vld [vmem:[%s724] sm:$0xff]
    %726 = vrot.lane.b32.xlu0 %v725, 104
    %v727 = vpop.permute.xlu0 %726
    %vm728 = vcmask 64512
    %s729 = scalar_lea.vmem [#allocation0], 515
    %730 = vst.msk [vmem:[%s729] ss:$8 sm:$0xf] %vm728, %v727
    %s731 = scalar_lea.vmem [#allocation0], 515
    %732 = vst.msk [vmem:[%s731] ss:$8 sm:$0xf0] %vm728, %v727
    %s733 = scalar_lea.vmem [#allocation1], 72
    %v734 = vld [vmem:[%s733] sm:$0xff]
    %735 = vrot.lane.b32.xlu0 %v734, 104
    %v736 = vpop.permute.xlu0 %735
    %vm737 = vcmask 64512
    %s738 = scalar_lea.vmem [#allocation0], 579
    %739 = vst.msk [vmem:[%s738] ss:$8 sm:$0xf] %vm737, %v736
    %s740 = scalar_lea.vmem [#allocation0], 579
    %741 = vst.msk [vmem:[%s740] ss:$8 sm:$0xf0] %vm737, %v736
    %s742 = scalar_lea.vmem [#allocation1], 80
    %v743 = vld [vmem:[%s742] sm:$0xff]
    %744 = vrot.lane.b32.xlu0 %v743, 104
    %v745 = vpop.permute.xlu0 %744
    %vm746 = vcmask 64512
    %s747 = scalar_lea.vmem [#allocation0], 643
    %748 = vst.msk [vmem:[%s747] ss:$8 sm:$0xf] %vm746, %v745
    %s749 = scalar_lea.vmem [#allocation0], 643
    %750 = vst.msk [vmem:[%s749] ss:$8 sm:$0xf0] %vm746, %v745
    %s751 = scalar_lea.vmem [#allocation1], 88
    %v752 = vld [vmem:[%s751] sm:$0xff]
    %753 = vrot.lane.b32.xlu0 %v752, 104
    %v754 = vpop.permute.xlu0 %753
    %vm755 = vcmask 64512
    %s756 = scalar_lea.vmem [#allocation0], 707
    %757 = vst.msk [vmem:[%s756] ss:$8 sm:$0xf] %vm755, %v754
    %s758 = scalar_lea.vmem [#allocation0], 707
    %759 = vst.msk [vmem:[%s758] ss:$8 sm:$0xf0] %vm755, %v754
    %s760 = scalar_lea.vmem [#allocation1], 96
    %v761 = vld [vmem:[%s760] sm:$0xff]
    %762 = vrot.lane.b32.xlu0 %v761, 104
    %v763 = vpop.permute.xlu0 %762
    %vm764 = vcmask 64512
    %s765 = scalar_lea.vmem [#allocation0], 771
    %766 = vst.msk [vmem:[%s765] ss:$8 sm:$0xf] %vm764, %v763
    %s767 = scalar_lea.vmem [#allocation0], 771
    %768 = vst.msk [vmem:[%s767] ss:$8 sm:$0xf0] %vm764, %v763
    %s769 = scalar_lea.vmem [#allocation1], 104
    %v770 = vld [vmem:[%s769] sm:$0xff]
    %771 = vrot.lane.b32.xlu0 %v770, 104
    %v772 = vpop.permute.xlu0 %771
    %vm773 = vcmask 64512
    %s774 = scalar_lea.vmem [#allocation0], 835
    %775 = vst.msk [vmem:[%s774] ss:$8 sm:$0xf] %vm773, %v772
    %s776 = scalar_lea.vmem [#allocation0], 835
    %777 = vst.msk [vmem:[%s776] ss:$8 sm:$0xf0] %vm773, %v772
    %s778 = scalar_lea.vmem [#allocation1], 112
    %v779 = vld [vmem:[%s778] sm:$0xff]
    %780 = vrot.lane.b32.xlu0 %v779, 104
    %v781 = vpop.permute.xlu0 %780
    %vm782 = vcmask 64512
    %s783 = scalar_lea.vmem [#allocation0], 899
    %784 = vst.msk [vmem:[%s783] ss:$8 sm:$0xf] %vm782, %v781
    %s785 = scalar_lea.vmem [#allocation0], 899
    %786 = vst.msk [vmem:[%s785] ss:$8 sm:$0xf0] %vm782, %v781
    %s787 = scalar_lea.vmem [#allocation1], 120
    %v788 = vld [vmem:[%s787] sm:$0xff]
    %789 = vrot.lane.b32.xlu0 %v788, 104
    %v790 = vpop.permute.xlu0 %789
    %vm791 = vcmask 64512
    %s792 = scalar_lea.vmem [#allocation0], 963
    %793 = vst.msk [vmem:[%s792] ss:$8 sm:$0xf] %vm791, %v790
    %s794 = scalar_lea.vmem [#allocation0], 963
    %795 = vst.msk [vmem:[%s794] ss:$8 sm:$0xf0] %vm791, %v790
    %v796 = vld [vmem:[#allocation1] sm:$0xff]
    %797 = vrot.lane.b32.xlu0 %v796, 96
    %v798 = vpop.permute.xlu0 %797
    %vm799 = vcmask 64512
    %s800 = scalar_lea.vmem [#allocation0], 4
    %801 = vst.msk [vmem:[%s800] ss:$8 sm:$0xf] %vm799, %v798
    %s802 = scalar_lea.vmem [#allocation0], 4
    %803 = vst.msk [vmem:[%s802] ss:$8 sm:$0xf0] %vm799, %v798
    %s804 = scalar_lea.vmem [#allocation1], 8
    %v805 = vld [vmem:[%s804] sm:$0xff]
    %806 = vrot.lane.b32.xlu0 %v805, 96
    %v807 = vpop.permute.xlu0 %806
    %vm808 = vcmask 64512
    %s809 = scalar_lea.vmem [#allocation0], 68
    %810 = vst.msk [vmem:[%s809] ss:$8 sm:$0xf] %vm808, %v807
    %s811 = scalar_lea.vmem [#allocation0], 68
    %812 = vst.msk [vmem:[%s811] ss:$8 sm:$0xf0] %vm808, %v807
    %s813 = scalar_lea.vmem [#allocation1], 16
    %v814 = vld [vmem:[%s813] sm:$0xff]
    %815 = vrot.lane.b32.xlu0 %v814, 96
    %v816 = vpop.permute.xlu0 %815
    %vm817 = vcmask 64512
    %s818 = scalar_lea.vmem [#allocation0], 132
    %819 = vst.msk [vmem:[%s818] ss:$8 sm:$0xf] %vm817, %v816
    %s820 = scalar_lea.vmem [#allocation0], 132
    %821 = vst.msk [vmem:[%s820] ss:$8 sm:$0xf0] %vm817, %v816
    %s822 = scalar_lea.vmem [#allocation1], 24
    %v823 = vld [vmem:[%s822] sm:$0xff]
    %824 = vrot.lane.b32.xlu0 %v823, 96
    %v825 = vpop.permute.xlu0 %824
    %vm826 = vcmask 64512
    %s827 = scalar_lea.vmem [#allocation0], 196
    %828 = vst.msk [vmem:[%s827] ss:$8 sm:$0xf] %vm826, %v825
    %s829 = scalar_lea.vmem [#allocation0], 196
    %830 = vst.msk [vmem:[%s829] ss:$8 sm:$0xf0] %vm826, %v825
    %s831 = scalar_lea.vmem [#allocation1], 32
    %v832 = vld [vmem:[%s831] sm:$0xff]
    %833 = vrot.lane.b32.xlu0 %v832, 96
    %v834 = vpop.permute.xlu0 %833
    %vm835 = vcmask 64512
    %s836 = scalar_lea.vmem [#allocation0], 260
    %837 = vst.msk [vmem:[%s836] ss:$8 sm:$0xf] %vm835, %v834
    %s838 = scalar_lea.vmem [#allocation0], 260
    %839 = vst.msk [vmem:[%s838] ss:$8 sm:$0xf0] %vm835, %v834
    %s840 = scalar_lea.vmem [#allocation1], 40
    %v841 = vld [vmem:[%s840] sm:$0xff]
    %842 = vrot.lane.b32.xlu0 %v841, 96
    %v843 = vpop.permute.xlu0 %842
    %vm844 = vcmask 64512
    %s845 = scalar_lea.vmem [#allocation0], 324
    %846 = vst.msk [vmem:[%s845] ss:$8 sm:$0xf] %vm844, %v843
    %s847 = scalar_lea.vmem [#allocation0], 324
    %848 = vst.msk [vmem:[%s847] ss:$8 sm:$0xf0] %vm844, %v843
    %s849 = scalar_lea.vmem [#allocation1], 48
    %v850 = vld [vmem:[%s849] sm:$0xff]
    %851 = vrot.lane.b32.xlu0 %v850, 96
    %v852 = vpop.permute.xlu0 %851
    %vm853 = vcmask 64512
    %s854 = scalar_lea.vmem [#allocation0], 388
    %855 = vst.msk [vmem:[%s854] ss:$8 sm:$0xf] %vm853, %v852
    %s856 = scalar_lea.vmem [#allocation0], 388
    %857 = vst.msk [vmem:[%s856] ss:$8 sm:$0xf0] %vm853, %v852
    %s858 = scalar_lea.vmem [#allocation1], 56
    %v859 = vld [vmem:[%s858] sm:$0xff]
    %860 = vrot.lane.b32.xlu0 %v859, 96
    %v861 = vpop.permute.xlu0 %860
    %vm862 = vcmask 64512
    %s863 = scalar_lea.vmem [#allocation0], 452
    %864 = vst.msk [vmem:[%s863] ss:$8 sm:$0xf] %vm862, %v861
    %s865 = scalar_lea.vmem [#allocation0], 452
    %866 = vst.msk [vmem:[%s865] ss:$8 sm:$0xf0] %vm862, %v861
    %s867 = scalar_lea.vmem [#allocation1], 64
    %v868 = vld [vmem:[%s867] sm:$0xff]
    %869 = vrot.lane.b32.xlu0 %v868, 96
    %v870 = vpop.permute.xlu0 %869
    %vm871 = vcmask 64512
    %s872 = scalar_lea.vmem [#allocation0], 516
    %873 = vst.msk [vmem:[%s872] ss:$8 sm:$0xf] %vm871, %v870
    %s874 = scalar_lea.vmem [#allocation0], 516
    %875 = vst.msk [vmem:[%s874] ss:$8 sm:$0xf0] %vm871, %v870
    %s876 = scalar_lea.vmem [#allocation1], 72
    %v877 = vld [vmem:[%s876] sm:$0xff]
    %878 = vrot.lane.b32.xlu0 %v877, 96
    %v879 = vpop.permute.xlu0 %878
    %vm880 = vcmask 64512
    %s881 = scalar_lea.vmem [#allocation0], 580
    %882 = vst.msk [vmem:[%s881] ss:$8 sm:$0xf] %vm880, %v879
    %s883 = scalar_lea.vmem [#allocation0], 580
    %884 = vst.msk [vmem:[%s883] ss:$8 sm:$0xf0] %vm880, %v879
    %s885 = scalar_lea.vmem [#allocation1], 80
    %v886 = vld [vmem:[%s885] sm:$0xff]
    %887 = vrot.lane.b32.xlu0 %v886, 96
    %v888 = vpop.permute.xlu0 %887
    %vm889 = vcmask 64512
    %s890 = scalar_lea.vmem [#allocation0], 644
    %891 = vst.msk [vmem:[%s890] ss:$8 sm:$0xf] %vm889, %v888
    %s892 = scalar_lea.vmem [#allocation0], 644
    %893 = vst.msk [vmem:[%s892] ss:$8 sm:$0xf0] %vm889, %v888
    %s894 = scalar_lea.vmem [#allocation1], 88
    %v895 = vld [vmem:[%s894] sm:$0xff]
    %896 = vrot.lane.b32.xlu0 %v895, 96
    %v897 = vpop.permute.xlu0 %896
    %vm898 = vcmask 64512
    %s899 = scalar_lea.vmem [#allocation0], 708
    %900 = vst.msk [vmem:[%s899] ss:$8 sm:$0xf] %vm898, %v897
    %s901 = scalar_lea.vmem [#allocation0], 708
    %902 = vst.msk [vmem:[%s901] ss:$8 sm:$0xf0] %vm898, %v897
    %s903 = scalar_lea.vmem [#allocation1], 96
    %v904 = vld [vmem:[%s903] sm:$0xff]
    %905 = vrot.lane.b32.xlu0 %v904, 96
    %v906 = vpop.permute.xlu0 %905
    %vm907 = vcmask 64512
    %s908 = scalar_lea.vmem [#allocation0], 772
    %909 = vst.msk [vmem:[%s908] ss:$8 sm:$0xf] %vm907, %v906
    %s910 = scalar_lea.vmem [#allocation0], 772
    %911 = vst.msk [vmem:[%s910] ss:$8 sm:$0xf0] %vm907, %v906
    %s912 = scalar_lea.vmem [#allocation1], 104
    %v913 = vld [vmem:[%s912] sm:$0xff]
    %914 = vrot.lane.b32.xlu0 %v913, 96
    %v915 = vpop.permute.xlu0 %914
    %vm916 = vcmask 64512
    %s917 = scalar_lea.vmem [#allocation0], 836
    %918 = vst.msk [vmem:[%s917] ss:$8 sm:$0xf] %vm916, %v915
    %s919 = scalar_lea.vmem [#allocation0], 836
    %920 = vst.msk [vmem:[%s919] ss:$8 sm:$0xf0] %vm916, %v915
    %s921 = scalar_lea.vmem [#allocation1], 112
    %v922 = vld [vmem:[%s921] sm:$0xff]
    %923 = vrot.lane.b32.xlu0 %v922, 96
    %v924 = vpop.permute.xlu0 %923
    %vm925 = vcmask 64512
    %s926 = scalar_lea.vmem [#allocation0], 900
    %927 = vst.msk [vmem:[%s926] ss:$8 sm:$0xf] %vm925, %v924
    %s928 = scalar_lea.vmem [#allocation0], 900
    %929 = vst.msk [vmem:[%s928] ss:$8 sm:$0xf0] %vm925, %v924
    %s930 = scalar_lea.vmem [#allocation1], 120
    %v931 = vld [vmem:[%s930] sm:$0xff]
    %932 = vrot.lane.b32.xlu0 %v931, 96
    %v933 = vpop.permute.xlu0 %932
    %vm934 = vcmask 64512
    %s935 = scalar_lea.vmem [#allocation0], 964
    %936 = vst.msk [vmem:[%s935] ss:$8 sm:$0xf] %vm934, %v933
    %s937 = scalar_lea.vmem [#allocation0], 964
    %938 = vst.msk [vmem:[%s937] ss:$8 sm:$0xf0] %vm934, %v933
    %v939 = vld [vmem:[#allocation1] sm:$0xff]
    %940 = vrot.lane.b32.xlu0 %v939, 88
    %v941 = vpop.permute.xlu0 %940
    %vm942 = vcmask 64512
    %s943 = scalar_lea.vmem [#allocation0], 5
    %944 = vst.msk [vmem:[%s943] ss:$8 sm:$0xf] %vm942, %v941
    %s945 = scalar_lea.vmem [#allocation0], 5
    %946 = vst.msk [vmem:[%s945] ss:$8 sm:$0xf0] %vm942, %v941
    %s947 = scalar_lea.vmem [#allocation1], 8
    %v948 = vld [vmem:[%s947] sm:$0xff]
    %949 = vrot.lane.b32.xlu0 %v948, 88
    %v950 = vpop.permute.xlu0 %949
    %vm951 = vcmask 64512
    %s952 = scalar_lea.vmem [#allocation0], 69
    %953 = vst.msk [vmem:[%s952] ss:$8 sm:$0xf] %vm951, %v950
    %s954 = scalar_lea.vmem [#allocation0], 69
    %955 = vst.msk [vmem:[%s954] ss:$8 sm:$0xf0] %vm951, %v950
    %s956 = scalar_lea.vmem [#allocation1], 16
    %v957 = vld [vmem:[%s956] sm:$0xff]
    %958 = vrot.lane.b32.xlu0 %v957, 88
    %v959 = vpop.permute.xlu0 %958
    %vm960 = vcmask 64512
    %s961 = scalar_lea.vmem [#allocation0], 133
    %962 = vst.msk [vmem:[%s961] ss:$8 sm:$0xf] %vm960, %v959
    %s963 = scalar_lea.vmem [#allocation0], 133
    %964 = vst.msk [vmem:[%s963] ss:$8 sm:$0xf0] %vm960, %v959
    %s965 = scalar_lea.vmem [#allocation1], 24
    %v966 = vld [vmem:[%s965] sm:$0xff]
    %967 = vrot.lane.b32.xlu0 %v966, 88
    %v968 = vpop.permute.xlu0 %967
    %vm969 = vcmask 64512
    %s970 = scalar_lea.vmem [#allocation0], 197
    %971 = vst.msk [vmem:[%s970] ss:$8 sm:$0xf] %vm969, %v968
    %s972 = scalar_lea.vmem [#allocation0], 197
    %973 = vst.msk [vmem:[%s972] ss:$8 sm:$0xf0] %vm969, %v968
    %s974 = scalar_lea.vmem [#allocation1], 32
    %v975 = vld [vmem:[%s974] sm:$0xff]
    %976 = vrot.lane.b32.xlu0 %v975, 88
    %v977 = vpop.permute.xlu0 %976
    %vm978 = vcmask 64512
    %s979 = scalar_lea.vmem [#allocation0], 261
    %980 = vst.msk [vmem:[%s979] ss:$8 sm:$0xf] %vm978, %v977
    %s981 = scalar_lea.vmem [#allocation0], 261
    %982 = vst.msk [vmem:[%s981] ss:$8 sm:$0xf0] %vm978, %v977
    %s983 = scalar_lea.vmem [#allocation1], 40
    %v984 = vld [vmem:[%s983] sm:$0xff]
    %985 = vrot.lane.b32.xlu0 %v984, 88
    %v986 = vpop.permute.xlu0 %985
    %vm987 = vcmask 64512
    %s988 = scalar_lea.vmem [#allocation0], 325
    %989 = vst.msk [vmem:[%s988] ss:$8 sm:$0xf] %vm987, %v986
    %s990 = scalar_lea.vmem [#allocation0], 325
    %991 = vst.msk [vmem:[%s990] ss:$8 sm:$0xf0] %vm987, %v986
    %s992 = scalar_lea.vmem [#allocation1], 48
    %v993 = vld [vmem:[%s992] sm:$0xff]
    %994 = vrot.lane.b32.xlu0 %v993, 88
    %v995 = vpop.permute.xlu0 %994
    %vm996 = vcmask 64512
    %s997 = scalar_lea.vmem [#allocation0], 389
    %998 = vst.msk [vmem:[%s997] ss:$8 sm:$0xf] %vm996, %v995
    %s999 = scalar_lea.vmem [#allocation0], 389
    %1000 = vst.msk [vmem:[%s999] ss:$8 sm:$0xf0] %vm996, %v995
    %s1001 = scalar_lea.vmem [#allocation1], 56
    %v1002 = vld [vmem:[%s1001] sm:$0xff]
    %1003 = vrot.lane.b32.xlu0 %v1002, 88
    %v1004 = vpop.permute.xlu0 %1003
    %vm1005 = vcmask 64512
    %s1006 = scalar_lea.vmem [#allocation0], 453
    %1007 = vst.msk [vmem:[%s1006] ss:$8 sm:$0xf] %vm1005, %v1004
    %s1008 = scalar_lea.vmem [#allocation0], 453
    %1009 = vst.msk [vmem:[%s1008] ss:$8 sm:$0xf0] %vm1005, %v1004
    %s1010 = scalar_lea.vmem [#allocation1], 64
    %v1011 = vld [vmem:[%s1010] sm:$0xff]
    %1012 = vrot.lane.b32.xlu0 %v1011, 88
    %v1013 = vpop.permute.xlu0 %1012
    %vm1014 = vcmask 64512
    %s1015 = scalar_lea.vmem [#allocation0], 517
    %1016 = vst.msk [vmem:[%s1015] ss:$8 sm:$0xf] %vm1014, %v1013
    %s1017 = scalar_lea.vmem [#allocation0], 517
    %1018 = vst.msk [vmem:[%s1017] ss:$8 sm:$0xf0] %vm1014, %v1013
    %s1019 = scalar_lea.vmem [#allocation1], 72
    %v1020 = vld [vmem:[%s1019] sm:$0xff]
    %1021 = vrot.lane.b32.xlu0 %v1020, 88
    %v1022 = vpop.permute.xlu0 %1021
    %vm1023 = vcmask 64512
    %s1024 = scalar_lea.vmem [#allocation0], 581
    %1025 = vst.msk [vmem:[%s1024] ss:$8 sm:$0xf] %vm1023, %v1022
    %s1026 = scalar_lea.vmem [#allocation0], 581
    %1027 = vst.msk [vmem:[%s1026] ss:$8 sm:$0xf0] %vm1023, %v1022
    %s1028 = scalar_lea.vmem [#allocation1], 80
    %v1029 = vld [vmem:[%s1028] sm:$0xff]
    %1030 = vrot.lane.b32.xlu0 %v1029, 88
    %v1031 = vpop.permute.xlu0 %1030
    %vm1032 = vcmask 64512
    %s1033 = scalar_lea.vmem [#allocation0], 645
    %1034 = vst.msk [vmem:[%s1033] ss:$8 sm:$0xf] %vm1032, %v1031
    %s1035 = scalar_lea.vmem [#allocation0], 645
    %1036 = vst.msk [vmem:[%s1035] ss:$8 sm:$0xf0] %vm1032, %v1031
    %s1037 = scalar_lea.vmem [#allocation1], 88
    %v1038 = vld [vmem:[%s1037] sm:$0xff]
    %1039 = vrot.lane.b32.xlu0 %v1038, 88
    %v1040 = vpop.permute.xlu0 %1039
    %vm1041 = vcmask 64512
    %s1042 = scalar_lea.vmem [#allocation0], 709
    %1043 = vst.msk [vmem:[%s1042] ss:$8 sm:$0xf] %vm1041, %v1040
    %s1044 = scalar_lea.vmem [#allocation0], 709
    %1045 = vst.msk [vmem:[%s1044] ss:$8 sm:$0xf0] %vm1041, %v1040
    %s1046 = scalar_lea.vmem [#allocation1], 96
    %v1047 = vld [vmem:[%s1046] sm:$0xff]
    %1048 = vrot.lane.b32.xlu0 %v1047, 88
    %v1049 = vpop.permute.xlu0 %1048
    %vm1050 = vcmask 64512
    %s1051 = scalar_lea.vmem [#allocation0], 773
    %1052 = vst.msk [vmem:[%s1051] ss:$8 sm:$0xf] %vm1050, %v1049
    %s1053 = scalar_lea.vmem [#allocation0], 773
    %1054 = vst.msk [vmem:[%s1053] ss:$8 sm:$0xf0] %vm1050, %v1049
    %s1055 = scalar_lea.vmem [#allocation1], 104
    %v1056 = vld [vmem:[%s1055] sm:$0xff]
    %1057 = vrot.lane.b32.xlu0 %v1056, 88
    %v1058 = vpop.permute.xlu0 %1057
    %vm1059 = vcmask 64512
    %s1060 = scalar_lea.vmem [#allocation0], 837
    %1061 = vst.msk [vmem:[%s1060] ss:$8 sm:$0xf] %vm1059, %v1058
    %s1062 = scalar_lea.vmem [#allocation0], 837
    %1063 = vst.msk [vmem:[%s1062] ss:$8 sm:$0xf0] %vm1059, %v1058
    %s1064 = scalar_lea.vmem [#allocation1], 112
    %v1065 = vld [vmem:[%s1064] sm:$0xff]
    %1066 = vrot.lane.b32.xlu0 %v1065, 88
    %v1067 = vpop.permute.xlu0 %1066
    %vm1068 = vcmask 64512
    %s1069 = scalar_lea.vmem [#allocation0], 901
    %1070 = vst.msk [vmem:[%s1069] ss:$8 sm:$0xf] %vm1068, %v1067
    %s1071 = scalar_lea.vmem [#allocation0], 901
    %1072 = vst.msk [vmem:[%s1071] ss:$8 sm:$0xf0] %vm1068, %v1067
    %s1073 = scalar_lea.vmem [#allocation1], 120
    %v1074 = vld [vmem:[%s1073] sm:$0xff]
    %1075 = vrot.lane.b32.xlu0 %v1074, 88
    %v1076 = vpop.permute.xlu0 %1075
    %vm1077 = vcmask 64512
    %s1078 = scalar_lea.vmem [#allocation0], 965
    %1079 = vst.msk [vmem:[%s1078] ss:$8 sm:$0xf] %vm1077, %v1076
    %s1080 = scalar_lea.vmem [#allocation0], 965
    %1081 = vst.msk [vmem:[%s1080] ss:$8 sm:$0xf0] %vm1077, %v1076
    %v1082 = vld [vmem:[#allocation1] sm:$0xff]
    %1083 = vrot.lane.b32.xlu0 %v1082, 80
    %v1084 = vpop.permute.xlu0 %1083
    %vm1085 = vcmask 64512
    %s1086 = scalar_lea.vmem [#allocation0], 6
    %1087 = vst.msk [vmem:[%s1086] ss:$8 sm:$0xf] %vm1085, %v1084
    %s1088 = scalar_lea.vmem [#allocation0], 6
    %1089 = vst.msk [vmem:[%s1088] ss:$8 sm:$0xf0] %vm1085, %v1084
    %s1090 = scalar_lea.vmem [#allocation1], 8
    %v1091 = vld [vmem:[%s1090] sm:$0xff]
    %1092 = vrot.lane.b32.xlu0 %v1091, 80
    %v1093 = vpop.permute.xlu0 %1092
    %vm1094 = vcmask 64512
    %s1095 = scalar_lea.vmem [#allocation0], 70
    %1096 = vst.msk [vmem:[%s1095] ss:$8 sm:$0xf] %vm1094, %v1093
    %s1097 = scalar_lea.vmem [#allocation0], 70
    %1098 = vst.msk [vmem:[%s1097] ss:$8 sm:$0xf0] %vm1094, %v1093
    %s1099 = scalar_lea.vmem [#allocation1], 16
    %v1100 = vld [vmem:[%s1099] sm:$0xff]
    %1101 = vrot.lane.b32.xlu0 %v1100, 80
    %v1102 = vpop.permute.xlu0 %1101
    %vm1103 = vcmask 64512
    %s1104 = scalar_lea.vmem [#allocation0], 134
    %1105 = vst.msk [vmem:[%s1104] ss:$8 sm:$0xf] %vm1103, %v1102
    %s1106 = scalar_lea.vmem [#allocation0], 134
    %1107 = vst.msk [vmem:[%s1106] ss:$8 sm:$0xf0] %vm1103, %v1102
    %s1108 = scalar_lea.vmem [#allocation1], 24
    %v1109 = vld [vmem:[%s1108] sm:$0xff]
    %1110 = vrot.lane.b32.xlu0 %v1109, 80
    %v1111 = vpop.permute.xlu0 %1110
    %vm1112 = vcmask 64512
    %s1113 = scalar_lea.vmem [#allocation0], 198
    %1114 = vst.msk [vmem:[%s1113] ss:$8 sm:$0xf] %vm1112, %v1111
    %s1115 = scalar_lea.vmem [#allocation0], 198
    %1116 = vst.msk [vmem:[%s1115] ss:$8 sm:$0xf0] %vm1112, %v1111
    %s1117 = scalar_lea.vmem [#allocation1], 32
    %v1118 = vld [vmem:[%s1117] sm:$0xff]
    %1119 = vrot.lane.b32.xlu0 %v1118, 80
    %v1120 = vpop.permute.xlu0 %1119
    %vm1121 = vcmask 64512
    %s1122 = scalar_lea.vmem [#allocation0], 262
    %1123 = vst.msk [vmem:[%s1122] ss:$8 sm:$0xf] %vm1121, %v1120
    %s1124 = scalar_lea.vmem [#allocation0], 262
    %1125 = vst.msk [vmem:[%s1124] ss:$8 sm:$0xf0] %vm1121, %v1120
    %s1126 = scalar_lea.vmem [#allocation1], 40
    %v1127 = vld [vmem:[%s1126] sm:$0xff]
    %1128 = vrot.lane.b32.xlu0 %v1127, 80
    %v1129 = vpop.permute.xlu0 %1128
    %vm1130 = vcmask 64512
    %s1131 = scalar_lea.vmem [#allocation0], 326
    %1132 = vst.msk [vmem:[%s1131] ss:$8 sm:$0xf] %vm1130, %v1129
    %s1133 = scalar_lea.vmem [#allocation0], 326
    %1134 = vst.msk [vmem:[%s1133] ss:$8 sm:$0xf0] %vm1130, %v1129
    %s1135 = scalar_lea.vmem [#allocation1], 48
    %v1136 = vld [vmem:[%s1135] sm:$0xff]
    %1137 = vrot.lane.b32.xlu0 %v1136, 80
    %v1138 = vpop.permute.xlu0 %1137
    %vm1139 = vcmask 64512
    %s1140 = scalar_lea.vmem [#allocation0], 390
    %1141 = vst.msk [vmem:[%s1140] ss:$8 sm:$0xf] %vm1139, %v1138
    %s1142 = scalar_lea.vmem [#allocation0], 390
    %1143 = vst.msk [vmem:[%s1142] ss:$8 sm:$0xf0] %vm1139, %v1138
    %s1144 = scalar_lea.vmem [#allocation1], 56
    %v1145 = vld [vmem:[%s1144] sm:$0xff]
    %1146 = vrot.lane.b32.xlu0 %v1145, 80
    %v1147 = vpop.permute.xlu0 %1146
    %vm1148 = vcmask 64512
    %s1149 = scalar_lea.vmem [#allocation0], 454
    %1150 = vst.msk [vmem:[%s1149] ss:$8 sm:$0xf] %vm1148, %v1147
    %s1151 = scalar_lea.vmem [#allocation0], 454
    %1152 = vst.msk [vmem:[%s1151] ss:$8 sm:$0xf0] %vm1148, %v1147
    %s1153 = scalar_lea.vmem [#allocation1], 64
    %v1154 = vld [vmem:[%s1153] sm:$0xff]
    %1155 = vrot.lane.b32.xlu0 %v1154, 80
    %v1156 = vpop.permute.xlu0 %1155
    %vm1157 = vcmask 64512
    %s1158 = scalar_lea.vmem [#allocation0], 518
    %1159 = vst.msk [vmem:[%s1158] ss:$8 sm:$0xf] %vm1157, %v1156
    %s1160 = scalar_lea.vmem [#allocation0], 518
    %1161 = vst.msk [vmem:[%s1160] ss:$8 sm:$0xf0] %vm1157, %v1156
    %s1162 = scalar_lea.vmem [#allocation1], 72
    %v1163 = vld [vmem:[%s1162] sm:$0xff]
    %1164 = vrot.lane.b32.xlu0 %v1163, 80
    %v1165 = vpop.permute.xlu0 %1164
    %vm1166 = vcmask 64512
    %s1167 = scalar_lea.vmem [#allocation0], 582
    %1168 = vst.msk [vmem:[%s1167] ss:$8 sm:$0xf] %vm1166, %v1165
    %s1169 = scalar_lea.vmem [#allocation0], 582
    %1170 = vst.msk [vmem:[%s1169] ss:$8 sm:$0xf0] %vm1166, %v1165
    %s1171 = scalar_lea.vmem [#allocation1], 80
    %v1172 = vld [vmem:[%s1171] sm:$0xff]
    %1173 = vrot.lane.b32.xlu0 %v1172, 80
    %v1174 = vpop.permute.xlu0 %1173
    %vm1175 = vcmask 64512
    %s1176 = scalar_lea.vmem [#allocation0], 646
    %1177 = vst.msk [vmem:[%s1176] ss:$8 sm:$0xf] %vm1175, %v1174
    %s1178 = scalar_lea.vmem [#allocation0], 646
    %1179 = vst.msk [vmem:[%s1178] ss:$8 sm:$0xf0] %vm1175, %v1174
    %s1180 = scalar_lea.vmem [#allocation1], 88
    %v1181 = vld [vmem:[%s1180] sm:$0xff]
    %1182 = vrot.lane.b32.xlu0 %v1181, 80
    %v1183 = vpop.permute.xlu0 %1182
    %vm1184 = vcmask 64512
    %s1185 = scalar_lea.vmem [#allocation0], 710
    %1186 = vst.msk [vmem:[%s1185] ss:$8 sm:$0xf] %vm1184, %v1183
    %s1187 = scalar_lea.vmem [#allocation0], 710
    %1188 = vst.msk [vmem:[%s1187] ss:$8 sm:$0xf0] %vm1184, %v1183
    %s1189 = scalar_lea.vmem [#allocation1], 96
    %v1190 = vld [vmem:[%s1189] sm:$0xff]
    %1191 = vrot.lane.b32.xlu0 %v1190, 80
    %v1192 = vpop.permute.xlu0 %1191
    %vm1193 = vcmask 64512
    %s1194 = scalar_lea.vmem [#allocation0], 774
    %1195 = vst.msk [vmem:[%s1194] ss:$8 sm:$0xf] %vm1193, %v1192
    %s1196 = scalar_lea.vmem [#allocation0], 774
    %1197 = vst.msk [vmem:[%s1196] ss:$8 sm:$0xf0] %vm1193, %v1192
    %s1198 = scalar_lea.vmem [#allocation1], 104
    %v1199 = vld [vmem:[%s1198] sm:$0xff]
    %1200 = vrot.lane.b32.xlu0 %v1199, 80
    %v1201 = vpop.permute.xlu0 %1200
    %vm1202 = vcmask 64512
    %s1203 = scalar_lea.vmem [#allocation0], 838
    %1204 = vst.msk [vmem:[%s1203] ss:$8 sm:$0xf] %vm1202, %v1201
    %s1205 = scalar_lea.vmem [#allocation0], 838
    %1206 = vst.msk [vmem:[%s1205] ss:$8 sm:$0xf0] %vm1202, %v1201
    %s1207 = scalar_lea.vmem [#allocation1], 112
    %v1208 = vld [vmem:[%s1207] sm:$0xff]
    %1209 = vrot.lane.b32.xlu0 %v1208, 80
    %v1210 = vpop.permute.xlu0 %1209
    %vm1211 = vcmask 64512
    %s1212 = scalar_lea.vmem [#allocation0], 902
    %1213 = vst.msk [vmem:[%s1212] ss:$8 sm:$0xf] %vm1211, %v1210
    %s1214 = scalar_lea.vmem [#allocation0], 902
    %1215 = vst.msk [vmem:[%s1214] ss:$8 sm:$0xf0] %vm1211, %v1210
    %s1216 = scalar_lea.vmem [#allocation1], 120
    %v1217 = vld [vmem:[%s1216] sm:$0xff]
    %1218 = vrot.lane.b32.xlu0 %v1217, 80
    %v1219 = vpop.permute.xlu0 %1218
    %vm1220 = vcmask 64512
    %s1221 = scalar_lea.vmem [#allocation0], 966
    %1222 = vst.msk [vmem:[%s1221] ss:$8 sm:$0xf] %vm1220, %v1219
    %s1223 = scalar_lea.vmem [#allocation0], 966
    %1224 = vst.msk [vmem:[%s1223] ss:$8 sm:$0xf0] %vm1220, %v1219
    %v1225 = vld [vmem:[#allocation1] sm:$0xff]
    %1226 = vrot.lane.b32.xlu0 %v1225, 72
    %v1227 = vpop.permute.xlu0 %1226
    %vm1228 = vcmask 64512
    %s1229 = scalar_lea.vmem [#allocation0], 7
    %1230 = vst.msk [vmem:[%s1229] ss:$8 sm:$0xf] %vm1228, %v1227
    %s1231 = scalar_lea.vmem [#allocation0], 7
    %1232 = vst.msk [vmem:[%s1231] ss:$8 sm:$0xf0] %vm1228, %v1227
    %s1233 = scalar_lea.vmem [#allocation1], 8
    %v1234 = vld [vmem:[%s1233] sm:$0xff]
    %1235 = vrot.lane.b32.xlu0 %v1234, 72
    %v1236 = vpop.permute.xlu0 %1235
    %vm1237 = vcmask 64512
    %s1238 = scalar_lea.vmem [#allocation0], 71
    %1239 = vst.msk [vmem:[%s1238] ss:$8 sm:$0xf] %vm1237, %v1236
    %s1240 = scalar_lea.vmem [#allocation0], 71
    %1241 = vst.msk [vmem:[%s1240] ss:$8 sm:$0xf0] %vm1237, %v1236
    %s1242 = scalar_lea.vmem [#allocation1], 16
    %v1243 = vld [vmem:[%s1242] sm:$0xff]
    %1244 = vrot.lane.b32.xlu0 %v1243, 72
    %v1245 = vpop.permute.xlu0 %1244
    %vm1246 = vcmask 64512
    %s1247 = scalar_lea.vmem [#allocation0], 135
    %1248 = vst.msk [vmem:[%s1247] ss:$8 sm:$0xf] %vm1246, %v1245
    %s1249 = scalar_lea.vmem [#allocation0], 135
    %1250 = vst.msk [vmem:[%s1249] ss:$8 sm:$0xf0] %vm1246, %v1245
    %s1251 = scalar_lea.vmem [#allocation1], 24
    %v1252 = vld [vmem:[%s1251] sm:$0xff]
    %1253 = vrot.lane.b32.xlu0 %v1252, 72
    %v1254 = vpop.permute.xlu0 %1253
    %vm1255 = vcmask 64512
    %s1256 = scalar_lea.vmem [#allocation0], 199
    %1257 = vst.msk [vmem:[%s1256] ss:$8 sm:$0xf] %vm1255, %v1254
    %s1258 = scalar_lea.vmem [#allocation0], 199
    %1259 = vst.msk [vmem:[%s1258] ss:$8 sm:$0xf0] %vm1255, %v1254
    %s1260 = scalar_lea.vmem [#allocation1], 32
    %v1261 = vld [vmem:[%s1260] sm:$0xff]
    %1262 = vrot.lane.b32.xlu0 %v1261, 72
    %v1263 = vpop.permute.xlu0 %1262
    %vm1264 = vcmask 64512
    %s1265 = scalar_lea.vmem [#allocation0], 263
    %1266 = vst.msk [vmem:[%s1265] ss:$8 sm:$0xf] %vm1264, %v1263
    %s1267 = scalar_lea.vmem [#allocation0], 263
    %1268 = vst.msk [vmem:[%s1267] ss:$8 sm:$0xf0] %vm1264, %v1263
    %s1269 = scalar_lea.vmem [#allocation1], 40
    %v1270 = vld [vmem:[%s1269] sm:$0xff]
    %1271 = vrot.lane.b32.xlu0 %v1270, 72
    %v1272 = vpop.permute.xlu0 %1271
    %vm1273 = vcmask 64512
    %s1274 = scalar_lea.vmem [#allocation0], 327
    %1275 = vst.msk [vmem:[%s1274] ss:$8 sm:$0xf] %vm1273, %v1272
    %s1276 = scalar_lea.vmem [#allocation0], 327
    %1277 = vst.msk [vmem:[%s1276] ss:$8 sm:$0xf0] %vm1273, %v1272
    %s1278 = scalar_lea.vmem [#allocation1], 48
    %v1279 = vld [vmem:[%s1278] sm:$0xff]
    %1280 = vrot.lane.b32.xlu0 %v1279, 72
    %v1281 = vpop.permute.xlu0 %1280
    %vm1282 = vcmask 64512
    %s1283 = scalar_lea.vmem [#allocation0], 391
    %1284 = vst.msk [vmem:[%s1283] ss:$8 sm:$0xf] %vm1282, %v1281
    %s1285 = scalar_lea.vmem [#allocation0], 391
    %1286 = vst.msk [vmem:[%s1285] ss:$8 sm:$0xf0] %vm1282, %v1281
    %s1287 = scalar_lea.vmem [#allocation1], 56
    %v1288 = vld [vmem:[%s1287] sm:$0xff]
    %1289 = vrot.lane.b32.xlu0 %v1288, 72
    %v1290 = vpop.permute.xlu0 %1289
    %vm1291 = vcmask 64512
    %s1292 = scalar_lea.vmem [#allocation0], 455
    %1293 = vst.msk [vmem:[%s1292] ss:$8 sm:$0xf] %vm1291, %v1290
    %s1294 = scalar_lea.vmem [#allocation0], 455
    %1295 = vst.msk [vmem:[%s1294] ss:$8 sm:$0xf0] %vm1291, %v1290
    %s1296 = scalar_lea.vmem [#allocation1], 64
    %v1297 = vld [vmem:[%s1296] sm:$0xff]
    %1298 = vrot.lane.b32.xlu0 %v1297, 72
    %v1299 = vpop.permute.xlu0 %1298
    %vm1300 = vcmask 64512
    %s1301 = scalar_lea.vmem [#allocation0], 519
    %1302 = vst.msk [vmem:[%s1301] ss:$8 sm:$0xf] %vm1300, %v1299
    %s1303 = scalar_lea.vmem [#allocation0], 519
    %1304 = vst.msk [vmem:[%s1303] ss:$8 sm:$0xf0] %vm1300, %v1299
    %s1305 = scalar_lea.vmem [#allocation1], 72
    %v1306 = vld [vmem:[%s1305] sm:$0xff]
    %1307 = vrot.lane.b32.xlu0 %v1306, 72
    %v1308 = vpop.permute.xlu0 %1307
    %vm1309 = vcmask 64512
    %s1310 = scalar_lea.vmem [#allocation0], 583
    %1311 = vst.msk [vmem:[%s1310] ss:$8 sm:$0xf] %vm1309, %v1308
    %s1312 = scalar_lea.vmem [#allocation0], 583
    %1313 = vst.msk [vmem:[%s1312] ss:$8 sm:$0xf0] %vm1309, %v1308
    %s1314 = scalar_lea.vmem [#allocation1], 80
    %v1315 = vld [vmem:[%s1314] sm:$0xff]
    %1316 = vrot.lane.b32.xlu0 %v1315, 72
    %v1317 = vpop.permute.xlu0 %1316
    %vm1318 = vcmask 64512
    %s1319 = scalar_lea.vmem [#allocation0], 647
    %1320 = vst.msk [vmem:[%s1319] ss:$8 sm:$0xf] %vm1318, %v1317
    %s1321 = scalar_lea.vmem [#allocation0], 647
    %1322 = vst.msk [vmem:[%s1321] ss:$8 sm:$0xf0] %vm1318, %v1317
    %s1323 = scalar_lea.vmem [#allocation1], 88
    %v1324 = vld [vmem:[%s1323] sm:$0xff]
    %1325 = vrot.lane.b32.xlu0 %v1324, 72
    %v1326 = vpop.permute.xlu0 %1325
    %vm1327 = vcmask 64512
    %s1328 = scalar_lea.vmem [#allocation0], 711
    %1329 = vst.msk [vmem:[%s1328] ss:$8 sm:$0xf] %vm1327, %v1326
    %s1330 = scalar_lea.vmem [#allocation0], 711
    %1331 = vst.msk [vmem:[%s1330] ss:$8 sm:$0xf0] %vm1327, %v1326
    %s1332 = scalar_lea.vmem [#allocation1], 96
    %v1333 = vld [vmem:[%s1332] sm:$0xff]
    %1334 = vrot.lane.b32.xlu0 %v1333, 72
    %v1335 = vpop.permute.xlu0 %1334
    %vm1336 = vcmask 64512
    %s1337 = scalar_lea.vmem [#allocation0], 775
    %1338 = vst.msk [vmem:[%s1337] ss:$8 sm:$0xf] %vm1336, %v1335
    %s1339 = scalar_lea.vmem [#allocation0], 775
    %1340 = vst.msk [vmem:[%s1339] ss:$8 sm:$0xf0] %vm1336, %v1335
    %s1341 = scalar_lea.vmem [#allocation1], 104
    %v1342 = vld [vmem:[%s1341] sm:$0xff]
    %1343 = vrot.lane.b32.xlu0 %v1342, 72
    %v1344 = vpop.permute.xlu0 %1343
    %vm1345 = vcmask 64512
    %s1346 = scalar_lea.vmem [#allocation0], 839
    %1347 = vst.msk [vmem:[%s1346] ss:$8 sm:$0xf] %vm1345, %v1344
    %s1348 = scalar_lea.vmem [#allocation0], 839
    %1349 = vst.msk [vmem:[%s1348] ss:$8 sm:$0xf0] %vm1345, %v1344
    %s1350 = scalar_lea.vmem [#allocation1], 112
    %v1351 = vld [vmem:[%s1350] sm:$0xff]
    %1352 = vrot.lane.b32.xlu0 %v1351, 72
    %v1353 = vpop.permute.xlu0 %1352
    %vm1354 = vcmask 64512
    %s1355 = scalar_lea.vmem [#allocation0], 903
    %1356 = vst.msk [vmem:[%s1355] ss:$8 sm:$0xf] %vm1354, %v1353
    %s1357 = scalar_lea.vmem [#allocation0], 903
    %1358 = vst.msk [vmem:[%s1357] ss:$8 sm:$0xf0] %vm1354, %v1353
    %s1359 = scalar_lea.vmem [#allocation1], 120
    %v1360 = vld [vmem:[%s1359] sm:$0xff]
    %1361 = vrot.lane.b32.xlu0 %v1360, 72
    %v1362 = vpop.permute.xlu0 %1361
    %vm1363 = vcmask 64512
    %s1364 = scalar_lea.vmem [#allocation0], 967
    %1365 = vst.msk [vmem:[%s1364] ss:$8 sm:$0xf] %vm1363, %v1362
    %s1366 = scalar_lea.vmem [#allocation0], 967
    %1367 = vst.msk [vmem:[%s1366] ss:$8 sm:$0xf0] %vm1363, %v1362
    %s1369 = smul.u32 4, 2
    %s1370 = sshll.u32 1, %s1369
    %s1371 = ssub.s32 %s1370, 1
    %s1372 = sshrl.u32 %s1369, 1
    %v1373 = vld [vmem:[#allocation0] sm:%s1371]
    %v1374 = vpack.c.bf16 0.0, %v1373
    %s1375 = sshll.u32 1, %s1372
    %s1376 = ssub.s32 %s1375, 1
    %1377 = vst [vmem:[%s1] sm:%s1376] %v1374
    %s1378 = scalar_lea.vmem [#allocation0], 8
    %v1379 = vld [vmem:[%s1378] sm:%s1371]
    %v1380 = vpack.c.bf16 0.0, %v1379
    %s1381 = sshll.u32 1, %s1372
    %s1382 = ssub.s32 %s1381, 1
    %s1383 = scalar_lea.vmem %s1, 4
    %1384 = vst [vmem:[%s1383] sm:%s1382] %v1380
    %s1385 = scalar_lea.vmem [#allocation0], 16
    %v1386 = vld [vmem:[%s1385] sm:%s1371]
    %v1387 = vpack.c.bf16 0.0, %v1386
    %s1388 = sshll.u32 1, %s1372
    %s1389 = ssub.s32 %s1388, 1
    %s1390 = smul.addr 4, 2
    %s1391 = scalar_lea.vmem %s1, %s1390
    %1392 = vst [vmem:[%s1391] sm:%s1389] %v1387
    %s1393 = scalar_lea.vmem [#allocation0], 24
    %v1394 = vld [vmem:[%s1393] sm:%s1371]
    %v1395 = vpack.c.bf16 0.0, %v1394
    %s1396 = sshll.u32 1, %s1372
    %s1397 = ssub.s32 %s1396, 1
    %s1398 = smul.addr 4, 3
    %s1399 = scalar_lea.vmem %s1, %s1398
    %1400 = vst [vmem:[%s1399] sm:%s1397] %v1395
    %s1401 = scalar_lea.vmem [#allocation0], 32
    %v1402 = vld [vmem:[%s1401] sm:%s1371]
    %v1403 = vpack.c.bf16 0.0, %v1402
    %s1404 = sshll.u32 1, %s1372
    %s1405 = ssub.s32 %s1404, 1
    %s1406 = smul.addr 4, 4
    %s1407 = scalar_lea.vmem %s1, %s1406
    %1408 = vst [vmem:[%s1407] sm:%s1405] %v1403
    %s1409 = scalar_lea.vmem [#allocation0], 40
    %v1410 = vld [vmem:[%s1409] sm:%s1371]
    %v1411 = vpack.c.bf16 0.0, %v1410
    %s1412 = sshll.u32 1, %s1372
    %s1413 = ssub.s32 %s1412, 1
    %s1414 = smul.addr 4, 5
    %s1415 = scalar_lea.vmem %s1, %s1414
    %1416 = vst [vmem:[%s1415] sm:%s1413] %v1411
    %s1417 = scalar_lea.vmem [#allocation0], 48
    %v1418 = vld [vmem:[%s1417] sm:%s1371]
    %v1419 = vpack.c.bf16 0.0, %v1418
    %s1420 = sshll.u32 1, %s1372
    %s1421 = ssub.s32 %s1420, 1
    %s1422 = smul.addr 4, 6
    %s1423 = scalar_lea.vmem %s1, %s1422
    %1424 = vst [vmem:[%s1423] sm:%s1421] %v1419
    %s1425 = scalar_lea.vmem [#allocation0], 56
    %v1426 = vld [vmem:[%s1425] sm:%s1371]
    %v1427 = vpack.c.bf16 0.0, %v1426
    %s1428 = sshll.u32 1, %s1372
    %s1429 = ssub.s32 %s1428, 1
    %s1430 = smul.addr 4, 7
    %s1431 = scalar_lea.vmem %s1, %s1430
    %1432 = vst [vmem:[%s1431] sm:%s1429] %v1427
    %s1433 = scalar_lea.vmem [#allocation0], 64
    %v1434 = vld [vmem:[%s1433] sm:%s1371]
    %v1435 = vpack.c.bf16 0.0, %v1434
    %s1436 = sshll.u32 1, %s1372
    %s1437 = ssub.s32 %s1436, 1
    %s1438 = smul.addr 4, 8
    %s1439 = scalar_lea.vmem %s1, %s1438
    %1440 = vst [vmem:[%s1439] sm:%s1437] %v1435
    %s1441 = scalar_lea.vmem [#allocation0], 72
    %v1442 = vld [vmem:[%s1441] sm:%s1371]
    %v1443 = vpack.c.bf16 0.0, %v1442
    %s1444 = sshll.u32 1, %s1372
    %s1445 = ssub.s32 %s1444, 1
    %s1446 = smul.addr 4, 9
    %s1447 = scalar_lea.vmem %s1, %s1446
    %1448 = vst [vmem:[%s1447] sm:%s1445] %v1443
    %s1449 = scalar_lea.vmem [#allocation0], 80
    %v1450 = vld [vmem:[%s1449] sm:%s1371]
    %v1451 = vpack.c.bf16 0.0, %v1450
    %s1452 = sshll.u32 1, %s1372
    %s1453 = ssub.s32 %s1452, 1
    %s1454 = smul.addr 4, 10
    %s1455 = scalar_lea.vmem %s1, %s1454
    %1456 = vst [vmem:[%s1455] sm:%s1453] %v1451
    %s1457 = scalar_lea.vmem [#allocation0], 88
    %v1458 = vld [vmem:[%s1457] sm:%s1371]
    %v1459 = vpack.c.bf16 0.0, %v1458
    %s1460 = sshll.u32 1, %s1372
    %s1461 = ssub.s32 %s1460, 1
    %s1462 = smul.addr 4, 11
    %s1463 = scalar_lea.vmem %s1, %s1462
    %1464 = vst [vmem:[%s1463] sm:%s1461] %v1459
    %s1465 = scalar_lea.vmem [#allocation0], 96
    %v1466 = vld [vmem:[%s1465] sm:%s1371]
    %v1467 = vpack.c.bf16 0.0, %v1466
    %s1468 = sshll.u32 1, %s1372
    %s1469 = ssub.s32 %s1468, 1
    %s1470 = smul.addr 4, 12
    %s1471 = scalar_lea.vmem %s1, %s1470
    %1472 = vst [vmem:[%s1471] sm:%s1469] %v1467
    %s1473 = scalar_lea.vmem [#allocation0], 104
    %v1474 = vld [vmem:[%s1473] sm:%s1371]
    %v1475 = vpack.c.bf16 0.0, %v1474
    %s1476 = sshll.u32 1, %s1372
    %s1477 = ssub.s32 %s1476, 1
    %s1478 = smul.addr 4, 13
    %s1479 = scalar_lea.vmem %s1, %s1478
    %1480 = vst [vmem:[%s1479] sm:%s1477] %v1475
    %s1481 = scalar_lea.vmem [#allocation0], 112
    %v1482 = vld [vmem:[%s1481] sm:%s1371]
    %v1483 = vpack.c.bf16 0.0, %v1482
    %s1484 = sshll.u32 1, %s1372
    %s1485 = ssub.s32 %s1484, 1
    %s1486 = smul.addr 4, 14
    %s1487 = scalar_lea.vmem %s1, %s1486
    %1488 = vst [vmem:[%s1487] sm:%s1485] %v1483
    %s1489 = scalar_lea.vmem [#allocation0], 120
    %v1490 = vld [vmem:[%s1489] sm:%s1371]
    %v1491 = vpack.c.bf16 0.0, %v1490
    %s1492 = sshll.u32 1, %s1372
    %s1493 = ssub.s32 %s1492, 1
    %s1494 = smul.addr 4, 15
    %s1495 = scalar_lea.vmem %s1, %s1494
    %1496 = vst [vmem:[%s1495] sm:%s1493] %v1491
    %s1497 = scalar_lea.vmem [#allocation0], 128
    %v1498 = vld [vmem:[%s1497] sm:%s1371]
    %v1499 = vpack.c.bf16 0.0, %v1498
    %s1500 = sshll.u32 1, %s1372
    %s1501 = ssub.s32 %s1500, 1
    %s1502 = smul.addr 4, 16
    %s1503 = scalar_lea.vmem %s1, %s1502
    %1504 = vst [vmem:[%s1503] sm:%s1501] %v1499
    %s1505 = scalar_lea.vmem [#allocation0], 136
    %v1506 = vld [vmem:[%s1505] sm:%s1371]
    %v1507 = vpack.c.bf16 0.0, %v1506
    %s1508 = sshll.u32 1, %s1372
    %s1509 = ssub.s32 %s1508, 1
    %s1510 = smul.addr 4, 17
    %s1511 = scalar_lea.vmem %s1, %s1510
    %1512 = vst [vmem:[%s1511] sm:%s1509] %v1507
    %s1513 = scalar_lea.vmem [#allocation0], 144
    %v1514 = vld [vmem:[%s1513] sm:%s1371]
    %v1515 = vpack.c.bf16 0.0, %v1514
    %s1516 = sshll.u32 1, %s1372
    %s1517 = ssub.s32 %s1516, 1
    %s1518 = smul.addr 4, 18
    %s1519 = scalar_lea.vmem %s1, %s1518
    %1520 = vst [vmem:[%s1519] sm:%s1517] %v1515
    %s1521 = scalar_lea.vmem [#allocation0], 152
    %v1522 = vld [vmem:[%s1521] sm:%s1371]
    %v1523 = vpack.c.bf16 0.0, %v1522
    %s1524 = sshll.u32 1, %s1372
    %s1525 = ssub.s32 %s1524, 1
    %s1526 = smul.addr 4, 19
    %s1527 = scalar_lea.vmem %s1, %s1526
    %1528 = vst [vmem:[%s1527] sm:%s1525] %v1523
    %s1529 = scalar_lea.vmem [#allocation0], 160
    %v1530 = vld [vmem:[%s1529] sm:%s1371]
    %v1531 = vpack.c.bf16 0.0, %v1530
    %s1532 = sshll.u32 1, %s1372
    %s1533 = ssub.s32 %s1532, 1
    %s1534 = smul.addr 4, 20
    %s1535 = scalar_lea.vmem %s1, %s1534
    %1536 = vst [vmem:[%s1535] sm:%s1533] %v1531
    %s1537 = scalar_lea.vmem [#allocation0], 168
    %v1538 = vld [vmem:[%s1537] sm:%s1371]
    %v1539 = vpack.c.bf16 0.0, %v1538
    %s1540 = sshll.u32 1, %s1372
    %s1541 = ssub.s32 %s1540, 1
    %s1542 = smul.addr 4, 21
    %s1543 = scalar_lea.vmem %s1, %s1542
    %1544 = vst [vmem:[%s1543] sm:%s1541] %v1539
    %s1545 = scalar_lea.vmem [#allocation0], 176
    %v1546 = vld [vmem:[%s1545] sm:%s1371]
    %v1547 = vpack.c.bf16 0.0, %v1546
    %s1548 = sshll.u32 1, %s1372
    %s1549 = ssub.s32 %s1548, 1
    %s1550 = smul.addr 4, 22
    %s1551 = scalar_lea.vmem %s1, %s1550
    %1552 = vst [vmem:[%s1551] sm:%s1549] %v1547
    %s1553 = scalar_lea.vmem [#allocation0], 184
    %v1554 = vld [vmem:[%s1553] sm:%s1371]
    %v1555 = vpack.c.bf16 0.0, %v1554
    %s1556 = sshll.u32 1, %s1372
    %s1557 = ssub.s32 %s1556, 1
    %s1558 = smul.addr 4, 23
    %s1559 = scalar_lea.vmem %s1, %s1558
    %1560 = vst [vmem:[%s1559] sm:%s1557] %v1555
    %s1561 = scalar_lea.vmem [#allocation0], 192
    %v1562 = vld [vmem:[%s1561] sm:%s1371]
    %v1563 = vpack.c.bf16 0.0, %v1562
    %s1564 = sshll.u32 1, %s1372
    %s1565 = ssub.s32 %s1564, 1
    %s1566 = smul.addr 4, 24
    %s1567 = scalar_lea.vmem %s1, %s1566
    %1568 = vst [vmem:[%s1567] sm:%s1565] %v1563
    %s1569 = scalar_lea.vmem [#allocation0], 200
    %v1570 = vld [vmem:[%s1569] sm:%s1371]
    %v1571 = vpack.c.bf16 0.0, %v1570
    %s1572 = sshll.u32 1, %s1372
    %s1573 = ssub.s32 %s1572, 1
    %s1574 = smul.addr 4, 25
    %s1575 = scalar_lea.vmem %s1, %s1574
    %1576 = vst [vmem:[%s1575] sm:%s1573] %v1571
    %s1577 = scalar_lea.vmem [#allocation0], 208
    %v1578 = vld [vmem:[%s1577] sm:%s1371]
    %v1579 = vpack.c.bf16 0.0, %v1578
    %s1580 = sshll.u32 1, %s1372
    %s1581 = ssub.s32 %s1580, 1
    %s1582 = smul.addr 4, 26
    %s1583 = scalar_lea.vmem %s1, %s1582
    %1584 = vst [vmem:[%s1583] sm:%s1581] %v1579
    %s1585 = scalar_lea.vmem [#allocation0], 216
    %v1586 = vld [vmem:[%s1585] sm:%s1371]
    %v1587 = vpack.c.bf16 0.0, %v1586
    %s1588 = sshll.u32 1, %s1372
    %s1589 = ssub.s32 %s1588, 1
    %s1590 = smul.addr 4, 27
    %s1591 = scalar_lea.vmem %s1, %s1590
    %1592 = vst [vmem:[%s1591] sm:%s1589] %v1587
    %s1593 = scalar_lea.vmem [#allocation0], 224
    %v1594 = vld [vmem:[%s1593] sm:%s1371]
    %v1595 = vpack.c.bf16 0.0, %v1594
    %s1596 = sshll.u32 1, %s1372
    %s1597 = ssub.s32 %s1596, 1
    %s1598 = smul.addr 4, 28
    %s1599 = scalar_lea.vmem %s1, %s1598
    %1600 = vst [vmem:[%s1599] sm:%s1597] %v1595
    %s1601 = scalar_lea.vmem [#allocation0], 232
    %v1602 = vld [vmem:[%s1601] sm:%s1371]
    %v1603 = vpack.c.bf16 0.0, %v1602
    %s1604 = sshll.u32 1, %s1372
    %s1605 = ssub.s32 %s1604, 1
    %s1606 = smul.addr 4, 29
    %s1607 = scalar_lea.vmem %s1, %s1606
    %1608 = vst [vmem:[%s1607] sm:%s1605] %v1603
    %s1609 = scalar_lea.vmem [#allocation0], 240
    %v1610 = vld [vmem:[%s1609] sm:%s1371]
    %v1611 = vpack.c.bf16 0.0, %v1610
    %s1612 = sshll.u32 1, %s1372
    %s1613 = ssub.s32 %s1612, 1
    %s1614 = smul.addr 4, 30
    %s1615 = scalar_lea.vmem %s1, %s1614
    %1616 = vst [vmem:[%s1615] sm:%s1613] %v1611
    %s1617 = scalar_lea.vmem [#allocation0], 248
    %v1618 = vld [vmem:[%s1617] sm:%s1371]
    %v1619 = vpack.c.bf16 0.0, %v1618
    %s1620 = sshll.u32 1, %s1372
    %s1621 = ssub.s32 %s1620, 1
    %s1622 = smul.addr 4, 31
    %s1623 = scalar_lea.vmem %s1, %s1622
    %1624 = vst [vmem:[%s1623] sm:%s1621] %v1619
    %s1625 = scalar_lea.vmem [#allocation0], 256
    %v1626 = vld [vmem:[%s1625] sm:%s1371]
    %v1627 = vpack.c.bf16 0.0, %v1626
    %s1628 = sshll.u32 1, %s1372
    %s1629 = ssub.s32 %s1628, 1
    %s1630 = smul.addr 4, 32
    %s1631 = scalar_lea.vmem %s1, %s1630
    %1632 = vst [vmem:[%s1631] sm:%s1629] %v1627
    %s1633 = scalar_lea.vmem [#allocation0], 264
    %v1634 = vld [vmem:[%s1633] sm:%s1371]
    %v1635 = vpack.c.bf16 0.0, %v1634
    %s1636 = sshll.u32 1, %s1372
    %s1637 = ssub.s32 %s1636, 1
    %s1638 = smul.addr 4, 33
    %s1639 = scalar_lea.vmem %s1, %s1638
    %1640 = vst [vmem:[%s1639] sm:%s1637] %v1635
    %s1641 = scalar_lea.vmem [#allocation0], 272
    %v1642 = vld [vmem:[%s1641] sm:%s1371]
    %v1643 = vpack.c.bf16 0.0, %v1642
    %s1644 = sshll.u32 1, %s1372
    %s1645 = ssub.s32 %s1644, 1
    %s1646 = smul.addr 4, 34
    %s1647 = scalar_lea.vmem %s1, %s1646
    %1648 = vst [vmem:[%s1647] sm:%s1645] %v1643
    %s1649 = scalar_lea.vmem [#allocation0], 280
    %v1650 = vld [vmem:[%s1649] sm:%s1371]
    %v1651 = vpack.c.bf16 0.0, %v1650
    %s1652 = sshll.u32 1, %s1372
    %s1653 = ssub.s32 %s1652, 1
    %s1654 = smul.addr 4, 35
    %s1655 = scalar_lea.vmem %s1, %s1654
    %1656 = vst [vmem:[%s1655] sm:%s1653] %v1651
    %s1657 = scalar_lea.vmem [#allocation0], 288
    %v1658 = vld [vmem:[%s1657] sm:%s1371]
    %v1659 = vpack.c.bf16 0.0, %v1658
    %s1660 = sshll.u32 1, %s1372
    %s1661 = ssub.s32 %s1660, 1
    %s1662 = smul.addr 4, 36
    %s1663 = scalar_lea.vmem %s1, %s1662
    %1664 = vst [vmem:[%s1663] sm:%s1661] %v1659
    %s1665 = scalar_lea.vmem [#allocation0], 296
    %v1666 = vld [vmem:[%s1665] sm:%s1371]
    %v1667 = vpack.c.bf16 0.0, %v1666
    %s1668 = sshll.u32 1, %s1372
    %s1669 = ssub.s32 %s1668, 1
    %s1670 = smul.addr 4, 37
    %s1671 = scalar_lea.vmem %s1, %s1670
    %1672 = vst [vmem:[%s1671] sm:%s1669] %v1667
    %s1673 = scalar_lea.vmem [#allocation0], 304
    %v1674 = vld [vmem:[%s1673] sm:%s1371]
    %v1675 = vpack.c.bf16 0.0, %v1674
    %s1676 = sshll.u32 1, %s1372
    %s1677 = ssub.s32 %s1676, 1
    %s1678 = smul.addr 4, 38
    %s1679 = scalar_lea.vmem %s1, %s1678
    %1680 = vst [vmem:[%s1679] sm:%s1677] %v1675
    %s1681 = scalar_lea.vmem [#allocation0], 312
    %v1682 = vld [vmem:[%s1681] sm:%s1371]
    %v1683 = vpack.c.bf16 0.0, %v1682
    %s1684 = sshll.u32 1, %s1372
    %s1685 = ssub.s32 %s1684, 1
    %s1686 = smul.addr 4, 39
    %s1687 = scalar_lea.vmem %s1, %s1686
    %1688 = vst [vmem:[%s1687] sm:%s1685] %v1683
    %s1689 = scalar_lea.vmem [#allocation0], 320
    %v1690 = vld [vmem:[%s1689] sm:%s1371]
    %v1691 = vpack.c.bf16 0.0, %v1690
    %s1692 = sshll.u32 1, %s1372
    %s1693 = ssub.s32 %s1692, 1
    %s1694 = smul.addr 4, 40
    %s1695 = scalar_lea.vmem %s1, %s1694
    %1696 = vst [vmem:[%s1695] sm:%s1693] %v1691
    %s1697 = scalar_lea.vmem [#allocation0], 328
    %v1698 = vld [vmem:[%s1697] sm:%s1371]
    %v1699 = vpack.c.bf16 0.0, %v1698
    %s1700 = sshll.u32 1, %s1372
    %s1701 = ssub.s32 %s1700, 1
    %s1702 = smul.addr 4, 41
    %s1703 = scalar_lea.vmem %s1, %s1702
    %1704 = vst [vmem:[%s1703] sm:%s1701] %v1699
    %s1705 = scalar_lea.vmem [#allocation0], 336
    %v1706 = vld [vmem:[%s1705] sm:%s1371]
    %v1707 = vpack.c.bf16 0.0, %v1706
    %s1708 = sshll.u32 1, %s1372
    %s1709 = ssub.s32 %s1708, 1
    %s1710 = smul.addr 4, 42
    %s1711 = scalar_lea.vmem %s1, %s1710
    %1712 = vst [vmem:[%s1711] sm:%s1709] %v1707
    %s1713 = scalar_lea.vmem [#allocation0], 344
    %v1714 = vld [vmem:[%s1713] sm:%s1371]
    %v1715 = vpack.c.bf16 0.0, %v1714
    %s1716 = sshll.u32 1, %s1372
    %s1717 = ssub.s32 %s1716, 1
    %s1718 = smul.addr 4, 43
    %s1719 = scalar_lea.vmem %s1, %s1718
    %1720 = vst [vmem:[%s1719] sm:%s1717] %v1715
    %s1721 = scalar_lea.vmem [#allocation0], 352
    %v1722 = vld [vmem:[%s1721] sm:%s1371]
    %v1723 = vpack.c.bf16 0.0, %v1722
    %s1724 = sshll.u32 1, %s1372
    %s1725 = ssub.s32 %s1724, 1
    %s1726 = smul.addr 4, 44
    %s1727 = scalar_lea.vmem %s1, %s1726
    %1728 = vst [vmem:[%s1727] sm:%s1725] %v1723
    %s1729 = scalar_lea.vmem [#allocation0], 360
    %v1730 = vld [vmem:[%s1729] sm:%s1371]
    %v1731 = vpack.c.bf16 0.0, %v1730
    %s1732 = sshll.u32 1, %s1372
    %s1733 = ssub.s32 %s1732, 1
    %s1734 = smul.addr 4, 45
    %s1735 = scalar_lea.vmem %s1, %s1734
    %1736 = vst [vmem:[%s1735] sm:%s1733] %v1731
    %s1737 = scalar_lea.vmem [#allocation0], 368
    %v1738 = vld [vmem:[%s1737] sm:%s1371]
    %v1739 = vpack.c.bf16 0.0, %v1738
    %s1740 = sshll.u32 1, %s1372
    %s1741 = ssub.s32 %s1740, 1
    %s1742 = smul.addr 4, 46
    %s1743 = scalar_lea.vmem %s1, %s1742
    %1744 = vst [vmem:[%s1743] sm:%s1741] %v1739
    %s1745 = scalar_lea.vmem [#allocation0], 376
    %v1746 = vld [vmem:[%s1745] sm:%s1371]
    %v1747 = vpack.c.bf16 0.0, %v1746
    %s1748 = sshll.u32 1, %s1372
    %s1749 = ssub.s32 %s1748, 1
    %s1750 = smul.addr 4, 47
    %s1751 = scalar_lea.vmem %s1, %s1750
    %1752 = vst [vmem:[%s1751] sm:%s1749] %v1747
    %s1753 = scalar_lea.vmem [#allocation0], 384
    %v1754 = vld [vmem:[%s1753] sm:%s1371]
    %v1755 = vpack.c.bf16 0.0, %v1754
    %s1756 = sshll.u32 1, %s1372
    %s1757 = ssub.s32 %s1756, 1
    %s1758 = smul.addr 4, 48
    %s1759 = scalar_lea.vmem %s1, %s1758
    %1760 = vst [vmem:[%s1759] sm:%s1757] %v1755
    %s1761 = scalar_lea.vmem [#allocation0], 392
    %v1762 = vld [vmem:[%s1761] sm:%s1371]
    %v1763 = vpack.c.bf16 0.0, %v1762
    %s1764 = sshll.u32 1, %s1372
    %s1765 = ssub.s32 %s1764, 1
    %s1766 = smul.addr 4, 49
    %s1767 = scalar_lea.vmem %s1, %s1766
    %1768 = vst [vmem:[%s1767] sm:%s1765] %v1763
    %s1769 = scalar_lea.vmem [#allocation0], 400
    %v1770 = vld [vmem:[%s1769] sm:%s1371]
    %v1771 = vpack.c.bf16 0.0, %v1770
    %s1772 = sshll.u32 1, %s1372
    %s1773 = ssub.s32 %s1772, 1
    %s1774 = smul.addr 4, 50
    %s1775 = scalar_lea.vmem %s1, %s1774
    %1776 = vst [vmem:[%s1775] sm:%s1773] %v1771
    %s1777 = scalar_lea.vmem [#allocation0], 408
    %v1778 = vld [vmem:[%s1777] sm:%s1371]
    %v1779 = vpack.c.bf16 0.0, %v1778
    %s1780 = sshll.u32 1, %s1372
    %s1781 = ssub.s32 %s1780, 1
    %s1782 = smul.addr 4, 51
    %s1783 = scalar_lea.vmem %s1, %s1782
    %1784 = vst [vmem:[%s1783] sm:%s1781] %v1779
    %s1785 = scalar_lea.vmem [#allocation0], 416
    %v1786 = vld [vmem:[%s1785] sm:%s1371]
    %v1787 = vpack.c.bf16 0.0, %v1786
    %s1788 = sshll.u32 1, %s1372
    %s1789 = ssub.s32 %s1788, 1
    %s1790 = smul.addr 4, 52
    %s1791 = scalar_lea.vmem %s1, %s1790
    %1792 = vst [vmem:[%s1791] sm:%s1789] %v1787
    %s1793 = scalar_lea.vmem [#allocation0], 424
    %v1794 = vld [vmem:[%s1793] sm:%s1371]
    %v1795 = vpack.c.bf16 0.0, %v1794
    %s1796 = sshll.u32 1, %s1372
    %s1797 = ssub.s32 %s1796, 1
    %s1798 = smul.addr 4, 53
    %s1799 = scalar_lea.vmem %s1, %s1798
    %1800 = vst [vmem:[%s1799] sm:%s1797] %v1795
    %s1801 = scalar_lea.vmem [#allocation0], 432
    %v1802 = vld [vmem:[%s1801] sm:%s1371]
    %v1803 = vpack.c.bf16 0.0, %v1802
    %s1804 = sshll.u32 1, %s1372
    %s1805 = ssub.s32 %s1804, 1
    %s1806 = smul.addr 4, 54
    %s1807 = scalar_lea.vmem %s1, %s1806
    %1808 = vst [vmem:[%s1807] sm:%s1805] %v1803
    %s1809 = scalar_lea.vmem [#allocation0], 440
    %v1810 = vld [vmem:[%s1809] sm:%s1371]
    %v1811 = vpack.c.bf16 0.0, %v1810
    %s1812 = sshll.u32 1, %s1372
    %s1813 = ssub.s32 %s1812, 1
    %s1814 = smul.addr 4, 55
    %s1815 = scalar_lea.vmem %s1, %s1814
    %1816 = vst [vmem:[%s1815] sm:%s1813] %v1811
    %s1817 = scalar_lea.vmem [#allocation0], 448
    %v1818 = vld [vmem:[%s1817] sm:%s1371]
    %v1819 = vpack.c.bf16 0.0, %v1818
    %s1820 = sshll.u32 1, %s1372
    %s1821 = ssub.s32 %s1820, 1
    %s1822 = smul.addr 4, 56
    %s1823 = scalar_lea.vmem %s1, %s1822
    %1824 = vst [vmem:[%s1823] sm:%s1821] %v1819
    %s1825 = scalar_lea.vmem [#allocation0], 456
    %v1826 = vld [vmem:[%s1825] sm:%s1371]
    %v1827 = vpack.c.bf16 0.0, %v1826
    %s1828 = sshll.u32 1, %s1372
    %s1829 = ssub.s32 %s1828, 1
    %s1830 = smul.addr 4, 57
    %s1831 = scalar_lea.vmem %s1, %s1830
    %1832 = vst [vmem:[%s1831] sm:%s1829] %v1827
    %s1833 = scalar_lea.vmem [#allocation0], 464
    %v1834 = vld [vmem:[%s1833] sm:%s1371]
    %v1835 = vpack.c.bf16 0.0, %v1834
    %s1836 = sshll.u32 1, %s1372
    %s1837 = ssub.s32 %s1836, 1
    %s1838 = smul.addr 4, 58
    %s1839 = scalar_lea.vmem %s1, %s1838
    %1840 = vst [vmem:[%s1839] sm:%s1837] %v1835
    %s1841 = scalar_lea.vmem [#allocation0], 472
    %v1842 = vld [vmem:[%s1841] sm:%s1371]
    %v1843 = vpack.c.bf16 0.0, %v1842
    %s1844 = sshll.u32 1, %s1372
    %s1845 = ssub.s32 %s1844, 1
    %s1846 = smul.addr 4, 59
    %s1847 = scalar_lea.vmem %s1, %s1846
    %1848 = vst [vmem:[%s1847] sm:%s1845] %v1843
    %s1849 = scalar_lea.vmem [#allocation0], 480
    %v1850 = vld [vmem:[%s1849] sm:%s1371]
    %v1851 = vpack.c.bf16 0.0, %v1850
    %s1852 = sshll.u32 1, %s1372
    %s1853 = ssub.s32 %s1852, 1
    %s1854 = smul.addr 4, 60
    %s1855 = scalar_lea.vmem %s1, %s1854
    %1856 = vst [vmem:[%s1855] sm:%s1853] %v1851
    %s1857 = scalar_lea.vmem [#allocation0], 488
    %v1858 = vld [vmem:[%s1857] sm:%s1371]
    %v1859 = vpack.c.bf16 0.0, %v1858
    %s1860 = sshll.u32 1, %s1372
    %s1861 = ssub.s32 %s1860, 1
    %s1862 = smul.addr 4, 61
    %s1863 = scalar_lea.vmem %s1, %s1862
    %1864 = vst [vmem:[%s1863] sm:%s1861] %v1859
    %s1865 = scalar_lea.vmem [#allocation0], 496
    %v1866 = vld [vmem:[%s1865] sm:%s1371]
    %v1867 = vpack.c.bf16 0.0, %v1866
    %s1868 = sshll.u32 1, %s1372
    %s1869 = ssub.s32 %s1868, 1
    %s1870 = smul.addr 4, 62
    %s1871 = scalar_lea.vmem %s1, %s1870
    %1872 = vst [vmem:[%s1871] sm:%s1869] %v1867
    %s1873 = scalar_lea.vmem [#allocation0], 504
    %v1874 = vld [vmem:[%s1873] sm:%s1371]
    %v1875 = vpack.c.bf16 0.0, %v1874
    %s1876 = sshll.u32 1, %s1372
    %s1877 = ssub.s32 %s1876, 1
    %s1878 = smul.addr 4, 63
    %s1879 = scalar_lea.vmem %s1, %s1878
    %1880 = vst [vmem:[%s1879] sm:%s1877] %v1875
    %s1881 = scalar_lea.vmem [#allocation0], 512
    %v1882 = vld [vmem:[%s1881] sm:%s1371]
    %v1883 = vpack.c.bf16 0.0, %v1882
    %s1884 = sshll.u32 1, %s1372
    %s1885 = ssub.s32 %s1884, 1
    %s1886 = smul.addr 4, 64
    %s1887 = scalar_lea.vmem %s1, %s1886
    %1888 = vst [vmem:[%s1887] sm:%s1885] %v1883
    %s1889 = scalar_lea.vmem [#allocation0], 520
    %v1890 = vld [vmem:[%s1889] sm:%s1371]
    %v1891 = vpack.c.bf16 0.0, %v1890
    %s1892 = sshll.u32 1, %s1372
    %s1893 = ssub.s32 %s1892, 1
    %s1894 = smul.addr 4, 65
    %s1895 = scalar_lea.vmem %s1, %s1894
    %1896 = vst [vmem:[%s1895] sm:%s1893] %v1891
    %s1897 = scalar_lea.vmem [#allocation0], 528
    %v1898 = vld [vmem:[%s1897] sm:%s1371]
    %v1899 = vpack.c.bf16 0.0, %v1898
    %s1900 = sshll.u32 1, %s1372
    %s1901 = ssub.s32 %s1900, 1
    %s1902 = smul.addr 4, 66
    %s1903 = scalar_lea.vmem %s1, %s1902
    %1904 = vst [vmem:[%s1903] sm:%s1901] %v1899
    %s1905 = scalar_lea.vmem [#allocation0], 536
    %v1906 = vld [vmem:[%s1905] sm:%s1371]
    %v1907 = vpack.c.bf16 0.0, %v1906
    %s1908 = sshll.u32 1, %s1372
    %s1909 = ssub.s32 %s1908, 1
    %s1910 = smul.addr 4, 67
    %s1911 = scalar_lea.vmem %s1, %s1910
    %1912 = vst [vmem:[%s1911] sm:%s1909] %v1907
    %s1913 = scalar_lea.vmem [#allocation0], 544
    %v1914 = vld [vmem:[%s1913] sm:%s1371]
    %v1915 = vpack.c.bf16 0.0, %v1914
    %s1916 = sshll.u32 1, %s1372
    %s1917 = ssub.s32 %s1916, 1
    %s1918 = smul.addr 4, 68
    %s1919 = scalar_lea.vmem %s1, %s1918
    %1920 = vst [vmem:[%s1919] sm:%s1917] %v1915
    %s1921 = scalar_lea.vmem [#allocation0], 552
    %v1922 = vld [vmem:[%s1921] sm:%s1371]
    %v1923 = vpack.c.bf16 0.0, %v1922
    %s1924 = sshll.u32 1, %s1372
    %s1925 = ssub.s32 %s1924, 1
    %s1926 = smul.addr 4, 69
    %s1927 = scalar_lea.vmem %s1, %s1926
    %1928 = vst [vmem:[%s1927] sm:%s1925] %v1923
    %s1929 = scalar_lea.vmem [#allocation0], 560
    %v1930 = vld [vmem:[%s1929] sm:%s1371]
    %v1931 = vpack.c.bf16 0.0, %v1930
    %s1932 = sshll.u32 1, %s1372
    %s1933 = ssub.s32 %s1932, 1
    %s1934 = smul.addr 4, 70
    %s1935 = scalar_lea.vmem %s1, %s1934
    %1936 = vst [vmem:[%s1935] sm:%s1933] %v1931
    %s1937 = scalar_lea.vmem [#allocation0], 568
    %v1938 = vld [vmem:[%s1937] sm:%s1371]
    %v1939 = vpack.c.bf16 0.0, %v1938
    %s1940 = sshll.u32 1, %s1372
    %s1941 = ssub.s32 %s1940, 1
    %s1942 = smul.addr 4, 71
    %s1943 = scalar_lea.vmem %s1, %s1942
    %1944 = vst [vmem:[%s1943] sm:%s1941] %v1939
    %s1945 = scalar_lea.vmem [#allocation0], 576
    %v1946 = vld [vmem:[%s1945] sm:%s1371]
    %v1947 = vpack.c.bf16 0.0, %v1946
    %s1948 = sshll.u32 1, %s1372
    %s1949 = ssub.s32 %s1948, 1
    %s1950 = smul.addr 4, 72
    %s1951 = scalar_lea.vmem %s1, %s1950
    %1952 = vst [vmem:[%s1951] sm:%s1949] %v1947
    %s1953 = scalar_lea.vmem [#allocation0], 584
    %v1954 = vld [vmem:[%s1953] sm:%s1371]
    %v1955 = vpack.c.bf16 0.0, %v1954
    %s1956 = sshll.u32 1, %s1372
    %s1957 = ssub.s32 %s1956, 1
    %s1958 = smul.addr 4, 73
    %s1959 = scalar_lea.vmem %s1, %s1958
    %1960 = vst [vmem:[%s1959] sm:%s1957] %v1955
    %s1961 = scalar_lea.vmem [#allocation0], 592
    %v1962 = vld [vmem:[%s1961] sm:%s1371]
    %v1963 = vpack.c.bf16 0.0, %v1962
    %s1964 = sshll.u32 1, %s1372
    %s1965 = ssub.s32 %s1964, 1
    %s1966 = smul.addr 4, 74
    %s1967 = scalar_lea.vmem %s1, %s1966
    %1968 = vst [vmem:[%s1967] sm:%s1965] %v1963
    %s1969 = scalar_lea.vmem [#allocation0], 600
    %v1970 = vld [vmem:[%s1969] sm:%s1371]
    %v1971 = vpack.c.bf16 0.0, %v1970
    %s1972 = sshll.u32 1, %s1372
    %s1973 = ssub.s32 %s1972, 1
    %s1974 = smul.addr 4, 75
    %s1975 = scalar_lea.vmem %s1, %s1974
    %1976 = vst [vmem:[%s1975] sm:%s1973] %v1971
    %s1977 = scalar_lea.vmem [#allocation0], 608
    %v1978 = vld [vmem:[%s1977] sm:%s1371]
    %v1979 = vpack.c.bf16 0.0, %v1978
    %s1980 = sshll.u32 1, %s1372
    %s1981 = ssub.s32 %s1980, 1
    %s1982 = smul.addr 4, 76
    %s1983 = scalar_lea.vmem %s1, %s1982
    %1984 = vst [vmem:[%s1983] sm:%s1981] %v1979
    %s1985 = scalar_lea.vmem [#allocation0], 616
    %v1986 = vld [vmem:[%s1985] sm:%s1371]
    %v1987 = vpack.c.bf16 0.0, %v1986
    %s1988 = sshll.u32 1, %s1372
    %s1989 = ssub.s32 %s1988, 1
    %s1990 = smul.addr 4, 77
    %s1991 = scalar_lea.vmem %s1, %s1990
    %1992 = vst [vmem:[%s1991] sm:%s1989] %v1987
    %s1993 = scalar_lea.vmem [#allocation0], 624
    %v1994 = vld [vmem:[%s1993] sm:%s1371]
    %v1995 = vpack.c.bf16 0.0, %v1994
    %s1996 = sshll.u32 1, %s1372
    %s1997 = ssub.s32 %s1996, 1
    %s1998 = smul.addr 4, 78
    %s1999 = scalar_lea.vmem %s1, %s1998
    %2000 = vst [vmem:[%s1999] sm:%s1997] %v1995
    %s2001 = scalar_lea.vmem [#allocation0], 632
    %v2002 = vld [vmem:[%s2001] sm:%s1371]
    %v2003 = vpack.c.bf16 0.0, %v2002
    %s2004 = sshll.u32 1, %s1372
    %s2005 = ssub.s32 %s2004, 1
    %s2006 = smul.addr 4, 79
    %s2007 = scalar_lea.vmem %s1, %s2006
    %2008 = vst [vmem:[%s2007] sm:%s2005] %v2003
    %s2009 = scalar_lea.vmem [#allocation0], 640
    %v2010 = vld [vmem:[%s2009] sm:%s1371]
    %v2011 = vpack.c.bf16 0.0, %v2010
    %s2012 = sshll.u32 1, %s1372
    %s2013 = ssub.s32 %s2012, 1
    %s2014 = smul.addr 4, 80
    %s2015 = scalar_lea.vmem %s1, %s2014
    %2016 = vst [vmem:[%s2015] sm:%s2013] %v2011
    %s2017 = scalar_lea.vmem [#allocation0], 648
    %v2018 = vld [vmem:[%s2017] sm:%s1371]
    %v2019 = vpack.c.bf16 0.0, %v2018
    %s2020 = sshll.u32 1, %s1372
    %s2021 = ssub.s32 %s2020, 1
    %s2022 = smul.addr 4, 81
    %s2023 = scalar_lea.vmem %s1, %s2022
    %2024 = vst [vmem:[%s2023] sm:%s2021] %v2019
    %s2025 = scalar_lea.vmem [#allocation0], 656
    %v2026 = vld [vmem:[%s2025] sm:%s1371]
    %v2027 = vpack.c.bf16 0.0, %v2026
    %s2028 = sshll.u32 1, %s1372
    %s2029 = ssub.s32 %s2028, 1
    %s2030 = smul.addr 4, 82
    %s2031 = scalar_lea.vmem %s1, %s2030
    %2032 = vst [vmem:[%s2031] sm:%s2029] %v2027
    %s2033 = scalar_lea.vmem [#allocation0], 664
    %v2034 = vld [vmem:[%s2033] sm:%s1371]
    %v2035 = vpack.c.bf16 0.0, %v2034
    %s2036 = sshll.u32 1, %s1372
    %s2037 = ssub.s32 %s2036, 1
    %s2038 = smul.addr 4, 83
    %s2039 = scalar_lea.vmem %s1, %s2038
    %2040 = vst [vmem:[%s2039] sm:%s2037] %v2035
    %s2041 = scalar_lea.vmem [#allocation0], 672
    %v2042 = vld [vmem:[%s2041] sm:%s1371]
    %v2043 = vpack.c.bf16 0.0, %v2042
    %s2044 = sshll.u32 1, %s1372
    %s2045 = ssub.s32 %s2044, 1
    %s2046 = smul.addr 4, 84
    %s2047 = scalar_lea.vmem %s1, %s2046
    %2048 = vst [vmem:[%s2047] sm:%s2045] %v2043
    %s2049 = scalar_lea.vmem [#allocation0], 680
    %v2050 = vld [vmem:[%s2049] sm:%s1371]
    %v2051 = vpack.c.bf16 0.0, %v2050
    %s2052 = sshll.u32 1, %s1372
    %s2053 = ssub.s32 %s2052, 1
    %s2054 = smul.addr 4, 85
    %s2055 = scalar_lea.vmem %s1, %s2054
    %2056 = vst [vmem:[%s2055] sm:%s2053] %v2051
    %s2057 = scalar_lea.vmem [#allocation0], 688
    %v2058 = vld [vmem:[%s2057] sm:%s1371]
    %v2059 = vpack.c.bf16 0.0, %v2058
    %s2060 = sshll.u32 1, %s1372
    %s2061 = ssub.s32 %s2060, 1
    %s2062 = smul.addr 4, 86
    %s2063 = scalar_lea.vmem %s1, %s2062
    %2064 = vst [vmem:[%s2063] sm:%s2061] %v2059
    %s2065 = scalar_lea.vmem [#allocation0], 696
    %v2066 = vld [vmem:[%s2065] sm:%s1371]
    %v2067 = vpack.c.bf16 0.0, %v2066
    %s2068 = sshll.u32 1, %s1372
    %s2069 = ssub.s32 %s2068, 1
    %s2070 = smul.addr 4, 87
    %s2071 = scalar_lea.vmem %s1, %s2070
    %2072 = vst [vmem:[%s2071] sm:%s2069] %v2067
    %s2073 = scalar_lea.vmem [#allocation0], 704
    %v2074 = vld [vmem:[%s2073] sm:%s1371]
    %v2075 = vpack.c.bf16 0.0, %v2074
    %s2076 = sshll.u32 1, %s1372
    %s2077 = ssub.s32 %s2076, 1
    %s2078 = smul.addr 4, 88
    %s2079 = scalar_lea.vmem %s1, %s2078
    %2080 = vst [vmem:[%s2079] sm:%s2077] %v2075
    %s2081 = scalar_lea.vmem [#allocation0], 712
    %v2082 = vld [vmem:[%s2081] sm:%s1371]
    %v2083 = vpack.c.bf16 0.0, %v2082
    %s2084 = sshll.u32 1, %s1372
    %s2085 = ssub.s32 %s2084, 1
    %s2086 = smul.addr 4, 89
    %s2087 = scalar_lea.vmem %s1, %s2086
    %2088 = vst [vmem:[%s2087] sm:%s2085] %v2083
    %s2089 = scalar_lea.vmem [#allocation0], 720
    %v2090 = vld [vmem:[%s2089] sm:%s1371]
    %v2091 = vpack.c.bf16 0.0, %v2090
    %s2092 = sshll.u32 1, %s1372
    %s2093 = ssub.s32 %s2092, 1
    %s2094 = smul.addr 4, 90
    %s2095 = scalar_lea.vmem %s1, %s2094
    %2096 = vst [vmem:[%s2095] sm:%s2093] %v2091
    %s2097 = scalar_lea.vmem [#allocation0], 728
    %v2098 = vld [vmem:[%s2097] sm:%s1371]
    %v2099 = vpack.c.bf16 0.0, %v2098
    %s2100 = sshll.u32 1, %s1372
    %s2101 = ssub.s32 %s2100, 1
    %s2102 = smul.addr 4, 91
    %s2103 = scalar_lea.vmem %s1, %s2102
    %2104 = vst [vmem:[%s2103] sm:%s2101] %v2099
    %s2105 = scalar_lea.vmem [#allocation0], 736
    %v2106 = vld [vmem:[%s2105] sm:%s1371]
    %v2107 = vpack.c.bf16 0.0, %v2106
    %s2108 = sshll.u32 1, %s1372
    %s2109 = ssub.s32 %s2108, 1
    %s2110 = smul.addr 4, 92
    %s2111 = scalar_lea.vmem %s1, %s2110
    %2112 = vst [vmem:[%s2111] sm:%s2109] %v2107
    %s2113 = scalar_lea.vmem [#allocation0], 744
    %v2114 = vld [vmem:[%s2113] sm:%s1371]
    %v2115 = vpack.c.bf16 0.0, %v2114
    %s2116 = sshll.u32 1, %s1372
    %s2117 = ssub.s32 %s2116, 1
    %s2118 = smul.addr 4, 93
    %s2119 = scalar_lea.vmem %s1, %s2118
    %2120 = vst [vmem:[%s2119] sm:%s2117] %v2115
    %s2121 = scalar_lea.vmem [#allocation0], 752
    %v2122 = vld [vmem:[%s2121] sm:%s1371]
    %v2123 = vpack.c.bf16 0.0, %v2122
    %s2124 = sshll.u32 1, %s1372
    %s2125 = ssub.s32 %s2124, 1
    %s2126 = smul.addr 4, 94
    %s2127 = scalar_lea.vmem %s1, %s2126
    %2128 = vst [vmem:[%s2127] sm:%s2125] %v2123
    %s2129 = scalar_lea.vmem [#allocation0], 760
    %v2130 = vld [vmem:[%s2129] sm:%s1371]
    %v2131 = vpack.c.bf16 0.0, %v2130
    %s2132 = sshll.u32 1, %s1372
    %s2133 = ssub.s32 %s2132, 1
    %s2134 = smul.addr 4, 95
    %s2135 = scalar_lea.vmem %s1, %s2134
    %2136 = vst [vmem:[%s2135] sm:%s2133] %v2131
    %s2137 = scalar_lea.vmem [#allocation0], 768
    %v2138 = vld [vmem:[%s2137] sm:%s1371]
    %v2139 = vpack.c.bf16 0.0, %v2138
    %s2140 = sshll.u32 1, %s1372
    %s2141 = ssub.s32 %s2140, 1
    %s2142 = smul.addr 4, 96
    %s2143 = scalar_lea.vmem %s1, %s2142
    %2144 = vst [vmem:[%s2143] sm:%s2141] %v2139
    %s2145 = scalar_lea.vmem [#allocation0], 776
    %v2146 = vld [vmem:[%s2145] sm:%s1371]
    %v2147 = vpack.c.bf16 0.0, %v2146
    %s2148 = sshll.u32 1, %s1372
    %s2149 = ssub.s32 %s2148, 1
    %s2150 = smul.addr 4, 97
    %s2151 = scalar_lea.vmem %s1, %s2150
    %2152 = vst [vmem:[%s2151] sm:%s2149] %v2147
    %s2153 = scalar_lea.vmem [#allocation0], 784
    %v2154 = vld [vmem:[%s2153] sm:%s1371]
    %v2155 = vpack.c.bf16 0.0, %v2154
    %s2156 = sshll.u32 1, %s1372
    %s2157 = ssub.s32 %s2156, 1
    %s2158 = smul.addr 4, 98
    %s2159 = scalar_lea.vmem %s1, %s2158
    %2160 = vst [vmem:[%s2159] sm:%s2157] %v2155
    %s2161 = scalar_lea.vmem [#allocation0], 792
    %v2162 = vld [vmem:[%s2161] sm:%s1371]
    %v2163 = vpack.c.bf16 0.0, %v2162
    %s2164 = sshll.u32 1, %s1372
    %s2165 = ssub.s32 %s2164, 1
    %s2166 = smul.addr 4, 99
    %s2167 = scalar_lea.vmem %s1, %s2166
    %2168 = vst [vmem:[%s2167] sm:%s2165] %v2163
    %s2169 = scalar_lea.vmem [#allocation0], 800
    %v2170 = vld [vmem:[%s2169] sm:%s1371]
    %v2171 = vpack.c.bf16 0.0, %v2170
    %s2172 = sshll.u32 1, %s1372
    %s2173 = ssub.s32 %s2172, 1
    %s2174 = smul.addr 4, 100
    %s2175 = scalar_lea.vmem %s1, %s2174
    %2176 = vst [vmem:[%s2175] sm:%s2173] %v2171
    %s2177 = scalar_lea.vmem [#allocation0], 808
    %v2178 = vld [vmem:[%s2177] sm:%s1371]
    %v2179 = vpack.c.bf16 0.0, %v2178
    %s2180 = sshll.u32 1, %s1372
    %s2181 = ssub.s32 %s2180, 1
    %s2182 = smul.addr 4, 101
    %s2183 = scalar_lea.vmem %s1, %s2182
    %2184 = vst [vmem:[%s2183] sm:%s2181] %v2179
    %s2185 = scalar_lea.vmem [#allocation0], 816
    %v2186 = vld [vmem:[%s2185] sm:%s1371]
    %v2187 = vpack.c.bf16 0.0, %v2186
    %s2188 = sshll.u32 1, %s1372
    %s2189 = ssub.s32 %s2188, 1
    %s2190 = smul.addr 4, 102
    %s2191 = scalar_lea.vmem %s1, %s2190
    %2192 = vst [vmem:[%s2191] sm:%s2189] %v2187
    %s2193 = scalar_lea.vmem [#allocation0], 824
    %v2194 = vld [vmem:[%s2193] sm:%s1371]
    %v2195 = vpack.c.bf16 0.0, %v2194
    %s2196 = sshll.u32 1, %s1372
    %s2197 = ssub.s32 %s2196, 1
    %s2198 = smul.addr 4, 103
    %s2199 = scalar_lea.vmem %s1, %s2198
    %2200 = vst [vmem:[%s2199] sm:%s2197] %v2195
    %s2201 = scalar_lea.vmem [#allocation0], 832
    %v2202 = vld [vmem:[%s2201] sm:%s1371]
    %v2203 = vpack.c.bf16 0.0, %v2202
    %s2204 = sshll.u32 1, %s1372
    %s2205 = ssub.s32 %s2204, 1
    %s2206 = smul.addr 4, 104
    %s2207 = scalar_lea.vmem %s1, %s2206
    %2208 = vst [vmem:[%s2207] sm:%s2205] %v2203
    %s2209 = scalar_lea.vmem [#allocation0], 840
    %v2210 = vld [vmem:[%s2209] sm:%s1371]
    %v2211 = vpack.c.bf16 0.0, %v2210
    %s2212 = sshll.u32 1, %s1372
    %s2213 = ssub.s32 %s2212, 1
    %s2214 = smul.addr 4, 105
    %s2215 = scalar_lea.vmem %s1, %s2214
    %2216 = vst [vmem:[%s2215] sm:%s2213] %v2211
    %s2217 = scalar_lea.vmem [#allocation0], 848
    %v2218 = vld [vmem:[%s2217] sm:%s1371]
    %v2219 = vpack.c.bf16 0.0, %v2218
    %s2220 = sshll.u32 1, %s1372
    %s2221 = ssub.s32 %s2220, 1
    %s2222 = smul.addr 4, 106
    %s2223 = scalar_lea.vmem %s1, %s2222
    %2224 = vst [vmem:[%s2223] sm:%s2221] %v2219
    %s2225 = scalar_lea.vmem [#allocation0], 856
    %v2226 = vld [vmem:[%s2225] sm:%s1371]
    %v2227 = vpack.c.bf16 0.0, %v2226
    %s2228 = sshll.u32 1, %s1372
    %s2229 = ssub.s32 %s2228, 1
    %s2230 = smul.addr 4, 107
    %s2231 = scalar_lea.vmem %s1, %s2230
    %2232 = vst [vmem:[%s2231] sm:%s2229] %v2227
    %s2233 = scalar_lea.vmem [#allocation0], 864
    %v2234 = vld [vmem:[%s2233] sm:%s1371]
    %v2235 = vpack.c.bf16 0.0, %v2234
    %s2236 = sshll.u32 1, %s1372
    %s2237 = ssub.s32 %s2236, 1
    %s2238 = smul.addr 4, 108
    %s2239 = scalar_lea.vmem %s1, %s2238
    %2240 = vst [vmem:[%s2239] sm:%s2237] %v2235
    %s2241 = scalar_lea.vmem [#allocation0], 872
    %v2242 = vld [vmem:[%s2241] sm:%s1371]
    %v2243 = vpack.c.bf16 0.0, %v2242
    %s2244 = sshll.u32 1, %s1372
    %s2245 = ssub.s32 %s2244, 1
    %s2246 = smul.addr 4, 109
    %s2247 = scalar_lea.vmem %s1, %s2246
    %2248 = vst [vmem:[%s2247] sm:%s2245] %v2243
    %s2249 = scalar_lea.vmem [#allocation0], 880
    %v2250 = vld [vmem:[%s2249] sm:%s1371]
    %v2251 = vpack.c.bf16 0.0, %v2250
    %s2252 = sshll.u32 1, %s1372
    %s2253 = ssub.s32 %s2252, 1
    %s2254 = smul.addr 4, 110
    %s2255 = scalar_lea.vmem %s1, %s2254
    %2256 = vst [vmem:[%s2255] sm:%s2253] %v2251
    %s2257 = scalar_lea.vmem [#allocation0], 888
    %v2258 = vld [vmem:[%s2257] sm:%s1371]
    %v2259 = vpack.c.bf16 0.0, %v2258
    %s2260 = sshll.u32 1, %s1372
    %s2261 = ssub.s32 %s2260, 1
    %s2262 = smul.addr 4, 111
    %s2263 = scalar_lea.vmem %s1, %s2262
    %2264 = vst [vmem:[%s2263] sm:%s2261] %v2259
    %s2265 = scalar_lea.vmem [#allocation0], 896
    %v2266 = vld [vmem:[%s2265] sm:%s1371]
    %v2267 = vpack.c.bf16 0.0, %v2266
    %s2268 = sshll.u32 1, %s1372
    %s2269 = ssub.s32 %s2268, 1
    %s2270 = smul.addr 4, 112
    %s2271 = scalar_lea.vmem %s1, %s2270
    %2272 = vst [vmem:[%s2271] sm:%s2269] %v2267
    %s2273 = scalar_lea.vmem [#allocation0], 904
    %v2274 = vld [vmem:[%s2273] sm:%s1371]
    %v2275 = vpack.c.bf16 0.0, %v2274
    %s2276 = sshll.u32 1, %s1372
    %s2277 = ssub.s32 %s2276, 1
    %s2278 = smul.addr 4, 113
    %s2279 = scalar_lea.vmem %s1, %s2278
    %2280 = vst [vmem:[%s2279] sm:%s2277] %v2275
    %s2281 = scalar_lea.vmem [#allocation0], 912
    %v2282 = vld [vmem:[%s2281] sm:%s1371]
    %v2283 = vpack.c.bf16 0.0, %v2282
    %s2284 = sshll.u32 1, %s1372
    %s2285 = ssub.s32 %s2284, 1
    %s2286 = smul.addr 4, 114
    %s2287 = scalar_lea.vmem %s1, %s2286
    %2288 = vst [vmem:[%s2287] sm:%s2285] %v2283
    %s2289 = scalar_lea.vmem [#allocation0], 920
    %v2290 = vld [vmem:[%s2289] sm:%s1371]
    %v2291 = vpack.c.bf16 0.0, %v2290
    %s2292 = sshll.u32 1, %s1372
    %s2293 = ssub.s32 %s2292, 1
    %s2294 = smul.addr 4, 115
    %s2295 = scalar_lea.vmem %s1, %s2294
    %2296 = vst [vmem:[%s2295] sm:%s2293] %v2291
    %s2297 = scalar_lea.vmem [#allocation0], 928
    %v2298 = vld [vmem:[%s2297] sm:%s1371]
    %v2299 = vpack.c.bf16 0.0, %v2298
    %s2300 = sshll.u32 1, %s1372
    %s2301 = ssub.s32 %s2300, 1
    %s2302 = smul.addr 4, 116
    %s2303 = scalar_lea.vmem %s1, %s2302
    %2304 = vst [vmem:[%s2303] sm:%s2301] %v2299
    %s2305 = scalar_lea.vmem [#allocation0], 936
    %v2306 = vld [vmem:[%s2305] sm:%s1371]
    %v2307 = vpack.c.bf16 0.0, %v2306
    %s2308 = sshll.u32 1, %s1372
    %s2309 = ssub.s32 %s2308, 1
    %s2310 = smul.addr 4, 117
    %s2311 = scalar_lea.vmem %s1, %s2310
    %2312 = vst [vmem:[%s2311] sm:%s2309] %v2307
    %s2313 = scalar_lea.vmem [#allocation0], 944
    %v2314 = vld [vmem:[%s2313] sm:%s1371]
    %v2315 = vpack.c.bf16 0.0, %v2314
    %s2316 = sshll.u32 1, %s1372
    %s2317 = ssub.s32 %s2316, 1
    %s2318 = smul.addr 4, 118
    %s2319 = scalar_lea.vmem %s1, %s2318
    %2320 = vst [vmem:[%s2319] sm:%s2317] %v2315
    %s2321 = scalar_lea.vmem [#allocation0], 952
    %v2322 = vld [vmem:[%s2321] sm:%s1371]
    %v2323 = vpack.c.bf16 0.0, %v2322
    %s2324 = sshll.u32 1, %s1372
    %s2325 = ssub.s32 %s2324, 1
    %s2326 = smul.addr 4, 119
    %s2327 = scalar_lea.vmem %s1, %s2326
    %2328 = vst [vmem:[%s2327] sm:%s2325] %v2323
    %s2329 = scalar_lea.vmem [#allocation0], 960
    %v2330 = vld [vmem:[%s2329] sm:%s1371]
    %v2331 = vpack.c.bf16 0.0, %v2330
    %s2332 = sshll.u32 1, %s1372
    %s2333 = ssub.s32 %s2332, 1
    %s2334 = smul.addr 4, 120
    %s2335 = scalar_lea.vmem %s1, %s2334
    %2336 = vst [vmem:[%s2335] sm:%s2333] %v2331
    %s2337 = scalar_lea.vmem [#allocation0], 968
    %v2338 = vld [vmem:[%s2337] sm:%s1371]
    %v2339 = vpack.c.bf16 0.0, %v2338
    %s2340 = sshll.u32 1, %s1372
    %s2341 = ssub.s32 %s2340, 1
    %s2342 = smul.addr 4, 121
    %s2343 = scalar_lea.vmem %s1, %s2342
    %2344 = vst [vmem:[%s2343] sm:%s2341] %v2339
    %s2345 = scalar_lea.vmem [#allocation0], 976
    %v2346 = vld [vmem:[%s2345] sm:%s1371]
    %v2347 = vpack.c.bf16 0.0, %v2346
    %s2348 = sshll.u32 1, %s1372
    %s2349 = ssub.s32 %s2348, 1
    %s2350 = smul.addr 4, 122
    %s2351 = scalar_lea.vmem %s1, %s2350
    %2352 = vst [vmem:[%s2351] sm:%s2349] %v2347
    %s2353 = scalar_lea.vmem [#allocation0], 984
    %v2354 = vld [vmem:[%s2353] sm:%s1371]
    %v2355 = vpack.c.bf16 0.0, %v2354
    %s2356 = sshll.u32 1, %s1372
    %s2357 = ssub.s32 %s2356, 1
    %s2358 = smul.addr 4, 123
    %s2359 = scalar_lea.vmem %s1, %s2358
    %2360 = vst [vmem:[%s2359] sm:%s2357] %v2355
    %s2361 = scalar_lea.vmem [#allocation0], 992
    %v2362 = vld [vmem:[%s2361] sm:%s1371]
    %v2363 = vpack.c.bf16 0.0, %v2362
    %s2364 = sshll.u32 1, %s1372
    %s2365 = ssub.s32 %s2364, 1
    %s2366 = smul.addr 4, 124
    %s2367 = scalar_lea.vmem %s1, %s2366
    %2368 = vst [vmem:[%s2367] sm:%s2365] %v2363
    %s2369 = scalar_lea.vmem [#allocation0], 1000
    %v2370 = vld [vmem:[%s2369] sm:%s1371]
    %v2371 = vpack.c.bf16 0.0, %v2370
    %s2372 = sshll.u32 1, %s1372
    %s2373 = ssub.s32 %s2372, 1
    %s2374 = smul.addr 4, 125
    %s2375 = scalar_lea.vmem %s1, %s2374
    %2376 = vst [vmem:[%s2375] sm:%s2373] %v2371
    %s2377 = scalar_lea.vmem [#allocation0], 1008
    %v2378 = vld [vmem:[%s2377] sm:%s1371]
    %v2379 = vpack.c.bf16 0.0, %v2378
    %s2380 = sshll.u32 1, %s1372
    %s2381 = ssub.s32 %s2380, 1
    %s2382 = smul.addr 4, 126
    %s2383 = scalar_lea.vmem %s1, %s2382
    %2384 = vst [vmem:[%s2383] sm:%s2381] %v2379
    %s2385 = scalar_lea.vmem [#allocation0], 1016
    %v2386 = vld [vmem:[%s2385] sm:%s1371]
    %v2387 = vpack.c.bf16 0.0, %v2386
    %s2388 = sshll.u32 1, %s1372
    %s2389 = ssub.s32 %s2388, 1
    %s2390 = smul.addr 4, 127
    %s2391 = scalar_lea.vmem %s1, %s2390
    %2392 = vst [vmem:[%s2391] sm:%s2389] %v2387

// kernel: patnet_forward.7
$region0: #{patnet_forward.7}
  #allocation0 [shape = 'u32[]', space=smem, size = 0x4, offset = 0x4, fixed_abs, tag = 'smem constant byte address 0x4 - core index']
  #allocation1 [shape = 'u32[144,128]{1,0:T(1,128)}', space=vmem, size = 0x12000, scoped, tag = 'internal scratch']
  %s0 = inlined_call_operand.vmem [shape: bf16[3,2,64,512], index: 0, kind: input, shape index: {}]
  %s1 = inlined_call_operand.vmem [shape: f32[2,1,64], index: 1, kind: input, shape index: {}]
  %s2 = inlined_call_operand.vmem [shape: bf16[3,2,4,512], index: 2, kind: input, shape index: {}]
  %s3 = inlined_call_operand.vmem [shape: bf16[3,2,2,64], index: 3, kind: output, shape index: {}]
  %s4 = sld [smem:[#allocation0]]
  $region45: #{patnet_forward.7} parent=0
    _
  %s6 = ssub.s32 1, %s4
  %s7 = scalar_select 0, %s6, %s4
  loop: start=0, step=1, limit=8
  $region2: #{patnet_forward.7} parent=0 // loop_pre_header
    _
  $region3: #{patnet_forward.7} parent=0 // loop_header
    %s9 = sphi 0, %s13
    %p10 = scmp.ge.s32.totalorder %s9, 8
    %s16 = sphi 0, %s35
    %s17 = sphi 0, %s31
    %s18 = sphi 0, %s27
    %s19 = sphi 0, %s16
    %s20 = sphi 0, %s17
    %s21 = sphi 0, %s18
    %s22 = sphi 0, %s19
    %s23 = sphi 0, %s20
    %s24 = sphi 0, %s21
    %s42 = sphi 0, %s44
    %s45 = sphi 0, %s42
    %s46 = sphi 0, %s45
    %s62 = sphi 0, %s46
    %s70 = sphi 0, %s72
    %s73 = sphi 0, %s70
    %s74 = sphi 0, %s73
    %s90 = sphi 0, %s74
    %s98 = sphi 0, %s100
    %s101 = sphi 0, %s98
    %s102 = sphi 0, %s101
    %s118 = sphi 0, %s102
    %s128 = sphi 0, %s130
    %s131 = sphi 0, %s128
    %s132 = sphi 0, %s131
    %s148 = sphi 0, %s132
  $region4: #{patnet_forward.7} parent=0 // loop_header_branch
    %12 = sbr.rel (%p10) target = $region8
  $region5: #{patnet_forward.7} parent=0 // loop_body
    %s14 = ssub.s32 %s9, 1
    %s15 = ssub.s32 %s9, 2
    %s25 = sadd.s32 1, %s18
    %p26 = scmp.ge.s32.totalorder %s25, 1
    %s27 = scalar_select %p26, 0, %s25
    %s28 = sadd.s32 1, %s17
    %s29 = scalar_select %p26, %s28, %s17
    %p30 = scmp.ge.s32.totalorder %s29, 2
    %s31 = scalar_select %p30, 0, %s29
    %s32 = sadd.s32 1, %s16
    %s33 = scalar_select %p30, %s32, %s16
    %p34 = scmp.ge.s32.totalorder %s33, 3
    %s35 = scalar_select %p34, 0, %s33
    %s36 = ssub.s32 %s16, %s35
    %s37 = ssub.s32 %s17, %s31
    %s38 = sor.u32 %s36, %s37
    %s39 = ssub.s32 %s18, %s27
    %s40 = sor.u32 %s38, %s39
    %p41 = scmp.eq.s32.totalorder %s40, 0
    %s43 = sadd.s32 %s42, 1
    %s44 = scalar_select %p41, %s42, %s43
    %p47 = pneg %p41
    %p48 = scmp.eq.s32.totalorder %s9, 5
    %p49 = por %p47, %p48
    %p50 = scmp.ne.s32.totalorder %s42, %s45
    %p51 = scmp.eq.s32.totalorder %s9, 0
    %p52 = por %p50, %p51
    %p53 = scmp.ne.s32.totalorder %s42, %s45
    %p54 = scmp.eq.s32.totalorder %s14, 5
    %p55 = por %p53, %p54
    %p56 = scmp.ne.s32.totalorder %s45, %s46
    %p57 = scmp.eq.s32.totalorder %s14, 0
    %p58 = por %p56, %p57
    %p59 = scmp.ne.s32.totalorder %s45, %s46
    %p60 = scmp.eq.s32.totalorder %s15, 5
    %p61 = por %p59, %p60
    %p63 = scmp.ne.s32.totalorder %s46, %s62
    %p64 = scmp.eq.s32.totalorder %s15, 0
    %p65 = por %p63, %p64
    %s66 = ssub.s32 %s17, %s31
    %s67 = ssub.s32 %s18, %s27
    %s68 = sor.u32 %s66, %s67
    %p69 = scmp.eq.s32.totalorder %s68, 0
    %s71 = sadd.s32 %s70, 1
    %s72 = scalar_select %p69, %s70, %s71
    %p75 = pneg %p69
    %p76 = scmp.eq.s32.totalorder %s9, 5
    %p77 = por %p75, %p76
    %p78 = scmp.ne.s32.totalorder %s70, %s73
    %p79 = scmp.eq.s32.totalorder %s9, 0
    %p80 = por %p78, %p79
    %p81 = scmp.ne.s32.totalorder %s70, %s73
    %p82 = scmp.eq.s32.totalorder %s14, 5
    %p83 = por %p81, %p82
    %p84 = scmp.ne.s32.totalorder %s73, %s74
    %p85 = scmp.eq.s32.totalorder %s14, 0
    %p86 = por %p84, %p85
    %p87 = scmp.ne.s32.totalorder %s73, %s74
    %p88 = scmp.eq.s32.totalorder %s15, 5
    %p89 = por %p87, %p88
    %p91 = scmp.ne.s32.totalorder %s74, %s90
    %p92 = scmp.eq.s32.totalorder %s15, 0
    %p93 = por %p91, %p92
    %s94 = ssub.s32 %s16, %s35
    %s95 = ssub.s32 %s17, %s31
    %s96 = sor.u32 %s94, %s95
    %p97 = scmp.eq.s32.totalorder %s96, 0
    %s99 = sadd.s32 %s98, 1
    %s100 = scalar_select %p97, %s98, %s99
    %p103 = pneg %p97
    %p104 = scmp.eq.s32.totalorder %s9, 5
    %p105 = por %p103, %p104
    %p106 = scmp.ne.s32.totalorder %s98, %s101
    %p107 = scmp.eq.s32.totalorder %s9, 0
    %p108 = por %p106, %p107
    %p109 = scmp.ne.s32.totalorder %s98, %s101
    %p110 = scmp.eq.s32.totalorder %s14, 5
    %p111 = por %p109, %p110
    %p112 = scmp.ne.s32.totalorder %s101, %s102
    %p113 = scmp.eq.s32.totalorder %s14, 0
    %p114 = por %p112, %p113
    %p115 = scmp.ne.s32.totalorder %s101, %s102
    %p116 = scmp.eq.s32.totalorder %s15, 5
    %p117 = por %p115, %p116
    %p119 = scmp.ne.s32.totalorder %s102, %s118
    %p120 = scmp.eq.s32.totalorder %s15, 0
    %p121 = por %p119, %p120
    %s122 = ssub.s32 %s16, %s35
    %s123 = ssub.s32 %s17, %s31
    %s124 = sor.u32 %s122, %s123
    %s125 = ssub.s32 %s18, %s27
    %s126 = sor.u32 %s124, %s125
    %p127 = scmp.eq.s32.totalorder %s126, 0
    %s129 = sadd.s32 %s128, 1
    %s130 = scalar_select %p127, %s128, %s129
    %p133 = pneg %p127
    %p134 = scmp.eq.s32.totalorder %s9, 5
    %p135 = por %p133, %p134
    %p136 = scmp.ne.s32.totalorder %s128, %s131
    %p137 = scmp.eq.s32.totalorder %s9, 0
    %p138 = por %p136, %p137
    %p139 = scmp.ne.s32.totalorder %s128, %s131
    %p140 = scmp.eq.s32.totalorder %s14, 5
    %p141 = por %p139, %p140
    %p142 = scmp.ne.s32.totalorder %s131, %s132
    %p143 = scmp.eq.s32.totalorder %s14, 0
    %p144 = por %p142, %p143
    %p145 = scmp.ne.s32.totalorder %s131, %s132
    %p146 = scmp.eq.s32.totalorder %s15, 5
    %p147 = por %p145, %p146
    %p149 = scmp.ne.s32.totalorder %s132, %s148
    %p150 = scmp.eq.s32.totalorder %s15, 0
    %p151 = por %p149, %p150
    %p152 = scmp.le.s32.totalorder 1, %s9
    %p153 = scmp.lt.s32.totalorder %s9, 7
    %p154 = pnand %p152, %p153
    %p155 = pneg %p154
    // Predicated region
    $region9: #{patnet_forward.7} parent=5 // pred_check
      _
    $region10: #{patnet_forward.7} parent=5 // pred_check_branch
      %157 = sbr.rel (%p154) target = $region12
    $region11: #{patnet_forward.7} parent=5 // pred_region
      %s158 = ssub.s32 %s9, 1
    $region12: #{patnet_forward.7} parent=5 // pred_fallthru
      _
    %p159 = scmp.lt.s32.totalorder %s9, 6
    // Predicated region
    $region13: #{patnet_forward.7} parent=5 // pred_check
      %p160 = pneg %p159
    $region14: #{patnet_forward.7} parent=5 // pred_check_branch
      %162 = sbr.rel (%p160) target = $region16
    $region15: #{patnet_forward.7} parent=5 // pred_region
      // Predicated region
      $region17: #{patnet_forward.7} parent=15 // pred_check
        %p163 = pneg %p52
      $region18: #{patnet_forward.7} parent=15 // pred_check_branch
        %165 = sbr.rel (%p163) target = $region20
      $region19: #{patnet_forward.7} parent=15 // pred_region
        %s166 = smul.u32 8, %s18
        %p167 = scmp.lt.s32.totalorder %s16, 2
        %s168 = scalar_select %p167, %s16, 2
        %p169 = scmp.lt.s32.totalorder %s17, 1
        %s170 = scalar_select %p169, %s17, 1
        %p171 = scmp.lt.s32.totalorder %s166, 7
        %s172 = scalar_select %p171, %s166, 7
        %s173 = smul.addr %s172, 4
        %s174 = smul.addr %s170, 32
        %s175 = sadd.s32 %s173, %s174
        %s176 = smul.addr %s168, 64
        %s177 = sadd.s32 %s175, %s176
        %s178 = smul.addr %s177, 4
        %s179 = scalar_lea.vmem %s0, %s178
        %s180 = smul.u32 8, %s18
      $region20: #{patnet_forward.7} parent=15 // pred_fallthru
        _
      // Predicated region
      $region21: #{patnet_forward.7} parent=15 // pred_check
        %p181 = pneg %p80
      $region22: #{patnet_forward.7} parent=15 // pred_check_branch
        %183 = sbr.rel (%p181) target = $region24
      $region23: #{patnet_forward.7} parent=15 // pred_region
        %p184 = scmp.lt.s32.totalorder %s17, 1
        %s185 = scalar_select %p184, %s17, 1
        %p186 = scmp.lt.s32.totalorder %s18, 0
        %s187 = scalar_select %p186, %s18, 0
        %s188 = sadd.s32 %s187, %s185
        %s189 = scalar_lea.vmem %s1, %s188
      $region24: #{patnet_forward.7} parent=15 // pred_fallthru
        _
      // Predicated region
      $region25: #{patnet_forward.7} parent=15 // pred_check
        %p190 = pneg %p108
      $region26: #{patnet_forward.7} parent=15 // pred_check_branch
        %192 = sbr.rel (%p190) target = $region28
      $region27: #{patnet_forward.7} parent=15 // pred_region
        %p193 = scmp.lt.s32.totalorder %s16, 2
        %s194 = scalar_select %p193, %s16, 2
        %p195 = scmp.lt.s32.totalorder %s17, 1
        %s196 = scalar_select %p195, %s17, 1
        %s197 = smul.addr %s196, 4
        %s198 = smul.addr %s194, 8
        %s199 = sadd.s32 %s197, %s198
        %s200 = smul.addr %s199, 2
        %s201 = scalar_lea.vmem %s2, %s200
      $region28: #{patnet_forward.7} parent=15 // pred_fallthru
        _
    $region16: #{patnet_forward.7} parent=5 // pred_fallthru
      _
    %p202 = scmp.le.s32.totalorder 1, %s9
    %p203 = scmp.lt.s32.totalorder %s9, 7
    %p204 = pnand %p202, %p203
    %p205 = pneg %p204
    // Predicated region
    $region29: #{patnet_forward.7} parent=5 // pred_check
      _
    $region30: #{patnet_forward.7} parent=5 // pred_check_branch
      %207 = sbr.rel (%p204) target = $region32
    $region31: #{patnet_forward.7} parent=5 // pred_region
      %s208 = ssub.s32 %s9, 1
      %s209 = smul.u32 8, %s21
      %p210 = scmp.lt.s32.totalorder %s19, 2
      %s211 = scalar_select %p210, %s19, 2
      %p212 = scmp.lt.s32.totalorder %s20, 1
      %s213 = scalar_select %p212, %s20, 1
      %p214 = scmp.lt.s32.totalorder %s209, 7
      %s215 = scalar_select %p214, %s209, 7
      %s216 = smul.addr %s215, 4
      %s217 = smul.addr %s213, 32
      %s218 = sadd.s32 %s216, %s217
      %s219 = smul.addr %s211, 64
      %s220 = sadd.s32 %s218, %s219
      %s221 = smul.addr %s220, 4
      %s222 = scalar_lea.vmem %s0, %s221
      %p223 = pneg %p58
      %p224 = pneg %p55
      %p225 = scmp.lt.s32.totalorder %s20, 1
      %s226 = scalar_select %p225, %s20, 1
      %p227 = scmp.lt.s32.totalorder %s21, 0
      %s228 = scalar_select %p227, %s21, 0
      %s229 = sadd.s32 %s228, %s226
      %s230 = scalar_lea.vmem %s1, %s229
      %p231 = pneg %p86
      %p232 = pneg %p83
      %p233 = scmp.lt.s32.totalorder %s19, 2
      %s234 = scalar_select %p233, %s19, 2
      %p235 = scmp.lt.s32.totalorder %s20, 1
      %s236 = scalar_select %p235, %s20, 1
      %s237 = smul.addr %s236, 4
      %s238 = smul.addr %s234, 8
      %s239 = sadd.s32 %s237, %s238
      %s240 = smul.addr %s239, 2
      %s241 = scalar_lea.vmem %s2, %s240
      %p242 = pneg %p114
      %p243 = pneg %p111
      %p244 = pneg %p144
      %p245 = pneg %p141
      %p246 = scmp.lt.s32.totalorder %s19, 2
      %s247 = scalar_select %p246, %s19, 2
      %p248 = scmp.lt.s32.totalorder %s20, 1
      %s249 = scalar_select %p248, %s20, 1
      %p250 = scmp.lt.s32.totalorder %s21, 0
      %s251 = scalar_select %p250, %s21, 0
      %s252 = sadd.s32 %s251, %s249
      %s253 = smul.addr %s247, 2
      %s254 = sadd.s32 %s252, %s253
      %s255 = scalar_lea.vmem %s3, %s254
      %s256 = smul.u32 8, %s21
      %p257 = scmp.lt.s32.totalorder %s19, 2
      %s258 = scalar_select %p257, %s19, 2
      %p259 = scmp.lt.s32.totalorder %s20, 1
      %s260 = scalar_select %p259, %s20, 1
      %p261 = scmp.lt.s32.totalorder %s256, 7
      %s262 = scalar_select %p261, %s256, 7
      %s263 = smul.addr %s262, 4
      %s264 = smul.addr %s260, 32
      %s265 = sadd.s32 %s263, %s264
      %s266 = smul.addr %s258, 64
      %s267 = sadd.s32 %s265, %s266
      %s268 = smul.addr %s267, 4
      %s269 = scalar_lea.vmem %s0, %s268
      %s270 = smul.u32 8, %s21
      %p271 = scmp.lt.s32.totalorder %s20, 1
      %s272 = scalar_select %p271, %s20, 1
      %p273 = scmp.lt.s32.totalorder %s21, 0
      %s274 = scalar_select %p273, %s21, 0
      %s275 = sadd.s32 %s274, %s272
      %s276 = scalar_lea.vmem %s1, %s275
      %p277 = scmp.lt.s32.totalorder %s19, 2
      %s278 = scalar_select %p277, %s19, 2
      %p279 = scmp.lt.s32.totalorder %s20, 1
      %s280 = scalar_select %p279, %s20, 1
      %s281 = smul.addr %s280, 4
      %s282 = smul.addr %s278, 8
      %s283 = sadd.s32 %s281, %s282
      %s284 = smul.addr %s283, 2
      %s285 = scalar_lea.vmem %s2, %s284
      %p286 = scmp.lt.s32.totalorder %s19, 2
      %s287 = scalar_select %p286, %s19, 2
      %p288 = scmp.lt.s32.totalorder %s20, 1
      %s289 = scalar_select %p288, %s20, 1
      %p290 = scmp.lt.s32.totalorder %s21, 0
      %s291 = scalar_select %p290, %s21, 0
      %s292 = sadd.s32 %s291, %s289
      %s293 = smul.addr %s287, 2
      %s294 = sadd.s32 %s292, %s293
      %s295 = scalar_lea.vmem %s3, %s294
      %v297 = vld [vmem:[%s269] sm:$0xff]
      %v298 = vld [vmem:[%s269 + $0x8] sm:$0xff]
      %v299 = vld [vmem:[%s269 + $0x10] sm:$0xff]
      %v300 = vld [vmem:[%s269 + $0x18] sm:$0xff]
      %v301 = vld [vmem:[%s269 + $0x20] sm:$0xff]
      %v302 = vld [vmem:[%s269 + $0x28] sm:$0xff]
      %v303 = vld [vmem:[%s269 + $0x30] sm:$0xff]
      %v304 = vld [vmem:[%s269 + $0x38] sm:$0xff]
      %v305 = vld [vmem:[%s269 + $0x40] sm:$0xff]
      %v306 = vld [vmem:[%s269 + $0x48] sm:$0xff]
      %v307 = vld [vmem:[%s269 + $0x50] sm:$0xff]
      %v308 = vld [vmem:[%s269 + $0x58] sm:$0xff]
      %v309 = vld [vmem:[%s269 + $0x60] sm:$0xff]
      %v310 = vld [vmem:[%s269 + $0x68] sm:$0xff]
      %v311 = vld [vmem:[%s269 + $0x70] sm:$0xff]
      %v312 = vld [vmem:[%s269 + $0x78] sm:$0xff]
      %v313 = vld [vmem:[%s276] sm:$0x1]
      %v314 = vld [vmem:[%s285] sm:$0xff]
      %v316 = vcombine.high %v314, %v314
      %v318 = vunpack.c.l.s4 1983009808
      %v319 = vunpack.c.0.s8 %v318
      %v320 = vlaneseq
      %v321 = vshrl.u32 %v320, 7
      %v322 = vsub.s32 %v319, %v321
      %v323 = vrot.slane %v314, %v322
      %v325 = vunpack.c.l.s4 1983009808
      %v326 = vunpack.c.0.s8 %v325
      %v327 = vlaneseq
      %v328 = vshrl.u32 %v327, 7
      %v329 = vsub.s32 %v326, %v328
      %v330 = vrot.slane %v316, %v329
      %v331 = vcombine.high %v323, %v323
      %v332 = vcombine.high %v330, %v330
      %v353 = vunpack.c.l.b16 %v297
      %v354 = vunpack.c.h.b16 %v297
      %v355 = vunpack.c.l.b16 %v298
      %v356 = vunpack.c.h.b16 %v298
      %v357 = vunpack.c.l.b16 %v299
      %v358 = vunpack.c.h.b16 %v299
      %v359 = vunpack.c.l.b16 %v300
      %v360 = vunpack.c.h.b16 %v300
      %v361 = vunpack.c.l.b16 %v301
      %v362 = vunpack.c.h.b16 %v301
      %v363 = vunpack.c.l.b16 %v302
      %v364 = vunpack.c.h.b16 %v302
      %v365 = vunpack.c.l.b16 %v303
      %v366 = vunpack.c.h.b16 %v303
      %v367 = vunpack.c.l.b16 %v304
      %v368 = vunpack.c.h.b16 %v304
      %v369 = vunpack.c.l.b16 %v305
      %v370 = vunpack.c.h.b16 %v305
      %v371 = vunpack.c.l.b16 %v306
      %v372 = vunpack.c.h.b16 %v306
      %v373 = vunpack.c.l.b16 %v307
      %v374 = vunpack.c.h.b16 %v307
      %v375 = vunpack.c.l.b16 %v308
      %v376 = vunpack.c.h.b16 %v308
      %v377 = vunpack.c.l.b16 %v309
      %v378 = vunpack.c.h.b16 %v309
      %v379 = vunpack.c.l.b16 %v310
      %v380 = vunpack.c.h.b16 %v310
      %v381 = vunpack.c.l.b16 %v311
      %v382 = vunpack.c.h.b16 %v311
      %v383 = vunpack.c.l.b16 %v312
      %v384 = vunpack.c.h.b16 %v312
      %v385 = vpack.c.b16 %v357, %v353
      %v386 = vpack.c.b16 %v358, %v354
      %v387 = vpack.c.b16 %v359, %v355
      %v388 = vpack.c.b16 %v360, %v356
      %v389 = vpack.c.b16 %v365, %v361
      %v390 = vpack.c.b16 %v366, %v362
      %v391 = vpack.c.b16 %v367, %v363
      %v392 = vpack.c.b16 %v368, %v364
      %v393 = vpack.c.b16 %v373, %v369
      %v394 = vpack.c.b16 %v374, %v370
      %v395 = vpack.c.b16 %v375, %v371
      %v396 = vpack.c.b16 %v376, %v372
      %v397 = vpack.c.b16 %v381, %v377
      %v398 = vpack.c.b16 %v382, %v378
      %v399 = vpack.c.b16 %v383, %v379
      %v400 = vpack.c.b16 %v384, %v380
      %417 = vmatprep.subr.bf16.mxu0 0
      %418 = vmatpush1.bf16.xpose.msra.mxu0 0
      %419 = vmatprep.subr.bf16.mxu0 0
      %420 = vmatpush1.bf16.xpose.msra.mxu0 0
      %421 = vmatprep.subr.bf16.mxu0 0
      %422 = vmatpush1.bf16.xpose.msra.mxu0 0
      %423 = vmatprep.subr.bf16.mxu0 0
      %424 = vmatpush1.bf16.xpose.msra.mxu0 0
      %425 = vmatprep.subr.bf16.mxu0 %v398
      %426 = vmatpush1.bf16.xpose.msra.mxu0 %v397
      %427 = vmatprep.subr.bf16.mxu0 %v394
      %428 = vmatpush1.bf16.xpose.msra.mxu0 %v393
      %429 = vmatprep.subr.bf16.mxu0 %v390
      %430 = vmatpush1.bf16.xpose.msra.mxu0 %v389
      %431 = vmatprep.subr.bf16.mxu0 %v386
      %432 = vmatpush1.bf16.xpose.msra.mxu0 %v385
      %433 = vmatprep.subr.bf16.mxu0 0
      %434 = vmatpush2.bf16.xpose.msra.mxu0 0
      %435 = vmatprep.subr.bf16.mxu0 0
      %436 = vmatpush2.bf16.xpose.msra.mxu0 0
      %437 = vmatprep.subr.bf16.mxu0 0
      %438 = vmatpush2.bf16.xpose.msra.mxu0 0
      %439 = vmatprep.subr.bf16.mxu0 0
      %440 = vmatpush2.bf16.xpose.msra.mxu0 0
      %441 = vmatprep.subr.bf16.mxu0 0
      %442 = vmatpush2.bf16.xpose.msra.mxu0 0
      %443 = vmatprep.subr.bf16.mxu0 0
      %444 = vmatpush2.bf16.xpose.msra.mxu0 0
      %445 = vmatprep.subr.bf16.mxu0 0
      %446 = vmatpush2.bf16.xpose.msra.mxu0 0
      %447 = vmatprep.subr.bf16.mxu0 0
      %448 = vmatpush2.bf16.xpose.msra.mxu0 0
      %449 = vmatprep.mubr.bf16.mxu0 %v331
      %450 = vmatmul.mubr.bf16.gmra.mxu0 %v323
      %v451 = vpop.f32.mrf.mxu0
      %v452 = vadd.f32 0.0, %v451
      %v453 = vpop.f32.mrf.mxu0
      %v454 = vpop.f32.mrf.mxu0
      %v455 = vpop.f32.mrf.mxu0
      %456 = vdwg.mxu0
      %457 = vmatprep.subr.bf16.mxu0 0
      %458 = vmatpush1.bf16.xpose.msra.mxu0 0
      %459 = vmatprep.subr.bf16.mxu0 0
      %460 = vmatpush1.bf16.xpose.msra.mxu0 0
      %461 = vmatprep.subr.bf16.mxu0 0
      %462 = vmatpush1.bf16.xpose.msra.mxu0 0
      %463 = vmatprep.subr.bf16.mxu0 0
      %464 = vmatpush1.bf16.xpose.msra.mxu0 0
      %465 = vmatprep.subr.bf16.mxu0 %v400
      %466 = vmatpush1.bf16.xpose.msra.mxu0 %v399
      %467 = vmatprep.subr.bf16.mxu0 %v396
      %468 = vmatpush1.bf16.xpose.msra.mxu0 %v395
      %469 = vmatprep.subr.bf16.mxu0 %v392
      %470 = vmatpush1.bf16.xpose.msra.mxu0 %v391
      %471 = vmatprep.subr.bf16.mxu0 %v388
      %472 = vmatpush1.bf16.xpose.msra.mxu0 %v387
      %473 = vmatprep.subr.bf16.mxu0 0
      %474 = vmatpush2.bf16.xpose.msra.mxu0 0
      %475 = vmatprep.subr.bf16.mxu0 0
      %476 = vmatpush2.bf16.xpose.msra.mxu0 0
      %477 = vmatprep.subr.bf16.mxu0 0
      %478 = vmatpush2.bf16.xpose.msra.mxu0 0
      %479 = vmatprep.subr.bf16.mxu0 0
      %480 = vmatpush2.bf16.xpose.msra.mxu0 0
      %481 = vmatprep.subr.bf16.mxu0 0
      %482 = vmatpush2.bf16.xpose.msra.mxu0 0
      %483 = vmatprep.subr.bf16.mxu0 0
      %484 = vmatpush2.bf16.xpose.msra.mxu0 0
      %485 = vmatprep.subr.bf16.mxu0 0
      %486 = vmatpush2.bf16.xpose.msra.mxu0 0
      %487 = vmatprep.subr.bf16.mxu0 0
      %488 = vmatpush2.bf16.xpose.msra.mxu0 0
      %489 = vmatprep.mubr.bf16.mxu0 %v332
      %490 = vmatmul.mubr.bf16.gmra.mxu0 %v330
      %v491 = vpop.f32.mrf.mxu0
      %v492 = vadd.f32 %v452, %v491
      %v493 = vpop.f32.mrf.mxu0
      %v494 = vpop.f32.mrf.mxu0
      %v495 = vpop.f32.mrf.mxu0
      %496 = vdwg.mxu0
      %v498 = vlaneseq
      %v499 = vshrl.u32 %v498, 7
      %v500 = vsub.s32 0, %v499
      %v501 = vrot.slane %v313, %v500
      %v503 = vmul.f32 %v492, %v501
      %v505 = vrot.slane %v503, 2
      %v507 = vmul.f32 %v503, %v505
      %v509 = vrot.slane %v507, 1
      %v511 = vadd.f32 %v507, %v509
      %v512 = vmax.f32 %v511, 0.0
      %v513 = vrsqrt.pop %v512
      %v514 = vmul.f32 %v512, %v513
      %vm515 = vcmp.eq.f32.partialorder %v512, inf
      %v516 = vsel %vm515, %v512, %v514
      %vm517 = vcmp.eq.f32.partialorder %v512, 0.0
      %v518 = vand.u32 %v512, 2147483648
      %v519 = vsel %vm517, %v518, %v516
      %v520 = vadd.f32 %v519, 1e-05
      %v521 = vrcp.pop %v520
      %v522 = vlaneseq
      %v523 = vshrl.u32 %v522, 7
      %v524 = vsub.s32 0, %v523
      %v525 = vrot.slane %v521, %v524
      %v526 = vmul.f32 %v503, %v525
      %v527 = vpack.c.bf16 %v526, %v526
      %vm528 = vcmask 516096
      %529 = vst.msk [vmem:[%s295] sm:$0x1] %vm528, %v527
      %p530 = scmp.lt.s32.totalorder %s19, 2
      %s531 = scalar_select %p530, %s19, 2
      %p532 = scmp.lt.s32.totalorder %s20, 1
      %s533 = scalar_select %p532, %s20, 1
      %p534 = scmp.lt.s32.totalorder %s21, 0
      %s535 = scalar_select %p534, %s21, 0
      %s536 = sadd.s32 %s535, %s533
      %s537 = smul.addr %s531, 2
      %s538 = sadd.s32 %s536, %s537
      %s539 = scalar_lea.vmem %s3, %s538
      // Predicated region
      $region33: #{patnet_forward.7} parent=31 // pred_check
        %p540 = pneg %p141
      $region34: #{patnet_forward.7} parent=31 // pred_check_branch
        %542 = sbr.rel (%p540) target = $region36
      $region35: #{patnet_forward.7} parent=31 // pred_region
        _
      $region36: #{patnet_forward.7} parent=31 // pred_fallthru
        _
    $region32: #{patnet_forward.7} parent=5 // pred_fallthru
      _
    %p543 = scmp.le.s32.totalorder 2, %s9
    // Predicated region
    $region37: #{patnet_forward.7} parent=5 // pred_check
      %p544 = pneg %p543
    $region38: #{patnet_forward.7} parent=5 // pred_check_branch
      %546 = sbr.rel (%p544) target = $region40
    $region39: #{patnet_forward.7} parent=5 // pred_region
      %s547 = ssub.s32 %s9, 2
      // Predicated region
      $region41: #{patnet_forward.7} parent=39 // pred_check
        %p548 = pneg %p147
      $region42: #{patnet_forward.7} parent=39 // pred_check_branch
        %550 = sbr.rel (%p548) target = $region44
      $region43: #{patnet_forward.7} parent=39 // pred_region
        %p551 = scmp.lt.s32.totalorder %s22, 2
        %s552 = scalar_select %p551, %s22, 2
        %p553 = scmp.lt.s32.totalorder %s23, 1
        %s554 = scalar_select %p553, %s23, 1
        %p555 = scmp.lt.s32.totalorder %s24, 0
        %s556 = scalar_select %p555, %s24, 0
        %s557 = sadd.s32 %s556, %s554
        %s558 = smul.addr %s552, 2
        %s559 = sadd.s32 %s557, %s558
        %s560 = scalar_lea.vmem %s3, %s559
      $region44: #{patnet_forward.7} parent=39 // pred_fallthru
        _
    $region40: #{patnet_forward.7} parent=5 // pred_fallthru
      _
  $region6: #{patnet_forward.7} parent=0 // loop_footer
    %s13 = sadd.s32 1, %s9
  $region7: #{patnet_forward.7} parent=0 // loop_footer_branch
    %8 = sbr.rel target = $region3
  $region8: #{patnet_forward.7} parent=0 // loop_exit
    _

// kernel: patnet_forward.8
$region0: #{patnet_forward.8}
  #allocation0 [shape = 'u32[]', space=smem, size = 0x4, offset = 0x4, fixed_abs, tag = 'smem constant byte address 0x4 - core index']
  #allocation1 [shape = 'u32[144,128]{1,0:T(1,128)}', space=vmem, size = 0x12000, scoped, tag = 'internal scratch']
  %s0 = inlined_call_operand.vmem [shape: bf16[3,2,64,512], index: 0, kind: input, shape index: {}]
  %s1 = inlined_call_operand.vmem [shape: bf16[3,2,4,512], index: 1, kind: input, shape index: {}]
  %s2 = inlined_call_operand.vmem [shape: bf16[3,2,2,64], index: 2, kind: input, shape index: {}]
  %s3 = inlined_call_operand.vmem [shape: bf16[3,2,64,64], index: 3, kind: output, shape index: {}]
  %s4 = sld [smem:[#allocation0]]
  $region45: #{patnet_forward.8} parent=0
    _
  %s6 = ssub.s32 1, %s4
  %s7 = scalar_select 0, %s6, %s4
  loop: start=0, step=1, limit=8
  $region2: #{patnet_forward.8} parent=0 // loop_pre_header
    _
  $region3: #{patnet_forward.8} parent=0 // loop_header
    %s9 = sphi 0, %s13
    %p10 = scmp.ge.s32.totalorder %s9, 8
    %s16 = sphi 0, %s35
    %s17 = sphi 0, %s31
    %s18 = sphi 0, %s27
    %s19 = sphi 0, %s16
    %s20 = sphi 0, %s17
    %s21 = sphi 0, %s18
    %s22 = sphi 0, %s19
    %s23 = sphi 0, %s20
    %s24 = sphi 0, %s21
    %s42 = sphi 0, %s44
    %s45 = sphi 0, %s42
    %s46 = sphi 0, %s45
    %s62 = sphi 0, %s46
    %s70 = sphi 0, %s72
    %s73 = sphi 0, %s70
    %s74 = sphi 0, %s73
    %s90 = sphi 0, %s74
    %s98 = sphi 0, %s100
    %s101 = sphi 0, %s98
    %s102 = sphi 0, %s101
    %s118 = sphi 0, %s102
    %s128 = sphi 0, %s130
    %s131 = sphi 0, %s128
    %s132 = sphi 0, %s131
    %s148 = sphi 0, %s132
  $region4: #{patnet_forward.8} parent=0 // loop_header_branch
    %12 = sbr.rel (%p10) target = $region8
  $region5: #{patnet_forward.8} parent=0 // loop_body
    %s14 = ssub.s32 %s9, 1
    %s15 = ssub.s32 %s9, 2
    %s25 = sadd.s32 1, %s18
    %p26 = scmp.ge.s32.totalorder %s25, 1
    %s27 = scalar_select %p26, 0, %s25
    %s28 = sadd.s32 1, %s17
    %s29 = scalar_select %p26, %s28, %s17
    %p30 = scmp.ge.s32.totalorder %s29, 2
    %s31 = scalar_select %p30, 0, %s29
    %s32 = sadd.s32 1, %s16
    %s33 = scalar_select %p30, %s32, %s16
    %p34 = scmp.ge.s32.totalorder %s33, 3
    %s35 = scalar_select %p34, 0, %s33
    %s36 = ssub.s32 %s16, %s35
    %s37 = ssub.s32 %s17, %s31
    %s38 = sor.u32 %s36, %s37
    %s39 = ssub.s32 %s18, %s27
    %s40 = sor.u32 %s38, %s39
    %p41 = scmp.eq.s32.totalorder %s40, 0
    %s43 = sadd.s32 %s42, 1
    %s44 = scalar_select %p41, %s42, %s43
    %p47 = pneg %p41
    %p48 = scmp.eq.s32.totalorder %s9, 5
    %p49 = por %p47, %p48
    %p50 = scmp.ne.s32.totalorder %s42, %s45
    %p51 = scmp.eq.s32.totalorder %s9, 0
    %p52 = por %p50, %p51
    %p53 = scmp.ne.s32.totalorder %s42, %s45
    %p54 = scmp.eq.s32.totalorder %s14, 5
    %p55 = por %p53, %p54
    %p56 = scmp.ne.s32.totalorder %s45, %s46
    %p57 = scmp.eq.s32.totalorder %s14, 0
    %p58 = por %p56, %p57
    %p59 = scmp.ne.s32.totalorder %s45, %s46
    %p60 = scmp.eq.s32.totalorder %s15, 5
    %p61 = por %p59, %p60
    %p63 = scmp.ne.s32.totalorder %s46, %s62
    %p64 = scmp.eq.s32.totalorder %s15, 0
    %p65 = por %p63, %p64
    %s66 = ssub.s32 %s16, %s35
    %s67 = ssub.s32 %s17, %s31
    %s68 = sor.u32 %s66, %s67
    %p69 = scmp.eq.s32.totalorder %s68, 0
    %s71 = sadd.s32 %s70, 1
    %s72 = scalar_select %p69, %s70, %s71
    %p75 = pneg %p69
    %p76 = scmp.eq.s32.totalorder %s9, 5
    %p77 = por %p75, %p76
    %p78 = scmp.ne.s32.totalorder %s70, %s73
    %p79 = scmp.eq.s32.totalorder %s9, 0
    %p80 = por %p78, %p79
    %p81 = scmp.ne.s32.totalorder %s70, %s73
    %p82 = scmp.eq.s32.totalorder %s14, 5
    %p83 = por %p81, %p82
    %p84 = scmp.ne.s32.totalorder %s73, %s74
    %p85 = scmp.eq.s32.totalorder %s14, 0
    %p86 = por %p84, %p85
    %p87 = scmp.ne.s32.totalorder %s73, %s74
    %p88 = scmp.eq.s32.totalorder %s15, 5
    %p89 = por %p87, %p88
    %p91 = scmp.ne.s32.totalorder %s74, %s90
    %p92 = scmp.eq.s32.totalorder %s15, 0
    %p93 = por %p91, %p92
    %s94 = ssub.s32 %s16, %s35
    %s95 = ssub.s32 %s17, %s31
    %s96 = sor.u32 %s94, %s95
    %p97 = scmp.eq.s32.totalorder %s96, 0
    %s99 = sadd.s32 %s98, 1
    %s100 = scalar_select %p97, %s98, %s99
    %p103 = pneg %p97
    %p104 = scmp.eq.s32.totalorder %s9, 5
    %p105 = por %p103, %p104
    %p106 = scmp.ne.s32.totalorder %s98, %s101
    %p107 = scmp.eq.s32.totalorder %s9, 0
    %p108 = por %p106, %p107
    %p109 = scmp.ne.s32.totalorder %s98, %s101
    %p110 = scmp.eq.s32.totalorder %s14, 5
    %p111 = por %p109, %p110
    %p112 = scmp.ne.s32.totalorder %s101, %s102
    %p113 = scmp.eq.s32.totalorder %s14, 0
    %p114 = por %p112, %p113
    %p115 = scmp.ne.s32.totalorder %s101, %s102
    %p116 = scmp.eq.s32.totalorder %s15, 5
    %p117 = por %p115, %p116
    %p119 = scmp.ne.s32.totalorder %s102, %s118
    %p120 = scmp.eq.s32.totalorder %s15, 0
    %p121 = por %p119, %p120
    %s122 = ssub.s32 %s16, %s35
    %s123 = ssub.s32 %s17, %s31
    %s124 = sor.u32 %s122, %s123
    %s125 = ssub.s32 %s18, %s27
    %s126 = sor.u32 %s124, %s125
    %p127 = scmp.eq.s32.totalorder %s126, 0
    %s129 = sadd.s32 %s128, 1
    %s130 = scalar_select %p127, %s128, %s129
    %p133 = pneg %p127
    %p134 = scmp.eq.s32.totalorder %s9, 5
    %p135 = por %p133, %p134
    %p136 = scmp.ne.s32.totalorder %s128, %s131
    %p137 = scmp.eq.s32.totalorder %s9, 0
    %p138 = por %p136, %p137
    %p139 = scmp.ne.s32.totalorder %s128, %s131
    %p140 = scmp.eq.s32.totalorder %s14, 5
    %p141 = por %p139, %p140
    %p142 = scmp.ne.s32.totalorder %s131, %s132
    %p143 = scmp.eq.s32.totalorder %s14, 0
    %p144 = por %p142, %p143
    %p145 = scmp.ne.s32.totalorder %s131, %s132
    %p146 = scmp.eq.s32.totalorder %s15, 5
    %p147 = por %p145, %p146
    %p149 = scmp.ne.s32.totalorder %s132, %s148
    %p150 = scmp.eq.s32.totalorder %s15, 0
    %p151 = por %p149, %p150
    %p152 = scmp.le.s32.totalorder 1, %s9
    %p153 = scmp.lt.s32.totalorder %s9, 7
    %p154 = pnand %p152, %p153
    %p155 = pneg %p154
    // Predicated region
    $region9: #{patnet_forward.8} parent=5 // pred_check
      _
    $region10: #{patnet_forward.8} parent=5 // pred_check_branch
      %157 = sbr.rel (%p154) target = $region12
    $region11: #{patnet_forward.8} parent=5 // pred_region
      %s158 = ssub.s32 %s9, 1
    $region12: #{patnet_forward.8} parent=5 // pred_fallthru
      _
    %p159 = scmp.lt.s32.totalorder %s9, 6
    // Predicated region
    $region13: #{patnet_forward.8} parent=5 // pred_check
      %p160 = pneg %p159
    $region14: #{patnet_forward.8} parent=5 // pred_check_branch
      %162 = sbr.rel (%p160) target = $region16
    $region15: #{patnet_forward.8} parent=5 // pred_region
      // Predicated region
      $region17: #{patnet_forward.8} parent=15 // pred_check
        %p163 = pneg %p52
      $region18: #{patnet_forward.8} parent=15 // pred_check_branch
        %165 = sbr.rel (%p163) target = $region20
      $region19: #{patnet_forward.8} parent=15 // pred_region
        %s166 = smul.u32 8, %s18
        %p167 = scmp.lt.s32.totalorder %s16, 2
        %s168 = scalar_select %p167, %s16, 2
        %p169 = scmp.lt.s32.totalorder %s17, 1
        %s170 = scalar_select %p169, %s17, 1
        %p171 = scmp.lt.s32.totalorder %s166, 7
        %s172 = scalar_select %p171, %s166, 7
        %s173 = smul.addr %s172, 4
        %s174 = smul.addr %s170, 32
        %s175 = sadd.s32 %s173, %s174
        %s176 = smul.addr %s168, 64
        %s177 = sadd.s32 %s175, %s176
        %s178 = smul.addr %s177, 4
        %s179 = scalar_lea.vmem %s0, %s178
        %s180 = smul.u32 8, %s18
      $region20: #{patnet_forward.8} parent=15 // pred_fallthru
        _
      // Predicated region
      $region21: #{patnet_forward.8} parent=15 // pred_check
        %p181 = pneg %p80
      $region22: #{patnet_forward.8} parent=15 // pred_check_branch
        %183 = sbr.rel (%p181) target = $region24
      $region23: #{patnet_forward.8} parent=15 // pred_region
        %p184 = scmp.lt.s32.totalorder %s16, 2
        %s185 = scalar_select %p184, %s16, 2
        %p186 = scmp.lt.s32.totalorder %s17, 1
        %s187 = scalar_select %p186, %s17, 1
        %s188 = smul.addr %s187, 4
        %s189 = smul.addr %s185, 8
        %s190 = sadd.s32 %s188, %s189
        %s191 = smul.addr %s190, 2
        %s192 = scalar_lea.vmem %s1, %s191
      $region24: #{patnet_forward.8} parent=15 // pred_fallthru
        _
      // Predicated region
      $region25: #{patnet_forward.8} parent=15 // pred_check
        %p193 = pneg %p108
      $region26: #{patnet_forward.8} parent=15 // pred_check_branch
        %195 = sbr.rel (%p193) target = $region28
      $region27: #{patnet_forward.8} parent=15 // pred_region
        %p196 = scmp.lt.s32.totalorder %s16, 2
        %s197 = scalar_select %p196, %s16, 2
        %p198 = scmp.lt.s32.totalorder %s17, 1
        %s199 = scalar_select %p198, %s17, 1
        %s200 = smul.addr %s197, 2
        %s201 = sadd.s32 %s199, %s200
        %s202 = scalar_lea.vmem %s2, %s201
      $region28: #{patnet_forward.8} parent=15 // pred_fallthru
        _
    $region16: #{patnet_forward.8} parent=5 // pred_fallthru
      _
    %p203 = scmp.le.s32.totalorder 1, %s9
    %p204 = scmp.lt.s32.totalorder %s9, 7
    %p205 = pnand %p203, %p204
    %p206 = pneg %p205
    // Predicated region
    $region29: #{patnet_forward.8} parent=5 // pred_check
      _
    $region30: #{patnet_forward.8} parent=5 // pred_check_branch
      %208 = sbr.rel (%p205) target = $region32
    $region31: #{patnet_forward.8} parent=5 // pred_region
      %s209 = ssub.s32 %s9, 1
      %s210 = smul.u32 8, %s21
      %p211 = scmp.lt.s32.totalorder %s19, 2
      %s212 = scalar_select %p211, %s19, 2
      %p213 = scmp.lt.s32.totalorder %s20, 1
      %s214 = scalar_select %p213, %s20, 1
      %p215 = scmp.lt.s32.totalorder %s210, 7
      %s216 = scalar_select %p215, %s210, 7
      %s217 = smul.addr %s216, 4
      %s218 = smul.addr %s214, 32
      %s219 = sadd.s32 %s217, %s218
      %s220 = smul.addr %s212, 64
      %s221 = sadd.s32 %s219, %s220
      %s222 = smul.addr %s221, 4
      %s223 = scalar_lea.vmem %s0, %s222
      %p224 = pneg %p58
      %p225 = pneg %p55
      %p226 = scmp.lt.s32.totalorder %s19, 2
      %s227 = scalar_select %p226, %s19, 2
      %p228 = scmp.lt.s32.totalorder %s20, 1
      %s229 = scalar_select %p228, %s20, 1
      %s230 = smul.addr %s229, 4
      %s231 = smul.addr %s227, 8
      %s232 = sadd.s32 %s230, %s231
      %s233 = smul.addr %s232, 2
      %s234 = scalar_lea.vmem %s1, %s233
      %p235 = pneg %p86
      %p236 = pneg %p83
      %p237 = scmp.lt.s32.totalorder %s19, 2
      %s238 = scalar_select %p237, %s19, 2
      %p239 = scmp.lt.s32.totalorder %s20, 1
      %s240 = scalar_select %p239, %s20, 1
      %s241 = smul.addr %s238, 2
      %s242 = sadd.s32 %s240, %s241
      %s243 = scalar_lea.vmem %s2, %s242
      %p244 = pneg %p114
      %p245 = pneg %p111
      %p246 = pneg %p144
      %p247 = pneg %p141
      %s248 = smul.u32 8, %s21
      %p249 = scmp.lt.s32.totalorder %s19, 2
      %s250 = scalar_select %p249, %s19, 2
      %p251 = scmp.lt.s32.totalorder %s20, 1
      %s252 = scalar_select %p251, %s20, 1
      %p253 = scmp.lt.s32.totalorder %s248, 7
      %s254 = scalar_select %p253, %s248, 7
      %s255 = smul.addr %s252, 8
      %s256 = sadd.s32 %s254, %s255
      %s257 = smul.addr %s250, 16
      %s258 = sadd.s32 %s256, %s257
      %s259 = smul.addr %s258, 4
      %s260 = scalar_lea.vmem %s3, %s259
      %s261 = smul.u32 8, %s21
      %p262 = scmp.lt.s32.totalorder %s19, 2
      %s263 = scalar_select %p262, %s19, 2
      %p264 = scmp.lt.s32.totalorder %s20, 1
      %s265 = scalar_select %p264, %s20, 1
      %p266 = scmp.lt.s32.totalorder %s261, 7
      %s267 = scalar_select %p266, %s261, 7
      %s268 = smul.addr %s267, 4
      %s269 = smul.addr %s265, 32
      %s270 = sadd.s32 %s268, %s269
      %s271 = smul.addr %s263, 64
      %s272 = sadd.s32 %s270, %s271
      %s273 = smul.addr %s272, 4
      %s274 = scalar_lea.vmem %s0, %s273
      %s275 = smul.u32 8, %s21
      %p276 = scmp.lt.s32.totalorder %s19, 2
      %s277 = scalar_select %p276, %s19, 2
      %p278 = scmp.lt.s32.totalorder %s20, 1
      %s279 = scalar_select %p278, %s20, 1
      %s280 = smul.addr %s279, 4
      %s281 = smul.addr %s277, 8
      %s282 = sadd.s32 %s280, %s281
      %s283 = smul.addr %s282, 2
      %s284 = scalar_lea.vmem %s1, %s283
      %p285 = scmp.lt.s32.totalorder %s19, 2
      %s286 = scalar_select %p285, %s19, 2
      %p287 = scmp.lt.s32.totalorder %s20, 1
      %s288 = scalar_select %p287, %s20, 1
      %s289 = smul.addr %s286, 2
      %s290 = sadd.s32 %s288, %s289
      %s291 = scalar_lea.vmem %s2, %s290
      %s292 = smul.u32 8, %s21
      %p293 = scmp.lt.s32.totalorder %s19, 2
      %s294 = scalar_select %p293, %s19, 2
      %p295 = scmp.lt.s32.totalorder %s20, 1
      %s296 = scalar_select %p295, %s20, 1
      %p297 = scmp.lt.s32.totalorder %s292, 7
      %s298 = scalar_select %p297, %s292, 7
      %s299 = smul.addr %s296, 8
      %s300 = sadd.s32 %s298, %s299
      %s301 = smul.addr %s294, 16
      %s302 = sadd.s32 %s300, %s301
      %s303 = smul.addr %s302, 4
      %s304 = scalar_lea.vmem %s3, %s303
      %s305 = smul.u32 8, %s21
      %v307 = vld [vmem:[%s274] sm:$0xff]
      %v308 = vld [vmem:[%s274 + $0x8] sm:$0xff]
      %v309 = vld [vmem:[%s274 + $0x10] sm:$0xff]
      %v310 = vld [vmem:[%s274 + $0x18] sm:$0xff]
      %v311 = vld [vmem:[%s274 + $0x20] sm:$0xff]
      %v312 = vld [vmem:[%s274 + $0x28] sm:$0xff]
      %v313 = vld [vmem:[%s274 + $0x30] sm:$0xff]
      %v314 = vld [vmem:[%s274 + $0x38] sm:$0xff]
      %v315 = vld [vmem:[%s274 + $0x40] sm:$0xff]
      %v316 = vld [vmem:[%s274 + $0x48] sm:$0xff]
      %v317 = vld [vmem:[%s274 + $0x50] sm:$0xff]
      %v318 = vld [vmem:[%s274 + $0x58] sm:$0xff]
      %v319 = vld [vmem:[%s274 + $0x60] sm:$0xff]
      %v320 = vld [vmem:[%s274 + $0x68] sm:$0xff]
      %v321 = vld [vmem:[%s274 + $0x70] sm:$0xff]
      %v322 = vld [vmem:[%s274 + $0x78] sm:$0xff]
      %v323 = vld [vmem:[%s284] sm:$0xff]
      %v324 = vld [vmem:[%s291] sm:$0x1]
      %v341 = vunpack.c.l.b16 %v307
      %v342 = vunpack.c.h.b16 %v307
      %v343 = vunpack.c.l.b16 %v308
      %v344 = vunpack.c.h.b16 %v308
      %v345 = vunpack.c.l.b16 %v309
      %v346 = vunpack.c.h.b16 %v309
      %v347 = vunpack.c.l.b16 %v310
      %v348 = vunpack.c.h.b16 %v310
      %v349 = vunpack.c.l.b16 %v311
      %v350 = vunpack.c.h.b16 %v311
      %v351 = vunpack.c.l.b16 %v312
      %v352 = vunpack.c.h.b16 %v312
      %v353 = vunpack.c.l.b16 %v313
      %v354 = vunpack.c.h.b16 %v313
      %v355 = vunpack.c.l.b16 %v314
      %v356 = vunpack.c.h.b16 %v314
      %v357 = vunpack.c.l.b16 %v315
      %v358 = vunpack.c.h.b16 %v315
      %v359 = vunpack.c.l.b16 %v316
      %v360 = vunpack.c.h.b16 %v316
      %v361 = vunpack.c.l.b16 %v317
      %v362 = vunpack.c.h.b16 %v317
      %v363 = vunpack.c.l.b16 %v318
      %v364 = vunpack.c.h.b16 %v318
      %v365 = vunpack.c.l.b16 %v319
      %v366 = vunpack.c.h.b16 %v319
      %v367 = vunpack.c.l.b16 %v320
      %v368 = vunpack.c.h.b16 %v320
      %v369 = vunpack.c.l.b16 %v321
      %v370 = vunpack.c.h.b16 %v321
      %v371 = vunpack.c.l.b16 %v322
      %v372 = vunpack.c.h.b16 %v322
      %v373 = vpack.c.b16 %v345, %v341
      %v374 = vpack.c.b16 %v346, %v342
      %v375 = vpack.c.b16 %v347, %v343
      %v376 = vpack.c.b16 %v348, %v344
      %v377 = vpack.c.b16 %v353, %v349
      %v378 = vpack.c.b16 %v354, %v350
      %v379 = vpack.c.b16 %v355, %v351
      %v380 = vpack.c.b16 %v356, %v352
      %v381 = vpack.c.b16 %v361, %v357
      %v382 = vpack.c.b16 %v362, %v358
      %v383 = vpack.c.b16 %v363, %v359
      %v384 = vpack.c.b16 %v364, %v360
      %v385 = vpack.c.b16 %v369, %v365
      %v386 = vpack.c.b16 %v370, %v366
      %v387 = vpack.c.b16 %v371, %v367
      %v388 = vpack.c.b16 %v372, %v368
      %v406 = vcombine.high %v323, %v323
      %v408 = vunpack.c.l.s4 1983009808
      %v409 = vunpack.c.0.s8 %v408
      %v410 = vlaneseq
      %v411 = vshrl.u32 %v410, 7
      %v412 = vsub.s32 %v409, %v411
      %v413 = vrot.slane %v323, %v412
      %v415 = vunpack.c.l.s4 1983009808
      %v416 = vunpack.c.0.s8 %v415
      %v417 = vlaneseq
      %v418 = vshrl.u32 %v417, 7
      %v419 = vsub.s32 %v416, %v418
      %v420 = vrot.slane %v406, %v419
      %v421 = vcombine.high %v413, %v413
      %v422 = vcombine.high %v420, %v420
      %427 = vmatprep.subr.bf16.mxu0 0
      %428 = vmatpush1.bf16.xpose.msra.mxu0 0
      %429 = vmatprep.subr.bf16.mxu0 0
      %430 = vmatpush1.bf16.xpose.msra.mxu0 0
      %431 = vmatprep.subr.bf16.mxu0 0
      %432 = vmatpush1.bf16.xpose.msra.mxu0 0
      %433 = vmatprep.subr.bf16.mxu0 0
      %434 = vmatpush1.bf16.xpose.msra.mxu0 0
      %435 = vmatprep.subr.bf16.mxu0 0
      %436 = vmatpush1.bf16.xpose.msra.mxu0 0
      %437 = vmatprep.subr.bf16.mxu0 0
      %438 = vmatpush1.bf16.xpose.msra.mxu0 0
      %439 = vmatprep.subr.bf16.mxu0 0
      %440 = vmatpush1.bf16.xpose.msra.mxu0 0
      %441 = vmatprep.subr.bf16.mxu0 %v421
      %442 = vmatpush1.bf16.xpose.msra.mxu0 %v413
      %443 = vmatprep.subr.bf16.mxu0 0
      %444 = vmatpush2.bf16.xpose.msra.mxu0 0
      %445 = vmatprep.subr.bf16.mxu0 0
      %446 = vmatpush2.bf16.xpose.msra.mxu0 0
      %447 = vmatprep.subr.bf16.mxu0 0
      %448 = vmatpush2.bf16.xpose.msra.mxu0 0
      %449 = vmatprep.subr.bf16.mxu0 0
      %450 = vmatpush2.bf16.xpose.msra.mxu0 0
      %451 = vmatprep.subr.bf16.mxu0 0
      %452 = vmatpush2.bf16.xpose.msra.mxu0 0
      %453 = vmatprep.subr.bf16.mxu0 0
      %454 = vmatpush2.bf16.xpose.msra.mxu0 0
      %455 = vmatprep.subr.bf16.mxu0 0
      %456 = vmatpush2.bf16.xpose.msra.mxu0 0
      %457 = vmatprep.subr.bf16.mxu0 0
      %458 = vmatpush2.bf16.xpose.msra.mxu0 0
      %459 = vmatprep.mubr.bf16.mxu0 %v374
      %460 = vmatmul.mubr.bf16.gmra.mxu0 %v373
      %v461 = vpop.f32.mrf.mxu0
      %v462 = vadd.f32 0.0, %v461
      %v463 = vpop.f32.mrf.mxu0
      %v464 = vpop.f32.mrf.mxu0
      %v465 = vadd.f32 0.0, %v464
      %v466 = vpop.f32.mrf.mxu0
      %467 = vmatprep.mubr.bf16.mxu0 %v378
      %468 = vmatmul.mubr.bf16.gmra.mxu0 %v377
      %v469 = vpop.f32.mrf.mxu0
      %v470 = vadd.f32 0.0, %v469
      %v471 = vpop.f32.mrf.mxu0
      %v472 = vpop.f32.mrf.mxu0
      %v473 = vadd.f32 0.0, %v472
      %v474 = vpop.f32.mrf.mxu0
      %475 = vmatprep.mubr.bf16.mxu0 %v382
      %476 = vmatmul.mubr.bf16.gmra.mxu0 %v381
      %v477 = vpop.f32.mrf.mxu0
      %v478 = vadd.f32 0.0, %v477
      %v479 = vpop.f32.mrf.mxu0
      %v480 = vpop.f32.mrf.mxu0
      %v481 = vadd.f32 0.0, %v480
      %v482 = vpop.f32.mrf.mxu0
      %483 = vmatprep.mubr.bf16.mxu0 %v386
      %484 = vmatmul.mubr.bf16.gmra.mxu0 %v385
      %v485 = vpop.f32.mrf.mxu0
      %v486 = vadd.f32 0.0, %v485
      %v487 = vpop.f32.mrf.mxu0
      %v488 = vpop.f32.mrf.mxu0
      %v489 = vadd.f32 0.0, %v488
      %v490 = vpop.f32.mrf.mxu0
      %491 = vdwg.mxu0
      %492 = vmatprep.subr.bf16.mxu0 0
      %493 = vmatpush1.bf16.xpose.msra.mxu0 0
      %494 = vmatprep.subr.bf16.mxu0 0
      %495 = vmatpush1.bf16.xpose.msra.mxu0 0
      %496 = vmatprep.subr.bf16.mxu0 0
      %497 = vmatpush1.bf16.xpose.msra.mxu0 0
      %498 = vmatprep.subr.bf16.mxu0 0
      %499 = vmatpush1.bf16.xpose.msra.mxu0 0
      %500 = vmatprep.subr.bf16.mxu0 0
      %501 = vmatpush1.bf16.xpose.msra.mxu0 0
      %502 = vmatprep.subr.bf16.mxu0 0
      %503 = vmatpush1.bf16.xpose.msra.mxu0 0
      %504 = vmatprep.subr.bf16.mxu0 0
      %505 = vmatpush1.bf16.xpose.msra.mxu0 0
      %506 = vmatprep.subr.bf16.mxu0 %v422
      %507 = vmatpush1.bf16.xpose.msra.mxu0 %v420
      %508 = vmatprep.subr.bf16.mxu0 0
      %509 = vmatpush2.bf16.xpose.msra.mxu0 0
      %510 = vmatprep.subr.bf16.mxu0 0
      %511 = vmatpush2.bf16.xpose.msra.mxu0 0
      %512 = vmatprep.subr.bf16.mxu0 0
      %513 = vmatpush2.bf16.xpose.msra.mxu0 0
      %514 = vmatprep.subr.bf16.mxu0 0
      %515 = vmatpush2.bf16.xpose.msra.mxu0 0
      %516 = vmatprep.subr.bf16.mxu0 0
      %517 = vmatpush2.bf16.xpose.msra.mxu0 0
      %518 = vmatprep.subr.bf16.mxu0 0
      %519 = vmatpush2.bf16.xpose.msra.mxu0 0
      %520 = vmatprep.subr.bf16.mxu0 0
      %521 = vmatpush2.bf16.xpose.msra.mxu0 0
      %522 = vmatprep.subr.bf16.mxu0 0
      %523 = vmatpush2.bf16.xpose.msra.mxu0 0
      %524 = vmatprep.mubr.bf16.mxu0 %v376
      %525 = vmatmul.mubr.bf16.gmra.mxu0 %v375
      %v526 = vpop.f32.mrf.mxu0
      %v527 = vadd.f32 %v462, %v526
      %v528 = vpop.f32.mrf.mxu0
      %v529 = vpop.f32.mrf.mxu0
      %v530 = vadd.f32 %v465, %v529
      %v531 = vpop.f32.mrf.mxu0
      %532 = vmatprep.mubr.bf16.mxu0 %v380
      %533 = vmatmul.mubr.bf16.gmra.mxu0 %v379
      %v534 = vpop.f32.mrf.mxu0
      %v535 = vadd.f32 %v470, %v534
      %v536 = vpop.f32.mrf.mxu0
      %v537 = vpop.f32.mrf.mxu0
      %v538 = vadd.f32 %v473, %v537
      %v539 = vpop.f32.mrf.mxu0
      %540 = vmatprep.mubr.bf16.mxu0 %v384
      %541 = vmatmul.mubr.bf16.gmra.mxu0 %v383
      %v542 = vpop.f32.mrf.mxu0
      %v543 = vadd.f32 %v478, %v542
      %v544 = vpop.f32.mrf.mxu0
      %v545 = vpop.f32.mrf.mxu0
      %v546 = vadd.f32 %v481, %v545
      %v547 = vpop.f32.mrf.mxu0
      %548 = vmatprep.mubr.bf16.mxu0 %v388
      %549 = vmatmul.mubr.bf16.gmra.mxu0 %v387
      %v550 = vpop.f32.mrf.mxu0
      %v551 = vadd.f32 %v486, %v550
      %v552 = vpop.f32.mrf.mxu0
      %v553 = vpop.f32.mrf.mxu0
      %v554 = vadd.f32 %v489, %v553
      %v555 = vpop.f32.mrf.mxu0
      %556 = vdwg.mxu0
      %565 = vrot.lane.b32.xlu0 %v527, 126
      %v566 = vpop.permute.xlu0 %565
      %567 = vrot.lane.b32.xlu0 %v530, 126
      %v568 = vpop.permute.xlu0 %567
      %569 = vrot.lane.b32.xlu0 %v535, 126
      %v570 = vpop.permute.xlu0 %569
      %571 = vrot.lane.b32.xlu0 %v538, 126
      %v572 = vpop.permute.xlu0 %571
      %573 = vrot.lane.b32.xlu0 %v543, 126
      %v574 = vpop.permute.xlu0 %573
      %575 = vrot.lane.b32.xlu0 %v546, 126
      %v576 = vpop.permute.xlu0 %575
      %577 = vrot.lane.b32.xlu0 %v551, 126
      %v578 = vpop.permute.xlu0 %577
      %579 = vrot.lane.b32.xlu0 %v554, 126
      %v580 = vpop.permute.xlu0 %579
      %v589 = vmul.f32 %v527, %v566
      %v590 = vmul.f32 %v530, %v568
      %v591 = vmul.f32 %v535, %v570
      %v592 = vmul.f32 %v538, %v572
      %v593 = vmul.f32 %v543, %v574
      %v594 = vmul.f32 %v546, %v576
      %v595 = vmul.f32 %v551, %v578
      %v596 = vmul.f32 %v554, %v580
      %605 = vrot.lane.b32.xlu0 %v589, 127
      %v606 = vpop.permute.xlu0 %605
      %607 = vrot.lane.b32.xlu0 %v590, 127
      %v608 = vpop.permute.xlu0 %607
      %609 = vrot.lane.b32.xlu0 %v591, 127
      %v610 = vpop.permute.xlu0 %609
      %611 = vrot.lane.b32.xlu0 %v592, 127
      %v612 = vpop.permute.xlu0 %611
      %613 = vrot.lane.b32.xlu0 %v593, 127
      %v614 = vpop.permute.xlu0 %613
      %615 = vrot.lane.b32.xlu0 %v594, 127
      %v616 = vpop.permute.xlu0 %615
      %617 = vrot.lane.b32.xlu0 %v595, 127
      %v618 = vpop.permute.xlu0 %617
      %619 = vrot.lane.b32.xlu0 %v596, 127
      %v620 = vpop.permute.xlu0 %619
      %v629 = vadd.f32 %v589, %v606
      %v630 = vadd.f32 %v590, %v608
      %v631 = vadd.f32 %v591, %v610
      %v632 = vadd.f32 %v592, %v612
      %v633 = vadd.f32 %v593, %v614
      %v634 = vadd.f32 %v594, %v616
      %v635 = vadd.f32 %v595, %v618
      %v636 = vadd.f32 %v596, %v620
      %v637 = vmax.f32 %v629, 0.0
      %v638 = vmax.f32 %v630, 0.0
      %v639 = vmax.f32 %v631, 0.0
      %v640 = vmax.f32 %v632, 0.0
      %v641 = vmax.f32 %v633, 0.0
      %v642 = vmax.f32 %v634, 0.0
      %v643 = vmax.f32 %v635, 0.0
      %v644 = vmax.f32 %v636, 0.0
      %v645 = vrsqrt.pop %v637
      %v646 = vmul.f32 %v637, %v645
      %vm647 = vcmp.eq.f32.partialorder %v637, inf
      %v648 = vsel %vm647, %v637, %v646
      %vm649 = vcmp.eq.f32.partialorder %v637, 0.0
      %v650 = vand.u32 %v637, 2147483648
      %v651 = vsel %vm649, %v650, %v648
      %v652 = vrsqrt.pop %v638
      %v653 = vmul.f32 %v638, %v652
      %vm654 = vcmp.eq.f32.partialorder %v638, inf
      %v655 = vsel %vm654, %v638, %v653
      %vm656 = vcmp.eq.f32.partialorder %v638, 0.0
      %v657 = vand.u32 %v638, 2147483648
      %v658 = vsel %vm656, %v657, %v655
      %v659 = vrsqrt.pop %v639
      %v660 = vmul.f32 %v639, %v659
      %vm661 = vcmp.eq.f32.partialorder %v639, inf
      %v662 = vsel %vm661, %v639, %v660
      %vm663 = vcmp.eq.f32.partialorder %v639, 0.0
      %v664 = vand.u32 %v639, 2147483648
      %v665 = vsel %vm663, %v664, %v662
      %v666 = vrsqrt.pop %v640
      %v667 = vmul.f32 %v640, %v666
      %vm668 = vcmp.eq.f32.partialorder %v640, inf
      %v669 = vsel %vm668, %v640, %v667
      %vm670 = vcmp.eq.f32.partialorder %v640, 0.0
      %v671 = vand.u32 %v640, 2147483648
      %v672 = vsel %vm670, %v671, %v669
      %v673 = vrsqrt.pop %v641
      %v674 = vmul.f32 %v641, %v673
      %vm675 = vcmp.eq.f32.partialorder %v641, inf
      %v676 = vsel %vm675, %v641, %v674
      %vm677 = vcmp.eq.f32.partialorder %v641, 0.0
      %v678 = vand.u32 %v641, 2147483648
      %v679 = vsel %vm677, %v678, %v676
      %v680 = vrsqrt.pop %v642
      %v681 = vmul.f32 %v642, %v680
      %vm682 = vcmp.eq.f32.partialorder %v642, inf
      %v683 = vsel %vm682, %v642, %v681
      %vm684 = vcmp.eq.f32.partialorder %v642, 0.0
      %v685 = vand.u32 %v642, 2147483648
      %v686 = vsel %vm684, %v685, %v683
      %v687 = vrsqrt.pop %v643
      %v688 = vmul.f32 %v643, %v687
      %vm689 = vcmp.eq.f32.partialorder %v643, inf
      %v690 = vsel %vm689, %v643, %v688
      %vm691 = vcmp.eq.f32.partialorder %v643, 0.0
      %v692 = vand.u32 %v643, 2147483648
      %v693 = vsel %vm691, %v692, %v690
      %v694 = vrsqrt.pop %v644
      %v695 = vmul.f32 %v644, %v694
      %vm696 = vcmp.eq.f32.partialorder %v644, inf
      %v697 = vsel %vm696, %v644, %v695
      %vm698 = vcmp.eq.f32.partialorder %v644, 0.0
      %v699 = vand.u32 %v644, 2147483648
      %v700 = vsel %vm698, %v699, %v697
      %v701 = vadd.f32 %v651, 1e-05
      %v702 = vadd.f32 %v658, 1e-05
      %v703 = vadd.f32 %v665, 1e-05
      %v704 = vadd.f32 %v672, 1e-05
      %v705 = vadd.f32 %v679, 1e-05
      %v706 = vadd.f32 %v686, 1e-05
      %v707 = vadd.f32 %v693, 1e-05
      %v708 = vadd.f32 %v700, 1e-05
      %v709 = vrcp.pop %v701
      %v710 = vrcp.pop %v702
      %v711 = vrcp.pop %v703
      %v712 = vrcp.pop %v704
      %v713 = vrcp.pop %v705
      %v714 = vrcp.pop %v706
      %v715 = vrcp.pop %v707
      %v716 = vrcp.pop %v708
      %718 = vset.pattern.permute.xlu0 0
      %719 = vperm.xlu0 %718, %v709
      %v720 = vpop.permute.xlu0 %719
      %723 = vset.pattern.permute.xlu0 0
      %724 = vperm.xlu0 %723, %v710
      %v725 = vpop.permute.xlu0 %724
      %728 = vset.pattern.permute.xlu0 0
      %729 = vperm.xlu0 %728, %v711
      %v730 = vpop.permute.xlu0 %729
      %733 = vset.pattern.permute.xlu0 0
      %734 = vperm.xlu0 %733, %v712
      %v735 = vpop.permute.xlu0 %734
      %738 = vset.pattern.permute.xlu0 0
      %739 = vperm.xlu0 %738, %v713
      %v740 = vpop.permute.xlu0 %739
      %743 = vset.pattern.permute.xlu0 0
      %744 = vperm.xlu0 %743, %v714
      %v745 = vpop.permute.xlu0 %744
      %748 = vset.pattern.permute.xlu0 0
      %749 = vperm.xlu0 %748, %v715
      %v750 = vpop.permute.xlu0 %749
      %753 = vset.pattern.permute.xlu0 0
      %754 = vperm.xlu0 %753, %v716
      %v755 = vpop.permute.xlu0 %754
      %v757 = vmul.f32 %v527, %v720
      %v758 = vmul.f32 %v530, %v725
      %v759 = vmul.f32 %v535, %v730
      %v760 = vmul.f32 %v538, %v735
      %v761 = vmul.f32 %v543, %v740
      %v762 = vmul.f32 %v546, %v745
      %v763 = vmul.f32 %v551, %v750
      %v764 = vmul.f32 %v554, %v755
      %v765 = vpack.c.bf16 %v758, %v757
      %v766 = vpack.c.bf16 %v760, %v759
      %v767 = vpack.c.bf16 %v762, %v761
      %v768 = vpack.c.bf16 %v764, %v763
      %773 = vrot.lane.b32.xlu0 %v765, 126
      %v774 = vpop.permute.xlu0 %773
      %775 = vrot.lane.b32.xlu0 %v766, 126
      %v776 = vpop.permute.xlu0 %775
      %777 = vrot.lane.b32.xlu0 %v767, 126
      %v778 = vpop.permute.xlu0 %777
      %779 = vrot.lane.b32.xlu0 %v768, 126
      %v780 = vpop.permute.xlu0 %779
      %vm781 = vcmask 15360
      %v783 = vsel %vm781, %v774, 0
      %v786 = vsel %vm781, %v776, 0
      %v789 = vsel %vm781, %v778, 0
      %v792 = vsel %vm781, %v780, 0
      %vm794 = vcmask 1040384
      %v796 = vsel %vm794, %v324, 0
      %798 = vmatprep.subr.bf16.mxu0 0
      %799 = vmatpush1.bf16.msra.mxu0 0
      %800 = vmatprep.subr.bf16.mxu0 0
      %801 = vmatpush1.bf16.msra.mxu0 0
      %802 = vmatprep.subr.bf16.mxu0 0
      %803 = vmatpush1.bf16.msra.mxu0 0
      %804 = vmatprep.subr.bf16.mxu0 0
      %805 = vmatpush1.bf16.msra.mxu0 0
      %806 = vmatprep.subr.bf16.mxu0 0
      %807 = vmatpush1.bf16.msra.mxu0 0
      %808 = vmatprep.subr.bf16.mxu0 0
      %809 = vmatpush1.bf16.msra.mxu0 0
      %810 = vmatprep.subr.bf16.mxu0 0
      %811 = vmatpush1.bf16.msra.mxu0 0
      %812 = vmatprep.subr.bf16.mxu0 0
      %813 = vmatpush1.bf16.msra.mxu0 %v796
      %814 = vmatprep.subr.bf16.mxu0 0
      %815 = vmatpush2.bf16.msra.mxu0 0
      %816 = vmatprep.subr.bf16.mxu0 0
      %817 = vmatpush2.bf16.msra.mxu0 0
      %818 = vmatprep.subr.bf16.mxu0 0
      %819 = vmatpush2.bf16.msra.mxu0 0
      %820 = vmatprep.subr.bf16.mxu0 0
      %821 = vmatpush2.bf16.msra.mxu0 0
      %822 = vmatprep.subr.bf16.mxu0 0
      %823 = vmatpush2.bf16.msra.mxu0 0
      %824 = vmatprep.subr.bf16.mxu0 0
      %825 = vmatpush2.bf16.msra.mxu0 0
      %826 = vmatprep.subr.bf16.mxu0 0
      %827 = vmatpush2.bf16.msra.mxu0 0
      %828 = vmatprep.subr.bf16.mxu0 0
      %829 = vmatpush2.bf16.msra.mxu0 0
      %830 = vmatprep.mubr.bf16.mxu0 0
      %831 = vmatmul.mubr.bf16.gmra.mxu0 %v783
      %v832 = vpop.f32.mrf.mxu0
      %v833 = vadd.f32 0.0, %v832
      %v834 = vpop.f32.mrf.mxu0
      %v835 = vpop.f32.mrf.mxu0
      %v836 = vadd.f32 0.0, %v835
      %v837 = vpop.f32.mrf.mxu0
      %838 = vmatprep.mubr.bf16.mxu0 0
      %839 = vmatmul.mubr.bf16.gmra.mxu0 %v786
      %v840 = vpop.f32.mrf.mxu0
      %v841 = vadd.f32 0.0, %v840
      %v842 = vpop.f32.mrf.mxu0
      %v843 = vpop.f32.mrf.mxu0
      %v844 = vadd.f32 0.0, %v843
      %v845 = vpop.f32.mrf.mxu0
      %846 = vmatprep.mubr.bf16.mxu0 0
      %847 = vmatmul.mubr.bf16.gmra.mxu0 %v789
      %v848 = vpop.f32.mrf.mxu0
      %v849 = vadd.f32 0.0, %v848
      %v850 = vpop.f32.mrf.mxu0
      %v851 = vpop.f32.mrf.mxu0
      %v852 = vadd.f32 0.0, %v851
      %v853 = vpop.f32.mrf.mxu0
      %854 = vmatprep.mubr.bf16.mxu0 0
      %855 = vmatmul.mubr.bf16.gmra.mxu0 %v792
      %v856 = vpop.f32.mrf.mxu0
      %v857 = vadd.f32 0.0, %v856
      %v858 = vpop.f32.mrf.mxu0
      %v859 = vpop.f32.mrf.mxu0
      %v860 = vadd.f32 0.0, %v859
      %v861 = vpop.f32.mrf.mxu0
      %862 = vdwg.mxu0
      %v863 = vmax.f32 %v833, 0.0
      %v864 = vmax.f32 %v836, 0.0
      %v865 = vmax.f32 %v841, 0.0
      %v866 = vmax.f32 %v844, 0.0
      %v867 = vmax.f32 %v849, 0.0
      %v868 = vmax.f32 %v852, 0.0
      %v869 = vmax.f32 %v857, 0.0
      %v870 = vmax.f32 %v860, 0.0
      %v871 = vpack.c.bf16 %v864, %v863
      %v872 = vpack.c.bf16 %v866, %v865
      %v873 = vpack.c.bf16 %v868, %v867
      %v874 = vpack.c.bf16 %v870, %v869
      %v879 = vunpack.c.l.b16 %v871
      %v880 = vunpack.c.h.b16 %v871
      %v881 = vunpack.c.l.b16 %v872
      %v882 = vunpack.c.h.b16 %v872
      %v883 = vunpack.c.l.b16 %v873
      %v884 = vunpack.c.h.b16 %v873
      %v885 = vunpack.c.l.b16 %v874
      %v886 = vunpack.c.h.b16 %v874
      %v887 = vpack.c.b16 %v879, %v879
      %v888 = vpack.c.b16 %v880, %v880
      %v889 = vpack.c.b16 %v881, %v881
      %v890 = vpack.c.b16 %v882, %v882
      %v891 = vpack.c.b16 %v883, %v883
      %v892 = vpack.c.b16 %v884, %v884
      %v893 = vpack.c.b16 %v885, %v885
      %v894 = vpack.c.b16 %v886, %v886
      %vm903 = vcmask 519168
      %904 = vst.msk [vmem:[%s304] sm:$0xf] %vm903, %v887
      %905 = vst.msk [vmem:[%s304 + $0x4] sm:$0xf] %vm903, %v888
      %906 = vst.msk [vmem:[%s304 + $0x8] sm:$0xf] %vm903, %v889
      %907 = vst.msk [vmem:[%s304 + $0xc] sm:$0xf] %vm903, %v890
      %908 = vst.msk [vmem:[%s304 + $0x10] sm:$0xf] %vm903, %v891
      %909 = vst.msk [vmem:[%s304 + $0x14] sm:$0xf] %vm903, %v892
      %910 = vst.msk [vmem:[%s304 + $0x18] sm:$0xf] %vm903, %v893
      %911 = vst.msk [vmem:[%s304 + $0x1c] sm:$0xf] %vm903, %v894
      %s912 = smul.u32 8, %s21
      %p913 = scmp.lt.s32.totalorder %s19, 2
      %s914 = scalar_select %p913, %s19, 2
      %p915 = scmp.lt.s32.totalorder %s20, 1
      %s916 = scalar_select %p915, %s20, 1
      %p917 = scmp.lt.s32.totalorder %s912, 7
      %s918 = scalar_select %p917, %s912, 7
      %s919 = smul.addr %s916, 8
      %s920 = sadd.s32 %s918, %s919
      %s921 = smul.addr %s914, 16
      %s922 = sadd.s32 %s920, %s921
      %s923 = smul.addr %s922, 4
      %s924 = scalar_lea.vmem %s3, %s923
      // Predicated region
      $region33: #{patnet_forward.8} parent=31 // pred_check
        %p925 = pneg %p141
      $region34: #{patnet_forward.8} parent=31 // pred_check_branch
        %927 = sbr.rel (%p925) target = $region36
      $region35: #{patnet_forward.8} parent=31 // pred_region
        %s928 = smul.u32 8, %s21
      $region36: #{patnet_forward.8} parent=31 // pred_fallthru
        _
    $region32: #{patnet_forward.8} parent=5 // pred_fallthru
      _
    %p929 = scmp.le.s32.totalorder 2, %s9
    // Predicated region
    $region37: #{patnet_forward.8} parent=5 // pred_check
      %p930 = pneg %p929
    $region38: #{patnet_forward.8} parent=5 // pred_check_branch
      %932 = sbr.rel (%p930) target = $region40
    $region39: #{patnet_forward.8} parent=5 // pred_region
      %s933 = ssub.s32 %s9, 2
      // Predicated region
      $region41: #{patnet_forward.8} parent=39 // pred_check
        %p934 = pneg %p147
      $region42: #{patnet_forward.8} parent=39 // pred_check_branch
        %936 = sbr.rel (%p934) target = $region44
      $region43: #{patnet_forward.8} parent=39 // pred_region
        %s937 = smul.u32 8, %s24
        %p938 = scmp.lt.s32.totalorder %s22, 2
        %s939 = scalar_select %p938, %s22, 2
        %p940 = scmp.lt.s32.totalorder %s23, 1
        %s941 = scalar_select %p940, %s23, 1
        %p942 = scmp.lt.s32.totalorder %s937, 7
        %s943 = scalar_select %p942, %s937, 7
        %s944 = smul.addr %s941, 8
        %s945 = sadd.s32 %s943, %s944
        %s946 = smul.addr %s939, 16
        %s947 = sadd.s32 %s945, %s946
        %s948 = smul.addr %s947, 4
        %s949 = scalar_lea.vmem %s3, %s948
      $region44: #{patnet_forward.8} parent=39 // pred_fallthru
        _
    $region40: #{patnet_forward.8} parent=5 // pred_fallthru
      _
  $region6: #{patnet_forward.8} parent=0 // loop_footer
    %s13 = sadd.s32 1, %s9
  $region7: #{patnet_forward.8} parent=0 // loop_footer_branch
    %8 = sbr.rel target = $region3
  $region8: #{patnet_forward.8} parent=0 // loop_exit
    _

</llo_original>
